<compile_context>
chip_gen: v7x
topology: tpu7x:2x2x1
jax: 0.10.0
libtpu: 0.0.40
codegen_flags: <defaults>
</compile_context>

<pallas_src>
import jax
import jax.numpy as jnp
from jax import lax
from jax.experimental import pallas as pl
from jax.experimental.pallas import tpu as pltpu

UNIT = 64                        # hidden size from the module
_L = 6                           # stacked recurrences: q00, q01, q01, i00, i01, i02
_INPUT_IDX = (0, 1, 2, 0, 1, 2)  # which of the 3 sequences feeds each stacked layer

_VMEM = pl.BlockSpec(memory_space=pltpu.MemorySpace.VMEM)


# -----------------------------------------------------------------------------
# Fused Pallas kernel (whole forward in one pallas_call)
# -----------------------------------------------------------------------------
def _lstm_abr_fused_kernel(inp_ref, w_in_ref, w_rec_ref, w1_ref, w2_ref, b_ref,
                           q_out_ref, logp_ref, i_out_ref, pre_ref):
    """Whole LSTM_ABR forward.

    inp_ref:   ((T+1)*B, 3) f32   rows 0..T*B-1: x_t for the 3 sequences
                                  (time-major), last B rows: split_set2
    w_in_ref:  (3, 1664)     bf16 [6 layers x 256 gate cols | q03_w | i03_w]
    w_rec_ref: (6, 64, 256)  bf16 dense per-layer W_hh (gate order i,f,g,o)
    w1_ref:    (2, 256, 64)  bf16 [q1 ; i1]
    w2_ref:    (2, 64, A)    bf16 [q2 ; i2]
    b_ref:     (1, 1792+2A)  f32  [b_in | q03_b | i03_b | q1_b | i1_b | q2_b | i2_b]
    outputs:   q_out (B,A), log_probs (B,A), i (B,A)
    pre_ref:   ((T+1)*B, 1664) f32 VMEM scratch for the fused input precompute
    """
    B, A = q_out_ref.shape
    T = inp_ref.shape[0] // B - 1
    L, H, GL = w_rec_ref.shape          # 6, 64, 256
    C_LSTM = L * GL                     # 1536
    C_PRE = w_in_ref.shape[1]           # 1664 = C_LSTM + 2*H

    # ---- One fused input matmul: x_t * W_ih (+ b) for every layer and step,
    #      plus s2 @ q03_w and s2 @ i03_w, staged in VMEM scratch.
    inp = inp_ref[...].astype(jnp.bfloat16)
    pre_ref[...] = (jnp.dot(inp, w_in_ref[...],
                            preferred_element_type=jnp.float32)
                    + b_ref[0:1, 0:C_PRE])

    # ---- Six LSTMs advanced jointly; dense per-layer bf16 recurrent weights,
    #      f32 carry and gate math.  Fully unrolled (T and L are static).
    h = [jnp.zeros((B, H), jnp.float32) for _ in range(L)]
    c = [jnp.zeros((B, H), jnp.float32) for _ in range(L)]
    for t in range(T):
        r0 = t * B
        for l in range(L):
            col = l * GL
            gates = (pre_ref[r0:r0 + B, col:col + GL]
                     + jnp.dot(h[l].astype(jnp.bfloat16), w_rec_ref[l],
                               preferred_element_type=jnp.float32))
            i_g = jax.nn.sigmoid(gates[:, 0 * H:1 * H])
            f_g = jax.nn.sigmoid(gates[:, 1 * H:2 * H])
            g_g = jnp.tanh(gates[:, 2 * H:3 * H])
            o_g = jax.nn.sigmoid(gates[:, 3 * H:4 * H])
            c[l] = f_g * c[l] + i_g * g_g
            h[l] = o_g * jnp.tanh(c[l])

    # ---- s2 head projections were computed in the fused matmul above.
    pT = T * B
    h3q = jnp.maximum(pre_ref[pT:pT + B, C_LSTM:C_LSTM + H], 0.0)
    h3i = jnp.maximum(pre_ref[pT:pT + B, C_LSTM + H:C_LSTM + 2 * H], 0.0)

    b_q1 = b_ref[0:1, C_PRE + 0 * H:C_PRE + 1 * H]
    b_i1 = b_ref[0:1, C_PRE + 1 * H:C_PRE + 2 * H]
    b_q2 = b_ref[0:1, C_PRE + 2 * H:C_PRE + 2 * H + A]
    b_i2 = b_ref[0:1, C_PRE + 2 * H + A:C_PRE + 2 * H + 2 * A]

    def mlp_head(parts, branch, b1, b2):
        # cat([p0,p1,p2,p3]) @ W1 as four 64-row partial dots (no concat and no
        # misaligned lane slices), ReLU, then @ W2.
        z = b1
        for k, p in enumerate(parts):
            z = z + jnp.dot(p.astype(jnp.bfloat16),
                            w1_ref[branch, k * H:(k + 1) * H, :],
                            preferred_element_type=jnp.float32)
        z = jnp.maximum(z, 0.0)
        return (jnp.dot(z.astype(jnp.bfloat16), w2_ref[branch],
                        preferred_element_type=jnp.float32) + b2)

    # q head: q2(relu(q1(cat([hq0, hq1, hq2, relu(q03(s2))]))))
    q_out_ref[...] = mlp_head([h[0], h[1], h[2], h3q], 0, b_q1, b_q2)

    # i head: i = relu(i2(relu(i1(cat)))); also log_softmax(i)
    i_val = jnp.maximum(mlp_head([h[3], h[4], h[5], h3i], 1, b_i1, b_i2), 0.0)
    i_out_ref[...] = i_val
    m = jnp.max(i_val, axis=1, keepdims=True)
    lse = m + jnp.log(jnp.sum(jnp.exp(i_val - m), axis=1, keepdims=True))
    logp_ref[...] = i_val - lse


# -----------------------------------------------------------------------------
# Forward wrapper: one pallas_call for the whole module
# -----------------------------------------------------------------------------
def lstm_abr_forward(packed, split_set1, split_set2):
    x = jnp.concatenate([s.astype(jnp.float32) for s in split_set1], axis=2)
    B, T, _ = x.shape
    xt = jnp.transpose(x, (1, 0, 2)).reshape(T * B, 3)          # time-major rows
    inp = jnp.concatenate([xt, split_set2.astype(jnp.float32)], axis=0)
    A = packed["w2"].shape[2]
    C_PRE = packed["w_in_h"].shape[1]

    q_out, logp, i_val = pl.pallas_call(
        _lstm_abr_fused_kernel,
        out_shape=(jax.ShapeDtypeStruct((B, A), jnp.float32),
                   jax.ShapeDtypeStruct((B, A), jnp.float32),
                   jax.ShapeDtypeStruct((B, A), jnp.float32)),
        in_specs=[_VMEM] * 6,
        out_specs=(_VMEM, _VMEM, _VMEM),
        scratch_shapes=[pltpu.VMEM(((T + 1) * B, C_PRE), jnp.float32)],
    )(inp, packed["w_in_h"], packed["w_rec"], packed["w1"], packed["w2"],
      packed["b_all"])
    return q_out, logp, i_val


# -----------------------------------------------------------------------------
# Parameter init (deterministic, PyTorch shapes; synthetic — no checkpoint load)
# -----------------------------------------------------------------------------
def _init_lstm(key, H):
    k1, k2, k3, k4 = jax.random.split(key, 4)
    s = 1.0 / jnp.sqrt(jnp.float32(H))
    w_ih = jax.random.uniform(k1, (4 * H, 1), jnp.float32, -s, s)
    w_hh = jax.random.uniform(k2, (4 * H, H), jnp.float32, -s, s)
    b_ih = jax.random.uniform(k3, (4 * H,), jnp.float32, -s, s)
    b_hh = jax.random.uniform(k4, (4 * H,), jnp.float32, -s, s)
    return {
        "wih": jnp.transpose(w_ih),               # (1, 4H)  gate order [i,f,g,o]
        "whhT": jnp.transpose(w_hh),              # (H, 4H)
        "b": (b_ih + b_hh).reshape(1, 4 * H),     # (1, 4H)
    }


def _init_linear(key, in_f, out_f):
    k1, k2 = jax.random.split(key)
    s = 1.0 / jnp.sqrt(jnp.float32(in_f))
    w = jax.random.uniform(k1, (out_f, in_f), jnp.float32, -s, s)
    b = jax.random.uniform(k2, (out_f,), jnp.float32, -s, s)
    return {"wT": jnp.transpose(w), "b": b.reshape(1, out_f)}


def init_lstm_abr_params(key, num_actions, unit=UNIT):
    keys = jax.random.split(key, 12)
    return {
        "q00": _init_lstm(keys[0], unit),
        "q01": _init_lstm(keys[1], unit),
        "q02": _init_lstm(keys[2], unit),   # created in __init__, unused in forward
        "q03": _init_linear(keys[3], 3, unit),
        "q1": _init_linear(keys[4], unit * 4, unit),
        "q2": _init_linear(keys[5], unit, num_actions),
        "i00": _init_lstm(keys[6], unit),
        "i01": _init_lstm(keys[7], unit),
        "i02": _init_lstm(keys[8], unit),
        "i03": _init_linear(keys[9], 3, unit),
        "i1": _init_linear(keys[10], unit * 4, unit),
        "i2": _init_linear(keys[11], unit, num_actions),
    }


def pack_lstm_abr_params(params, unit=UNIT):
    """Pack the module into 5 weight buffers (bf16) + 1 bias buffer (f32).

    Stacked layer order: [q00, q01(x1), q01(x2), i00, i01, i02]  (q01 reused,
    q02 unused — exactly the PyTorch forward).  Per-layer column layout inside
    the 256-wide block is PyTorch gate order [i | f | g | o], 64 lanes each.
    """
    layers = [params["q00"], params["q01"], params["q01"],
              params["i00"], params["i01"], params["i02"]]
    H = unit
    assert len(layers) == _L
    GL = 4 * H
    C = _L * GL                                                # 1536

    # Dense per-layer recurrent weights (no block-diagonal zero padding).
    w_rec = jnp.stack([p["whhT"] for p in layers], axis=0)     # (6, 64, 256)

    # Input weights: layer-major 256-col blocks; only the feeding sequence row
    # is non-zero.  The q03 / i03 head projections are appended as extra cols
    # so a single matmul computes every input-side contribution.
    w_in = jnp.zeros((3, C), jnp.float32)
    b_in = jnp.zeros((1, C), jnp.float32)
    for l, p in enumerate(layers):
        w_in = w_in.at[_INPUT_IDX[l], l * GL:(l + 1) * GL].set(p["wih"][0])
        b_in = b_in.at[0, l * GL:(l + 1) * GL].set(p["b"][0])
    w_in_h = jnp.concatenate(
        [w_in, params["q03"]["wT"], params["i03"]["wT"]], axis=1)  # (3, 1664)

    b_all = jnp.concatenate(
        [b_in, params["q03"]["b"], params["i03"]["b"],
         params["q1"]["b"], params["i1"]["b"],
         params["q2"]["b"], params["i2"]["b"]], axis=1)            # (1, 1792+2A)

    w1 = jnp.stack([params["q1"]["wT"], params["i1"]["wT"]], axis=0)  # (2,256,64)
    w2 = jnp.stack([params["q2"]["wT"], params["i2"]["wT"]], axis=0)  # (2,64,A)

    return {
        "w_in_h": w_in_h.astype(jnp.bfloat16),
        "w_rec": w_rec.astype(jnp.bfloat16),
        "w1": w1.astype(jnp.bfloat16),
        "w2": w2.astype(jnp.bfloat16),
        "b_all": b_all,                       # biases stay f32
    }


# -----------------------------------------------------------------------------
# Pure-JAX reference (mirrors the PyTorch forward) for correctness checking
# -----------------------------------------------------------------------------
def _lstm_ref(x_bt1, p):
    B = x_bt1.shape[0]
    H = p["whhT"].shape[0]

    def step(carry, x_t):
        h, c = carry
        gates = x_t * p["wih"] + h @ p["whhT"] + p["b"]
        i = jax.nn.sigmoid(gates[:, 0:H])
        f = jax.nn.sigmoid(gates[:, H:2 * H])
        g = jnp.tanh(gates[:, 2 * H:3 * H])
        o = jax.nn.sigmoid(gates[:, 3 * H:4 * H])
        c = f * c + i * g
        h = o * jnp.tanh(c)
        return (h, c), None

    xs = jnp.transpose(x_bt1, (1, 0, 2))
    (h, _), _ = lax.scan(step, (jnp.zeros((B, H), jnp.float32),
                                jnp.zeros((B, H), jnp.float32)), xs)
    return h


def lstm_abr_reference(params, split_set1, split_set2):
    s2 = split_set2
    hq0 = _lstm_ref(split_set1[0], params["q00"])
    hq1 = _lstm_ref(split_set1[1], params["q01"])
    hq2 = _lstm_ref(split_set1[2], params["q01"])   # q01 reused, as in PyTorch
    h3q = jax.nn.relu(s2 @ params["q03"]["wT"] + params["q03"]["b"])
    q = jax.nn.relu(jnp.concatenate([hq0, hq1, hq2, h3q], axis=1)
                    @ params["q1"]["wT"] + params["q1"]["b"])
    q_out = q @ params["q2"]["wT"] + params["q2"]["b"]

    hi0 = _lstm_ref(split_set1[0], params["i00"])
    hi1 = _lstm_ref(split_set1[1], params["i01"])
    hi2 = _lstm_ref(split_set1[2], params["i02"])
    h3i = jax.nn.relu(s2 @ params["i03"]["wT"] + params["i03"]["b"])
    i_ = jax.nn.relu(jnp.concatenate([hi0, hi1, hi2, h3i], axis=1)
                     @ params["i1"]["wT"] + params["i1"]["b"])
    i_ = jax.nn.relu(i_ @ params["i2"]["wT"] + params["i2"]["b"])
    return q_out, jax.nn.log_softmax(i_, axis=1), i_


# -----------------------------------------------------------------------------
# Main
# -----------------------------------------------------------------------------
if __name__ == "__main__":
    B, T, A = 2, 8, 6  # batch, sequence length, num_actions
    key = jax.random.PRNGKey(0)
    k_params, k0, k1, k2, k3 = jax.random.split(key, 5)

    params = init_lstm_abr_params(k_params, num_actions=A)
    packed = pack_lstm_abr_params(params)

    split_set1 = [
        jax.random.normal(k0, (B, T, 1), jnp.float32),
        jax.random.normal(k1, (B, T, 1), jnp.float32),
        jax.random.normal(k2, (B, T, 1), jnp.float32),
    ]
    split_set2 = jax.random.normal(k3, (B, 3), jnp.float32)

    fwd = jax.jit(lstm_abr_forward)
    q_out, log_probs, i_val = fwd(packed, split_set1, split_set2)
    jax.block_until_ready((q_out, log_probs, i_val))

    assert q_out.shape == (B, A)
    assert log_probs.shape == (B, A)
    assert i_val.shape == (B, A)

    # Cross-check against the pure-JAX (f32, highest-precision) reference of the
    # PyTorch forward.  Tolerance 2e-2: kernel uses bf16 matmul operands with
    # f32 accumulate / f32 carry, which introduces ~1e-3-scale rounding.
    with jax.default_matmul_precision("highest"):
        q_ref, lp_ref, i_ref = jax.jit(lstm_abr_reference)(
            params, split_set1, split_set2)
    jax.block_until_ready((q_ref, lp_ref, i_ref))
    assert float(jnp.max(jnp.abs(q_out - q_ref))) < 2e-2
    assert float(jnp.max(jnp.abs(log_probs - lp_ref))) < 2e-2
    assert float(jnp.max(jnp.abs(i_val - i_ref))) < 2e-2

    print("KERNEL_OK")
</pallas_src>

<mosaic_0001>
module attributes {stable_mosaic.version = 11 : i64} {
  func.func @_lstm_abr_fused_kernel(%arg0: memref<18x3xf32, #tpu.memory_space<vmem>>, %arg1: memref<3x1664xbf16, #tpu.memory_space<vmem>>, %arg2: memref<6x64x256xbf16, #tpu.memory_space<vmem>>, %arg3: memref<2x256x64xbf16, #tpu.memory_space<vmem>>, %arg4: memref<2x64x6xbf16, #tpu.memory_space<vmem>>, %arg5: memref<1x1804xf32, #tpu.memory_space<vmem>>, %arg6: memref<2x6xf32, #tpu.memory_space<vmem>>, %arg7: memref<2x6xf32, #tpu.memory_space<vmem>>, %arg8: memref<2x6xf32, #tpu.memory_space<vmem>>, %arg9: memref<18x1664xf32, #tpu.memory_space<vmem>>) attributes {dimension_semantics = [], scalar_prefetch = 0 : i64, scratch_operands = 1 : i64, tpu.core_type = #tpu.core_type<tc>} {
    %c0 = arith.constant 0 : index
    %c0_0 = arith.constant 0 : index
    %0 = vector.load %arg0[%c0, %c0_0] : memref<18x3xf32, #tpu.memory_space<vmem>>, vector<18x3xf32>
    %1 = arith.truncf %0 : vector<18x3xf32> to vector<18x3xbf16>
    %c0_1 = arith.constant 0 : index
    %c0_2 = arith.constant 0 : index
    %2 = vector.load %arg1[%c0_1, %c0_2] : memref<3x1664xbf16, #tpu.memory_space<vmem>>, vector<3x1664xbf16>
    %cst = arith.constant dense<0.000000e+00> : vector<18x1664xf32>
    %3 = tpu.matmul %1, %2, %cst {dimension_numbers = #tpu.dot_dimension_numbers<[1], [0], [0], [1], [0, 0, 1, 1], [], []>} : vector<18x3xbf16>, vector<3x1664xbf16>, vector<18x1664xf32> -> vector<18x1664xf32>
    %c0_3 = arith.constant 0 : index
    %c0_4 = arith.constant 0 : index
    %4 = vector.load %arg5[%c0_3, %c0_4] : memref<1x1804xf32, #tpu.memory_space<vmem>>, vector<1x1664xf32>
    %5 = vector.broadcast %4 : vector<1x1664xf32> to vector<18x1664xf32>
    %6 = arith.addf %3, %5 : vector<18x1664xf32>
    %c0_5 = arith.constant 0 : index
    %c0_6 = arith.constant 0 : index
    %7 = vector.load %arg9[%c0_5, %c0_6] : memref<18x1664xf32, #tpu.memory_space<vmem>>, vector<18x1664xf32>
    tpu.vector_store %arg9[%c0_5, %c0_6], %6 {strides = array<i32>} : memref<18x1664xf32, #tpu.memory_space<vmem>>, vector<18x1664xf32>,
    %cst_7 = arith.constant 0.000000e+00 : f32
    %8 = vector.broadcast %cst_7 : f32 to vector<2x64xf32>
    %cst_8 = arith.constant 0.000000e+00 : f32
    %9 = vector.broadcast %cst_8 : f32 to vector<2x64xf32>
    %cst_9 = arith.constant 0.000000e+00 : f32
    %10 = vector.broadcast %cst_9 : f32 to vector<2x64xf32>
    %cst_10 = arith.constant 0.000000e+00 : f32
    %11 = vector.broadcast %cst_10 : f32 to vector<2x64xf32>
    %cst_11 = arith.constant 0.000000e+00 : f32
    %12 = vector.broadcast %cst_11 : f32 to vector<2x64xf32>
    %cst_12 = arith.constant 0.000000e+00 : f32
    %13 = vector.broadcast %cst_12 : f32 to vector<2x64xf32>
    %cst_13 = arith.constant 0.000000e+00 : f32
    %14 = vector.broadcast %cst_13 : f32 to vector<2x64xf32>
    %cst_14 = arith.constant 0.000000e+00 : f32
    %15 = vector.broadcast %cst_14 : f32 to vector<2x64xf32>
    %cst_15 = arith.constant 0.000000e+00 : f32
    %16 = vector.broadcast %cst_15 : f32 to vector<2x64xf32>
    %cst_16 = arith.constant 0.000000e+00 : f32
    %17 = vector.broadcast %cst_16 : f32 to vector<2x64xf32>
    %cst_17 = arith.constant 0.000000e+00 : f32
    %18 = vector.broadcast %cst_17 : f32 to vector<2x64xf32>
    %cst_18 = arith.constant 0.000000e+00 : f32
    %19 = vector.broadcast %cst_18 : f32 to vector<2x64xf32>
    %c0_19 = arith.constant 0 : index
    %c0_20 = arith.constant 0 : index
    %20 = vector.load %arg9[%c0_19, %c0_20] : memref<18x1664xf32, #tpu.memory_space<vmem>>, vector<2x256xf32>
    %21 = arith.truncf %8 : vector<2x64xf32> to vector<2x64xbf16>
    %c0_21 = arith.constant 0 : index
    %c0_22 = arith.constant 0 : index
    %c0_23 = arith.constant 0 : index
    %22 = vector.load %arg2[%c0_21, %c0_22, %c0_23] : memref<6x64x256xbf16, #tpu.memory_space<vmem>>, vector<1x64x256xbf16>
    %23 = vector.shape_cast %22 : vector<1x64x256xbf16> to vector<64x256xbf16>
    %cst_24 = arith.constant dense<0.000000e+00> : vector<2x256xf32>
    %24 = tpu.matmul %21, %23, %cst_24 {dimension_numbers = #tpu.dot_dimension_numbers<[1], [0], [0], [1], [0, 0, 1, 1], [], []>} : vector<2x64xbf16>, vector<64x256xbf16>, vector<2x256xf32> -> vector<2x256xf32>
    %25 = arith.addf %20, %24 : vector<2x256xf32>
    %26 = vector.extract_strided_slice %25 {offsets = [0, 0], sizes = [2, 64], strides = [1, 1]} : vector<2x256xf32> to vector<2x64xf32>
    %27 = arith.negf %26 : vector<2x64xf32>
    %28 = math.exp %27 : vector<2x64xf32>
    %cst_25 = arith.constant 1.000000e+00 : f32
    %29 = vector.broadcast %cst_25 : f32 to vector<2x64xf32>
    %30 = arith.addf %29, %28 : vector<2x64xf32>
    %31 = arith.divf %29, %30 : vector<2x64xf32>
    %32 = vector.extract_strided_slice %25 {offsets = [0, 64], sizes = [2, 64], strides = [1, 1]} : vector<2x256xf32> to vector<2x64xf32>
    %33 = arith.negf %32 : vector<2x64xf32>
    %34 = math.exp %33 : vector<2x64xf32>
    %cst_26 = arith.constant 1.000000e+00 : f32
    %35 = vector.broadcast %cst_26 : f32 to vector<2x64xf32>
    %36 = arith.addf %35, %34 : vector<2x64xf32>
    %37 = arith.divf %35, %36 : vector<2x64xf32>
    %38 = vector.extract_strided_slice %25 {offsets = [0, 128], sizes = [2, 64], strides = [1, 1]} : vector<2x256xf32> to vector<2x64xf32>
    %39 = math.tanh %38 : vector<2x64xf32>
    %40 = vector.extract_strided_slice %25 {offsets = [0, 192], sizes = [2, 64], strides = [1, 1]} : vector<2x256xf32> to vector<2x64xf32>
    %41 = arith.negf %40 : vector<2x64xf32>
    %42 = math.exp %41 : vector<2x64xf32>
    %cst_27 = arith.constant 1.000000e+00 : f32
    %43 = vector.broadcast %cst_27 : f32 to vector<2x64xf32>
    %44 = arith.addf %43, %42 : vector<2x64xf32>
    %45 = arith.divf %43, %44 : vector<2x64xf32>
    %46 = arith.mulf %37, %14 : vector<2x64xf32>
    %47 = arith.mulf %31, %39 : vector<2x64xf32>
    %48 = arith.addf %46, %47 : vector<2x64xf32>
    %49 = math.tanh %48 : vector<2x64xf32>
    %50 = arith.mulf %45, %49 : vector<2x64xf32>
    %c0_28 = arith.constant 0 : index
    %c256 = arith.constant 256 : index
    %51 = vector.load %arg9[%c0_28, %c256] : memref<18x1664xf32, #tpu.memory_space<vmem>>, vector<2x256xf32>
    %52 = arith.truncf %9 : vector<2x64xf32> to vector<2x64xbf16>
    %c1 = arith.constant 1 : index
    %c0_29 = arith.constant 0 : index
    %c0_30 = arith.constant 0 : index
    %53 = vector.load %arg2[%c1, %c0_29, %c0_30] : memref<6x64x256xbf16, #tpu.memory_space<vmem>>, vector<1x64x256xbf16>
    %54 = vector.shape_cast %53 : vector<1x64x256xbf16> to vector<64x256xbf16>
    %cst_31 = arith.constant dense<0.000000e+00> : vector<2x256xf32>
    %55 = tpu.matmul %52, %54, %cst_31 {dimension_numbers = #tpu.dot_dimension_numbers<[1], [0], [0], [1], [0, 0, 1, 1], [], []>} : vector<2x64xbf16>, vector<64x256xbf16>, vector<2x256xf32> -> vector<2x256xf32>
    %56 = arith.addf %51, %55 : vector<2x256xf32>
    %57 = vector.extract_strided_slice %56 {offsets = [0, 0], sizes = [2, 64], strides = [1, 1]} : vector<2x256xf32> to vector<2x64xf32>
    %58 = arith.negf %57 : vector<2x64xf32>
    %59 = math.exp %58 : vector<2x64xf32>
    %cst_32 = arith.constant 1.000000e+00 : f32
    %60 = vector.broadcast %cst_32 : f32 to vector<2x64xf32>
    %61 = arith.addf %60, %59 : vector<2x64xf32>
    %62 = arith.divf %60, %61 : vector<2x64xf32>
    %63 = vector.extract_strided_slice %56 {offsets = [0, 64], sizes = [2, 64], strides = [1, 1]} : vector<2x256xf32> to vector<2x64xf32>
    %64 = arith.negf %63 : vector<2x64xf32>
    %65 = math.exp %64 : vector<2x64xf32>
    %cst_33 = arith.constant 1.000000e+00 : f32
    %66 = vector.broadcast %cst_33 : f32 to vector<2x64xf32>
    %67 = arith.addf %66, %65 : vector<2x64xf32>
    %68 = arith.divf %66, %67 : vector<2x64xf32>
    %69 = vector.extract_strided_slice %56 {offsets = [0, 128], sizes = [2, 64], strides = [1, 1]} : vector<2x256xf32> to vector<2x64xf32>
    %70 = math.tanh %69 : vector<2x64xf32>
    %71 = vector.extract_strided_slice %56 {offsets = [0, 192], sizes = [2, 64], strides = [1, 1]} : vector<2x256xf32> to vector<2x64xf32>
    %72 = arith.negf %71 : vector<2x64xf32>
    %73 = math.exp %72 : vector<2x64xf32>
    %cst_34 = arith.constant 1.000000e+00 : f32
    %74 = vector.broadcast %cst_34 : f32 to vector<2x64xf32>
    %75 = arith.addf %74, %73 : vector<2x64xf32>
    %76 = arith.divf %74, %75 : vector<2x64xf32>
    %77 = arith.mulf %68, %15 : vector<2x64xf32>
    %78 = arith.mulf %62, %70 : vector<2x64xf32>
    %79 = arith.addf %77, %78 : vector<2x64xf32>
    %80 = math.tanh %79 : vector<2x64xf32>
    %81 = arith.mulf %76, %80 : vector<2x64xf32>
    %c0_35 = arith.constant 0 : index
    %c512 = arith.constant 512 : index
    %82 = vector.load %arg9[%c0_35, %c512] : memref<18x1664xf32, #tpu.memory_space<vmem>>, vector<2x256xf32>
    %83 = arith.truncf %10 : vector<2x64xf32> to vector<2x64xbf16>
    %c2 = arith.constant 2 : index
    %c0_36 = arith.constant 0 : index
    %c0_37 = arith.constant 0 : index
    %84 = vector.load %arg2[%c2, %c0_36, %c0_37] : memref<6x64x256xbf16, #tpu.memory_space<vmem>>, vector<1x64x256xbf16>
    %85 = vector.shape_cast %84 : vector<1x64x256xbf16> to vector<64x256xbf16>
    %cst_38 = arith.constant dense<0.000000e+00> : vector<2x256xf32>
    %86 = tpu.matmul %83, %85, %cst_38 {dimension_numbers = #tpu.dot_dimension_numbers<[1], [0], [0], [1], [0, 0, 1, 1], [], []>} : vector<2x64xbf16>, vector<64x256xbf16>, vector<2x256xf32> -> vector<2x256xf32>
    %87 = arith.addf %82, %86 : vector<2x256xf32>
    %88 = vector.extract_strided_slice %87 {offsets = [0, 0], sizes = [2, 64], strides = [1, 1]} : vector<2x256xf32> to vector<2x64xf32>
    %89 = arith.negf %88 : vector<2x64xf32>
    %90 = math.exp %89 : vector<2x64xf32>
    %cst_39 = arith.constant 1.000000e+00 : f32
    %91 = vector.broadcast %cst_39 : f32 to vector<2x64xf32>
    %92 = arith.addf %91, %90 : vector<2x64xf32>
    %93 = arith.divf %91, %92 : vector<2x64xf32>
    %94 = vector.extract_strided_slice %87 {offsets = [0, 64], sizes = [2, 64], strides = [1, 1]} : vector<2x256xf32> to vector<2x64xf32>
    %95 = arith.negf %94 : vector<2x64xf32>
    %96 = math.exp %95 : vector<2x64xf32>
    %cst_40 = arith.constant 1.000000e+00 : f32
    %97 = vector.broadcast %cst_40 : f32 to vector<2x64xf32>
    %98 = arith.addf %97, %96 : vector<2x64xf32>
    %99 = arith.divf %97, %98 : vector<2x64xf32>
    %100 = vector.extract_strided_slice %87 {offsets = [0, 128], sizes = [2, 64], strides = [1, 1]} : vector<2x256xf32> to vector<2x64xf32>
    %101 = math.tanh %100 : vector<2x64xf32>
    %102 = vector.extract_strided_slice %87 {offsets = [0, 192], sizes = [2, 64], strides = [1, 1]} : vector<2x256xf32> to vector<2x64xf32>
    %103 = arith.negf %102 : vector<2x64xf32>
    %104 = math.exp %103 : vector<2x64xf32>
    %cst_41 = arith.constant 1.000000e+00 : f32
    %105 = vector.broadcast %cst_41 : f32 to vector<2x64xf32>
    %106 = arith.addf %105, %104 : vector<2x64xf32>
    %107 = arith.divf %105, %106 : vector<2x64xf32>
    %108 = arith.mulf %99, %16 : vector<2x64xf32>
    %109 = arith.mulf %93, %101 : vector<2x64xf32>
    %110 = arith.addf %108, %109 : vector<2x64xf32>
    %111 = math.tanh %110 : vector<2x64xf32>
    %112 = arith.mulf %107, %111 : vector<2x64xf32>
    %c0_42 = arith.constant 0 : index
    %c768 = arith.constant 768 : index
    %113 = vector.load %arg9[%c0_42, %c768] : memref<18x1664xf32, #tpu.memory_space<vmem>>, vector<2x256xf32>
    %114 = arith.truncf %11 : vector<2x64xf32> to vector<2x64xbf16>
    %c3 = arith.constant 3 : index
    %c0_43 = arith.constant 0 : index
    %c0_44 = arith.constant 0 : index
    %115 = vector.load %arg2[%c3, %c0_43, %c0_44] : memref<6x64x256xbf16, #tpu.memory_space<vmem>>, vector<1x64x256xbf16>
    %116 = vector.shape_cast %115 : vector<1x64x256xbf16> to vector<64x256xbf16>
    %cst_45 = arith.constant dense<0.000000e+00> : vector<2x256xf32>
    %117 = tpu.matmul %114, %116, %cst_45 {dimension_numbers = #tpu.dot_dimension_numbers<[1], [0], [0], [1], [0, 0, 1, 1], [], []>} : vector<2x64xbf16>, vector<64x256xbf16>, vector<2x256xf32> -> vector<2x256xf32>
    %118 = arith.addf %113, %117 : vector<2x256xf32>
    %119 = vector.extract_strided_slice %118 {offsets = [0, 0], sizes = [2, 64], strides = [1, 1]} : vector<2x256xf32> to vector<2x64xf32>
    %120 = arith.negf %119 : vector<2x64xf32>
    %121 = math.exp %120 : vector<2x64xf32>
    %cst_46 = arith.constant 1.000000e+00 : f32
    %122 = vector.broadcast %cst_46 : f32 to vector<2x64xf32>
    %123 = arith.addf %122, %121 : vector<2x64xf32>
    %124 = arith.divf %122, %123 : vector<2x64xf32>
    %125 = vector.extract_strided_slice %118 {offsets = [0, 64], sizes = [2, 64], strides = [1, 1]} : vector<2x256xf32> to vector<2x64xf32>
    %126 = arith.negf %125 : vector<2x64xf32>
    %127 = math.exp %126 : vector<2x64xf32>
    %cst_47 = arith.constant 1.000000e+00 : f32
    %128 = vector.broadcast %cst_47 : f32 to vector<2x64xf32>
    %129 = arith.addf %128, %127 : vector<2x64xf32>
    %130 = arith.divf %128, %129 : vector<2x64xf32>
    %131 = vector.extract_strided_slice %118 {offsets = [0, 128], sizes = [2, 64], strides = [1, 1]} : vector<2x256xf32> to vector<2x64xf32>
    %132 = math.tanh %131 : vector<2x64xf32>
    %133 = vector.extract_strided_slice %118 {offsets = [0, 192], sizes = [2, 64], strides = [1, 1]} : vector<2x256xf32> to vector<2x64xf32>
    %134 = arith.negf %133 : vector<2x64xf32>
    %135 = math.exp %134 : vector<2x64xf32>
    %cst_48 = arith.constant 1.000000e+00 : f32
    %136 = vector.broadcast %cst_48 : f32 to vector<2x64xf32>
    %137 = arith.addf %136, %135 : vector<2x64xf32>
    %138 = arith.divf %136, %137 : vector<2x64xf32>
    %139 = arith.mulf %130, %17 : vector<2x64xf32>
    %140 = arith.mulf %124, %132 : vector<2x64xf32>
    %141 = arith.addf %139, %140 : vector<2x64xf32>
    %142 = math.tanh %141 : vector<2x64xf32>
    %143 = arith.mulf %138, %142 : vector<2x64xf32>
    %c0_49 = arith.constant 0 : index
    %c1024 = arith.constant 1024 : index
    %144 = vector.load %arg9[%c0_49, %c1024] : memref<18x1664xf32, #tpu.memory_space<vmem>>, vector<2x256xf32>
    %145 = arith.truncf %12 : vector<2x64xf32> to vector<2x64xbf16>
    %c4 = arith.constant 4 : index
    %c0_50 = arith.constant 0 : index
    %c0_51 = arith.constant 0 : index
    %146 = vector.load %arg2[%c4, %c0_50, %c0_51] : memref<6x64x256xbf16, #tpu.memory_space<vmem>>, vector<1x64x256xbf16>
    %147 = vector.shape_cast %146 : vector<1x64x256xbf16> to vector<64x256xbf16>
    %cst_52 = arith.constant dense<0.000000e+00> : vector<2x256xf32>
    %148 = tpu.matmul %145, %147, %cst_52 {dimension_numbers = #tpu.dot_dimension_numbers<[1], [0], [0], [1], [0, 0, 1, 1], [], []>} : vector<2x64xbf16>, vector<64x256xbf16>, vector<2x256xf32> -> vector<2x256xf32>
    %149 = arith.addf %144, %148 : vector<2x256xf32>
    %150 = vector.extract_strided_slice %149 {offsets = [0, 0], sizes = [2, 64], strides = [1, 1]} : vector<2x256xf32> to vector<2x64xf32>
    %151 = arith.negf %150 : vector<2x64xf32>
    %152 = math.exp %151 : vector<2x64xf32>
    %cst_53 = arith.constant 1.000000e+00 : f32
    %153 = vector.broadcast %cst_53 : f32 to vector<2x64xf32>
    %154 = arith.addf %153, %152 : vector<2x64xf32>
    %155 = arith.divf %153, %154 : vector<2x64xf32>
    %156 = vector.extract_strided_slice %149 {offsets = [0, 64], sizes = [2, 64], strides = [1, 1]} : vector<2x256xf32> to vector<2x64xf32>
    %157 = arith.negf %156 : vector<2x64xf32>
    %158 = math.exp %157 : vector<2x64xf32>
    %cst_54 = arith.constant 1.000000e+00 : f32
    %159 = vector.broadcast %cst_54 : f32 to vector<2x64xf32>
    %160 = arith.addf %159, %158 : vector<2x64xf32>
    %161 = arith.divf %159, %160 : vector<2x64xf32>
    %162 = vector.extract_strided_slice %149 {offsets = [0, 128], sizes = [2, 64], strides = [1, 1]} : vector<2x256xf32> to vector<2x64xf32>
    %163 = math.tanh %162 : vector<2x64xf32>
    %164 = vector.extract_strided_slice %149 {offsets = [0, 192], sizes = [2, 64], strides = [1, 1]} : vector<2x256xf32> to vector<2x64xf32>
    %165 = arith.negf %164 : vector<2x64xf32>
    %166 = math.exp %165 : vector<2x64xf32>
    %cst_55 = arith.constant 1.000000e+00 : f32
    %167 = vector.broadcast %cst_55 : f32 to vector<2x64xf32>
    %168 = arith.addf %167, %166 : vector<2x64xf32>
    %169 = arith.divf %167, %168 : vector<2x64xf32>
    %170 = arith.mulf %161, %18 : vector<2x64xf32>
    %171 = arith.mulf %155, %163 : vector<2x64xf32>
    %172 = arith.addf %170, %171 : vector<2x64xf32>
    %173 = math.tanh %172 : vector<2x64xf32>
    %174 = arith.mulf %169, %173 : vector<2x64xf32>
    %c0_56 = arith.constant 0 : index
    %c1280 = arith.constant 1280 : index
    %175 = vector.load %arg9[%c0_56, %c1280] : memref<18x1664xf32, #tpu.memory_space<vmem>>, vector<2x256xf32>
    %176 = arith.truncf %13 : vector<2x64xf32> to vector<2x64xbf16>
    %c5 = arith.constant 5 : index
    %c0_57 = arith.constant 0 : index
    %c0_58 = arith.constant 0 : index
    %177 = vector.load %arg2[%c5, %c0_57, %c0_58] : memref<6x64x256xbf16, #tpu.memory_space<vmem>>, vector<1x64x256xbf16>
    %178 = vector.shape_cast %177 : vector<1x64x256xbf16> to vector<64x256xbf16>
    %cst_59 = arith.constant dense<0.000000e+00> : vector<2x256xf32>
    %179 = tpu.matmul %176, %178, %cst_59 {dimension_numbers = #tpu.dot_dimension_numbers<[1], [0], [0], [1], [0, 0, 1, 1], [], []>} : vector<2x64xbf16>, vector<64x256xbf16>, vector<2x256xf32> -> vector<2x256xf32>
    %180 = arith.addf %175, %179 : vector<2x256xf32>
    %181 = vector.extract_strided_slice %180 {offsets = [0, 0], sizes = [2, 64], strides = [1, 1]} : vector<2x256xf32> to vector<2x64xf32>
    %182 = arith.negf %181 : vector<2x64xf32>
    %183 = math.exp %182 : vector<2x64xf32>
    %cst_60 = arith.constant 1.000000e+00 : f32
    %184 = vector.broadcast %cst_60 : f32 to vector<2x64xf32>
    %185 = arith.addf %184, %183 : vector<2x64xf32>
    %186 = arith.divf %184, %185 : vector<2x64xf32>
    %187 = vector.extract_strided_slice %180 {offsets = [0, 64], sizes = [2, 64], strides = [1, 1]} : vector<2x256xf32> to vector<2x64xf32>
    %188 = arith.negf %187 : vector<2x64xf32>
    %189 = math.exp %188 : vector<2x64xf32>
    %cst_61 = arith.constant 1.000000e+00 : f32
    %190 = vector.broadcast %cst_61 : f32 to vector<2x64xf32>
    %191 = arith.addf %190, %189 : vector<2x64xf32>
    %192 = arith.divf %190, %191 : vector<2x64xf32>
    %193 = vector.extract_strided_slice %180 {offsets = [0, 128], sizes = [2, 64], strides = [1, 1]} : vector<2x256xf32> to vector<2x64xf32>
    %194 = math.tanh %193 : vector<2x64xf32>
    %195 = vector.extract_strided_slice %180 {offsets = [0, 192], sizes = [2, 64], strides = [1, 1]} : vector<2x256xf32> to vector<2x64xf32>
    %196 = arith.negf %195 : vector<2x64xf32>
    %197 = math.exp %196 : vector<2x64xf32>
    %cst_62 = arith.constant 1.000000e+00 : f32
    %198 = vector.broadcast %cst_62 : f32 to vector<2x64xf32>
    %199 = arith.addf %198, %197 : vector<2x64xf32>
    %200 = arith.divf %198, %199 : vector<2x64xf32>
    %201 = arith.mulf %192, %19 : vector<2x64xf32>
    %202 = arith.mulf %186, %194 : vector<2x64xf32>
    %203 = arith.addf %201, %202 : vector<2x64xf32>
    %204 = math.tanh %203 : vector<2x64xf32>
    %205 = arith.mulf %200, %204 : vector<2x64xf32>
    %c2_63 = arith.constant 2 : index
    %c0_64 = arith.constant 0 : index
    %206 = vector.load %arg9[%c2_63, %c0_64] : memref<18x1664xf32, #tpu.memory_space<vmem>>, vector<2x256xf32>
    %207 = arith.truncf %50 : vector<2x64xf32> to vector<2x64xbf16>
    %c0_65 = arith.constant 0 : index
    %c0_66 = arith.constant 0 : index
    %c0_67 = arith.constant 0 : index
    %208 = vector.load %arg2[%c0_65, %c0_66, %c0_67] : memref<6x64x256xbf16, #tpu.memory_space<vmem>>, vector<1x64x256xbf16>
    %209 = vector.shape_cast %208 : vector<1x64x256xbf16> to vector<64x256xbf16>
    %cst_68 = arith.constant dense<0.000000e+00> : vector<2x256xf32>
    %210 = tpu.matmul %207, %209, %cst_68 {dimension_numbers = #tpu.dot_dimension_numbers<[1], [0], [0], [1], [0, 0, 1, 1], [], []>} : vector<2x64xbf16>, vector<64x256xbf16>, vector<2x256xf32> -> vector<2x256xf32>
    %211 = arith.addf %206, %210 : vector<2x256xf32>
    %212 = vector.extract_strided_slice %211 {offsets = [0, 0], sizes = [2, 64], strides = [1, 1]} : vector<2x256xf32> to vector<2x64xf32>
    %213 = arith.negf %212 : vector<2x64xf32>
    %214 = math.exp %213 : vector<2x64xf32>
    %cst_69 = arith.constant 1.000000e+00 : f32
    %215 = vector.broadcast %cst_69 : f32 to vector<2x64xf32>
    %216 = arith.addf %215, %214 : vector<2x64xf32>
    %217 = arith.divf %215, %216 : vector<2x64xf32>
    %218 = vector.extract_strided_slice %211 {offsets = [0, 64], sizes = [2, 64], strides = [1, 1]} : vector<2x256xf32> to vector<2x64xf32>
    %219 = arith.negf %218 : vector<2x64xf32>
    %220 = math.exp %219 : vector<2x64xf32>
    %cst_70 = arith.constant 1.000000e+00 : f32
    %221 = vector.broadcast %cst_70 : f32 to vector<2x64xf32>
    %222 = arith.addf %221, %220 : vector<2x64xf32>
    %223 = arith.divf %221, %222 : vector<2x64xf32>
    %224 = vector.extract_strided_slice %211 {offsets = [0, 128], sizes = [2, 64], strides = [1, 1]} : vector<2x256xf32> to vector<2x64xf32>
    %225 = math.tanh %224 : vector<2x64xf32>
    %226 = vector.extract_strided_slice %211 {offsets = [0, 192], sizes = [2, 64], strides = [1, 1]} : vector<2x256xf32> to vector<2x64xf32>
    %227 = arith.negf %226 : vector<2x64xf32>
    %228 = math.exp %227 : vector<2x64xf32>
    %cst_71 = arith.constant 1.000000e+00 : f32
    %229 = vector.broadcast %cst_71 : f32 to vector<2x64xf32>
    %230 = arith.addf %229, %228 : vector<2x64xf32>
    %231 = arith.divf %229, %230 : vector<2x64xf32>
    %232 = arith.mulf %223, %48 : vector<2x64xf32>
    %233 = arith.mulf %217, %225 : vector<2x64xf32>
    %234 = arith.addf %232, %233 : vector<2x64xf32>
    %235 = math.tanh %234 : vector<2x64xf32>
    %236 = arith.mulf %231, %235 : vector<2x64xf32>
    %c2_72 = arith.constant 2 : index
    %c256_73 = arith.constant 256 : index
    %237 = vector.load %arg9[%c2_72, %c256_73] : memref<18x1664xf32, #tpu.memory_space<vmem>>, vector<2x256xf32>
    %238 = arith.truncf %81 : vector<2x64xf32> to vector<2x64xbf16>
    %c1_74 = arith.constant 1 : index
    %c0_75 = arith.constant 0 : index
    %c0_76 = arith.constant 0 : index
    %239 = vector.load %arg2[%c1_74, %c0_75, %c0_76] : memref<6x64x256xbf16, #tpu.memory_space<vmem>>, vector<1x64x256xbf16>
    %240 = vector.shape_cast %239 : vector<1x64x256xbf16> to vector<64x256xbf16>
    %cst_77 = arith.constant dense<0.000000e+00> : vector<2x256xf32>
    %241 = tpu.matmul %238, %240, %cst_77 {dimension_numbers = #tpu.dot_dimension_numbers<[1], [0], [0], [1], [0, 0, 1, 1], [], []>} : vector<2x64xbf16>, vector<64x256xbf16>, vector<2x256xf32> -> vector<2x256xf32>
    %242 = arith.addf %237, %241 : vector<2x256xf32>
    %243 = vector.extract_strided_slice %242 {offsets = [0, 0], sizes = [2, 64], strides = [1, 1]} : vector<2x256xf32> to vector<2x64xf32>
    %244 = arith.negf %243 : vector<2x64xf32>
    %245 = math.exp %244 : vector<2x64xf32>
    %cst_78 = arith.constant 1.000000e+00 : f32
    %246 = vector.broadcast %cst_78 : f32 to vector<2x64xf32>
    %247 = arith.addf %246, %245 : vector<2x64xf32>
    %248 = arith.divf %246, %247 : vector<2x64xf32>
    %249 = vector.extract_strided_slice %242 {offsets = [0, 64], sizes = [2, 64], strides = [1, 1]} : vector<2x256xf32> to vector<2x64xf32>
    %250 = arith.negf %249 : vector<2x64xf32>
    %251 = math.exp %250 : vector<2x64xf32>
    %cst_79 = arith.constant 1.000000e+00 : f32
    %252 = vector.broadcast %cst_79 : f32 to vector<2x64xf32>
    %253 = arith.addf %252, %251 : vector<2x64xf32>
    %254 = arith.divf %252, %253 : vector<2x64xf32>
    %255 = vector.extract_strided_slice %242 {offsets = [0, 128], sizes = [2, 64], strides = [1, 1]} : vector<2x256xf32> to vector<2x64xf32>
    %256 = math.tanh %255 : vector<2x64xf32>
    %257 = vector.extract_strided_slice %242 {offsets = [0, 192], sizes = [2, 64], strides = [1, 1]} : vector<2x256xf32> to vector<2x64xf32>
    %258 = arith.negf %257 : vector<2x64xf32>
    %259 = math.exp %258 : vector<2x64xf32>
    %cst_80 = arith.constant 1.000000e+00 : f32
    %260 = vector.broadcast %cst_80 : f32 to vector<2x64xf32>
    %261 = arith.addf %260, %259 : vector<2x64xf32>
    %262 = arith.divf %260, %261 : vector<2x64xf32>
    %263 = arith.mulf %254, %79 : vector<2x64xf32>
    %264 = arith.mulf %248, %256 : vector<2x64xf32>
    %265 = arith.addf %263, %264 : vector<2x64xf32>
    %266 = math.tanh %265 : vector<2x64xf32>
    %267 = arith.mulf %262, %266 : vector<2x64xf32>
    %c2_81 = arith.constant 2 : index
    %c512_82 = arith.constant 512 : index
    %268 = vector.load %arg9[%c2_81, %c512_82] : memref<18x1664xf32, #tpu.memory_space<vmem>>, vector<2x256xf32>
    %269 = arith.truncf %112 : vector<2x64xf32> to vector<2x64xbf16>
    %c2_83 = arith.constant 2 : index
    %c0_84 = arith.constant 0 : index
    %c0_85 = arith.constant 0 : index
    %270 = vector.load %arg2[%c2_83, %c0_84, %c0_85] : memref<6x64x256xbf16, #tpu.memory_space<vmem>>, vector<1x64x256xbf16>
    %271 = vector.shape_cast %270 : vector<1x64x256xbf16> to vector<64x256xbf16>
    %cst_86 = arith.constant dense<0.000000e+00> : vector<2x256xf32>
    %272 = tpu.matmul %269, %271, %cst_86 {dimension_numbers = #tpu.dot_dimension_numbers<[1], [0], [0], [1], [0, 0, 1, 1], [], []>} : vector<2x64xbf16>, vector<64x256xbf16>, vector<2x256xf32> -> vector<2x256xf32>
    %273 = arith.addf %268, %272 : vector<2x256xf32>
    %274 = vector.extract_strided_slice %273 {offsets = [0, 0], sizes = [2, 64], strides = [1, 1]} : vector<2x256xf32> to vector<2x64xf32>
    %275 = arith.negf %274 : vector<2x64xf32>
    %276 = math.exp %275 : vector<2x64xf32>
    %cst_87 = arith.constant 1.000000e+00 : f32
    %277 = vector.broadcast %cst_87 : f32 to vector<2x64xf32>
    %278 = arith.addf %277, %276 : vector<2x64xf32>
    %279 = arith.divf %277, %278 : vector<2x64xf32>
    %280 = vector.extract_strided_slice %273 {offsets = [0, 64], sizes = [2, 64], strides = [1, 1]} : vector<2x256xf32> to vector<2x64xf32>
    %281 = arith.negf %280 : vector<2x64xf32>
    %282 = math.exp %281 : vector<2x64xf32>
    %cst_88 = arith.constant 1.000000e+00 : f32
    %283 = vector.broadcast %cst_88 : f32 to vector<2x64xf32>
    %284 = arith.addf %283, %282 : vector<2x64xf32>
    %285 = arith.divf %283, %284 : vector<2x64xf32>
    %286 = vector.extract_strided_slice %273 {offsets = [0, 128], sizes = [2, 64], strides = [1, 1]} : vector<2x256xf32> to vector<2x64xf32>
    %287 = math.tanh %286 : vector<2x64xf32>
    %288 = vector.extract_strided_slice %273 {offsets = [0, 192], sizes = [2, 64], strides = [1, 1]} : vector<2x256xf32> to vector<2x64xf32>
    %289 = arith.negf %288 : vector<2x64xf32>
    %290 = math.exp %289 : vector<2x64xf32>
    %cst_89 = arith.constant 1.000000e+00 : f32
    %291 = vector.broadcast %cst_89 : f32 to vector<2x64xf32>
    %292 = arith.addf %291, %290 : vector<2x64xf32>
    %293 = arith.divf %291, %292 : vector<2x64xf32>
    %294 = arith.mulf %285, %110 : vector<2x64xf32>
    %295 = arith.mulf %279, %287 : vector<2x64xf32>
    %296 = arith.addf %294, %295 : vector<2x64xf32>
    %297 = math.tanh %296 : vector<2x64xf32>
    %298 = arith.mulf %293, %297 : vector<2x64xf32>
    %c2_90 = arith.constant 2 : index
    %c768_91 = arith.constant 768 : index
    %299 = vector.load %arg9[%c2_90, %c768_91] : memref<18x1664xf32, #tpu.memory_space<vmem>>, vector<2x256xf32>
    %300 = arith.truncf %143 : vector<2x64xf32> to vector<2x64xbf16>
    %c3_92 = arith.constant 3 : index
    %c0_93 = arith.constant 0 : index
    %c0_94 = arith.constant 0 : index
    %301 = vector.load %arg2[%c3_92, %c0_93, %c0_94] : memref<6x64x256xbf16, #tpu.memory_space<vmem>>, vector<1x64x256xbf16>
    %302 = vector.shape_cast %301 : vector<1x64x256xbf16> to vector<64x256xbf16>
    %cst_95 = arith.constant dense<0.000000e+00> : vector<2x256xf32>
    %303 = tpu.matmul %300, %302, %cst_95 {dimension_numbers = #tpu.dot_dimension_numbers<[1], [0], [0], [1], [0, 0, 1, 1], [], []>} : vector<2x64xbf16>, vector<64x256xbf16>, vector<2x256xf32> -> vector<2x256xf32>
    %304 = arith.addf %299, %303 : vector<2x256xf32>
    %305 = vector.extract_strided_slice %304 {offsets = [0, 0], sizes = [2, 64], strides = [1, 1]} : vector<2x256xf32> to vector<2x64xf32>
    %306 = arith.negf %305 : vector<2x64xf32>
    %307 = math.exp %306 : vector<2x64xf32>
    %cst_96 = arith.constant 1.000000e+00 : f32
    %308 = vector.broadcast %cst_96 : f32 to vector<2x64xf32>
    %309 = arith.addf %308, %307 : vector<2x64xf32>
    %310 = arith.divf %308, %309 : vector<2x64xf32>
    %311 = vector.extract_strided_slice %304 {offsets = [0, 64], sizes = [2, 64], strides = [1, 1]} : vector<2x256xf32> to vector<2x64xf32>
    %312 = arith.negf %311 : vector<2x64xf32>
    %313 = math.exp %312 : vector<2x64xf32>
    %cst_97 = arith.constant 1.000000e+00 : f32
    %314 = vector.broadcast %cst_97 : f32 to vector<2x64xf32>
    %315 = arith.addf %314, %313 : vector<2x64xf32>
    %316 = arith.divf %314, %315 : vector<2x64xf32>
    %317 = vector.extract_strided_slice %304 {offsets = [0, 128], sizes = [2, 64], strides = [1, 1]} : vector<2x256xf32> to vector<2x64xf32>
    %318 = math.tanh %317 : vector<2x64xf32>
    %319 = vector.extract_strided_slice %304 {offsets = [0, 192], sizes = [2, 64], strides = [1, 1]} : vector<2x256xf32> to vector<2x64xf32>
    %320 = arith.negf %319 : vector<2x64xf32>
    %321 = math.exp %320 : vector<2x64xf32>
    %cst_98 = arith.constant 1.000000e+00 : f32
    %322 = vector.broadcast %cst_98 : f32 to vector<2x64xf32>
    %323 = arith.addf %322, %321 : vector<2x64xf32>
    %324 = arith.divf %322, %323 : vector<2x64xf32>
    %325 = arith.mulf %316, %141 : vector<2x64xf32>
    %326 = arith.mulf %310, %318 : vector<2x64xf32>
    %327 = arith.addf %325, %326 : vector<2x64xf32>
    %328 = math.tanh %327 : vector<2x64xf32>
    %329 = arith.mulf %324, %328 : vector<2x64xf32>
    %c2_99 = arith.constant 2 : index
    %c1024_100 = arith.constant 1024 : index
    %330 = vector.load %arg9[%c2_99, %c1024_100] : memref<18x1664xf32, #tpu.memory_space<vmem>>, vector<2x256xf32>
    %331 = arith.truncf %174 : vector<2x64xf32> to vector<2x64xbf16>
    %c4_101 = arith.constant 4 : index
    %c0_102 = arith.constant 0 : index
    %c0_103 = arith.constant 0 : index
    %332 = vector.load %arg2[%c4_101, %c0_102, %c0_103] : memref<6x64x256xbf16, #tpu.memory_space<vmem>>, vector<1x64x256xbf16>
    %333 = vector.shape_cast %332 : vector<1x64x256xbf16> to vector<64x256xbf16>
    %cst_104 = arith.constant dense<0.000000e+00> : vector<2x256xf32>
    %334 = tpu.matmul %331, %333, %cst_104 {dimension_numbers = #tpu.dot_dimension_numbers<[1], [0], [0], [1], [0, 0, 1, 1], [], []>} : vector<2x64xbf16>, vector<64x256xbf16>, vector<2x256xf32> -> vector<2x256xf32>
    %335 = arith.addf %330, %334 : vector<2x256xf32>
    %336 = vector.extract_strided_slice %335 {offsets = [0, 0], sizes = [2, 64], strides = [1, 1]} : vector<2x256xf32> to vector<2x64xf32>
    %337 = arith.negf %336 : vector<2x64xf32>
    %338 = math.exp %337 : vector<2x64xf32>
    %cst_105 = arith.constant 1.000000e+00 : f32
    %339 = vector.broadcast %cst_105 : f32 to vector<2x64xf32>
    %340 = arith.addf %339, %338 : vector<2x64xf32>
    %341 = arith.divf %339, %340 : vector<2x64xf32>
    %342 = vector.extract_strided_slice %335 {offsets = [0, 64], sizes = [2, 64], strides = [1, 1]} : vector<2x256xf32> to vector<2x64xf32>
    %343 = arith.negf %342 : vector<2x64xf32>
    %344 = math.exp %343 : vector<2x64xf32>
    %cst_106 = arith.constant 1.000000e+00 : f32
    %345 = vector.broadcast %cst_106 : f32 to vector<2x64xf32>
    %346 = arith.addf %345, %344 : vector<2x64xf32>
    %347 = arith.divf %345, %346 : vector<2x64xf32>
    %348 = vector.extract_strided_slice %335 {offsets = [0, 128], sizes = [2, 64], strides = [1, 1]} : vector<2x256xf32> to vector<2x64xf32>
    %349 = math.tanh %348 : vector<2x64xf32>
    %350 = vector.extract_strided_slice %335 {offsets = [0, 192], sizes = [2, 64], strides = [1, 1]} : vector<2x256xf32> to vector<2x64xf32>
    %351 = arith.negf %350 : vector<2x64xf32>
    %352 = math.exp %351 : vector<2x64xf32>
    %cst_107 = arith.constant 1.000000e+00 : f32
    %353 = vector.broadcast %cst_107 : f32 to vector<2x64xf32>
    %354 = arith.addf %353, %352 : vector<2x64xf32>
    %355 = arith.divf %353, %354 : vector<2x64xf32>
    %356 = arith.mulf %347, %172 : vector<2x64xf32>
    %357 = arith.mulf %341, %349 : vector<2x64xf32>
    %358 = arith.addf %356, %357 : vector<2x64xf32>
    %359 = math.tanh %358 : vector<2x64xf32>
    %360 = arith.mulf %355, %359 : vector<2x64xf32>
    %c2_108 = arith.constant 2 : index
    %c1280_109 = arith.constant 1280 : index
    %361 = vector.load %arg9[%c2_108, %c1280_109] : memref<18x1664xf32, #tpu.memory_space<vmem>>, vector<2x256xf32>
    %362 = arith.truncf %205 : vector<2x64xf32> to vector<2x64xbf16>
    %c5_110 = arith.constant 5 : index
    %c0_111 = arith.constant 0 : index
    %c0_112 = arith.constant 0 : index
    %363 = vector.load %arg2[%c5_110, %c0_111, %c0_112] : memref<6x64x256xbf16, #tpu.memory_space<vmem>>, vector<1x64x256xbf16>
    %364 = vector.shape_cast %363 : vector<1x64x256xbf16> to vector<64x256xbf16>
    %cst_113 = arith.constant dense<0.000000e+00> : vector<2x256xf32>
    %365 = tpu.matmul %362, %364, %cst_113 {dimension_numbers = #tpu.dot_dimension_numbers<[1], [0], [0], [1], [0, 0, 1, 1], [], []>} : vector<2x64xbf16>, vector<64x256xbf16>, vector<2x256xf32> -> vector<2x256xf32>
    %366 = arith.addf %361, %365 : vector<2x256xf32>
    %367 = vector.extract_strided_slice %366 {offsets = [0, 0], sizes = [2, 64], strides = [1, 1]} : vector<2x256xf32> to vector<2x64xf32>
    %368 = arith.negf %367 : vector<2x64xf32>
    %369 = math.exp %368 : vector<2x64xf32>
    %cst_114 = arith.constant 1.000000e+00 : f32
    %370 = vector.broadcast %cst_114 : f32 to vector<2x64xf32>
    %371 = arith.addf %370, %369 : vector<2x64xf32>
    %372 = arith.divf %370, %371 : vector<2x64xf32>
    %373 = vector.extract_strided_slice %366 {offsets = [0, 64], sizes = [2, 64], strides = [1, 1]} : vector<2x256xf32> to vector<2x64xf32>
    %374 = arith.negf %373 : vector<2x64xf32>
    %375 = math.exp %374 : vector<2x64xf32>
    %cst_115 = arith.constant 1.000000e+00 : f32
    %376 = vector.broadcast %cst_115 : f32 to vector<2x64xf32>
    %377 = arith.addf %376, %375 : vector<2x64xf32>
    %378 = arith.divf %376, %377 : vector<2x64xf32>
    %379 = vector.extract_strided_slice %366 {offsets = [0, 128], sizes = [2, 64], strides = [1, 1]} : vector<2x256xf32> to vector<2x64xf32>
    %380 = math.tanh %379 : vector<2x64xf32>
    %381 = vector.extract_strided_slice %366 {offsets = [0, 192], sizes = [2, 64], strides = [1, 1]} : vector<2x256xf32> to vector<2x64xf32>
    %382 = arith.negf %381 : vector<2x64xf32>
    %383 = math.exp %382 : vector<2x64xf32>
    %cst_116 = arith.constant 1.000000e+00 : f32
    %384 = vector.broadcast %cst_116 : f32 to vector<2x64xf32>
    %385 = arith.addf %384, %383 : vector<2x64xf32>
    %386 = arith.divf %384, %385 : vector<2x64xf32>
    %387 = arith.mulf %378, %203 : vector<2x64xf32>
    %388 = arith.mulf %372, %380 : vector<2x64xf32>
    %389 = arith.addf %387, %388 : vector<2x64xf32>
    %390 = math.tanh %389 : vector<2x64xf32>
    %391 = arith.mulf %386, %390 : vector<2x64xf32>
    %c4_117 = arith.constant 4 : index
    %c0_118 = arith.constant 0 : index
    %392 = vector.load %arg9[%c4_117, %c0_118] : memref<18x1664xf32, #tpu.memory_space<vmem>>, vector<2x256xf32>
    %393 = arith.truncf %236 : vector<2x64xf32> to vector<2x64xbf16>
    %c0_119 = arith.constant 0 : index
    %c0_120 = arith.constant 0 : index
    %c0_121 = arith.constant 0 : index
    %394 = vector.load %arg2[%c0_119, %c0_120, %c0_121] : memref<6x64x256xbf16, #tpu.memory_space<vmem>>, vector<1x64x256xbf16>
    %395 = vector.shape_cast %394 : vector<1x64x256xbf16> to vector<64x256xbf16>
    %cst_122 = arith.constant dense<0.000000e+00> : vector<2x256xf32>
    %396 = tpu.matmul %393, %395, %cst_122 {dimension_numbers = #tpu.dot_dimension_numbers<[1], [0], [0], [1], [0, 0, 1, 1], [], []>} : vector<2x64xbf16>, vector<64x256xbf16>, vector<2x256xf32> -> vector<2x256xf32>
    %397 = arith.addf %392, %396 : vector<2x256xf32>
    %398 = vector.extract_strided_slice %397 {offsets = [0, 0], sizes = [2, 64], strides = [1, 1]} : vector<2x256xf32> to vector<2x64xf32>
    %399 = arith.negf %398 : vector<2x64xf32>
    %400 = math.exp %399 : vector<2x64xf32>
    %cst_123 = arith.constant 1.000000e+00 : f32
    %401 = vector.broadcast %cst_123 : f32 to vector<2x64xf32>
    %402 = arith.addf %401, %400 : vector<2x64xf32>
    %403 = arith.divf %401, %402 : vector<2x64xf32>
    %404 = vector.extract_strided_slice %397 {offsets = [0, 64], sizes = [2, 64], strides = [1, 1]} : vector<2x256xf32> to vector<2x64xf32>
    %405 = arith.negf %404 : vector<2x64xf32>
    %406 = math.exp %405 : vector<2x64xf32>
    %cst_124 = arith.constant 1.000000e+00 : f32
    %407 = vector.broadcast %cst_124 : f32 to vector<2x64xf32>
    %408 = arith.addf %407, %406 : vector<2x64xf32>
    %409 = arith.divf %407, %408 : vector<2x64xf32>
    %410 = vector.extract_strided_slice %397 {offsets = [0, 128], sizes = [2, 64], strides = [1, 1]} : vector<2x256xf32> to vector<2x64xf32>
    %411 = math.tanh %410 : vector<2x64xf32>
    %412 = vector.extract_strided_slice %397 {offsets = [0, 192], sizes = [2, 64], strides = [1, 1]} : vector<2x256xf32> to vector<2x64xf32>
    %413 = arith.negf %412 : vector<2x64xf32>
    %414 = math.exp %413 : vector<2x64xf32>
    %cst_125 = arith.constant 1.000000e+00 : f32
    %415 = vector.broadcast %cst_125 : f32 to vector<2x64xf32>
    %416 = arith.addf %415, %414 : vector<2x64xf32>
    %417 = arith.divf %415, %416 : vector<2x64xf32>
    %418 = arith.mulf %409, %234 : vector<2x64xf32>
    %419 = arith.mulf %403, %411 : vector<2x64xf32>
    %420 = arith.addf %418, %419 : vector<2x64xf32>
    %421 = math.tanh %420 : vector<2x64xf32>
    %422 = arith.mulf %417, %421 : vector<2x64xf32>
    %c4_126 = arith.constant 4 : index
    %c256_127 = arith.constant 256 : index
    %423 = vector.load %arg9[%c4_126, %c256_127] : memref<18x1664xf32, #tpu.memory_space<vmem>>, vector<2x256xf32>
    %424 = arith.truncf %267 : vector<2x64xf32> to vector<2x64xbf16>
    %c1_128 = arith.constant 1 : index
    %c0_129 = arith.constant 0 : index
    %c0_130 = arith.constant 0 : index
    %425 = vector.load %arg2[%c1_128, %c0_129, %c0_130] : memref<6x64x256xbf16, #tpu.memory_space<vmem>>, vector<1x64x256xbf16>
    %426 = vector.shape_cast %425 : vector<1x64x256xbf16> to vector<64x256xbf16>
    %cst_131 = arith.constant dense<0.000000e+00> : vector<2x256xf32>
    %427 = tpu.matmul %424, %426, %cst_131 {dimension_numbers = #tpu.dot_dimension_numbers<[1], [0], [0], [1], [0, 0, 1, 1], [], []>} : vector<2x64xbf16>, vector<64x256xbf16>, vector<2x256xf32> -> vector<2x256xf32>
    %428 = arith.addf %423, %427 : vector<2x256xf32>
    %429 = vector.extract_strided_slice %428 {offsets = [0, 0], sizes = [2, 64], strides = [1, 1]} : vector<2x256xf32> to vector<2x64xf32>
    %430 = arith.negf %429 : vector<2x64xf32>
    %431 = math.exp %430 : vector<2x64xf32>
    %cst_132 = arith.constant 1.000000e+00 : f32
    %432 = vector.broadcast %cst_132 : f32 to vector<2x64xf32>
    %433 = arith.addf %432, %431 : vector<2x64xf32>
    %434 = arith.divf %432, %433 : vector<2x64xf32>
    %435 = vector.extract_strided_slice %428 {offsets = [0, 64], sizes = [2, 64], strides = [1, 1]} : vector<2x256xf32> to vector<2x64xf32>
    %436 = arith.negf %435 : vector<2x64xf32>
    %437 = math.exp %436 : vector<2x64xf32>
    %cst_133 = arith.constant 1.000000e+00 : f32
    %438 = vector.broadcast %cst_133 : f32 to vector<2x64xf32>
    %439 = arith.addf %438, %437 : vector<2x64xf32>
    %440 = arith.divf %438, %439 : vector<2x64xf32>
    %441 = vector.extract_strided_slice %428 {offsets = [0, 128], sizes = [2, 64], strides = [1, 1]} : vector<2x256xf32> to vector<2x64xf32>
    %442 = math.tanh %441 : vector<2x64xf32>
    %443 = vector.extract_strided_slice %428 {offsets = [0, 192], sizes = [2, 64], strides = [1, 1]} : vector<2x256xf32> to vector<2x64xf32>
    %444 = arith.negf %443 : vector<2x64xf32>
    %445 = math.exp %444 : vector<2x64xf32>
    %cst_134 = arith.constant 1.000000e+00 : f32
    %446 = vector.broadcast %cst_134 : f32 to vector<2x64xf32>
    %447 = arith.addf %446, %445 : vector<2x64xf32>
    %448 = arith.divf %446, %447 : vector<2x64xf32>
    %449 = arith.mulf %440, %265 : vector<2x64xf32>
    %450 = arith.mulf %434, %442 : vector<2x64xf32>
    %451 = arith.addf %449, %450 : vector<2x64xf32>
    %452 = math.tanh %451 : vector<2x64xf32>
    %453 = arith.mulf %448, %452 : vector<2x64xf32>
    %c4_135 = arith.constant 4 : index
    %c512_136 = arith.constant 512 : index
    %454 = vector.load %arg9[%c4_135, %c512_136] : memref<18x1664xf32, #tpu.memory_space<vmem>>, vector<2x256xf32>
    %455 = arith.truncf %298 : vector<2x64xf32> to vector<2x64xbf16>
    %c2_137 = arith.constant 2 : index
    %c0_138 = arith.constant 0 : index
    %c0_139 = arith.constant 0 : index
    %456 = vector.load %arg2[%c2_137, %c0_138, %c0_139] : memref<6x64x256xbf16, #tpu.memory_space<vmem>>, vector<1x64x256xbf16>
    %457 = vector.shape_cast %456 : vector<1x64x256xbf16> to vector<64x256xbf16>
    %cst_140 = arith.constant dense<0.000000e+00> : vector<2x256xf32>
    %458 = tpu.matmul %455, %457, %cst_140 {dimension_numbers = #tpu.dot_dimension_numbers<[1], [0], [0], [1], [0, 0, 1, 1], [], []>} : vector<2x64xbf16>, vector<64x256xbf16>, vector<2x256xf32> -> vector<2x256xf32>
    %459 = arith.addf %454, %458 : vector<2x256xf32>
    %460 = vector.extract_strided_slice %459 {offsets = [0, 0], sizes = [2, 64], strides = [1, 1]} : vector<2x256xf32> to vector<2x64xf32>
    %461 = arith.negf %460 : vector<2x64xf32>
    %462 = math.exp %461 : vector<2x64xf32>
    %cst_141 = arith.constant 1.000000e+00 : f32
    %463 = vector.broadcast %cst_141 : f32 to vector<2x64xf32>
    %464 = arith.addf %463, %462 : vector<2x64xf32>
    %465 = arith.divf %463, %464 : vector<2x64xf32>
    %466 = vector.extract_strided_slice %459 {offsets = [0, 64], sizes = [2, 64], strides = [1, 1]} : vector<2x256xf32> to vector<2x64xf32>
    %467 = arith.negf %466 : vector<2x64xf32>
    %468 = math.exp %467 : vector<2x64xf32>
    %cst_142 = arith.constant 1.000000e+00 : f32
    %469 = vector.broadcast %cst_142 : f32 to vector<2x64xf32>
    %470 = arith.addf %469, %468 : vector<2x64xf32>
    %471 = arith.divf %469, %470 : vector<2x64xf32>
    %472 = vector.extract_strided_slice %459 {offsets = [0, 128], sizes = [2, 64], strides = [1, 1]} : vector<2x256xf32> to vector<2x64xf32>
    %473 = math.tanh %472 : vector<2x64xf32>
    %474 = vector.extract_strided_slice %459 {offsets = [0, 192], sizes = [2, 64], strides = [1, 1]} : vector<2x256xf32> to vector<2x64xf32>
    %475 = arith.negf %474 : vector<2x64xf32>
    %476 = math.exp %475 : vector<2x64xf32>
    %cst_143 = arith.constant 1.000000e+00 : f32
    %477 = vector.broadcast %cst_143 : f32 to vector<2x64xf32>
    %478 = arith.addf %477, %476 : vector<2x64xf32>
    %479 = arith.divf %477, %478 : vector<2x64xf32>
    %480 = arith.mulf %471, %296 : vector<2x64xf32>
    %481 = arith.mulf %465, %473 : vector<2x64xf32>
    %482 = arith.addf %480, %481 : vector<2x64xf32>
    %483 = math.tanh %482 : vector<2x64xf32>
    %484 = arith.mulf %479, %483 : vector<2x64xf32>
    %c4_144 = arith.constant 4 : index
    %c768_145 = arith.constant 768 : index
    %485 = vector.load %arg9[%c4_144, %c768_145] : memref<18x1664xf32, #tpu.memory_space<vmem>>, vector<2x256xf32>
    %486 = arith.truncf %329 : vector<2x64xf32> to vector<2x64xbf16>
    %c3_146 = arith.constant 3 : index
    %c0_147 = arith.constant 0 : index
    %c0_148 = arith.constant 0 : index
    %487 = vector.load %arg2[%c3_146, %c0_147, %c0_148] : memref<6x64x256xbf16, #tpu.memory_space<vmem>>, vector<1x64x256xbf16>
    %488 = vector.shape_cast %487 : vector<1x64x256xbf16> to vector<64x256xbf16>
    %cst_149 = arith.constant dense<0.000000e+00> : vector<2x256xf32>
    %489 = tpu.matmul %486, %488, %cst_149 {dimension_numbers = #tpu.dot_dimension_numbers<[1], [0], [0], [1], [0, 0, 1, 1], [], []>} : vector<2x64xbf16>, vector<64x256xbf16>, vector<2x256xf32> -> vector<2x256xf32>
    %490 = arith.addf %485, %489 : vector<2x256xf32>
    %491 = vector.extract_strided_slice %490 {offsets = [0, 0], sizes = [2, 64], strides = [1, 1]} : vector<2x256xf32> to vector<2x64xf32>
    %492 = arith.negf %491 : vector<2x64xf32>
    %493 = math.exp %492 : vector<2x64xf32>
    %cst_150 = arith.constant 1.000000e+00 : f32
    %494 = vector.broadcast %cst_150 : f32 to vector<2x64xf32>
    %495 = arith.addf %494, %493 : vector<2x64xf32>
    %496 = arith.divf %494, %495 : vector<2x64xf32>
    %497 = vector.extract_strided_slice %490 {offsets = [0, 64], sizes = [2, 64], strides = [1, 1]} : vector<2x256xf32> to vector<2x64xf32>
    %498 = arith.negf %497 : vector<2x64xf32>
    %499 = math.exp %498 : vector<2x64xf32>
    %cst_151 = arith.constant 1.000000e+00 : f32
    %500 = vector.broadcast %cst_151 : f32 to vector<2x64xf32>
    %501 = arith.addf %500, %499 : vector<2x64xf32>
    %502 = arith.divf %500, %501 : vector<2x64xf32>
    %503 = vector.extract_strided_slice %490 {offsets = [0, 128], sizes = [2, 64], strides = [1, 1]} : vector<2x256xf32> to vector<2x64xf32>
    %504 = math.tanh %503 : vector<2x64xf32>
    %505 = vector.extract_strided_slice %490 {offsets = [0, 192], sizes = [2, 64], strides = [1, 1]} : vector<2x256xf32> to vector<2x64xf32>
    %506 = arith.negf %505 : vector<2x64xf32>
    %507 = math.exp %506 : vector<2x64xf32>
    %cst_152 = arith.constant 1.000000e+00 : f32
    %508 = vector.broadcast %cst_152 : f32 to vector<2x64xf32>
    %509 = arith.addf %508, %507 : vector<2x64xf32>
    %510 = arith.divf %508, %509 : vector<2x64xf32>
    %511 = arith.mulf %502, %327 : vector<2x64xf32>
    %512 = arith.mulf %496, %504 : vector<2x64xf32>
    %513 = arith.addf %511, %512 : vector<2x64xf32>
    %514 = math.tanh %513 : vector<2x64xf32>
    %515 = arith.mulf %510, %514 : vector<2x64xf32>
    %c4_153 = arith.constant 4 : index
    %c1024_154 = arith.constant 1024 : index
    %516 = vector.load %arg9[%c4_153, %c1024_154] : memref<18x1664xf32, #tpu.memory_space<vmem>>, vector<2x256xf32>
    %517 = arith.truncf %360 : vector<2x64xf32> to vector<2x64xbf16>
    %c4_155 = arith.constant 4 : index
    %c0_156 = arith.constant 0 : index
    %c0_157 = arith.constant 0 : index
    %518 = vector.load %arg2[%c4_155, %c0_156, %c0_157] : memref<6x64x256xbf16, #tpu.memory_space<vmem>>, vector<1x64x256xbf16>
    %519 = vector.shape_cast %518 : vector<1x64x256xbf16> to vector<64x256xbf16>
    %cst_158 = arith.constant dense<0.000000e+00> : vector<2x256xf32>
    %520 = tpu.matmul %517, %519, %cst_158 {dimension_numbers = #tpu.dot_dimension_numbers<[1], [0], [0], [1], [0, 0, 1, 1], [], []>} : vector<2x64xbf16>, vector<64x256xbf16>, vector<2x256xf32> -> vector<2x256xf32>
    %521 = arith.addf %516, %520 : vector<2x256xf32>
    %522 = vector.extract_strided_slice %521 {offsets = [0, 0], sizes = [2, 64], strides = [1, 1]} : vector<2x256xf32> to vector<2x64xf32>
    %523 = arith.negf %522 : vector<2x64xf32>
    %524 = math.exp %523 : vector<2x64xf32>
    %cst_159 = arith.constant 1.000000e+00 : f32
    %525 = vector.broadcast %cst_159 : f32 to vector<2x64xf32>
    %526 = arith.addf %525, %524 : vector<2x64xf32>
    %527 = arith.divf %525, %526 : vector<2x64xf32>
    %528 = vector.extract_strided_slice %521 {offsets = [0, 64], sizes = [2, 64], strides = [1, 1]} : vector<2x256xf32> to vector<2x64xf32>
    %529 = arith.negf %528 : vector<2x64xf32>
    %530 = math.exp %529 : vector<2x64xf32>
    %cst_160 = arith.constant 1.000000e+00 : f32
    %531 = vector.broadcast %cst_160 : f32 to vector<2x64xf32>
    %532 = arith.addf %531, %530 : vector<2x64xf32>
    %533 = arith.divf %531, %532 : vector<2x64xf32>
    %534 = vector.extract_strided_slice %521 {offsets = [0, 128], sizes = [2, 64], strides = [1, 1]} : vector<2x256xf32> to vector<2x64xf32>
    %535 = math.tanh %534 : vector<2x64xf32>
    %536 = vector.extract_strided_slice %521 {offsets = [0, 192], sizes = [2, 64], strides = [1, 1]} : vector<2x256xf32> to vector<2x64xf32>
    %537 = arith.negf %536 : vector<2x64xf32>
    %538 = math.exp %537 : vector<2x64xf32>
    %cst_161 = arith.constant 1.000000e+00 : f32
    %539 = vector.broadcast %cst_161 : f32 to vector<2x64xf32>
    %540 = arith.addf %539, %538 : vector<2x64xf32>
    %541 = arith.divf %539, %540 : vector<2x64xf32>
    %542 = arith.mulf %533, %358 : vector<2x64xf32>
    %543 = arith.mulf %527, %535 : vector<2x64xf32>
    %544 = arith.addf %542, %543 : vector<2x64xf32>
    %545 = math.tanh %544 : vector<2x64xf32>
    %546 = arith.mulf %541, %545 : vector<2x64xf32>
    %c4_162 = arith.constant 4 : index
    %c1280_163 = arith.constant 1280 : index
    %547 = vector.load %arg9[%c4_162, %c1280_163] : memref<18x1664xf32, #tpu.memory_space<vmem>>, vector<2x256xf32>
    %548 = arith.truncf %391 : vector<2x64xf32> to vector<2x64xbf16>
    %c5_164 = arith.constant 5 : index
    %c0_165 = arith.constant 0 : index
    %c0_166 = arith.constant 0 : index
    %549 = vector.load %arg2[%c5_164, %c0_165, %c0_166] : memref<6x64x256xbf16, #tpu.memory_space<vmem>>, vector<1x64x256xbf16>
    %550 = vector.shape_cast %549 : vector<1x64x256xbf16> to vector<64x256xbf16>
    %cst_167 = arith.constant dense<0.000000e+00> : vector<2x256xf32>
    %551 = tpu.matmul %548, %550, %cst_167 {dimension_numbers = #tpu.dot_dimension_numbers<[1], [0], [0], [1], [0, 0, 1, 1], [], []>} : vector<2x64xbf16>, vector<64x256xbf16>, vector<2x256xf32> -> vector<2x256xf32>
    %552 = arith.addf %547, %551 : vector<2x256xf32>
    %553 = vector.extract_strided_slice %552 {offsets = [0, 0], sizes = [2, 64], strides = [1, 1]} : vector<2x256xf32> to vector<2x64xf32>
    %554 = arith.negf %553 : vector<2x64xf32>
    %555 = math.exp %554 : vector<2x64xf32>
    %cst_168 = arith.constant 1.000000e+00 : f32
    %556 = vector.broadcast %cst_168 : f32 to vector<2x64xf32>
    %557 = arith.addf %556, %555 : vector<2x64xf32>
    %558 = arith.divf %556, %557 : vector<2x64xf32>
    %559 = vector.extract_strided_slice %552 {offsets = [0, 64], sizes = [2, 64], strides = [1, 1]} : vector<2x256xf32> to vector<2x64xf32>
    %560 = arith.negf %559 : vector<2x64xf32>
    %561 = math.exp %560 : vector<2x64xf32>
    %cst_169 = arith.constant 1.000000e+00 : f32
    %562 = vector.broadcast %cst_169 : f32 to vector<2x64xf32>
    %563 = arith.addf %562, %561 : vector<2x64xf32>
    %564 = arith.divf %562, %563 : vector<2x64xf32>
    %565 = vector.extract_strided_slice %552 {offsets = [0, 128], sizes = [2, 64], strides = [1, 1]} : vector<2x256xf32> to vector<2x64xf32>
    %566 = math.tanh %565 : vector<2x64xf32>
    %567 = vector.extract_strided_slice %552 {offsets = [0, 192], sizes = [2, 64], strides = [1, 1]} : vector<2x256xf32> to vector<2x64xf32>
    %568 = arith.negf %567 : vector<2x64xf32>
    %569 = math.exp %568 : vector<2x64xf32>
    %cst_170 = arith.constant 1.000000e+00 : f32
    %570 = vector.broadcast %cst_170 : f32 to vector<2x64xf32>
    %571 = arith.addf %570, %569 : vector<2x64xf32>
    %572 = arith.divf %570, %571 : vector<2x64xf32>
    %573 = arith.mulf %564, %389 : vector<2x64xf32>
    %574 = arith.mulf %558, %566 : vector<2x64xf32>
    %575 = arith.addf %573, %574 : vector<2x64xf32>
    %576 = math.tanh %575 : vector<2x64xf32>
    %577 = arith.mulf %572, %576 : vector<2x64xf32>
    %c6 = arith.constant 6 : index
    %c0_171 = arith.constant 0 : index
    %578 = vector.load %arg9[%c6, %c0_171] : memref<18x1664xf32, #tpu.memory_space<vmem>>, vector<2x256xf32>
    %579 = arith.truncf %422 : vector<2x64xf32> to vector<2x64xbf16>
    %c0_172 = arith.constant 0 : index
    %c0_173 = arith.constant 0 : index
    %c0_174 = arith.constant 0 : index
    %580 = vector.load %arg2[%c0_172, %c0_173, %c0_174] : memref<6x64x256xbf16, #tpu.memory_space<vmem>>, vector<1x64x256xbf16>
    %581 = vector.shape_cast %580 : vector<1x64x256xbf16> to vector<64x256xbf16>
    %cst_175 = arith.constant dense<0.000000e+00> : vector<2x256xf32>
    %582 = tpu.matmul %579, %581, %cst_175 {dimension_numbers = #tpu.dot_dimension_numbers<[1], [0], [0], [1], [0, 0, 1, 1], [], []>} : vector<2x64xbf16>, vector<64x256xbf16>, vector<2x256xf32> -> vector<2x256xf32>
    %583 = arith.addf %578, %582 : vector<2x256xf32>
    %584 = vector.extract_strided_slice %583 {offsets = [0, 0], sizes = [2, 64], strides = [1, 1]} : vector<2x256xf32> to vector<2x64xf32>
    %585 = arith.negf %584 : vector<2x64xf32>
    %586 = math.exp %585 : vector<2x64xf32>
    %cst_176 = arith.constant 1.000000e+00 : f32
    %587 = vector.broadcast %cst_176 : f32 to vector<2x64xf32>
    %588 = arith.addf %587, %586 : vector<2x64xf32>
    %589 = arith.divf %587, %588 : vector<2x64xf32>
    %590 = vector.extract_strided_slice %583 {offsets = [0, 64], sizes = [2, 64], strides = [1, 1]} : vector<2x256xf32> to vector<2x64xf32>
    %591 = arith.negf %590 : vector<2x64xf32>
    %592 = math.exp %591 : vector<2x64xf32>
    %cst_177 = arith.constant 1.000000e+00 : f32
    %593 = vector.broadcast %cst_177 : f32 to vector<2x64xf32>
    %594 = arith.addf %593, %592 : vector<2x64xf32>
    %595 = arith.divf %593, %594 : vector<2x64xf32>
    %596 = vector.extract_strided_slice %583 {offsets = [0, 128], sizes = [2, 64], strides = [1, 1]} : vector<2x256xf32> to vector<2x64xf32>
    %597 = math.tanh %596 : vector<2x64xf32>
    %598 = vector.extract_strided_slice %583 {offsets = [0, 192], sizes = [2, 64], strides = [1, 1]} : vector<2x256xf32> to vector<2x64xf32>
    %599 = arith.negf %598 : vector<2x64xf32>
    %600 = math.exp %599 : vector<2x64xf32>
    %cst_178 = arith.constant 1.000000e+00 : f32
    %601 = vector.broadcast %cst_178 : f32 to vector<2x64xf32>
    %602 = arith.addf %601, %600 : vector<2x64xf32>
    %603 = arith.divf %601, %602 : vector<2x64xf32>
    %604 = arith.mulf %595, %420 : vector<2x64xf32>
    %605 = arith.mulf %589, %597 : vector<2x64xf32>
    %606 = arith.addf %604, %605 : vector<2x64xf32>
    %607 = math.tanh %606 : vector<2x64xf32>
    %608 = arith.mulf %603, %607 : vector<2x64xf32>
    %c6_179 = arith.constant 6 : index
    %c256_180 = arith.constant 256 : index
    %609 = vector.load %arg9[%c6_179, %c256_180] : memref<18x1664xf32, #tpu.memory_space<vmem>>, vector<2x256xf32>
    %610 = arith.truncf %453 : vector<2x64xf32> to vector<2x64xbf16>
    %c1_181 = arith.constant 1 : index
    %c0_182 = arith.constant 0 : index
    %c0_183 = arith.constant 0 : index
    %611 = vector.load %arg2[%c1_181, %c0_182, %c0_183] : memref<6x64x256xbf16, #tpu.memory_space<vmem>>, vector<1x64x256xbf16>
    %612 = vector.shape_cast %611 : vector<1x64x256xbf16> to vector<64x256xbf16>
    %cst_184 = arith.constant dense<0.000000e+00> : vector<2x256xf32>
    %613 = tpu.matmul %610, %612, %cst_184 {dimension_numbers = #tpu.dot_dimension_numbers<[1], [0], [0], [1], [0, 0, 1, 1], [], []>} : vector<2x64xbf16>, vector<64x256xbf16>, vector<2x256xf32> -> vector<2x256xf32>
    %614 = arith.addf %609, %613 : vector<2x256xf32>
    %615 = vector.extract_strided_slice %614 {offsets = [0, 0], sizes = [2, 64], strides = [1, 1]} : vector<2x256xf32> to vector<2x64xf32>
    %616 = arith.negf %615 : vector<2x64xf32>
    %617 = math.exp %616 : vector<2x64xf32>
    %cst_185 = arith.constant 1.000000e+00 : f32
    %618 = vector.broadcast %cst_185 : f32 to vector<2x64xf32>
    %619 = arith.addf %618, %617 : vector<2x64xf32>
    %620 = arith.divf %618, %619 : vector<2x64xf32>
    %621 = vector.extract_strided_slice %614 {offsets = [0, 64], sizes = [2, 64], strides = [1, 1]} : vector<2x256xf32> to vector<2x64xf32>
    %622 = arith.negf %621 : vector<2x64xf32>
    %623 = math.exp %622 : vector<2x64xf32>
    %cst_186 = arith.constant 1.000000e+00 : f32
    %624 = vector.broadcast %cst_186 : f32 to vector<2x64xf32>
    %625 = arith.addf %624, %623 : vector<2x64xf32>
    %626 = arith.divf %624, %625 : vector<2x64xf32>
    %627 = vector.extract_strided_slice %614 {offsets = [0, 128], sizes = [2, 64], strides = [1, 1]} : vector<2x256xf32> to vector<2x64xf32>
    %628 = math.tanh %627 : vector<2x64xf32>
    %629 = vector.extract_strided_slice %614 {offsets = [0, 192], sizes = [2, 64], strides = [1, 1]} : vector<2x256xf32> to vector<2x64xf32>
    %630 = arith.negf %629 : vector<2x64xf32>
    %631 = math.exp %630 : vector<2x64xf32>
    %cst_187 = arith.constant 1.000000e+00 : f32
    %632 = vector.broadcast %cst_187 : f32 to vector<2x64xf32>
    %633 = arith.addf %632, %631 : vector<2x64xf32>
    %634 = arith.divf %632, %633 : vector<2x64xf32>
    %635 = arith.mulf %626, %451 : vector<2x64xf32>
    %636 = arith.mulf %620, %628 : vector<2x64xf32>
    %637 = arith.addf %635, %636 : vector<2x64xf32>
    %638 = math.tanh %637 : vector<2x64xf32>
    %639 = arith.mulf %634, %638 : vector<2x64xf32>
    %c6_188 = arith.constant 6 : index
    %c512_189 = arith.constant 512 : index
    %640 = vector.load %arg9[%c6_188, %c512_189] : memref<18x1664xf32, #tpu.memory_space<vmem>>, vector<2x256xf32>
    %641 = arith.truncf %484 : vector<2x64xf32> to vector<2x64xbf16>
    %c2_190 = arith.constant 2 : index
    %c0_191 = arith.constant 0 : index
    %c0_192 = arith.constant 0 : index
    %642 = vector.load %arg2[%c2_190, %c0_191, %c0_192] : memref<6x64x256xbf16, #tpu.memory_space<vmem>>, vector<1x64x256xbf16>
    %643 = vector.shape_cast %642 : vector<1x64x256xbf16> to vector<64x256xbf16>
    %cst_193 = arith.constant dense<0.000000e+00> : vector<2x256xf32>
    %644 = tpu.matmul %641, %643, %cst_193 {dimension_numbers = #tpu.dot_dimension_numbers<[1], [0], [0], [1], [0, 0, 1, 1], [], []>} : vector<2x64xbf16>, vector<64x256xbf16>, vector<2x256xf32> -> vector<2x256xf32>
    %645 = arith.addf %640, %644 : vector<2x256xf32>
    %646 = vector.extract_strided_slice %645 {offsets = [0, 0], sizes = [2, 64], strides = [1, 1]} : vector<2x256xf32> to vector<2x64xf32>
    %647 = arith.negf %646 : vector<2x64xf32>
    %648 = math.exp %647 : vector<2x64xf32>
    %cst_194 = arith.constant 1.000000e+00 : f32
    %649 = vector.broadcast %cst_194 : f32 to vector<2x64xf32>
    %650 = arith.addf %649, %648 : vector<2x64xf32>
    %651 = arith.divf %649, %650 : vector<2x64xf32>
    %652 = vector.extract_strided_slice %645 {offsets = [0, 64], sizes = [2, 64], strides = [1, 1]} : vector<2x256xf32> to vector<2x64xf32>
    %653 = arith.negf %652 : vector<2x64xf32>
    %654 = math.exp %653 : vector<2x64xf32>
    %cst_195 = arith.constant 1.000000e+00 : f32
    %655 = vector.broadcast %cst_195 : f32 to vector<2x64xf32>
    %656 = arith.addf %655, %654 : vector<2x64xf32>
    %657 = arith.divf %655, %656 : vector<2x64xf32>
    %658 = vector.extract_strided_slice %645 {offsets = [0, 128], sizes = [2, 64], strides = [1, 1]} : vector<2x256xf32> to vector<2x64xf32>
    %659 = math.tanh %658 : vector<2x64xf32>
    %660 = vector.extract_strided_slice %645 {offsets = [0, 192], sizes = [2, 64], strides = [1, 1]} : vector<2x256xf32> to vector<2x64xf32>
    %661 = arith.negf %660 : vector<2x64xf32>
    %662 = math.exp %661 : vector<2x64xf32>
    %cst_196 = arith.constant 1.000000e+00 : f32
    %663 = vector.broadcast %cst_196 : f32 to vector<2x64xf32>
    %664 = arith.addf %663, %662 : vector<2x64xf32>
    %665 = arith.divf %663, %664 : vector<2x64xf32>
    %666 = arith.mulf %657, %482 : vector<2x64xf32>
    %667 = arith.mulf %651, %659 : vector<2x64xf32>
    %668 = arith.addf %666, %667 : vector<2x64xf32>
    %669 = math.tanh %668 : vector<2x64xf32>
    %670 = arith.mulf %665, %669 : vector<2x64xf32>
    %c6_197 = arith.constant 6 : index
    %c768_198 = arith.constant 768 : index
    %671 = vector.load %arg9[%c6_197, %c768_198] : memref<18x1664xf32, #tpu.memory_space<vmem>>, vector<2x256xf32>
    %672 = arith.truncf %515 : vector<2x64xf32> to vector<2x64xbf16>
    %c3_199 = arith.constant 3 : index
    %c0_200 = arith.constant 0 : index
    %c0_201 = arith.constant 0 : index
    %673 = vector.load %arg2[%c3_199, %c0_200, %c0_201] : memref<6x64x256xbf16, #tpu.memory_space<vmem>>, vector<1x64x256xbf16>
    %674 = vector.shape_cast %673 : vector<1x64x256xbf16> to vector<64x256xbf16>
    %cst_202 = arith.constant dense<0.000000e+00> : vector<2x256xf32>
    %675 = tpu.matmul %672, %674, %cst_202 {dimension_numbers = #tpu.dot_dimension_numbers<[1], [0], [0], [1], [0, 0, 1, 1], [], []>} : vector<2x64xbf16>, vector<64x256xbf16>, vector<2x256xf32> -> vector<2x256xf32>
    %676 = arith.addf %671, %675 : vector<2x256xf32>
    %677 = vector.extract_strided_slice %676 {offsets = [0, 0], sizes = [2, 64], strides = [1, 1]} : vector<2x256xf32> to vector<2x64xf32>
    %678 = arith.negf %677 : vector<2x64xf32>
    %679 = math.exp %678 : vector<2x64xf32>
    %cst_203 = arith.constant 1.000000e+00 : f32
    %680 = vector.broadcast %cst_203 : f32 to vector<2x64xf32>
    %681 = arith.addf %680, %679 : vector<2x64xf32>
    %682 = arith.divf %680, %681 : vector<2x64xf32>
    %683 = vector.extract_strided_slice %676 {offsets = [0, 64], sizes = [2, 64], strides = [1, 1]} : vector<2x256xf32> to vector<2x64xf32>
    %684 = arith.negf %683 : vector<2x64xf32>
    %685 = math.exp %684 : vector<2x64xf32>
    %cst_204 = arith.constant 1.000000e+00 : f32
    %686 = vector.broadcast %cst_204 : f32 to vector<2x64xf32>
    %687 = arith.addf %686, %685 : vector<2x64xf32>
    %688 = arith.divf %686, %687 : vector<2x64xf32>
    %689 = vector.extract_strided_slice %676 {offsets = [0, 128], sizes = [2, 64], strides = [1, 1]} : vector<2x256xf32> to vector<2x64xf32>
    %690 = math.tanh %689 : vector<2x64xf32>
    %691 = vector.extract_strided_slice %676 {offsets = [0, 192], sizes = [2, 64], strides = [1, 1]} : vector<2x256xf32> to vector<2x64xf32>
    %692 = arith.negf %691 : vector<2x64xf32>
    %693 = math.exp %692 : vector<2x64xf32>
    %cst_205 = arith.constant 1.000000e+00 : f32
    %694 = vector.broadcast %cst_205 : f32 to vector<2x64xf32>
    %695 = arith.addf %694, %693 : vector<2x64xf32>
    %696 = arith.divf %694, %695 : vector<2x64xf32>
    %697 = arith.mulf %688, %513 : vector<2x64xf32>
    %698 = arith.mulf %682, %690 : vector<2x64xf32>
    %699 = arith.addf %697, %698 : vector<2x64xf32>
    %700 = math.tanh %699 : vector<2x64xf32>
    %701 = arith.mulf %696, %700 : vector<2x64xf32>
    %c6_206 = arith.constant 6 : index
    %c1024_207 = arith.constant 1024 : index
    %702 = vector.load %arg9[%c6_206, %c1024_207] : memref<18x1664xf32, #tpu.memory_space<vmem>>, vector<2x256xf32>
    %703 = arith.truncf %546 : vector<2x64xf32> to vector<2x64xbf16>
    %c4_208 = arith.constant 4 : index
    %c0_209 = arith.constant 0 : index
    %c0_210 = arith.constant 0 : index
    %704 = vector.load %arg2[%c4_208, %c0_209, %c0_210] : memref<6x64x256xbf16, #tpu.memory_space<vmem>>, vector<1x64x256xbf16>
    %705 = vector.shape_cast %704 : vector<1x64x256xbf16> to vector<64x256xbf16>
    %cst_211 = arith.constant dense<0.000000e+00> : vector<2x256xf32>
    %706 = tpu.matmul %703, %705, %cst_211 {dimension_numbers = #tpu.dot_dimension_numbers<[1], [0], [0], [1], [0, 0, 1, 1], [], []>} : vector<2x64xbf16>, vector<64x256xbf16>, vector<2x256xf32> -> vector<2x256xf32>
    %707 = arith.addf %702, %706 : vector<2x256xf32>
    %708 = vector.extract_strided_slice %707 {offsets = [0, 0], sizes = [2, 64], strides = [1, 1]} : vector<2x256xf32> to vector<2x64xf32>
    %709 = arith.negf %708 : vector<2x64xf32>
    %710 = math.exp %709 : vector<2x64xf32>
    %cst_212 = arith.constant 1.000000e+00 : f32
    %711 = vector.broadcast %cst_212 : f32 to vector<2x64xf32>
    %712 = arith.addf %711, %710 : vector<2x64xf32>
    %713 = arith.divf %711, %712 : vector<2x64xf32>
    %714 = vector.extract_strided_slice %707 {offsets = [0, 64], sizes = [2, 64], strides = [1, 1]} : vector<2x256xf32> to vector<2x64xf32>
    %715 = arith.negf %714 : vector<2x64xf32>
    %716 = math.exp %715 : vector<2x64xf32>
    %cst_213 = arith.constant 1.000000e+00 : f32
    %717 = vector.broadcast %cst_213 : f32 to vector<2x64xf32>
    %718 = arith.addf %717, %716 : vector<2x64xf32>
    %719 = arith.divf %717, %718 : vector<2x64xf32>
    %720 = vector.extract_strided_slice %707 {offsets = [0, 128], sizes = [2, 64], strides = [1, 1]} : vector<2x256xf32> to vector<2x64xf32>
    %721 = math.tanh %720 : vector<2x64xf32>
    %722 = vector.extract_strided_slice %707 {offsets = [0, 192], sizes = [2, 64], strides = [1, 1]} : vector<2x256xf32> to vector<2x64xf32>
    %723 = arith.negf %722 : vector<2x64xf32>
    %724 = math.exp %723 : vector<2x64xf32>
    %cst_214 = arith.constant 1.000000e+00 : f32
    %725 = vector.broadcast %cst_214 : f32 to vector<2x64xf32>
    %726 = arith.addf %725, %724 : vector<2x64xf32>
    %727 = arith.divf %725, %726 : vector<2x64xf32>
    %728 = arith.mulf %719, %544 : vector<2x64xf32>
    %729 = arith.mulf %713, %721 : vector<2x64xf32>
    %730 = arith.addf %728, %729 : vector<2x64xf32>
    %731 = math.tanh %730 : vector<2x64xf32>
    %732 = arith.mulf %727, %731 : vector<2x64xf32>
    %c6_215 = arith.constant 6 : index
    %c1280_216 = arith.constant 1280 : index
    %733 = vector.load %arg9[%c6_215, %c1280_216] : memref<18x1664xf32, #tpu.memory_space<vmem>>, vector<2x256xf32>
    %734 = arith.truncf %577 : vector<2x64xf32> to vector<2x64xbf16>
    %c5_217 = arith.constant 5 : index
    %c0_218 = arith.constant 0 : index
    %c0_219 = arith.constant 0 : index
    %735 = vector.load %arg2[%c5_217, %c0_218, %c0_219] : memref<6x64x256xbf16, #tpu.memory_space<vmem>>, vector<1x64x256xbf16>
    %736 = vector.shape_cast %735 : vector<1x64x256xbf16> to vector<64x256xbf16>
    %cst_220 = arith.constant dense<0.000000e+00> : vector<2x256xf32>
    %737 = tpu.matmul %734, %736, %cst_220 {dimension_numbers = #tpu.dot_dimension_numbers<[1], [0], [0], [1], [0, 0, 1, 1], [], []>} : vector<2x64xbf16>, vector<64x256xbf16>, vector<2x256xf32> -> vector<2x256xf32>
    %738 = arith.addf %733, %737 : vector<2x256xf32>
    %739 = vector.extract_strided_slice %738 {offsets = [0, 0], sizes = [2, 64], strides = [1, 1]} : vector<2x256xf32> to vector<2x64xf32>
    %740 = arith.negf %739 : vector<2x64xf32>
    %741 = math.exp %740 : vector<2x64xf32>
    %cst_221 = arith.constant 1.000000e+00 : f32
    %742 = vector.broadcast %cst_221 : f32 to vector<2x64xf32>
    %743 = arith.addf %742, %741 : vector<2x64xf32>
    %744 = arith.divf %742, %743 : vector<2x64xf32>
    %745 = vector.extract_strided_slice %738 {offsets = [0, 64], sizes = [2, 64], strides = [1, 1]} : vector<2x256xf32> to vector<2x64xf32>
    %746 = arith.negf %745 : vector<2x64xf32>
    %747 = math.exp %746 : vector<2x64xf32>
    %cst_222 = arith.constant 1.000000e+00 : f32
    %748 = vector.broadcast %cst_222 : f32 to vector<2x64xf32>
    %749 = arith.addf %748, %747 : vector<2x64xf32>
    %750 = arith.divf %748, %749 : vector<2x64xf32>
    %751 = vector.extract_strided_slice %738 {offsets = [0, 128], sizes = [2, 64], strides = [1, 1]} : vector<2x256xf32> to vector<2x64xf32>
    %752 = math.tanh %751 : vector<2x64xf32>
    %753 = vector.extract_strided_slice %738 {offsets = [0, 192], sizes = [2, 64], strides = [1, 1]} : vector<2x256xf32> to vector<2x64xf32>
    %754 = arith.negf %753 : vector<2x64xf32>
    %755 = math.exp %754 : vector<2x64xf32>
    %cst_223 = arith.constant 1.000000e+00 : f32
    %756 = vector.broadcast %cst_223 : f32 to vector<2x64xf32>
    %757 = arith.addf %756, %755 : vector<2x64xf32>
    %758 = arith.divf %756, %757 : vector<2x64xf32>
    %759 = arith.mulf %750, %575 : vector<2x64xf32>
    %760 = arith.mulf %744, %752 : vector<2x64xf32>
    %761 = arith.addf %759, %760 : vector<2x64xf32>
    %762 = math.tanh %761 : vector<2x64xf32>
    %763 = arith.mulf %758, %762 : vector<2x64xf32>
    %c8 = arith.constant 8 : index
    %c0_224 = arith.constant 0 : index
    %764 = vector.load %arg9[%c8, %c0_224] : memref<18x1664xf32, #tpu.memory_space<vmem>>, vector<2x256xf32>
    %765 = arith.truncf %608 : vector<2x64xf32> to vector<2x64xbf16>
    %c0_225 = arith.constant 0 : index
    %c0_226 = arith.constant 0 : index
    %c0_227 = arith.constant 0 : index
    %766 = vector.load %arg2[%c0_225, %c0_226, %c0_227] : memref<6x64x256xbf16, #tpu.memory_space<vmem>>, vector<1x64x256xbf16>
    %767 = vector.shape_cast %766 : vector<1x64x256xbf16> to vector<64x256xbf16>
    %cst_228 = arith.constant dense<0.000000e+00> : vector<2x256xf32>
    %768 = tpu.matmul %765, %767, %cst_228 {dimension_numbers = #tpu.dot_dimension_numbers<[1], [0], [0], [1], [0, 0, 1, 1], [], []>} : vector<2x64xbf16>, vector<64x256xbf16>, vector<2x256xf32> -> vector<2x256xf32>
    %769 = arith.addf %764, %768 : vector<2x256xf32>
    %770 = vector.extract_strided_slice %769 {offsets = [0, 0], sizes = [2, 64], strides = [1, 1]} : vector<2x256xf32> to vector<2x64xf32>
    %771 = arith.negf %770 : vector<2x64xf32>
    %772 = math.exp %771 : vector<2x64xf32>
    %cst_229 = arith.constant 1.000000e+00 : f32
    %773 = vector.broadcast %cst_229 : f32 to vector<2x64xf32>
    %774 = arith.addf %773, %772 : vector<2x64xf32>
    %775 = arith.divf %773, %774 : vector<2x64xf32>
    %776 = vector.extract_strided_slice %769 {offsets = [0, 64], sizes = [2, 64], strides = [1, 1]} : vector<2x256xf32> to vector<2x64xf32>
    %777 = arith.negf %776 : vector<2x64xf32>
    %778 = math.exp %777 : vector<2x64xf32>
    %cst_230 = arith.constant 1.000000e+00 : f32
    %779 = vector.broadcast %cst_230 : f32 to vector<2x64xf32>
    %780 = arith.addf %779, %778 : vector<2x64xf32>
    %781 = arith.divf %779, %780 : vector<2x64xf32>
    %782 = vector.extract_strided_slice %769 {offsets = [0, 128], sizes = [2, 64], strides = [1, 1]} : vector<2x256xf32> to vector<2x64xf32>
    %783 = math.tanh %782 : vector<2x64xf32>
    %784 = vector.extract_strided_slice %769 {offsets = [0, 192], sizes = [2, 64], strides = [1, 1]} : vector<2x256xf32> to vector<2x64xf32>
    %785 = arith.negf %784 : vector<2x64xf32>
    %786 = math.exp %785 : vector<2x64xf32>
    %cst_231 = arith.constant 1.000000e+00 : f32
    %787 = vector.broadcast %cst_231 : f32 to vector<2x64xf32>
    %788 = arith.addf %787, %786 : vector<2x64xf32>
    %789 = arith.divf %787, %788 : vector<2x64xf32>
    %790 = arith.mulf %781, %606 : vector<2x64xf32>
    %791 = arith.mulf %775, %783 : vector<2x64xf32>
    %792 = arith.addf %790, %791 : vector<2x64xf32>
    %793 = math.tanh %792 : vector<2x64xf32>
    %794 = arith.mulf %789, %793 : vector<2x64xf32>
    %c8_232 = arith.constant 8 : index
    %c256_233 = arith.constant 256 : index
    %795 = vector.load %arg9[%c8_232, %c256_233] : memref<18x1664xf32, #tpu.memory_space<vmem>>, vector<2x256xf32>
    %796 = arith.truncf %639 : vector<2x64xf32> to vector<2x64xbf16>
    %c1_234 = arith.constant 1 : index
    %c0_235 = arith.constant 0 : index
    %c0_236 = arith.constant 0 : index
    %797 = vector.load %arg2[%c1_234, %c0_235, %c0_236] : memref<6x64x256xbf16, #tpu.memory_space<vmem>>, vector<1x64x256xbf16>
    %798 = vector.shape_cast %797 : vector<1x64x256xbf16> to vector<64x256xbf16>
    %cst_237 = arith.constant dense<0.000000e+00> : vector<2x256xf32>
    %799 = tpu.matmul %796, %798, %cst_237 {dimension_numbers = #tpu.dot_dimension_numbers<[1], [0], [0], [1], [0, 0, 1, 1], [], []>} : vector<2x64xbf16>, vector<64x256xbf16>, vector<2x256xf32> -> vector<2x256xf32>
    %800 = arith.addf %795, %799 : vector<2x256xf32>
    %801 = vector.extract_strided_slice %800 {offsets = [0, 0], sizes = [2, 64], strides = [1, 1]} : vector<2x256xf32> to vector<2x64xf32>
    %802 = arith.negf %801 : vector<2x64xf32>
    %803 = math.exp %802 : vector<2x64xf32>
    %cst_238 = arith.constant 1.000000e+00 : f32
    %804 = vector.broadcast %cst_238 : f32 to vector<2x64xf32>
    %805 = arith.addf %804, %803 : vector<2x64xf32>
    %806 = arith.divf %804, %805 : vector<2x64xf32>
    %807 = vector.extract_strided_slice %800 {offsets = [0, 64], sizes = [2, 64], strides = [1, 1]} : vector<2x256xf32> to vector<2x64xf32>
    %808 = arith.negf %807 : vector<2x64xf32>
    %809 = math.exp %808 : vector<2x64xf32>
    %cst_239 = arith.constant 1.000000e+00 : f32
    %810 = vector.broadcast %cst_239 : f32 to vector<2x64xf32>
    %811 = arith.addf %810, %809 : vector<2x64xf32>
    %812 = arith.divf %810, %811 : vector<2x64xf32>
    %813 = vector.extract_strided_slice %800 {offsets = [0, 128], sizes = [2, 64], strides = [1, 1]} : vector<2x256xf32> to vector<2x64xf32>
    %814 = math.tanh %813 : vector<2x64xf32>
    %815 = vector.extract_strided_slice %800 {offsets = [0, 192], sizes = [2, 64], strides = [1, 1]} : vector<2x256xf32> to vector<2x64xf32>
    %816 = arith.negf %815 : vector<2x64xf32>
    %817 = math.exp %816 : vector<2x64xf32>
    %cst_240 = arith.constant 1.000000e+00 : f32
    %818 = vector.broadcast %cst_240 : f32 to vector<2x64xf32>
    %819 = arith.addf %818, %817 : vector<2x64xf32>
    %820 = arith.divf %818, %819 : vector<2x64xf32>
    %821 = arith.mulf %812, %637 : vector<2x64xf32>
    %822 = arith.mulf %806, %814 : vector<2x64xf32>
    %823 = arith.addf %821, %822 : vector<2x64xf32>
    %824 = math.tanh %823 : vector<2x64xf32>
    %825 = arith.mulf %820, %824 : vector<2x64xf32>
    %c8_241 = arith.constant 8 : index
    %c512_242 = arith.constant 512 : index
    %826 = vector.load %arg9[%c8_241, %c512_242] : memref<18x1664xf32, #tpu.memory_space<vmem>>, vector<2x256xf32>
    %827 = arith.truncf %670 : vector<2x64xf32> to vector<2x64xbf16>
    %c2_243 = arith.constant 2 : index
    %c0_244 = arith.constant 0 : index
    %c0_245 = arith.constant 0 : index
    %828 = vector.load %arg2[%c2_243, %c0_244, %c0_245] : memref<6x64x256xbf16, #tpu.memory_space<vmem>>, vector<1x64x256xbf16>
    %829 = vector.shape_cast %828 : vector<1x64x256xbf16> to vector<64x256xbf16>
    %cst_246 = arith.constant dense<0.000000e+00> : vector<2x256xf32>
    %830 = tpu.matmul %827, %829, %cst_246 {dimension_numbers = #tpu.dot_dimension_numbers<[1], [0], [0], [1], [0, 0, 1, 1], [], []>} : vector<2x64xbf16>, vector<64x256xbf16>, vector<2x256xf32> -> vector<2x256xf32>
    %831 = arith.addf %826, %830 : vector<2x256xf32>
    %832 = vector.extract_strided_slice %831 {offsets = [0, 0], sizes = [2, 64], strides = [1, 1]} : vector<2x256xf32> to vector<2x64xf32>
    %833 = arith.negf %832 : vector<2x64xf32>
    %834 = math.exp %833 : vector<2x64xf32>
    %cst_247 = arith.constant 1.000000e+00 : f32
    %835 = vector.broadcast %cst_247 : f32 to vector<2x64xf32>
    %836 = arith.addf %835, %834 : vector<2x64xf32>
    %837 = arith.divf %835, %836 : vector<2x64xf32>
    %838 = vector.extract_strided_slice %831 {offsets = [0, 64], sizes = [2, 64], strides = [1, 1]} : vector<2x256xf32> to vector<2x64xf32>
    %839 = arith.negf %838 : vector<2x64xf32>
    %840 = math.exp %839 : vector<2x64xf32>
    %cst_248 = arith.constant 1.000000e+00 : f32
    %841 = vector.broadcast %cst_248 : f32 to vector<2x64xf32>
    %842 = arith.addf %841, %840 : vector<2x64xf32>
    %843 = arith.divf %841, %842 : vector<2x64xf32>
    %844 = vector.extract_strided_slice %831 {offsets = [0, 128], sizes = [2, 64], strides = [1, 1]} : vector<2x256xf32> to vector<2x64xf32>
    %845 = math.tanh %844 : vector<2x64xf32>
    %846 = vector.extract_strided_slice %831 {offsets = [0, 192], sizes = [2, 64], strides = [1, 1]} : vector<2x256xf32> to vector<2x64xf32>
    %847 = arith.negf %846 : vector<2x64xf32>
    %848 = math.exp %847 : vector<2x64xf32>
    %cst_249 = arith.constant 1.000000e+00 : f32
    %849 = vector.broadcast %cst_249 : f32 to vector<2x64xf32>
    %850 = arith.addf %849, %848 : vector<2x64xf32>
    %851 = arith.divf %849, %850 : vector<2x64xf32>
    %852 = arith.mulf %843, %668 : vector<2x64xf32>
    %853 = arith.mulf %837, %845 : vector<2x64xf32>
    %854 = arith.addf %852, %853 : vector<2x64xf32>
    %855 = math.tanh %854 : vector<2x64xf32>
    %856 = arith.mulf %851, %855 : vector<2x64xf32>
    %c8_250 = arith.constant 8 : index
    %c768_251 = arith.constant 768 : index
    %857 = vector.load %arg9[%c8_250, %c768_251] : memref<18x1664xf32, #tpu.memory_space<vmem>>, vector<2x256xf32>
    %858 = arith.truncf %701 : vector<2x64xf32> to vector<2x64xbf16>
    %c3_252 = arith.constant 3 : index
    %c0_253 = arith.constant 0 : index
    %c0_254 = arith.constant 0 : index
    %859 = vector.load %arg2[%c3_252, %c0_253, %c0_254] : memref<6x64x256xbf16, #tpu.memory_space<vmem>>, vector<1x64x256xbf16>
    %860 = vector.shape_cast %859 : vector<1x64x256xbf16> to vector<64x256xbf16>
    %cst_255 = arith.constant dense<0.000000e+00> : vector<2x256xf32>
    %861 = tpu.matmul %858, %860, %cst_255 {dimension_numbers = #tpu.dot_dimension_numbers<[1], [0], [0], [1], [0, 0, 1, 1], [], []>} : vector<2x64xbf16>, vector<64x256xbf16>, vector<2x256xf32> -> vector<2x256xf32>
    %862 = arith.addf %857, %861 : vector<2x256xf32>
    %863 = vector.extract_strided_slice %862 {offsets = [0, 0], sizes = [2, 64], strides = [1, 1]} : vector<2x256xf32> to vector<2x64xf32>
    %864 = arith.negf %863 : vector<2x64xf32>
    %865 = math.exp %864 : vector<2x64xf32>
    %cst_256 = arith.constant 1.000000e+00 : f32
    %866 = vector.broadcast %cst_256 : f32 to vector<2x64xf32>
    %867 = arith.addf %866, %865 : vector<2x64xf32>
    %868 = arith.divf %866, %867 : vector<2x64xf32>
    %869 = vector.extract_strided_slice %862 {offsets = [0, 64], sizes = [2, 64], strides = [1, 1]} : vector<2x256xf32> to vector<2x64xf32>
    %870 = arith.negf %869 : vector<2x64xf32>
    %871 = math.exp %870 : vector<2x64xf32>
    %cst_257 = arith.constant 1.000000e+00 : f32
    %872 = vector.broadcast %cst_257 : f32 to vector<2x64xf32>
    %873 = arith.addf %872, %871 : vector<2x64xf32>
    %874 = arith.divf %872, %873 : vector<2x64xf32>
    %875 = vector.extract_strided_slice %862 {offsets = [0, 128], sizes = [2, 64], strides = [1, 1]} : vector<2x256xf32> to vector<2x64xf32>
    %876 = math.tanh %875 : vector<2x64xf32>
    %877 = vector.extract_strided_slice %862 {offsets = [0, 192], sizes = [2, 64], strides = [1, 1]} : vector<2x256xf32> to vector<2x64xf32>
    %878 = arith.negf %877 : vector<2x64xf32>
    %879 = math.exp %878 : vector<2x64xf32>
    %cst_258 = arith.constant 1.000000e+00 : f32
    %880 = vector.broadcast %cst_258 : f32 to vector<2x64xf32>
    %881 = arith.addf %880, %879 : vector<2x64xf32>
    %882 = arith.divf %880, %881 : vector<2x64xf32>
    %883 = arith.mulf %874, %699 : vector<2x64xf32>
    %884 = arith.mulf %868, %876 : vector<2x64xf32>
    %885 = arith.addf %883, %884 : vector<2x64xf32>
    %886 = math.tanh %885 : vector<2x64xf32>
    %887 = arith.mulf %882, %886 : vector<2x64xf32>
    %c8_259 = arith.constant 8 : index
    %c1024_260 = arith.constant 1024 : index
    %888 = vector.load %arg9[%c8_259, %c1024_260] : memref<18x1664xf32, #tpu.memory_space<vmem>>, vector<2x256xf32>
    %889 = arith.truncf %732 : vector<2x64xf32> to vector<2x64xbf16>
    %c4_261 = arith.constant 4 : index
    %c0_262 = arith.constant 0 : index
    %c0_263 = arith.constant 0 : index
    %890 = vector.load %arg2[%c4_261, %c0_262, %c0_263] : memref<6x64x256xbf16, #tpu.memory_space<vmem>>, vector<1x64x256xbf16>
    %891 = vector.shape_cast %890 : vector<1x64x256xbf16> to vector<64x256xbf16>
    %cst_264 = arith.constant dense<0.000000e+00> : vector<2x256xf32>
    %892 = tpu.matmul %889, %891, %cst_264 {dimension_numbers = #tpu.dot_dimension_numbers<[1], [0], [0], [1], [0, 0, 1, 1], [], []>} : vector<2x64xbf16>, vector<64x256xbf16>, vector<2x256xf32> -> vector<2x256xf32>
    %893 = arith.addf %888, %892 : vector<2x256xf32>
    %894 = vector.extract_strided_slice %893 {offsets = [0, 0], sizes = [2, 64], strides = [1, 1]} : vector<2x256xf32> to vector<2x64xf32>
    %895 = arith.negf %894 : vector<2x64xf32>
    %896 = math.exp %895 : vector<2x64xf32>
    %cst_265 = arith.constant 1.000000e+00 : f32
    %897 = vector.broadcast %cst_265 : f32 to vector<2x64xf32>
    %898 = arith.addf %897, %896 : vector<2x64xf32>
    %899 = arith.divf %897, %898 : vector<2x64xf32>
    %900 = vector.extract_strided_slice %893 {offsets = [0, 64], sizes = [2, 64], strides = [1, 1]} : vector<2x256xf32> to vector<2x64xf32>
    %901 = arith.negf %900 : vector<2x64xf32>
    %902 = math.exp %901 : vector<2x64xf32>
    %cst_266 = arith.constant 1.000000e+00 : f32
    %903 = vector.broadcast %cst_266 : f32 to vector<2x64xf32>
    %904 = arith.addf %903, %902 : vector<2x64xf32>
    %905 = arith.divf %903, %904 : vector<2x64xf32>
    %906 = vector.extract_strided_slice %893 {offsets = [0, 128], sizes = [2, 64], strides = [1, 1]} : vector<2x256xf32> to vector<2x64xf32>
    %907 = math.tanh %906 : vector<2x64xf32>
    %908 = vector.extract_strided_slice %893 {offsets = [0, 192], sizes = [2, 64], strides = [1, 1]} : vector<2x256xf32> to vector<2x64xf32>
    %909 = arith.negf %908 : vector<2x64xf32>
    %910 = math.exp %909 : vector<2x64xf32>
    %cst_267 = arith.constant 1.000000e+00 : f32
    %911 = vector.broadcast %cst_267 : f32 to vector<2x64xf32>
    %912 = arith.addf %911, %910 : vector<2x64xf32>
    %913 = arith.divf %911, %912 : vector<2x64xf32>
    %914 = arith.mulf %905, %730 : vector<2x64xf32>
    %915 = arith.mulf %899, %907 : vector<2x64xf32>
    %916 = arith.addf %914, %915 : vector<2x64xf32>
    %917 = math.tanh %916 : vector<2x64xf32>
    %918 = arith.mulf %913, %917 : vector<2x64xf32>
    %c8_268 = arith.constant 8 : index
    %c1280_269 = arith.constant 1280 : index
    %919 = vector.load %arg9[%c8_268, %c1280_269] : memref<18x1664xf32, #tpu.memory_space<vmem>>, vector<2x256xf32>
    %920 = arith.truncf %763 : vector<2x64xf32> to vector<2x64xbf16>
    %c5_270 = arith.constant 5 : index
    %c0_271 = arith.constant 0 : index
    %c0_272 = arith.constant 0 : index
    %921 = vector.load %arg2[%c5_270, %c0_271, %c0_272] : memref<6x64x256xbf16, #tpu.memory_space<vmem>>, vector<1x64x256xbf16>
    %922 = vector.shape_cast %921 : vector<1x64x256xbf16> to vector<64x256xbf16>
    %cst_273 = arith.constant dense<0.000000e+00> : vector<2x256xf32>
    %923 = tpu.matmul %920, %922, %cst_273 {dimension_numbers = #tpu.dot_dimension_numbers<[1], [0], [0], [1], [0, 0, 1, 1], [], []>} : vector<2x64xbf16>, vector<64x256xbf16>, vector<2x256xf32> -> vector<2x256xf32>
    %924 = arith.addf %919, %923 : vector<2x256xf32>
    %925 = vector.extract_strided_slice %924 {offsets = [0, 0], sizes = [2, 64], strides = [1, 1]} : vector<2x256xf32> to vector<2x64xf32>
    %926 = arith.negf %925 : vector<2x64xf32>
    %927 = math.exp %926 : vector<2x64xf32>
    %cst_274 = arith.constant 1.000000e+00 : f32
    %928 = vector.broadcast %cst_274 : f32 to vector<2x64xf32>
    %929 = arith.addf %928, %927 : vector<2x64xf32>
    %930 = arith.divf %928, %929 : vector<2x64xf32>
    %931 = vector.extract_strided_slice %924 {offsets = [0, 64], sizes = [2, 64], strides = [1, 1]} : vector<2x256xf32> to vector<2x64xf32>
    %932 = arith.negf %931 : vector<2x64xf32>
    %933 = math.exp %932 : vector<2x64xf32>
    %cst_275 = arith.constant 1.000000e+00 : f32
    %934 = vector.broadcast %cst_275 : f32 to vector<2x64xf32>
    %935 = arith.addf %934, %933 : vector<2x64xf32>
    %936 = arith.divf %934, %935 : vector<2x64xf32>
    %937 = vector.extract_strided_slice %924 {offsets = [0, 128], sizes = [2, 64], strides = [1, 1]} : vector<2x256xf32> to vector<2x64xf32>
    %938 = math.tanh %937 : vector<2x64xf32>
    %939 = vector.extract_strided_slice %924 {offsets = [0, 192], sizes = [2, 64], strides = [1, 1]} : vector<2x256xf32> to vector<2x64xf32>
    %940 = arith.negf %939 : vector<2x64xf32>
    %941 = math.exp %940 : vector<2x64xf32>
    %cst_276 = arith.constant 1.000000e+00 : f32
    %942 = vector.broadcast %cst_276 : f32 to vector<2x64xf32>
    %943 = arith.addf %942, %941 : vector<2x64xf32>
    %944 = arith.divf %942, %943 : vector<2x64xf32>
    %945 = arith.mulf %936, %761 : vector<2x64xf32>
    %946 = arith.mulf %930, %938 : vector<2x64xf32>
    %947 = arith.addf %945, %946 : vector<2x64xf32>
    %948 = math.tanh %947 : vector<2x64xf32>
    %949 = arith.mulf %944, %948 : vector<2x64xf32>
    %c10 = arith.constant 10 : index
    %c0_277 = arith.constant 0 : index
    %950 = vector.load %arg9[%c10, %c0_277] : memref<18x1664xf32, #tpu.memory_space<vmem>>, vector<2x256xf32>
    %951 = arith.truncf %794 : vector<2x64xf32> to vector<2x64xbf16>
    %c0_278 = arith.constant 0 : index
    %c0_279 = arith.constant 0 : index
    %c0_280 = arith.constant 0 : index
    %952 = vector.load %arg2[%c0_278, %c0_279, %c0_280] : memref<6x64x256xbf16, #tpu.memory_space<vmem>>, vector<1x64x256xbf16>
    %953 = vector.shape_cast %952 : vector<1x64x256xbf16> to vector<64x256xbf16>
    %cst_281 = arith.constant dense<0.000000e+00> : vector<2x256xf32>
    %954 = tpu.matmul %951, %953, %cst_281 {dimension_numbers = #tpu.dot_dimension_numbers<[1], [0], [0], [1], [0, 0, 1, 1], [], []>} : vector<2x64xbf16>, vector<64x256xbf16>, vector<2x256xf32> -> vector<2x256xf32>
    %955 = arith.addf %950, %954 : vector<2x256xf32>
    %956 = vector.extract_strided_slice %955 {offsets = [0, 0], sizes = [2, 64], strides = [1, 1]} : vector<2x256xf32> to vector<2x64xf32>
    %957 = arith.negf %956 : vector<2x64xf32>
    %958 = math.exp %957 : vector<2x64xf32>
    %cst_282 = arith.constant 1.000000e+00 : f32
    %959 = vector.broadcast %cst_282 : f32 to vector<2x64xf32>
    %960 = arith.addf %959, %958 : vector<2x64xf32>
    %961 = arith.divf %959, %960 : vector<2x64xf32>
    %962 = vector.extract_strided_slice %955 {offsets = [0, 64], sizes = [2, 64], strides = [1, 1]} : vector<2x256xf32> to vector<2x64xf32>
    %963 = arith.negf %962 : vector<2x64xf32>
    %964 = math.exp %963 : vector<2x64xf32>
    %cst_283 = arith.constant 1.000000e+00 : f32
    %965 = vector.broadcast %cst_283 : f32 to vector<2x64xf32>
    %966 = arith.addf %965, %964 : vector<2x64xf32>
    %967 = arith.divf %965, %966 : vector<2x64xf32>
    %968 = vector.extract_strided_slice %955 {offsets = [0, 128], sizes = [2, 64], strides = [1, 1]} : vector<2x256xf32> to vector<2x64xf32>
    %969 = math.tanh %968 : vector<2x64xf32>
    %970 = vector.extract_strided_slice %955 {offsets = [0, 192], sizes = [2, 64], strides = [1, 1]} : vector<2x256xf32> to vector<2x64xf32>
    %971 = arith.negf %970 : vector<2x64xf32>
    %972 = math.exp %971 : vector<2x64xf32>
    %cst_284 = arith.constant 1.000000e+00 : f32
    %973 = vector.broadcast %cst_284 : f32 to vector<2x64xf32>
    %974 = arith.addf %973, %972 : vector<2x64xf32>
    %975 = arith.divf %973, %974 : vector<2x64xf32>
    %976 = arith.mulf %967, %792 : vector<2x64xf32>
    %977 = arith.mulf %961, %969 : vector<2x64xf32>
    %978 = arith.addf %976, %977 : vector<2x64xf32>
    %979 = math.tanh %978 : vector<2x64xf32>
    %980 = arith.mulf %975, %979 : vector<2x64xf32>
    %c10_285 = arith.constant 10 : index
    %c256_286 = arith.constant 256 : index
    %981 = vector.load %arg9[%c10_285, %c256_286] : memref<18x1664xf32, #tpu.memory_space<vmem>>, vector<2x256xf32>
    %982 = arith.truncf %825 : vector<2x64xf32> to vector<2x64xbf16>
    %c1_287 = arith.constant 1 : index
    %c0_288 = arith.constant 0 : index
    %c0_289 = arith.constant 0 : index
    %983 = vector.load %arg2[%c1_287, %c0_288, %c0_289] : memref<6x64x256xbf16, #tpu.memory_space<vmem>>, vector<1x64x256xbf16>
    %984 = vector.shape_cast %983 : vector<1x64x256xbf16> to vector<64x256xbf16>
    %cst_290 = arith.constant dense<0.000000e+00> : vector<2x256xf32>
    %985 = tpu.matmul %982, %984, %cst_290 {dimension_numbers = #tpu.dot_dimension_numbers<[1], [0], [0], [1], [0, 0, 1, 1], [], []>} : vector<2x64xbf16>, vector<64x256xbf16>, vector<2x256xf32> -> vector<2x256xf32>
    %986 = arith.addf %981, %985 : vector<2x256xf32>
    %987 = vector.extract_strided_slice %986 {offsets = [0, 0], sizes = [2, 64], strides = [1, 1]} : vector<2x256xf32> to vector<2x64xf32>
    %988 = arith.negf %987 : vector<2x64xf32>
    %989 = math.exp %988 : vector<2x64xf32>
    %cst_291 = arith.constant 1.000000e+00 : f32
    %990 = vector.broadcast %cst_291 : f32 to vector<2x64xf32>
    %991 = arith.addf %990, %989 : vector<2x64xf32>
    %992 = arith.divf %990, %991 : vector<2x64xf32>
    %993 = vector.extract_strided_slice %986 {offsets = [0, 64], sizes = [2, 64], strides = [1, 1]} : vector<2x256xf32> to vector<2x64xf32>
    %994 = arith.negf %993 : vector<2x64xf32>
    %995 = math.exp %994 : vector<2x64xf32>
    %cst_292 = arith.constant 1.000000e+00 : f32
    %996 = vector.broadcast %cst_292 : f32 to vector<2x64xf32>
    %997 = arith.addf %996, %995 : vector<2x64xf32>
    %998 = arith.divf %996, %997 : vector<2x64xf32>
    %999 = vector.extract_strided_slice %986 {offsets = [0, 128], sizes = [2, 64], strides = [1, 1]} : vector<2x256xf32> to vector<2x64xf32>
    %1000 = math.tanh %999 : vector<2x64xf32>
    %1001 = vector.extract_strided_slice %986 {offsets = [0, 192], sizes = [2, 64], strides = [1, 1]} : vector<2x256xf32> to vector<2x64xf32>
    %1002 = arith.negf %1001 : vector<2x64xf32>
    %1003 = math.exp %1002 : vector<2x64xf32>
    %cst_293 = arith.constant 1.000000e+00 : f32
    %1004 = vector.broadcast %cst_293 : f32 to vector<2x64xf32>
    %1005 = arith.addf %1004, %1003 : vector<2x64xf32>
    %1006 = arith.divf %1004, %1005 : vector<2x64xf32>
    %1007 = arith.mulf %998, %823 : vector<2x64xf32>
    %1008 = arith.mulf %992, %1000 : vector<2x64xf32>
    %1009 = arith.addf %1007, %1008 : vector<2x64xf32>
    %1010 = math.tanh %1009 : vector<2x64xf32>
    %1011 = arith.mulf %1006, %1010 : vector<2x64xf32>
    %c10_294 = arith.constant 10 : index
    %c512_295 = arith.constant 512 : index
    %1012 = vector.load %arg9[%c10_294, %c512_295] : memref<18x1664xf32, #tpu.memory_space<vmem>>, vector<2x256xf32>
    %1013 = arith.truncf %856 : vector<2x64xf32> to vector<2x64xbf16>
    %c2_296 = arith.constant 2 : index
    %c0_297 = arith.constant 0 : index
    %c0_298 = arith.constant 0 : index
    %1014 = vector.load %arg2[%c2_296, %c0_297, %c0_298] : memref<6x64x256xbf16, #tpu.memory_space<vmem>>, vector<1x64x256xbf16>
    %1015 = vector.shape_cast %1014 : vector<1x64x256xbf16> to vector<64x256xbf16>
    %cst_299 = arith.constant dense<0.000000e+00> : vector<2x256xf32>
    %1016 = tpu.matmul %1013, %1015, %cst_299 {dimension_numbers = #tpu.dot_dimension_numbers<[1], [0], [0], [1], [0, 0, 1, 1], [], []>} : vector<2x64xbf16>, vector<64x256xbf16>, vector<2x256xf32> -> vector<2x256xf32>
    %1017 = arith.addf %1012, %1016 : vector<2x256xf32>
    %1018 = vector.extract_strided_slice %1017 {offsets = [0, 0], sizes = [2, 64], strides = [1, 1]} : vector<2x256xf32> to vector<2x64xf32>
    %1019 = arith.negf %1018 : vector<2x64xf32>
    %1020 = math.exp %1019 : vector<2x64xf32>
    %cst_300 = arith.constant 1.000000e+00 : f32
    %1021 = vector.broadcast %cst_300 : f32 to vector<2x64xf32>
    %1022 = arith.addf %1021, %1020 : vector<2x64xf32>
    %1023 = arith.divf %1021, %1022 : vector<2x64xf32>
    %1024 = vector.extract_strided_slice %1017 {offsets = [0, 64], sizes = [2, 64], strides = [1, 1]} : vector<2x256xf32> to vector<2x64xf32>
    %1025 = arith.negf %1024 : vector<2x64xf32>
    %1026 = math.exp %1025 : vector<2x64xf32>
    %cst_301 = arith.constant 1.000000e+00 : f32
    %1027 = vector.broadcast %cst_301 : f32 to vector<2x64xf32>
    %1028 = arith.addf %1027, %1026 : vector<2x64xf32>
    %1029 = arith.divf %1027, %1028 : vector<2x64xf32>
    %1030 = vector.extract_strided_slice %1017 {offsets = [0, 128], sizes = [2, 64], strides = [1, 1]} : vector<2x256xf32> to vector<2x64xf32>
    %1031 = math.tanh %1030 : vector<2x64xf32>
    %1032 = vector.extract_strided_slice %1017 {offsets = [0, 192], sizes = [2, 64], strides = [1, 1]} : vector<2x256xf32> to vector<2x64xf32>
    %1033 = arith.negf %1032 : vector<2x64xf32>
    %1034 = math.exp %1033 : vector<2x64xf32>
    %cst_302 = arith.constant 1.000000e+00 : f32
    %1035 = vector.broadcast %cst_302 : f32 to vector<2x64xf32>
    %1036 = arith.addf %1035, %1034 : vector<2x64xf32>
    %1037 = arith.divf %1035, %1036 : vector<2x64xf32>
    %1038 = arith.mulf %1029, %854 : vector<2x64xf32>
    %1039 = arith.mulf %1023, %1031 : vector<2x64xf32>
    %1040 = arith.addf %1038, %1039 : vector<2x64xf32>
    %1041 = math.tanh %1040 : vector<2x64xf32>
    %1042 = arith.mulf %1037, %1041 : vector<2x64xf32>
    %c10_303 = arith.constant 10 : index
    %c768_304 = arith.constant 768 : index
    %1043 = vector.load %arg9[%c10_303, %c768_304] : memref<18x1664xf32, #tpu.memory_space<vmem>>, vector<2x256xf32>
    %1044 = arith.truncf %887 : vector<2x64xf32> to vector<2x64xbf16>
    %c3_305 = arith.constant 3 : index
    %c0_306 = arith.constant 0 : index
    %c0_307 = arith.constant 0 : index
    %1045 = vector.load %arg2[%c3_305, %c0_306, %c0_307] : memref<6x64x256xbf16, #tpu.memory_space<vmem>>, vector<1x64x256xbf16>
    %1046 = vector.shape_cast %1045 : vector<1x64x256xbf16> to vector<64x256xbf16>
    %cst_308 = arith.constant dense<0.000000e+00> : vector<2x256xf32>
    %1047 = tpu.matmul %1044, %1046, %cst_308 {dimension_numbers = #tpu.dot_dimension_numbers<[1], [0], [0], [1], [0, 0, 1, 1], [], []>} : vector<2x64xbf16>, vector<64x256xbf16>, vector<2x256xf32> -> vector<2x256xf32>
    %1048 = arith.addf %1043, %1047 : vector<2x256xf32>
    %1049 = vector.extract_strided_slice %1048 {offsets = [0, 0], sizes = [2, 64], strides = [1, 1]} : vector<2x256xf32> to vector<2x64xf32>
    %1050 = arith.negf %1049 : vector<2x64xf32>
    %1051 = math.exp %1050 : vector<2x64xf32>
    %cst_309 = arith.constant 1.000000e+00 : f32
    %1052 = vector.broadcast %cst_309 : f32 to vector<2x64xf32>
    %1053 = arith.addf %1052, %1051 : vector<2x64xf32>
    %1054 = arith.divf %1052, %1053 : vector<2x64xf32>
    %1055 = vector.extract_strided_slice %1048 {offsets = [0, 64], sizes = [2, 64], strides = [1, 1]} : vector<2x256xf32> to vector<2x64xf32>
    %1056 = arith.negf %1055 : vector<2x64xf32>
    %1057 = math.exp %1056 : vector<2x64xf32>
    %cst_310 = arith.constant 1.000000e+00 : f32
    %1058 = vector.broadcast %cst_310 : f32 to vector<2x64xf32>
    %1059 = arith.addf %1058, %1057 : vector<2x64xf32>
    %1060 = arith.divf %1058, %1059 : vector<2x64xf32>
    %1061 = vector.extract_strided_slice %1048 {offsets = [0, 128], sizes = [2, 64], strides = [1, 1]} : vector<2x256xf32> to vector<2x64xf32>
    %1062 = math.tanh %1061 : vector<2x64xf32>
    %1063 = vector.extract_strided_slice %1048 {offsets = [0, 192], sizes = [2, 64], strides = [1, 1]} : vector<2x256xf32> to vector<2x64xf32>
    %1064 = arith.negf %1063 : vector<2x64xf32>
    %1065 = math.exp %1064 : vector<2x64xf32>
    %cst_311 = arith.constant 1.000000e+00 : f32
    %1066 = vector.broadcast %cst_311 : f32 to vector<2x64xf32>
    %1067 = arith.addf %1066, %1065 : vector<2x64xf32>
    %1068 = arith.divf %1066, %1067 : vector<2x64xf32>
    %1069 = arith.mulf %1060, %885 : vector<2x64xf32>
    %1070 = arith.mulf %1054, %1062 : vector<2x64xf32>
    %1071 = arith.addf %1069, %1070 : vector<2x64xf32>
    %1072 = math.tanh %1071 : vector<2x64xf32>
    %1073 = arith.mulf %1068, %1072 : vector<2x64xf32>
    %c10_312 = arith.constant 10 : index
    %c1024_313 = arith.constant 1024 : index
    %1074 = vector.load %arg9[%c10_312, %c1024_313] : memref<18x1664xf32, #tpu.memory_space<vmem>>, vector<2x256xf32>
    %1075 = arith.truncf %918 : vector<2x64xf32> to vector<2x64xbf16>
    %c4_314 = arith.constant 4 : index
    %c0_315 = arith.constant 0 : index
    %c0_316 = arith.constant 0 : index
    %1076 = vector.load %arg2[%c4_314, %c0_315, %c0_316] : memref<6x64x256xbf16, #tpu.memory_space<vmem>>, vector<1x64x256xbf16>
    %1077 = vector.shape_cast %1076 : vector<1x64x256xbf16> to vector<64x256xbf16>
    %cst_317 = arith.constant dense<0.000000e+00> : vector<2x256xf32>
    %1078 = tpu.matmul %1075, %1077, %cst_317 {dimension_numbers = #tpu.dot_dimension_numbers<[1], [0], [0], [1], [0, 0, 1, 1], [], []>} : vector<2x64xbf16>, vector<64x256xbf16>, vector<2x256xf32> -> vector<2x256xf32>
    %1079 = arith.addf %1074, %1078 : vector<2x256xf32>
    %1080 = vector.extract_strided_slice %1079 {offsets = [0, 0], sizes = [2, 64], strides = [1, 1]} : vector<2x256xf32> to vector<2x64xf32>
    %1081 = arith.negf %1080 : vector<2x64xf32>
    %1082 = math.exp %1081 : vector<2x64xf32>
    %cst_318 = arith.constant 1.000000e+00 : f32
    %1083 = vector.broadcast %cst_318 : f32 to vector<2x64xf32>
    %1084 = arith.addf %1083, %1082 : vector<2x64xf32>
    %1085 = arith.divf %1083, %1084 : vector<2x64xf32>
    %1086 = vector.extract_strided_slice %1079 {offsets = [0, 64], sizes = [2, 64], strides = [1, 1]} : vector<2x256xf32> to vector<2x64xf32>
    %1087 = arith.negf %1086 : vector<2x64xf32>
    %1088 = math.exp %1087 : vector<2x64xf32>
    %cst_319 = arith.constant 1.000000e+00 : f32
    %1089 = vector.broadcast %cst_319 : f32 to vector<2x64xf32>
    %1090 = arith.addf %1089, %1088 : vector<2x64xf32>
    %1091 = arith.divf %1089, %1090 : vector<2x64xf32>
    %1092 = vector.extract_strided_slice %1079 {offsets = [0, 128], sizes = [2, 64], strides = [1, 1]} : vector<2x256xf32> to vector<2x64xf32>
    %1093 = math.tanh %1092 : vector<2x64xf32>
    %1094 = vector.extract_strided_slice %1079 {offsets = [0, 192], sizes = [2, 64], strides = [1, 1]} : vector<2x256xf32> to vector<2x64xf32>
    %1095 = arith.negf %1094 : vector<2x64xf32>
    %1096 = math.exp %1095 : vector<2x64xf32>
    %cst_320 = arith.constant 1.000000e+00 : f32
    %1097 = vector.broadcast %cst_320 : f32 to vector<2x64xf32>
    %1098 = arith.addf %1097, %1096 : vector<2x64xf32>
    %1099 = arith.divf %1097, %1098 : vector<2x64xf32>
    %1100 = arith.mulf %1091, %916 : vector<2x64xf32>
    %1101 = arith.mulf %1085, %1093 : vector<2x64xf32>
    %1102 = arith.addf %1100, %1101 : vector<2x64xf32>
    %1103 = math.tanh %1102 : vector<2x64xf32>
    %1104 = arith.mulf %1099, %1103 : vector<2x64xf32>
    %c10_321 = arith.constant 10 : index
    %c1280_322 = arith.constant 1280 : index
    %1105 = vector.load %arg9[%c10_321, %c1280_322] : memref<18x1664xf32, #tpu.memory_space<vmem>>, vector<2x256xf32>
    %1106 = arith.truncf %949 : vector<2x64xf32> to vector<2x64xbf16>
    %c5_323 = arith.constant 5 : index
    %c0_324 = arith.constant 0 : index
    %c0_325 = arith.constant 0 : index
    %1107 = vector.load %arg2[%c5_323, %c0_324, %c0_325] : memref<6x64x256xbf16, #tpu.memory_space<vmem>>, vector<1x64x256xbf16>
    %1108 = vector.shape_cast %1107 : vector<1x64x256xbf16> to vector<64x256xbf16>
    %cst_326 = arith.constant dense<0.000000e+00> : vector<2x256xf32>
    %1109 = tpu.matmul %1106, %1108, %cst_326 {dimension_numbers = #tpu.dot_dimension_numbers<[1], [0], [0], [1], [0, 0, 1, 1], [], []>} : vector<2x64xbf16>, vector<64x256xbf16>, vector<2x256xf32> -> vector<2x256xf32>
    %1110 = arith.addf %1105, %1109 : vector<2x256xf32>
    %1111 = vector.extract_strided_slice %1110 {offsets = [0, 0], sizes = [2, 64], strides = [1, 1]} : vector<2x256xf32> to vector<2x64xf32>
    %1112 = arith.negf %1111 : vector<2x64xf32>
    %1113 = math.exp %1112 : vector<2x64xf32>
    %cst_327 = arith.constant 1.000000e+00 : f32
    %1114 = vector.broadcast %cst_327 : f32 to vector<2x64xf32>
    %1115 = arith.addf %1114, %1113 : vector<2x64xf32>
    %1116 = arith.divf %1114, %1115 : vector<2x64xf32>
    %1117 = vector.extract_strided_slice %1110 {offsets = [0, 64], sizes = [2, 64], strides = [1, 1]} : vector<2x256xf32> to vector<2x64xf32>
    %1118 = arith.negf %1117 : vector<2x64xf32>
    %1119 = math.exp %1118 : vector<2x64xf32>
    %cst_328 = arith.constant 1.000000e+00 : f32
    %1120 = vector.broadcast %cst_328 : f32 to vector<2x64xf32>
    %1121 = arith.addf %1120, %1119 : vector<2x64xf32>
    %1122 = arith.divf %1120, %1121 : vector<2x64xf32>
    %1123 = vector.extract_strided_slice %1110 {offsets = [0, 128], sizes = [2, 64], strides = [1, 1]} : vector<2x256xf32> to vector<2x64xf32>
    %1124 = math.tanh %1123 : vector<2x64xf32>
    %1125 = vector.extract_strided_slice %1110 {offsets = [0, 192], sizes = [2, 64], strides = [1, 1]} : vector<2x256xf32> to vector<2x64xf32>
    %1126 = arith.negf %1125 : vector<2x64xf32>
    %1127 = math.exp %1126 : vector<2x64xf32>
    %cst_329 = arith.constant 1.000000e+00 : f32
    %1128 = vector.broadcast %cst_329 : f32 to vector<2x64xf32>
    %1129 = arith.addf %1128, %1127 : vector<2x64xf32>
    %1130 = arith.divf %1128, %1129 : vector<2x64xf32>
    %1131 = arith.mulf %1122, %947 : vector<2x64xf32>
    %1132 = arith.mulf %1116, %1124 : vector<2x64xf32>
    %1133 = arith.addf %1131, %1132 : vector<2x64xf32>
    %1134 = math.tanh %1133 : vector<2x64xf32>
    %1135 = arith.mulf %1130, %1134 : vector<2x64xf32>
    %c12 = arith.constant 12 : index
    %c0_330 = arith.constant 0 : index
    %1136 = vector.load %arg9[%c12, %c0_330] : memref<18x1664xf32, #tpu.memory_space<vmem>>, vector<2x256xf32>
    %1137 = arith.truncf %980 : vector<2x64xf32> to vector<2x64xbf16>
    %c0_331 = arith.constant 0 : index
    %c0_332 = arith.constant 0 : index
    %c0_333 = arith.constant 0 : index
    %1138 = vector.load %arg2[%c0_331, %c0_332, %c0_333] : memref<6x64x256xbf16, #tpu.memory_space<vmem>>, vector<1x64x256xbf16>
    %1139 = vector.shape_cast %1138 : vector<1x64x256xbf16> to vector<64x256xbf16>
    %cst_334 = arith.constant dense<0.000000e+00> : vector<2x256xf32>
    %1140 = tpu.matmul %1137, %1139, %cst_334 {dimension_numbers = #tpu.dot_dimension_numbers<[1], [0], [0], [1], [0, 0, 1, 1], [], []>} : vector<2x64xbf16>, vector<64x256xbf16>, vector<2x256xf32> -> vector<2x256xf32>
    %1141 = arith.addf %1136, %1140 : vector<2x256xf32>
    %1142 = vector.extract_strided_slice %1141 {offsets = [0, 0], sizes = [2, 64], strides = [1, 1]} : vector<2x256xf32> to vector<2x64xf32>
    %1143 = arith.negf %1142 : vector<2x64xf32>
    %1144 = math.exp %1143 : vector<2x64xf32>
    %cst_335 = arith.constant 1.000000e+00 : f32
    %1145 = vector.broadcast %cst_335 : f32 to vector<2x64xf32>
    %1146 = arith.addf %1145, %1144 : vector<2x64xf32>
    %1147 = arith.divf %1145, %1146 : vector<2x64xf32>
    %1148 = vector.extract_strided_slice %1141 {offsets = [0, 64], sizes = [2, 64], strides = [1, 1]} : vector<2x256xf32> to vector<2x64xf32>
    %1149 = arith.negf %1148 : vector<2x64xf32>
    %1150 = math.exp %1149 : vector<2x64xf32>
    %cst_336 = arith.constant 1.000000e+00 : f32
    %1151 = vector.broadcast %cst_336 : f32 to vector<2x64xf32>
    %1152 = arith.addf %1151, %1150 : vector<2x64xf32>
    %1153 = arith.divf %1151, %1152 : vector<2x64xf32>
    %1154 = vector.extract_strided_slice %1141 {offsets = [0, 128], sizes = [2, 64], strides = [1, 1]} : vector<2x256xf32> to vector<2x64xf32>
    %1155 = math.tanh %1154 : vector<2x64xf32>
    %1156 = vector.extract_strided_slice %1141 {offsets = [0, 192], sizes = [2, 64], strides = [1, 1]} : vector<2x256xf32> to vector<2x64xf32>
    %1157 = arith.negf %1156 : vector<2x64xf32>
    %1158 = math.exp %1157 : vector<2x64xf32>
    %cst_337 = arith.constant 1.000000e+00 : f32
    %1159 = vector.broadcast %cst_337 : f32 to vector<2x64xf32>
    %1160 = arith.addf %1159, %1158 : vector<2x64xf32>
    %1161 = arith.divf %1159, %1160 : vector<2x64xf32>
    %1162 = arith.mulf %1153, %978 : vector<2x64xf32>
    %1163 = arith.mulf %1147, %1155 : vector<2x64xf32>
    %1164 = arith.addf %1162, %1163 : vector<2x64xf32>
    %1165 = math.tanh %1164 : vector<2x64xf32>
    %1166 = arith.mulf %1161, %1165 : vector<2x64xf32>
    %c12_338 = arith.constant 12 : index
    %c256_339 = arith.constant 256 : index
    %1167 = vector.load %arg9[%c12_338, %c256_339] : memref<18x1664xf32, #tpu.memory_space<vmem>>, vector<2x256xf32>
    %1168 = arith.truncf %1011 : vector<2x64xf32> to vector<2x64xbf16>
    %c1_340 = arith.constant 1 : index
    %c0_341 = arith.constant 0 : index
    %c0_342 = arith.constant 0 : index
    %1169 = vector.load %arg2[%c1_340, %c0_341, %c0_342] : memref<6x64x256xbf16, #tpu.memory_space<vmem>>, vector<1x64x256xbf16>
    %1170 = vector.shape_cast %1169 : vector<1x64x256xbf16> to vector<64x256xbf16>
    %cst_343 = arith.constant dense<0.000000e+00> : vector<2x256xf32>
    %1171 = tpu.matmul %1168, %1170, %cst_343 {dimension_numbers = #tpu.dot_dimension_numbers<[1], [0], [0], [1], [0, 0, 1, 1], [], []>} : vector<2x64xbf16>, vector<64x256xbf16>, vector<2x256xf32> -> vector<2x256xf32>
    %1172 = arith.addf %1167, %1171 : vector<2x256xf32>
    %1173 = vector.extract_strided_slice %1172 {offsets = [0, 0], sizes = [2, 64], strides = [1, 1]} : vector<2x256xf32> to vector<2x64xf32>
    %1174 = arith.negf %1173 : vector<2x64xf32>
    %1175 = math.exp %1174 : vector<2x64xf32>
    %cst_344 = arith.constant 1.000000e+00 : f32
    %1176 = vector.broadcast %cst_344 : f32 to vector<2x64xf32>
    %1177 = arith.addf %1176, %1175 : vector<2x64xf32>
    %1178 = arith.divf %1176, %1177 : vector<2x64xf32>
    %1179 = vector.extract_strided_slice %1172 {offsets = [0, 64], sizes = [2, 64], strides = [1, 1]} : vector<2x256xf32> to vector<2x64xf32>
    %1180 = arith.negf %1179 : vector<2x64xf32>
    %1181 = math.exp %1180 : vector<2x64xf32>
    %cst_345 = arith.constant 1.000000e+00 : f32
    %1182 = vector.broadcast %cst_345 : f32 to vector<2x64xf32>
    %1183 = arith.addf %1182, %1181 : vector<2x64xf32>
    %1184 = arith.divf %1182, %1183 : vector<2x64xf32>
    %1185 = vector.extract_strided_slice %1172 {offsets = [0, 128], sizes = [2, 64], strides = [1, 1]} : vector<2x256xf32> to vector<2x64xf32>
    %1186 = math.tanh %1185 : vector<2x64xf32>
    %1187 = vector.extract_strided_slice %1172 {offsets = [0, 192], sizes = [2, 64], strides = [1, 1]} : vector<2x256xf32> to vector<2x64xf32>
    %1188 = arith.negf %1187 : vector<2x64xf32>
    %1189 = math.exp %1188 : vector<2x64xf32>
    %cst_346 = arith.constant 1.000000e+00 : f32
    %1190 = vector.broadcast %cst_346 : f32 to vector<2x64xf32>
    %1191 = arith.addf %1190, %1189 : vector<2x64xf32>
    %1192 = arith.divf %1190, %1191 : vector<2x64xf32>
    %1193 = arith.mulf %1184, %1009 : vector<2x64xf32>
    %1194 = arith.mulf %1178, %1186 : vector<2x64xf32>
    %1195 = arith.addf %1193, %1194 : vector<2x64xf32>
    %1196 = math.tanh %1195 : vector<2x64xf32>
    %1197 = arith.mulf %1192, %1196 : vector<2x64xf32>
    %c12_347 = arith.constant 12 : index
    %c512_348 = arith.constant 512 : index
    %1198 = vector.load %arg9[%c12_347, %c512_348] : memref<18x1664xf32, #tpu.memory_space<vmem>>, vector<2x256xf32>
    %1199 = arith.truncf %1042 : vector<2x64xf32> to vector<2x64xbf16>
    %c2_349 = arith.constant 2 : index
    %c0_350 = arith.constant 0 : index
    %c0_351 = arith.constant 0 : index
    %1200 = vector.load %arg2[%c2_349, %c0_350, %c0_351] : memref<6x64x256xbf16, #tpu.memory_space<vmem>>, vector<1x64x256xbf16>
    %1201 = vector.shape_cast %1200 : vector<1x64x256xbf16> to vector<64x256xbf16>
    %cst_352 = arith.constant dense<0.000000e+00> : vector<2x256xf32>
    %1202 = tpu.matmul %1199, %1201, %cst_352 {dimension_numbers = #tpu.dot_dimension_numbers<[1], [0], [0], [1], [0, 0, 1, 1], [], []>} : vector<2x64xbf16>, vector<64x256xbf16>, vector<2x256xf32> -> vector<2x256xf32>
    %1203 = arith.addf %1198, %1202 : vector<2x256xf32>
    %1204 = vector.extract_strided_slice %1203 {offsets = [0, 0], sizes = [2, 64], strides = [1, 1]} : vector<2x256xf32> to vector<2x64xf32>
    %1205 = arith.negf %1204 : vector<2x64xf32>
    %1206 = math.exp %1205 : vector<2x64xf32>
    %cst_353 = arith.constant 1.000000e+00 : f32
    %1207 = vector.broadcast %cst_353 : f32 to vector<2x64xf32>
    %1208 = arith.addf %1207, %1206 : vector<2x64xf32>
    %1209 = arith.divf %1207, %1208 : vector<2x64xf32>
    %1210 = vector.extract_strided_slice %1203 {offsets = [0, 64], sizes = [2, 64], strides = [1, 1]} : vector<2x256xf32> to vector<2x64xf32>
    %1211 = arith.negf %1210 : vector<2x64xf32>
    %1212 = math.exp %1211 : vector<2x64xf32>
    %cst_354 = arith.constant 1.000000e+00 : f32
    %1213 = vector.broadcast %cst_354 : f32 to vector<2x64xf32>
    %1214 = arith.addf %1213, %1212 : vector<2x64xf32>
    %1215 = arith.divf %1213, %1214 : vector<2x64xf32>
    %1216 = vector.extract_strided_slice %1203 {offsets = [0, 128], sizes = [2, 64], strides = [1, 1]} : vector<2x256xf32> to vector<2x64xf32>
    %1217 = math.tanh %1216 : vector<2x64xf32>
    %1218 = vector.extract_strided_slice %1203 {offsets = [0, 192], sizes = [2, 64], strides = [1, 1]} : vector<2x256xf32> to vector<2x64xf32>
    %1219 = arith.negf %1218 : vector<2x64xf32>
    %1220 = math.exp %1219 : vector<2x64xf32>
    %cst_355 = arith.constant 1.000000e+00 : f32
    %1221 = vector.broadcast %cst_355 : f32 to vector<2x64xf32>
    %1222 = arith.addf %1221, %1220 : vector<2x64xf32>
    %1223 = arith.divf %1221, %1222 : vector<2x64xf32>
    %1224 = arith.mulf %1215, %1040 : vector<2x64xf32>
    %1225 = arith.mulf %1209, %1217 : vector<2x64xf32>
    %1226 = arith.addf %1224, %1225 : vector<2x64xf32>
    %1227 = math.tanh %1226 : vector<2x64xf32>
    %1228 = arith.mulf %1223, %1227 : vector<2x64xf32>
    %c12_356 = arith.constant 12 : index
    %c768_357 = arith.constant 768 : index
    %1229 = vector.load %arg9[%c12_356, %c768_357] : memref<18x1664xf32, #tpu.memory_space<vmem>>, vector<2x256xf32>
    %1230 = arith.truncf %1073 : vector<2x64xf32> to vector<2x64xbf16>
    %c3_358 = arith.constant 3 : index
    %c0_359 = arith.constant 0 : index
    %c0_360 = arith.constant 0 : index
    %1231 = vector.load %arg2[%c3_358, %c0_359, %c0_360] : memref<6x64x256xbf16, #tpu.memory_space<vmem>>, vector<1x64x256xbf16>
    %1232 = vector.shape_cast %1231 : vector<1x64x256xbf16> to vector<64x256xbf16>
    %cst_361 = arith.constant dense<0.000000e+00> : vector<2x256xf32>
    %1233 = tpu.matmul %1230, %1232, %cst_361 {dimension_numbers = #tpu.dot_dimension_numbers<[1], [0], [0], [1], [0, 0, 1, 1], [], []>} : vector<2x64xbf16>, vector<64x256xbf16>, vector<2x256xf32> -> vector<2x256xf32>
    %1234 = arith.addf %1229, %1233 : vector<2x256xf32>
    %1235 = vector.extract_strided_slice %1234 {offsets = [0, 0], sizes = [2, 64], strides = [1, 1]} : vector<2x256xf32> to vector<2x64xf32>
    %1236 = arith.negf %1235 : vector<2x64xf32>
    %1237 = math.exp %1236 : vector<2x64xf32>
    %cst_362 = arith.constant 1.000000e+00 : f32
    %1238 = vector.broadcast %cst_362 : f32 to vector<2x64xf32>
    %1239 = arith.addf %1238, %1237 : vector<2x64xf32>
    %1240 = arith.divf %1238, %1239 : vector<2x64xf32>
    %1241 = vector.extract_strided_slice %1234 {offsets = [0, 64], sizes = [2, 64], strides = [1, 1]} : vector<2x256xf32> to vector<2x64xf32>
    %1242 = arith.negf %1241 : vector<2x64xf32>
    %1243 = math.exp %1242 : vector<2x64xf32>
    %cst_363 = arith.constant 1.000000e+00 : f32
    %1244 = vector.broadcast %cst_363 : f32 to vector<2x64xf32>
    %1245 = arith.addf %1244, %1243 : vector<2x64xf32>
    %1246 = arith.divf %1244, %1245 : vector<2x64xf32>
    %1247 = vector.extract_strided_slice %1234 {offsets = [0, 128], sizes = [2, 64], strides = [1, 1]} : vector<2x256xf32> to vector<2x64xf32>
    %1248 = math.tanh %1247 : vector<2x64xf32>
    %1249 = vector.extract_strided_slice %1234 {offsets = [0, 192], sizes = [2, 64], strides = [1, 1]} : vector<2x256xf32> to vector<2x64xf32>
    %1250 = arith.negf %1249 : vector<2x64xf32>
    %1251 = math.exp %1250 : vector<2x64xf32>
    %cst_364 = arith.constant 1.000000e+00 : f32
    %1252 = vector.broadcast %cst_364 : f32 to vector<2x64xf32>
    %1253 = arith.addf %1252, %1251 : vector<2x64xf32>
    %1254 = arith.divf %1252, %1253 : vector<2x64xf32>
    %1255 = arith.mulf %1246, %1071 : vector<2x64xf32>
    %1256 = arith.mulf %1240, %1248 : vector<2x64xf32>
    %1257 = arith.addf %1255, %1256 : vector<2x64xf32>
    %1258 = math.tanh %1257 : vector<2x64xf32>
    %1259 = arith.mulf %1254, %1258 : vector<2x64xf32>
    %c12_365 = arith.constant 12 : index
    %c1024_366 = arith.constant 1024 : index
    %1260 = vector.load %arg9[%c12_365, %c1024_366] : memref<18x1664xf32, #tpu.memory_space<vmem>>, vector<2x256xf32>
    %1261 = arith.truncf %1104 : vector<2x64xf32> to vector<2x64xbf16>
    %c4_367 = arith.constant 4 : index
    %c0_368 = arith.constant 0 : index
    %c0_369 = arith.constant 0 : index
    %1262 = vector.load %arg2[%c4_367, %c0_368, %c0_369] : memref<6x64x256xbf16, #tpu.memory_space<vmem>>, vector<1x64x256xbf16>
    %1263 = vector.shape_cast %1262 : vector<1x64x256xbf16> to vector<64x256xbf16>
    %cst_370 = arith.constant dense<0.000000e+00> : vector<2x256xf32>
    %1264 = tpu.matmul %1261, %1263, %cst_370 {dimension_numbers = #tpu.dot_dimension_numbers<[1], [0], [0], [1], [0, 0, 1, 1], [], []>} : vector<2x64xbf16>, vector<64x256xbf16>, vector<2x256xf32> -> vector<2x256xf32>
    %1265 = arith.addf %1260, %1264 : vector<2x256xf32>
    %1266 = vector.extract_strided_slice %1265 {offsets = [0, 0], sizes = [2, 64], strides = [1, 1]} : vector<2x256xf32> to vector<2x64xf32>
    %1267 = arith.negf %1266 : vector<2x64xf32>
    %1268 = math.exp %1267 : vector<2x64xf32>
    %cst_371 = arith.constant 1.000000e+00 : f32
    %1269 = vector.broadcast %cst_371 : f32 to vector<2x64xf32>
    %1270 = arith.addf %1269, %1268 : vector<2x64xf32>
    %1271 = arith.divf %1269, %1270 : vector<2x64xf32>
    %1272 = vector.extract_strided_slice %1265 {offsets = [0, 64], sizes = [2, 64], strides = [1, 1]} : vector<2x256xf32> to vector<2x64xf32>
    %1273 = arith.negf %1272 : vector<2x64xf32>
    %1274 = math.exp %1273 : vector<2x64xf32>
    %cst_372 = arith.constant 1.000000e+00 : f32
    %1275 = vector.broadcast %cst_372 : f32 to vector<2x64xf32>
    %1276 = arith.addf %1275, %1274 : vector<2x64xf32>
    %1277 = arith.divf %1275, %1276 : vector<2x64xf32>
    %1278 = vector.extract_strided_slice %1265 {offsets = [0, 128], sizes = [2, 64], strides = [1, 1]} : vector<2x256xf32> to vector<2x64xf32>
    %1279 = math.tanh %1278 : vector<2x64xf32>
    %1280 = vector.extract_strided_slice %1265 {offsets = [0, 192], sizes = [2, 64], strides = [1, 1]} : vector<2x256xf32> to vector<2x64xf32>
    %1281 = arith.negf %1280 : vector<2x64xf32>
    %1282 = math.exp %1281 : vector<2x64xf32>
    %cst_373 = arith.constant 1.000000e+00 : f32
    %1283 = vector.broadcast %cst_373 : f32 to vector<2x64xf32>
    %1284 = arith.addf %1283, %1282 : vector<2x64xf32>
    %1285 = arith.divf %1283, %1284 : vector<2x64xf32>
    %1286 = arith.mulf %1277, %1102 : vector<2x64xf32>
    %1287 = arith.mulf %1271, %1279 : vector<2x64xf32>
    %1288 = arith.addf %1286, %1287 : vector<2x64xf32>
    %1289 = math.tanh %1288 : vector<2x64xf32>
    %1290 = arith.mulf %1285, %1289 : vector<2x64xf32>
    %c12_374 = arith.constant 12 : index
    %c1280_375 = arith.constant 1280 : index
    %1291 = vector.load %arg9[%c12_374, %c1280_375] : memref<18x1664xf32, #tpu.memory_space<vmem>>, vector<2x256xf32>
    %1292 = arith.truncf %1135 : vector<2x64xf32> to vector<2x64xbf16>
    %c5_376 = arith.constant 5 : index
    %c0_377 = arith.constant 0 : index
    %c0_378 = arith.constant 0 : index
    %1293 = vector.load %arg2[%c5_376, %c0_377, %c0_378] : memref<6x64x256xbf16, #tpu.memory_space<vmem>>, vector<1x64x256xbf16>
    %1294 = vector.shape_cast %1293 : vector<1x64x256xbf16> to vector<64x256xbf16>
    %cst_379 = arith.constant dense<0.000000e+00> : vector<2x256xf32>
    %1295 = tpu.matmul %1292, %1294, %cst_379 {dimension_numbers = #tpu.dot_dimension_numbers<[1], [0], [0], [1], [0, 0, 1, 1], [], []>} : vector<2x64xbf16>, vector<64x256xbf16>, vector<2x256xf32> -> vector<2x256xf32>
    %1296 = arith.addf %1291, %1295 : vector<2x256xf32>
    %1297 = vector.extract_strided_slice %1296 {offsets = [0, 0], sizes = [2, 64], strides = [1, 1]} : vector<2x256xf32> to vector<2x64xf32>
    %1298 = arith.negf %1297 : vector<2x64xf32>
    %1299 = math.exp %1298 : vector<2x64xf32>
    %cst_380 = arith.constant 1.000000e+00 : f32
    %1300 = vector.broadcast %cst_380 : f32 to vector<2x64xf32>
    %1301 = arith.addf %1300, %1299 : vector<2x64xf32>
    %1302 = arith.divf %1300, %1301 : vector<2x64xf32>
    %1303 = vector.extract_strided_slice %1296 {offsets = [0, 64], sizes = [2, 64], strides = [1, 1]} : vector<2x256xf32> to vector<2x64xf32>
    %1304 = arith.negf %1303 : vector<2x64xf32>
    %1305 = math.exp %1304 : vector<2x64xf32>
    %cst_381 = arith.constant 1.000000e+00 : f32
    %1306 = vector.broadcast %cst_381 : f32 to vector<2x64xf32>
    %1307 = arith.addf %1306, %1305 : vector<2x64xf32>
    %1308 = arith.divf %1306, %1307 : vector<2x64xf32>
    %1309 = vector.extract_strided_slice %1296 {offsets = [0, 128], sizes = [2, 64], strides = [1, 1]} : vector<2x256xf32> to vector<2x64xf32>
    %1310 = math.tanh %1309 : vector<2x64xf32>
    %1311 = vector.extract_strided_slice %1296 {offsets = [0, 192], sizes = [2, 64], strides = [1, 1]} : vector<2x256xf32> to vector<2x64xf32>
    %1312 = arith.negf %1311 : vector<2x64xf32>
    %1313 = math.exp %1312 : vector<2x64xf32>
    %cst_382 = arith.constant 1.000000e+00 : f32
    %1314 = vector.broadcast %cst_382 : f32 to vector<2x64xf32>
    %1315 = arith.addf %1314, %1313 : vector<2x64xf32>
    %1316 = arith.divf %1314, %1315 : vector<2x64xf32>
    %1317 = arith.mulf %1308, %1133 : vector<2x64xf32>
    %1318 = arith.mulf %1302, %1310 : vector<2x64xf32>
    %1319 = arith.addf %1317, %1318 : vector<2x64xf32>
    %1320 = math.tanh %1319 : vector<2x64xf32>
    %1321 = arith.mulf %1316, %1320 : vector<2x64xf32>
    %c14 = arith.constant 14 : index
    %c0_383 = arith.constant 0 : index
    %1322 = vector.load %arg9[%c14, %c0_383] : memref<18x1664xf32, #tpu.memory_space<vmem>>, vector<2x256xf32>
    %1323 = arith.truncf %1166 : vector<2x64xf32> to vector<2x64xbf16>
    %c0_384 = arith.constant 0 : index
    %c0_385 = arith.constant 0 : index
    %c0_386 = arith.constant 0 : index
    %1324 = vector.load %arg2[%c0_384, %c0_385, %c0_386] : memref<6x64x256xbf16, #tpu.memory_space<vmem>>, vector<1x64x256xbf16>
    %1325 = vector.shape_cast %1324 : vector<1x64x256xbf16> to vector<64x256xbf16>
    %cst_387 = arith.constant dense<0.000000e+00> : vector<2x256xf32>
    %1326 = tpu.matmul %1323, %1325, %cst_387 {dimension_numbers = #tpu.dot_dimension_numbers<[1], [0], [0], [1], [0, 0, 1, 1], [], []>} : vector<2x64xbf16>, vector<64x256xbf16>, vector<2x256xf32> -> vector<2x256xf32>
    %1327 = arith.addf %1322, %1326 : vector<2x256xf32>
    %1328 = vector.extract_strided_slice %1327 {offsets = [0, 0], sizes = [2, 64], strides = [1, 1]} : vector<2x256xf32> to vector<2x64xf32>
    %1329 = arith.negf %1328 : vector<2x64xf32>
    %1330 = math.exp %1329 : vector<2x64xf32>
    %cst_388 = arith.constant 1.000000e+00 : f32
    %1331 = vector.broadcast %cst_388 : f32 to vector<2x64xf32>
    %1332 = arith.addf %1331, %1330 : vector<2x64xf32>
    %1333 = arith.divf %1331, %1332 : vector<2x64xf32>
    %1334 = vector.extract_strided_slice %1327 {offsets = [0, 64], sizes = [2, 64], strides = [1, 1]} : vector<2x256xf32> to vector<2x64xf32>
    %1335 = arith.negf %1334 : vector<2x64xf32>
    %1336 = math.exp %1335 : vector<2x64xf32>
    %cst_389 = arith.constant 1.000000e+00 : f32
    %1337 = vector.broadcast %cst_389 : f32 to vector<2x64xf32>
    %1338 = arith.addf %1337, %1336 : vector<2x64xf32>
    %1339 = arith.divf %1337, %1338 : vector<2x64xf32>
    %1340 = vector.extract_strided_slice %1327 {offsets = [0, 128], sizes = [2, 64], strides = [1, 1]} : vector<2x256xf32> to vector<2x64xf32>
    %1341 = math.tanh %1340 : vector<2x64xf32>
    %1342 = vector.extract_strided_slice %1327 {offsets = [0, 192], sizes = [2, 64], strides = [1, 1]} : vector<2x256xf32> to vector<2x64xf32>
    %1343 = arith.negf %1342 : vector<2x64xf32>
    %1344 = math.exp %1343 : vector<2x64xf32>
    %cst_390 = arith.constant 1.000000e+00 : f32
    %1345 = vector.broadcast %cst_390 : f32 to vector<2x64xf32>
    %1346 = arith.addf %1345, %1344 : vector<2x64xf32>
    %1347 = arith.divf %1345, %1346 : vector<2x64xf32>
    %1348 = arith.mulf %1339, %1164 : vector<2x64xf32>
    %1349 = arith.mulf %1333, %1341 : vector<2x64xf32>
    %1350 = arith.addf %1348, %1349 : vector<2x64xf32>
    %1351 = math.tanh %1350 : vector<2x64xf32>
    %1352 = arith.mulf %1347, %1351 : vector<2x64xf32>
    %c14_391 = arith.constant 14 : index
    %c256_392 = arith.constant 256 : index
    %1353 = vector.load %arg9[%c14_391, %c256_392] : memref<18x1664xf32, #tpu.memory_space<vmem>>, vector<2x256xf32>
    %1354 = arith.truncf %1197 : vector<2x64xf32> to vector<2x64xbf16>
    %c1_393 = arith.constant 1 : index
    %c0_394 = arith.constant 0 : index
    %c0_395 = arith.constant 0 : index
    %1355 = vector.load %arg2[%c1_393, %c0_394, %c0_395] : memref<6x64x256xbf16, #tpu.memory_space<vmem>>, vector<1x64x256xbf16>
    %1356 = vector.shape_cast %1355 : vector<1x64x256xbf16> to vector<64x256xbf16>
    %cst_396 = arith.constant dense<0.000000e+00> : vector<2x256xf32>
    %1357 = tpu.matmul %1354, %1356, %cst_396 {dimension_numbers = #tpu.dot_dimension_numbers<[1], [0], [0], [1], [0, 0, 1, 1], [], []>} : vector<2x64xbf16>, vector<64x256xbf16>, vector<2x256xf32> -> vector<2x256xf32>
    %1358 = arith.addf %1353, %1357 : vector<2x256xf32>
    %1359 = vector.extract_strided_slice %1358 {offsets = [0, 0], sizes = [2, 64], strides = [1, 1]} : vector<2x256xf32> to vector<2x64xf32>
    %1360 = arith.negf %1359 : vector<2x64xf32>
    %1361 = math.exp %1360 : vector<2x64xf32>
    %cst_397 = arith.constant 1.000000e+00 : f32
    %1362 = vector.broadcast %cst_397 : f32 to vector<2x64xf32>
    %1363 = arith.addf %1362, %1361 : vector<2x64xf32>
    %1364 = arith.divf %1362, %1363 : vector<2x64xf32>
    %1365 = vector.extract_strided_slice %1358 {offsets = [0, 64], sizes = [2, 64], strides = [1, 1]} : vector<2x256xf32> to vector<2x64xf32>
    %1366 = arith.negf %1365 : vector<2x64xf32>
    %1367 = math.exp %1366 : vector<2x64xf32>
    %cst_398 = arith.constant 1.000000e+00 : f32
    %1368 = vector.broadcast %cst_398 : f32 to vector<2x64xf32>
    %1369 = arith.addf %1368, %1367 : vector<2x64xf32>
    %1370 = arith.divf %1368, %1369 : vector<2x64xf32>
    %1371 = vector.extract_strided_slice %1358 {offsets = [0, 128], sizes = [2, 64], strides = [1, 1]} : vector<2x256xf32> to vector<2x64xf32>
    %1372 = math.tanh %1371 : vector<2x64xf32>
    %1373 = vector.extract_strided_slice %1358 {offsets = [0, 192], sizes = [2, 64], strides = [1, 1]} : vector<2x256xf32> to vector<2x64xf32>
    %1374 = arith.negf %1373 : vector<2x64xf32>
    %1375 = math.exp %1374 : vector<2x64xf32>
    %cst_399 = arith.constant 1.000000e+00 : f32
    %1376 = vector.broadcast %cst_399 : f32 to vector<2x64xf32>
    %1377 = arith.addf %1376, %1375 : vector<2x64xf32>
    %1378 = arith.divf %1376, %1377 : vector<2x64xf32>
    %1379 = arith.mulf %1370, %1195 : vector<2x64xf32>
    %1380 = arith.mulf %1364, %1372 : vector<2x64xf32>
    %1381 = arith.addf %1379, %1380 : vector<2x64xf32>
    %1382 = math.tanh %1381 : vector<2x64xf32>
    %1383 = arith.mulf %1378, %1382 : vector<2x64xf32>
    %c14_400 = arith.constant 14 : index
    %c512_401 = arith.constant 512 : index
    %1384 = vector.load %arg9[%c14_400, %c512_401] : memref<18x1664xf32, #tpu.memory_space<vmem>>, vector<2x256xf32>
    %1385 = arith.truncf %1228 : vector<2x64xf32> to vector<2x64xbf16>
    %c2_402 = arith.constant 2 : index
    %c0_403 = arith.constant 0 : index
    %c0_404 = arith.constant 0 : index
    %1386 = vector.load %arg2[%c2_402, %c0_403, %c0_404] : memref<6x64x256xbf16, #tpu.memory_space<vmem>>, vector<1x64x256xbf16>
    %1387 = vector.shape_cast %1386 : vector<1x64x256xbf16> to vector<64x256xbf16>
    %cst_405 = arith.constant dense<0.000000e+00> : vector<2x256xf32>
    %1388 = tpu.matmul %1385, %1387, %cst_405 {dimension_numbers = #tpu.dot_dimension_numbers<[1], [0], [0], [1], [0, 0, 1, 1], [], []>} : vector<2x64xbf16>, vector<64x256xbf16>, vector<2x256xf32> -> vector<2x256xf32>
    %1389 = arith.addf %1384, %1388 : vector<2x256xf32>
    %1390 = vector.extract_strided_slice %1389 {offsets = [0, 0], sizes = [2, 64], strides = [1, 1]} : vector<2x256xf32> to vector<2x64xf32>
    %1391 = arith.negf %1390 : vector<2x64xf32>
    %1392 = math.exp %1391 : vector<2x64xf32>
    %cst_406 = arith.constant 1.000000e+00 : f32
    %1393 = vector.broadcast %cst_406 : f32 to vector<2x64xf32>
    %1394 = arith.addf %1393, %1392 : vector<2x64xf32>
    %1395 = arith.divf %1393, %1394 : vector<2x64xf32>
    %1396 = vector.extract_strided_slice %1389 {offsets = [0, 64], sizes = [2, 64], strides = [1, 1]} : vector<2x256xf32> to vector<2x64xf32>
    %1397 = arith.negf %1396 : vector<2x64xf32>
    %1398 = math.exp %1397 : vector<2x64xf32>
    %cst_407 = arith.constant 1.000000e+00 : f32
    %1399 = vector.broadcast %cst_407 : f32 to vector<2x64xf32>
    %1400 = arith.addf %1399, %1398 : vector<2x64xf32>
    %1401 = arith.divf %1399, %1400 : vector<2x64xf32>
    %1402 = vector.extract_strided_slice %1389 {offsets = [0, 128], sizes = [2, 64], strides = [1, 1]} : vector<2x256xf32> to vector<2x64xf32>
    %1403 = math.tanh %1402 : vector<2x64xf32>
    %1404 = vector.extract_strided_slice %1389 {offsets = [0, 192], sizes = [2, 64], strides = [1, 1]} : vector<2x256xf32> to vector<2x64xf32>
    %1405 = arith.negf %1404 : vector<2x64xf32>
    %1406 = math.exp %1405 : vector<2x64xf32>
    %cst_408 = arith.constant 1.000000e+00 : f32
    %1407 = vector.broadcast %cst_408 : f32 to vector<2x64xf32>
    %1408 = arith.addf %1407, %1406 : vector<2x64xf32>
    %1409 = arith.divf %1407, %1408 : vector<2x64xf32>
    %1410 = arith.mulf %1401, %1226 : vector<2x64xf32>
    %1411 = arith.mulf %1395, %1403 : vector<2x64xf32>
    %1412 = arith.addf %1410, %1411 : vector<2x64xf32>
    %1413 = math.tanh %1412 : vector<2x64xf32>
    %1414 = arith.mulf %1409, %1413 : vector<2x64xf32>
    %c14_409 = arith.constant 14 : index
    %c768_410 = arith.constant 768 : index
    %1415 = vector.load %arg9[%c14_409, %c768_410] : memref<18x1664xf32, #tpu.memory_space<vmem>>, vector<2x256xf32>
    %1416 = arith.truncf %1259 : vector<2x64xf32> to vector<2x64xbf16>
    %c3_411 = arith.constant 3 : index
    %c0_412 = arith.constant 0 : index
    %c0_413 = arith.constant 0 : index
    %1417 = vector.load %arg2[%c3_411, %c0_412, %c0_413] : memref<6x64x256xbf16, #tpu.memory_space<vmem>>, vector<1x64x256xbf16>
    %1418 = vector.shape_cast %1417 : vector<1x64x256xbf16> to vector<64x256xbf16>
    %cst_414 = arith.constant dense<0.000000e+00> : vector<2x256xf32>
    %1419 = tpu.matmul %1416, %1418, %cst_414 {dimension_numbers = #tpu.dot_dimension_numbers<[1], [0], [0], [1], [0, 0, 1, 1], [], []>} : vector<2x64xbf16>, vector<64x256xbf16>, vector<2x256xf32> -> vector<2x256xf32>
    %1420 = arith.addf %1415, %1419 : vector<2x256xf32>
    %1421 = vector.extract_strided_slice %1420 {offsets = [0, 0], sizes = [2, 64], strides = [1, 1]} : vector<2x256xf32> to vector<2x64xf32>
    %1422 = arith.negf %1421 : vector<2x64xf32>
    %1423 = math.exp %1422 : vector<2x64xf32>
    %cst_415 = arith.constant 1.000000e+00 : f32
    %1424 = vector.broadcast %cst_415 : f32 to vector<2x64xf32>
    %1425 = arith.addf %1424, %1423 : vector<2x64xf32>
    %1426 = arith.divf %1424, %1425 : vector<2x64xf32>
    %1427 = vector.extract_strided_slice %1420 {offsets = [0, 64], sizes = [2, 64], strides = [1, 1]} : vector<2x256xf32> to vector<2x64xf32>
    %1428 = arith.negf %1427 : vector<2x64xf32>
    %1429 = math.exp %1428 : vector<2x64xf32>
    %cst_416 = arith.constant 1.000000e+00 : f32
    %1430 = vector.broadcast %cst_416 : f32 to vector<2x64xf32>
    %1431 = arith.addf %1430, %1429 : vector<2x64xf32>
    %1432 = arith.divf %1430, %1431 : vector<2x64xf32>
    %1433 = vector.extract_strided_slice %1420 {offsets = [0, 128], sizes = [2, 64], strides = [1, 1]} : vector<2x256xf32> to vector<2x64xf32>
    %1434 = math.tanh %1433 : vector<2x64xf32>
    %1435 = vector.extract_strided_slice %1420 {offsets = [0, 192], sizes = [2, 64], strides = [1, 1]} : vector<2x256xf32> to vector<2x64xf32>
    %1436 = arith.negf %1435 : vector<2x64xf32>
    %1437 = math.exp %1436 : vector<2x64xf32>
    %cst_417 = arith.constant 1.000000e+00 : f32
    %1438 = vector.broadcast %cst_417 : f32 to vector<2x64xf32>
    %1439 = arith.addf %1438, %1437 : vector<2x64xf32>
    %1440 = arith.divf %1438, %1439 : vector<2x64xf32>
    %1441 = arith.mulf %1432, %1257 : vector<2x64xf32>
    %1442 = arith.mulf %1426, %1434 : vector<2x64xf32>
    %1443 = arith.addf %1441, %1442 : vector<2x64xf32>
    %1444 = math.tanh %1443 : vector<2x64xf32>
    %1445 = arith.mulf %1440, %1444 : vector<2x64xf32>
    %c14_418 = arith.constant 14 : index
    %c1024_419 = arith.constant 1024 : index
    %1446 = vector.load %arg9[%c14_418, %c1024_419] : memref<18x1664xf32, #tpu.memory_space<vmem>>, vector<2x256xf32>
    %1447 = arith.truncf %1290 : vector<2x64xf32> to vector<2x64xbf16>
    %c4_420 = arith.constant 4 : index
    %c0_421 = arith.constant 0 : index
    %c0_422 = arith.constant 0 : index
    %1448 = vector.load %arg2[%c4_420, %c0_421, %c0_422] : memref<6x64x256xbf16, #tpu.memory_space<vmem>>, vector<1x64x256xbf16>
    %1449 = vector.shape_cast %1448 : vector<1x64x256xbf16> to vector<64x256xbf16>
    %cst_423 = arith.constant dense<0.000000e+00> : vector<2x256xf32>
    %1450 = tpu.matmul %1447, %1449, %cst_423 {dimension_numbers = #tpu.dot_dimension_numbers<[1], [0], [0], [1], [0, 0, 1, 1], [], []>} : vector<2x64xbf16>, vector<64x256xbf16>, vector<2x256xf32> -> vector<2x256xf32>
    %1451 = arith.addf %1446, %1450 : vector<2x256xf32>
    %1452 = vector.extract_strided_slice %1451 {offsets = [0, 0], sizes = [2, 64], strides = [1, 1]} : vector<2x256xf32> to vector<2x64xf32>
    %1453 = arith.negf %1452 : vector<2x64xf32>
    %1454 = math.exp %1453 : vector<2x64xf32>
    %cst_424 = arith.constant 1.000000e+00 : f32
    %1455 = vector.broadcast %cst_424 : f32 to vector<2x64xf32>
    %1456 = arith.addf %1455, %1454 : vector<2x64xf32>
    %1457 = arith.divf %1455, %1456 : vector<2x64xf32>
    %1458 = vector.extract_strided_slice %1451 {offsets = [0, 64], sizes = [2, 64], strides = [1, 1]} : vector<2x256xf32> to vector<2x64xf32>
    %1459 = arith.negf %1458 : vector<2x64xf32>
    %1460 = math.exp %1459 : vector<2x64xf32>
    %cst_425 = arith.constant 1.000000e+00 : f32
    %1461 = vector.broadcast %cst_425 : f32 to vector<2x64xf32>
    %1462 = arith.addf %1461, %1460 : vector<2x64xf32>
    %1463 = arith.divf %1461, %1462 : vector<2x64xf32>
    %1464 = vector.extract_strided_slice %1451 {offsets = [0, 128], sizes = [2, 64], strides = [1, 1]} : vector<2x256xf32> to vector<2x64xf32>
    %1465 = math.tanh %1464 : vector<2x64xf32>
    %1466 = vector.extract_strided_slice %1451 {offsets = [0, 192], sizes = [2, 64], strides = [1, 1]} : vector<2x256xf32> to vector<2x64xf32>
    %1467 = arith.negf %1466 : vector<2x64xf32>
    %1468 = math.exp %1467 : vector<2x64xf32>
    %cst_426 = arith.constant 1.000000e+00 : f32
    %1469 = vector.broadcast %cst_426 : f32 to vector<2x64xf32>
    %1470 = arith.addf %1469, %1468 : vector<2x64xf32>
    %1471 = arith.divf %1469, %1470 : vector<2x64xf32>
    %1472 = arith.mulf %1463, %1288 : vector<2x64xf32>
    %1473 = arith.mulf %1457, %1465 : vector<2x64xf32>
    %1474 = arith.addf %1472, %1473 : vector<2x64xf32>
    %1475 = math.tanh %1474 : vector<2x64xf32>
    %1476 = arith.mulf %1471, %1475 : vector<2x64xf32>
    %c14_427 = arith.constant 14 : index
    %c1280_428 = arith.constant 1280 : index
    %1477 = vector.load %arg9[%c14_427, %c1280_428] : memref<18x1664xf32, #tpu.memory_space<vmem>>, vector<2x256xf32>
    %1478 = arith.truncf %1321 : vector<2x64xf32> to vector<2x64xbf16>
    %c5_429 = arith.constant 5 : index
    %c0_430 = arith.constant 0 : index
    %c0_431 = arith.constant 0 : index
    %1479 = vector.load %arg2[%c5_429, %c0_430, %c0_431] : memref<6x64x256xbf16, #tpu.memory_space<vmem>>, vector<1x64x256xbf16>
    %1480 = vector.shape_cast %1479 : vector<1x64x256xbf16> to vector<64x256xbf16>
    %cst_432 = arith.constant dense<0.000000e+00> : vector<2x256xf32>
    %1481 = tpu.matmul %1478, %1480, %cst_432 {dimension_numbers = #tpu.dot_dimension_numbers<[1], [0], [0], [1], [0, 0, 1, 1], [], []>} : vector<2x64xbf16>, vector<64x256xbf16>, vector<2x256xf32> -> vector<2x256xf32>
    %1482 = arith.addf %1477, %1481 : vector<2x256xf32>
    %1483 = vector.extract_strided_slice %1482 {offsets = [0, 0], sizes = [2, 64], strides = [1, 1]} : vector<2x256xf32> to vector<2x64xf32>
    %1484 = arith.negf %1483 : vector<2x64xf32>
    %1485 = math.exp %1484 : vector<2x64xf32>
    %cst_433 = arith.constant 1.000000e+00 : f32
    %1486 = vector.broadcast %cst_433 : f32 to vector<2x64xf32>
    %1487 = arith.addf %1486, %1485 : vector<2x64xf32>
    %1488 = arith.divf %1486, %1487 : vector<2x64xf32>
    %1489 = vector.extract_strided_slice %1482 {offsets = [0, 64], sizes = [2, 64], strides = [1, 1]} : vector<2x256xf32> to vector<2x64xf32>
    %1490 = arith.negf %1489 : vector<2x64xf32>
    %1491 = math.exp %1490 : vector<2x64xf32>
    %cst_434 = arith.constant 1.000000e+00 : f32
    %1492 = vector.broadcast %cst_434 : f32 to vector<2x64xf32>
    %1493 = arith.addf %1492, %1491 : vector<2x64xf32>
    %1494 = arith.divf %1492, %1493 : vector<2x64xf32>
    %1495 = vector.extract_strided_slice %1482 {offsets = [0, 128], sizes = [2, 64], strides = [1, 1]} : vector<2x256xf32> to vector<2x64xf32>
    %1496 = math.tanh %1495 : vector<2x64xf32>
    %1497 = vector.extract_strided_slice %1482 {offsets = [0, 192], sizes = [2, 64], strides = [1, 1]} : vector<2x256xf32> to vector<2x64xf32>
    %1498 = arith.negf %1497 : vector<2x64xf32>
    %1499 = math.exp %1498 : vector<2x64xf32>
    %cst_435 = arith.constant 1.000000e+00 : f32
    %1500 = vector.broadcast %cst_435 : f32 to vector<2x64xf32>
    %1501 = arith.addf %1500, %1499 : vector<2x64xf32>
    %1502 = arith.divf %1500, %1501 : vector<2x64xf32>
    %1503 = arith.mulf %1494, %1319 : vector<2x64xf32>
    %1504 = arith.mulf %1488, %1496 : vector<2x64xf32>
    %1505 = arith.addf %1503, %1504 : vector<2x64xf32>
    %1506 = math.tanh %1505 : vector<2x64xf32>
    %1507 = arith.mulf %1502, %1506 : vector<2x64xf32>
    %c16 = arith.constant 16 : index
    %c1536 = arith.constant 1536 : index
    %1508 = vector.load %arg9[%c16, %c1536] : memref<18x1664xf32, #tpu.memory_space<vmem>>, vector<2x64xf32>
    %cst_436 = arith.constant 0.000000e+00 : f32
    %1509 = vector.broadcast %cst_436 : f32 to vector<2x64xf32>
    %1510 = arith.maximumf %1508, %1509 : vector<2x64xf32>
    %c16_437 = arith.constant 16 : index
    %c1600 = arith.constant 1600 : index
    %1511 = vector.load %arg9[%c16_437, %c1600] : memref<18x1664xf32, #tpu.memory_space<vmem>>, vector<2x64xf32>
    %cst_438 = arith.constant 0.000000e+00 : f32
    %1512 = vector.broadcast %cst_438 : f32 to vector<2x64xf32>
    %1513 = arith.maximumf %1511, %1512 : vector<2x64xf32>
    %c0_439 = arith.constant 0 : index
    %c1664 = arith.constant 1664 : index
    %1514 = vector.load %arg5[%c0_439, %c1664] : memref<1x1804xf32, #tpu.memory_space<vmem>>, vector<1x64xf32>
    %c0_440 = arith.constant 0 : index
    %c1728 = arith.constant 1728 : index
    %1515 = vector.load %arg5[%c0_440, %c1728] : memref<1x1804xf32, #tpu.memory_space<vmem>>, vector<1x64xf32>
    %c0_441 = arith.constant 0 : index
    %c1792 = arith.constant 1792 : index
    %1516 = vector.load %arg5[%c0_441, %c1792] : memref<1x1804xf32, #tpu.memory_space<vmem>>, vector<1x6xf32>
    %c0_442 = arith.constant 0 : index
    %c1798 = arith.constant 1798 : index
    %1517 = vector.load %arg5[%c0_442, %c1798] : memref<1x1804xf32, #tpu.memory_space<vmem>>, vector<1x6xf32>
    %1518 = arith.truncf %1352 : vector<2x64xf32> to vector<2x64xbf16>
    %c0_443 = arith.constant 0 : index
    %c0_444 = arith.constant 0 : index
    %c0_445 = arith.constant 0 : index
    %1519 = vector.load %arg3[%c0_443, %c0_444, %c0_445] : memref<2x256x64xbf16, #tpu.memory_space<vmem>>, vector<1x64x64xbf16>
    %1520 = vector.shape_cast %1519 : vector<1x64x64xbf16> to vector<64x64xbf16>
    %cst_446 = arith.constant dense<0.000000e+00> : vector<2x64xf32>
    %1521 = tpu.matmul %1518, %1520, %cst_446 {dimension_numbers = #tpu.dot_dimension_numbers<[1], [0], [0], [1], [0, 0, 1, 1], [], []>} : vector<2x64xbf16>, vector<64x64xbf16>, vector<2x64xf32> -> vector<2x64xf32>
    %1522 = vector.broadcast %1514 : vector<1x64xf32> to vector<2x64xf32>
    %1523 = arith.addf %1522, %1521 : vector<2x64xf32>
    %1524 = arith.truncf %1383 : vector<2x64xf32> to vector<2x64xbf16>
    %c0_447 = arith.constant 0 : index
    %c64 = arith.constant 64 : index
    %c0_448 = arith.constant 0 : index
    %1525 = vector.load %arg3[%c0_447, %c64, %c0_448] : memref<2x256x64xbf16, #tpu.memory_space<vmem>>, vector<1x64x64xbf16>
    %1526 = vector.shape_cast %1525 : vector<1x64x64xbf16> to vector<64x64xbf16>
    %cst_449 = arith.constant dense<0.000000e+00> : vector<2x64xf32>
    %1527 = tpu.matmul %1524, %1526, %cst_449 {dimension_numbers = #tpu.dot_dimension_numbers<[1], [0], [0], [1], [0, 0, 1, 1], [], []>} : vector<2x64xbf16>, vector<64x64xbf16>, vector<2x64xf32> -> vector<2x64xf32>
    %1528 = arith.addf %1523, %1527 : vector<2x64xf32>
    %1529 = arith.truncf %1414 : vector<2x64xf32> to vector<2x64xbf16>
    %c0_450 = arith.constant 0 : index
    %c128 = arith.constant 128 : index
    %c0_451 = arith.constant 0 : index
    %1530 = vector.load %arg3[%c0_450, %c128, %c0_451] : memref<2x256x64xbf16, #tpu.memory_space<vmem>>, vector<1x64x64xbf16>
    %1531 = vector.shape_cast %1530 : vector<1x64x64xbf16> to vector<64x64xbf16>
    %cst_452 = arith.constant dense<0.000000e+00> : vector<2x64xf32>
    %1532 = tpu.matmul %1529, %1531, %cst_452 {dimension_numbers = #tpu.dot_dimension_numbers<[1], [0], [0], [1], [0, 0, 1, 1], [], []>} : vector<2x64xbf16>, vector<64x64xbf16>, vector<2x64xf32> -> vector<2x64xf32>
    %1533 = arith.addf %1528, %1532 : vector<2x64xf32>
    %1534 = arith.truncf %1510 : vector<2x64xf32> to vector<2x64xbf16>
    %c0_453 = arith.constant 0 : index
    %c192 = arith.constant 192 : index
    %c0_454 = arith.constant 0 : index
    %1535 = vector.load %arg3[%c0_453, %c192, %c0_454] : memref<2x256x64xbf16, #tpu.memory_space<vmem>>, vector<1x64x64xbf16>
    %1536 = vector.shape_cast %1535 : vector<1x64x64xbf16> to vector<64x64xbf16>
    %cst_455 = arith.constant dense<0.000000e+00> : vector<2x64xf32>
    %1537 = tpu.matmul %1534, %1536, %cst_455 {dimension_numbers = #tpu.dot_dimension_numbers<[1], [0], [0], [1], [0, 0, 1, 1], [], []>} : vector<2x64xbf16>, vector<64x64xbf16>, vector<2x64xf32> -> vector<2x64xf32>
    %1538 = arith.addf %1533, %1537 : vector<2x64xf32>
    %cst_456 = arith.constant 0.000000e+00 : f32
    %1539 = vector.broadcast %cst_456 : f32 to vector<2x64xf32>
    %1540 = arith.maximumf %1538, %1539 : vector<2x64xf32>
    %1541 = arith.truncf %1540 : vector<2x64xf32> to vector<2x64xbf16>
    %c0_457 = arith.constant 0 : index
    %c0_458 = arith.constant 0 : index
    %c0_459 = arith.constant 0 : index
    %1542 = vector.load %arg4[%c0_457, %c0_458, %c0_459] : memref<2x64x6xbf16, #tpu.memory_space<vmem>>, vector<1x64x6xbf16>
    %1543 = vector.shape_cast %1542 : vector<1x64x6xbf16> to vector<64x6xbf16>
    %cst_460 = arith.constant dense<0.000000e+00> : vector<2x6xf32>
    %1544 = tpu.matmul %1541, %1543, %cst_460 {dimension_numbers = #tpu.dot_dimension_numbers<[1], [0], [0], [1], [0, 0, 1, 1], [], []>} : vector<2x64xbf16>, vector<64x6xbf16>, vector<2x6xf32> -> vector<2x6xf32>
    %1545 = vector.broadcast %1516 : vector<1x6xf32> to vector<2x6xf32>
    %1546 = arith.addf %1544, %1545 : vector<2x6xf32>
    %c0_461 = arith.constant 0 : index
    %c0_462 = arith.constant 0 : index
    %1547 = vector.load %arg6[%c0_461, %c0_462] : memref<2x6xf32, #tpu.memory_space<vmem>>, vector<2x6xf32>
    tpu.vector_store %arg6[%c0_461, %c0_462], %1546 {strides = array<i32>} : memref<2x6xf32, #tpu.memory_space<vmem>>, vector<2x6xf32>,
    %1548 = arith.truncf %1445 : vector<2x64xf32> to vector<2x64xbf16>
    %c1_463 = arith.constant 1 : index
    %c0_464 = arith.constant 0 : index
    %c0_465 = arith.constant 0 : index
    %1549 = vector.load %arg3[%c1_463, %c0_464, %c0_465] : memref<2x256x64xbf16, #tpu.memory_space<vmem>>, vector<1x64x64xbf16>
    %1550 = vector.shape_cast %1549 : vector<1x64x64xbf16> to vector<64x64xbf16>
    %cst_466 = arith.constant dense<0.000000e+00> : vector<2x64xf32>
    %1551 = tpu.matmul %1548, %1550, %cst_466 {dimension_numbers = #tpu.dot_dimension_numbers<[1], [0], [0], [1], [0, 0, 1, 1], [], []>} : vector<2x64xbf16>, vector<64x64xbf16>, vector<2x64xf32> -> vector<2x64xf32>
    %1552 = vector.broadcast %1515 : vector<1x64xf32> to vector<2x64xf32>
    %1553 = arith.addf %1552, %1551 : vector<2x64xf32>
    %1554 = arith.truncf %1476 : vector<2x64xf32> to vector<2x64xbf16>
    %c1_467 = arith.constant 1 : index
    %c64_468 = arith.constant 64 : index
    %c0_469 = arith.constant 0 : index
    %1555 = vector.load %arg3[%c1_467, %c64_468, %c0_469] : memref<2x256x64xbf16, #tpu.memory_space<vmem>>, vector<1x64x64xbf16>
    %1556 = vector.shape_cast %1555 : vector<1x64x64xbf16> to vector<64x64xbf16>
    %cst_470 = arith.constant dense<0.000000e+00> : vector<2x64xf32>
    %1557 = tpu.matmul %1554, %1556, %cst_470 {dimension_numbers = #tpu.dot_dimension_numbers<[1], [0], [0], [1], [0, 0, 1, 1], [], []>} : vector<2x64xbf16>, vector<64x64xbf16>, vector<2x64xf32> -> vector<2x64xf32>
    %1558 = arith.addf %1553, %1557 : vector<2x64xf32>
    %1559 = arith.truncf %1507 : vector<2x64xf32> to vector<2x64xbf16>
    %c1_471 = arith.constant 1 : index
    %c128_472 = arith.constant 128 : index
    %c0_473 = arith.constant 0 : index
    %1560 = vector.load %arg3[%c1_471, %c128_472, %c0_473] : memref<2x256x64xbf16, #tpu.memory_space<vmem>>, vector<1x64x64xbf16>
    %1561 = vector.shape_cast %1560 : vector<1x64x64xbf16> to vector<64x64xbf16>
    %cst_474 = arith.constant dense<0.000000e+00> : vector<2x64xf32>
    %1562 = tpu.matmul %1559, %1561, %cst_474 {dimension_numbers = #tpu.dot_dimension_numbers<[1], [0], [0], [1], [0, 0, 1, 1], [], []>} : vector<2x64xbf16>, vector<64x64xbf16>, vector<2x64xf32> -> vector<2x64xf32>
    %1563 = arith.addf %1558, %1562 : vector<2x64xf32>
    %1564 = arith.truncf %1513 : vector<2x64xf32> to vector<2x64xbf16>
    %c1_475 = arith.constant 1 : index
    %c192_476 = arith.constant 192 : index
    %c0_477 = arith.constant 0 : index
    %1565 = vector.load %arg3[%c1_475, %c192_476, %c0_477] : memref<2x256x64xbf16, #tpu.memory_space<vmem>>, vector<1x64x64xbf16>
    %1566 = vector.shape_cast %1565 : vector<1x64x64xbf16> to vector<64x64xbf16>
    %cst_478 = arith.constant dense<0.000000e+00> : vector<2x64xf32>
    %1567 = tpu.matmul %1564, %1566, %cst_478 {dimension_numbers = #tpu.dot_dimension_numbers<[1], [0], [0], [1], [0, 0, 1, 1], [], []>} : vector<2x64xbf16>, vector<64x64xbf16>, vector<2x64xf32> -> vector<2x64xf32>
    %1568 = arith.addf %1563, %1567 : vector<2x64xf32>
    %cst_479 = arith.constant 0.000000e+00 : f32
    %1569 = vector.broadcast %cst_479 : f32 to vector<2x64xf32>
    %1570 = arith.maximumf %1568, %1569 : vector<2x64xf32>
    %1571 = arith.truncf %1570 : vector<2x64xf32> to vector<2x64xbf16>
    %c1_480 = arith.constant 1 : index
    %c0_481 = arith.constant 0 : index
    %c0_482 = arith.constant 0 : index
    %1572 = vector.load %arg4[%c1_480, %c0_481, %c0_482] : memref<2x64x6xbf16, #tpu.memory_space<vmem>>, vector<1x64x6xbf16>
    %1573 = vector.shape_cast %1572 : vector<1x64x6xbf16> to vector<64x6xbf16>
    %cst_483 = arith.constant dense<0.000000e+00> : vector<2x6xf32>
    %1574 = tpu.matmul %1571, %1573, %cst_483 {dimension_numbers = #tpu.dot_dimension_numbers<[1], [0], [0], [1], [0, 0, 1, 1], [], []>} : vector<2x64xbf16>, vector<64x6xbf16>, vector<2x6xf32> -> vector<2x6xf32>
    %1575 = vector.broadcast %1517 : vector<1x6xf32> to vector<2x6xf32>
    %1576 = arith.addf %1574, %1575 : vector<2x6xf32>
    %cst_484 = arith.constant 0.000000e+00 : f32
    %1577 = vector.broadcast %cst_484 : f32 to vector<2x6xf32>
    %1578 = arith.maximumf %1576, %1577 : vector<2x6xf32>
    %c0_485 = arith.constant 0 : index
    %c0_486 = arith.constant 0 : index
    %1579 = vector.load %arg8[%c0_485, %c0_486] : memref<2x6xf32, #tpu.memory_space<vmem>>, vector<2x6xf32>
    tpu.vector_store %arg8[%c0_485, %c0_486], %1578 {strides = array<i32>} : memref<2x6xf32, #tpu.memory_space<vmem>>, vector<2x6xf32>,
    %cst_487 = arith.constant dense<0xFF800000> : vector<2xf32>
    %1580 = vector.multi_reduction <maximumf>, %1578, %cst_487 [1] : vector<2x6xf32> to vector<2xf32>
    %1581 = vector.shape_cast %1580 : vector<2xf32> to vector<2x1xf32>
    %1582 = vector.broadcast %1581 : vector<2x1xf32> to vector<2x6xf32>
    %1583 = arith.subf %1578, %1582 : vector<2x6xf32>
    %1584 = math.exp %1583 : vector<2x6xf32>
    %cst_488 = arith.constant dense<0.000000e+00> : vector<2xf32>
    %1585 = vector.multi_reduction <add>, %1584, %cst_488 [1] : vector<2x6xf32> to vector<2xf32>
    %1586 = vector.shape_cast %1585 : vector<2xf32> to vector<2x1xf32>
    %1587 = math.log %1586 : vector<2x1xf32>
    %1588 = arith.addf %1581, %1587 : vector<2x1xf32>
    %1589 = vector.broadcast %1588 : vector<2x1xf32> to vector<2x6xf32>
    %1590 = arith.subf %1578, %1589 : vector<2x6xf32>
    %c0_489 = arith.constant 0 : index
    %c0_490 = arith.constant 0 : index
    %1591 = vector.load %arg7[%c0_489, %c0_490] : memref<2x6xf32, #tpu.memory_space<vmem>>, vector<2x6xf32>
    tpu.vector_store %arg7[%c0_489, %c0_490], %1590 {strides = array<i32>} : memref<2x6xf32, #tpu.memory_space<vmem>>, vector<2x6xf32>,
    return
  }
}

</mosaic_0001>

<llo_original>
// kernel: lstm_abr_forward.1
$region0: #{lstm_abr_forward.1}
  #allocation0 [shape = 'u32[]', space=smem, size = 0x4, offset = 0x4, fixed_abs, tag = 'smem constant byte address 0x4 - core index']
  #allocation1 [shape = 'u32[144,128]{1,0:T(1,128)}', space=vmem, size = 0x12000, scoped, tag = 'internal scratch']
  #allocation2 [shape = 'f32[18,1664]{1,0:T(8,128)}', space=vmem, size = 0x27000, scoped, tag = 'scratch operand']
  %s0 = inlined_call_operand.vmem [shape: f32[18,3], index: 0, kind: input, shape index: {}]
  %s1 = inlined_call_operand.vmem [shape: bf16[3,1664], index: 1, kind: input, shape index: {}]
  %s2 = inlined_call_operand.vmem [shape: bf16[6,64,256], index: 2, kind: input, shape index: {}]
  %s3 = inlined_call_operand.vmem [shape: bf16[2,256,64], index: 3, kind: input, shape index: {}]
  %s4 = inlined_call_operand.vmem [shape: bf16[2,64,6], index: 4, kind: input, shape index: {}]
  %s5 = inlined_call_operand.vmem [shape: f32[1,1804], index: 5, kind: input, shape index: {}]
  %s6 = inlined_call_operand.hbm [shape: f32[2,6], index: 6, kind: output, shape index: {0}]
  %s7 = inlined_call_operand.hbm [shape: f32[2,6], index: 7, kind: output, shape index: {1}]
  %s8 = inlined_call_operand.hbm [shape: f32[2,6], index: 8, kind: output, shape index: {2}]
  %9 = xla_tuple %s6, %s7, %s8
  %s10 = sld [smem:[#allocation0]]
  $region50: #{lstm_abr_forward.1} parent=0
    _
  %s12 = ssub.s32 1, %s10
  %s13 = scalar_select 0, %s12, %s10
  $region1: #{lstm_abr_forward.1} parent=0
    #allocation3 [shape = 'u8[1024]{0}', space=vmem, size = 0x400, scoped, tag = 'output window, operand 0, single buffered']
    #allocation4 [shape = 's32[1]{0}', space=sflag, size = 0x4, scoped, tag = 'scoped memory for lstm_abr_forward.1']
    #allocation5 [shape = 'u8[1024]{0}', space=vmem, size = 0x400, scoped, tag = 'output window, operand 1, single buffered']
    #allocation6 [shape = 's32[1]{0}', space=sflag, size = 0x4, scoped, tag = 'scoped memory for lstm_abr_forward.1']
    #allocation7 [shape = 'u8[1024]{0}', space=vmem, size = 0x400, scoped, tag = 'output window, operand 2, single buffered']
    %14 = vsyncpa [#allocation4], 0
    %15 = vsyncpa [#allocation6], 0
    // Predicated region
    $region2: #{lstm_abr_forward.1} parent=1 // pred_check
      _
    $region3: #{lstm_abr_forward.1} parent=1 // pred_check_branch
      %17 = sbr.rel (0) target = $region5
    $region4: #{lstm_abr_forward.1} parent=1 // pred_region
      _
    $region5: #{lstm_abr_forward.1} parent=1 // pred_fallthru
      _
    // Predicated region
    $region6: #{lstm_abr_forward.1} parent=1 // pred_check
      _
    $region7: #{lstm_abr_forward.1} parent=1 // pred_check_branch
      %19 = sbr.rel (0) target = $region9
    $region8: #{lstm_abr_forward.1} parent=1 // pred_region
      _
    $region9: #{lstm_abr_forward.1} parent=1 // pred_fallthru
      _
    // Predicated region
    $region10: #{lstm_abr_forward.1} parent=1 // pred_check
      _
    $region11: #{lstm_abr_forward.1} parent=1 // pred_check_branch
      %21 = sbr.rel (0) target = $region13
    $region12: #{lstm_abr_forward.1} parent=1 // pred_region
      _
    $region13: #{lstm_abr_forward.1} parent=1 // pred_fallthru
      _
    // Predicated region
    $region14: #{lstm_abr_forward.1} parent=1 // pred_check
      _
    $region15: #{lstm_abr_forward.1} parent=1 // pred_check_branch
      %23 = sbr.rel (0) target = $region17
    $region16: #{lstm_abr_forward.1} parent=1 // pred_region
      _
    $region17: #{lstm_abr_forward.1} parent=1 // pred_fallthru
      _
    // Predicated region
    $region18: #{lstm_abr_forward.1} parent=1 // pred_check
      _
    $region19: #{lstm_abr_forward.1} parent=1 // pred_check_branch
      %25 = sbr.rel (0) target = $region21
    $region20: #{lstm_abr_forward.1} parent=1 // pred_region
      _
    $region21: #{lstm_abr_forward.1} parent=1 // pred_fallthru
      _
    // Predicated region
    $region22: #{lstm_abr_forward.1} parent=1 // pred_check
      _
    $region23: #{lstm_abr_forward.1} parent=1 // pred_check_branch
      %27 = sbr.rel (0) target = $region25
    $region24: #{lstm_abr_forward.1} parent=1 // pred_region
      _
    $region25: #{lstm_abr_forward.1} parent=1 // pred_fallthru
      _
    %v29 = vld [vmem:[%s0] sm:$0xff]
    %v30 = vld [vmem:[%s0 + $0x8] sm:$0xff]
    %v31 = vld [vmem:[%s0 + $0x10] sm:$0x3]
    %v32 = vpack.c.bf16 %v30, %v29
    %v33 = vpack.c.bf16 %v31, %v31
    %v34 = vld [vmem:[%s1] sm:$0xff]
    %v35 = vld [vmem:[%s1 + $0x8] sm:$0xff]
    %v36 = vld [vmem:[%s1 + $0x10] sm:$0xff]
    %v37 = vld [vmem:[%s1 + $0x18] sm:$0x3]
    %v38 = vld [vmem:[%s5] sm:$0xff]
    %v39 = vld [vmem:[%s5 + $0x8] sm:$0x1f]
    %v42 = vlaneseq
    %v43 = vshrl.u32 %v42, 7
    %v44 = vsub.s32 0, %v43
    %v45 = vrot.slane %v38, %v44
    %v46 = vlaneseq
    %v47 = vshrl.u32 %v46, 7
    %v48 = vsub.s32 1, %v47
    %v49 = vrot.slane %v38, %v48
    %v50 = vlaneseq
    %v51 = vshrl.u32 %v50, 7
    %v52 = vsub.s32 2, %v51
    %v53 = vrot.slane %v38, %v52
    %v54 = vlaneseq
    %v55 = vshrl.u32 %v54, 7
    %v56 = vsub.s32 3, %v55
    %v57 = vrot.slane %v38, %v56
    %v58 = vlaneseq
    %v59 = vshrl.u32 %v58, 7
    %v60 = vsub.s32 4, %v59
    %v61 = vrot.slane %v38, %v60
    %v62 = vlaneseq
    %v63 = vshrl.u32 %v62, 7
    %v64 = vsub.s32 5, %v63
    %v65 = vrot.slane %v38, %v64
    %v66 = vlaneseq
    %v67 = vshrl.u32 %v66, 7
    %v68 = vsub.s32 6, %v67
    %v69 = vrot.slane %v38, %v68
    %v70 = vlaneseq
    %v71 = vshrl.u32 %v70, 7
    %v72 = vsub.s32 7, %v71
    %v73 = vrot.slane %v38, %v72
    %v74 = vlaneseq
    %v75 = vshrl.u32 %v74, 7
    %v76 = vsub.s32 0, %v75
    %v77 = vrot.slane %v39, %v76
    %v78 = vlaneseq
    %v79 = vshrl.u32 %v78, 7
    %v80 = vsub.s32 1, %v79
    %v81 = vrot.slane %v39, %v80
    %v82 = vlaneseq
    %v83 = vshrl.u32 %v82, 7
    %v84 = vsub.s32 2, %v83
    %v85 = vrot.slane %v39, %v84
    %v86 = vlaneseq
    %v87 = vshrl.u32 %v86, 7
    %v88 = vsub.s32 3, %v87
    %v89 = vrot.slane %v39, %v88
    %v90 = vlaneseq
    %v91 = vshrl.u32 %v90, 7
    %v92 = vsub.s32 4, %v91
    %v93 = vrot.slane %v39, %v92
    %v111 = vcombine.high %v34, %v34
    %v113 = vunpack.c.l.s4 1983009808
    %v114 = vunpack.c.0.s8 %v113
    %v115 = vlaneseq
    %v116 = vshrl.u32 %v115, 7
    %v117 = vsub.s32 %v114, %v116
    %v118 = vrot.slane %v34, %v117
    %v120 = vunpack.c.l.s4 1983009808
    %v121 = vunpack.c.0.s8 %v120
    %v122 = vlaneseq
    %v123 = vshrl.u32 %v122, 7
    %v124 = vsub.s32 %v121, %v123
    %v125 = vrot.slane %v111, %v124
    %v126 = vcombine.high %v118, %v118
    %v127 = vcombine.high %v125, %v125
    %v128 = vcombine.high %v35, %v35
    %v130 = vunpack.c.l.s4 1983009808
    %v131 = vunpack.c.0.s8 %v130
    %v132 = vlaneseq
    %v133 = vshrl.u32 %v132, 7
    %v134 = vsub.s32 %v131, %v133
    %v135 = vrot.slane %v35, %v134
    %v137 = vunpack.c.l.s4 1983009808
    %v138 = vunpack.c.0.s8 %v137
    %v139 = vlaneseq
    %v140 = vshrl.u32 %v139, 7
    %v141 = vsub.s32 %v138, %v140
    %v142 = vrot.slane %v128, %v141
    %v143 = vcombine.high %v135, %v135
    %v144 = vcombine.high %v142, %v142
    %v145 = vcombine.high %v36, %v36
    %v147 = vunpack.c.l.s4 1983009808
    %v148 = vunpack.c.0.s8 %v147
    %v149 = vlaneseq
    %v150 = vshrl.u32 %v149, 7
    %v151 = vsub.s32 %v148, %v150
    %v152 = vrot.slane %v36, %v151
    %v154 = vunpack.c.l.s4 1983009808
    %v155 = vunpack.c.0.s8 %v154
    %v156 = vlaneseq
    %v157 = vshrl.u32 %v156, 7
    %v158 = vsub.s32 %v155, %v157
    %v159 = vrot.slane %v145, %v158
    %v160 = vcombine.high %v152, %v152
    %v161 = vcombine.high %v159, %v159
    %v163 = vunpack.c.l.s4 1983009808
    %v164 = vunpack.c.0.s8 %v163
    %v165 = vlaneseq
    %v166 = vshrl.u32 %v165, 7
    %v167 = vsub.s32 %v164, %v166
    %v168 = vrot.slane %v37, %v167
    %vm169 = vcmask 23552
    %v171 = vsel %vm169, %v32, 0
    %v174 = vsel %vm169, %v33, 0
    %vm176 = vcmask 1040384
    %vm177 = vcmask 1041408
    %v178 = vsel %vm176, 4294967295, 65535
    %v179 = vsel %vm177, %v178, 0
    %v181 = vand.u32 %v118, %v179
    %v184 = vand.u32 %v126, %v179
    %v187 = vand.u32 %v125, %v179
    %v190 = vand.u32 %v127, %v179
    %v193 = vand.u32 %v135, %v179
    %v196 = vand.u32 %v143, %v179
    %v199 = vand.u32 %v142, %v179
    %v202 = vand.u32 %v144, %v179
    %v205 = vand.u32 %v152, %v179
    %v208 = vand.u32 %v160, %v179
    %v211 = vand.u32 %v159, %v179
    %v214 = vand.u32 %v161, %v179
    %v217 = vand.u32 %v168, %v179
    %219 = vmatprep.subr.bf16.mxu0 %v184
    %220 = vmatpush1.bf16.msra.mxu0 %v181
    %221 = vmatprep.subr.bf16.mxu0 0
    %222 = vmatpush1.bf16.msra.mxu0 0
    %223 = vmatprep.subr.bf16.mxu0 0
    %224 = vmatpush1.bf16.msra.mxu0 0
    %225 = vmatprep.subr.bf16.mxu0 0
    %226 = vmatpush1.bf16.msra.mxu0 0
    %227 = vmatprep.subr.bf16.mxu0 0
    %228 = vmatpush1.bf16.msra.mxu0 0
    %229 = vmatprep.subr.bf16.mxu0 0
    %230 = vmatpush1.bf16.msra.mxu0 0
    %231 = vmatprep.subr.bf16.mxu0 0
    %232 = vmatpush1.bf16.msra.mxu0 0
    %233 = vmatprep.subr.bf16.mxu0 0
    %234 = vmatpush1.bf16.msra.mxu0 0
    %235 = vmatprep.subr.bf16.mxu0 0
    %236 = vmatpush1.bf16.msra.mxu0 0
    %237 = vmatprep.subr.bf16.mxu0 0
    %238 = vmatpush1.bf16.msra.mxu0 0
    %239 = vmatprep.subr.bf16.mxu0 0
    %240 = vmatpush1.bf16.msra.mxu0 0
    %241 = vmatprep.subr.bf16.mxu0 0
    %242 = vmatpush1.bf16.msra.mxu0 0
    %243 = vmatprep.subr.bf16.mxu0 0
    %244 = vmatpush1.bf16.msra.mxu0 0
    %245 = vmatprep.subr.bf16.mxu0 0
    %246 = vmatpush1.bf16.msra.mxu0 0
    %247 = vmatprep.subr.bf16.mxu0 0
    %248 = vmatpush1.bf16.msra.mxu0 0
    %249 = vmatprep.subr.bf16.mxu0 0
    %250 = vmatpush1.bf16.msra.mxu0 0
    %251 = vmatprep.mubr.bf16.mxu0 0
    %252 = vmatmul.mubr.bf16.gmra.mrb[0].mxu0 %v171
    %v253 = vpop.f32.mrb[0].mxu0
    %v254 = vadd.f32 %v45, %v253
    %v255 = vpop.f32.mrb[0].mxu0
    %v256 = vadd.f32 %v49, %v255
    %v257 = vpop.f32.mrb[0].mxu0
    %v258 = vadd.f32 %v45, %v257
    %v259 = vpop.f32.mrb[0].mxu0
    %v260 = vadd.f32 %v49, %v259
    %261 = vmatprep.mubr.bf16.mxu0 0
    %262 = vmatmul.mubr.bf16.gmra.mrb[0].mxu0 %v174
    %v263 = vpop.f32.mrb[0].mxu0
    %v264 = vadd.f32 %v45, %v263
    %v265 = vpop.f32.mrb[0].mxu0
    %v266 = vadd.f32 %v49, %v265
    %v267 = vpop.f32.mrb[0].mxu0
    %v268 = vpop.f32.mrb[0].mxu0
    %269 = vdwg.mxu0
    %270 = vmatprep.subr.bf16.mxu0 %v190
    %271 = vmatpush1.bf16.msra.mxu0 %v187
    %272 = vmatprep.subr.bf16.mxu0 0
    %273 = vmatpush1.bf16.msra.mxu0 0
    %274 = vmatprep.subr.bf16.mxu0 0
    %275 = vmatpush1.bf16.msra.mxu0 0
    %276 = vmatprep.subr.bf16.mxu0 0
    %277 = vmatpush1.bf16.msra.mxu0 0
    %278 = vmatprep.subr.bf16.mxu0 0
    %279 = vmatpush1.bf16.msra.mxu0 0
    %280 = vmatprep.subr.bf16.mxu0 0
    %281 = vmatpush1.bf16.msra.mxu0 0
    %282 = vmatprep.subr.bf16.mxu0 0
    %283 = vmatpush1.bf16.msra.mxu0 0
    %284 = vmatprep.subr.bf16.mxu0 0
    %285 = vmatpush1.bf16.msra.mxu0 0
    %286 = vmatprep.subr.bf16.mxu0 0
    %287 = vmatpush1.bf16.msra.mxu0 0
    %288 = vmatprep.subr.bf16.mxu0 0
    %289 = vmatpush1.bf16.msra.mxu0 0
    %290 = vmatprep.subr.bf16.mxu0 0
    %291 = vmatpush1.bf16.msra.mxu0 0
    %292 = vmatprep.subr.bf16.mxu0 0
    %293 = vmatpush1.bf16.msra.mxu0 0
    %294 = vmatprep.subr.bf16.mxu0 0
    %295 = vmatpush1.bf16.msra.mxu0 0
    %296 = vmatprep.subr.bf16.mxu0 0
    %297 = vmatpush1.bf16.msra.mxu0 0
    %298 = vmatprep.subr.bf16.mxu0 0
    %299 = vmatpush1.bf16.msra.mxu0 0
    %300 = vmatprep.subr.bf16.mxu0 0
    %301 = vmatpush1.bf16.msra.mxu0 0
    %302 = vmatprep.mubr.bf16.mxu0 0
    %303 = vmatmul.mubr.bf16.gmra.mrb[0].mxu0 %v171
    %v304 = vpop.f32.mrb[0].mxu0
    %v305 = vadd.f32 %v53, %v304
    %v306 = vpop.f32.mrb[0].mxu0
    %v307 = vadd.f32 %v57, %v306
    %v308 = vpop.f32.mrb[0].mxu0
    %v309 = vadd.f32 %v53, %v308
    %v310 = vpop.f32.mrb[0].mxu0
    %v311 = vadd.f32 %v57, %v310
    %312 = vmatprep.mubr.bf16.mxu0 0
    %313 = vmatmul.mubr.bf16.gmra.mrb[0].mxu0 %v174
    %v314 = vpop.f32.mrb[0].mxu0
    %v315 = vadd.f32 %v53, %v314
    %v316 = vpop.f32.mrb[0].mxu0
    %v317 = vadd.f32 %v57, %v316
    %v318 = vpop.f32.mrb[0].mxu0
    %v319 = vpop.f32.mrb[0].mxu0
    %320 = vdwg.mxu0
    %321 = vmatprep.subr.bf16.mxu0 %v196
    %322 = vmatpush1.bf16.msra.mxu0 %v193
    %323 = vmatprep.subr.bf16.mxu0 0
    %324 = vmatpush1.bf16.msra.mxu0 0
    %325 = vmatprep.subr.bf16.mxu0 0
    %326 = vmatpush1.bf16.msra.mxu0 0
    %327 = vmatprep.subr.bf16.mxu0 0
    %328 = vmatpush1.bf16.msra.mxu0 0
    %329 = vmatprep.subr.bf16.mxu0 0
    %330 = vmatpush1.bf16.msra.mxu0 0
    %331 = vmatprep.subr.bf16.mxu0 0
    %332 = vmatpush1.bf16.msra.mxu0 0
    %333 = vmatprep.subr.bf16.mxu0 0
    %334 = vmatpush1.bf16.msra.mxu0 0
    %335 = vmatprep.subr.bf16.mxu0 0
    %336 = vmatpush1.bf16.msra.mxu0 0
    %337 = vmatprep.subr.bf16.mxu0 0
    %338 = vmatpush1.bf16.msra.mxu0 0
    %339 = vmatprep.subr.bf16.mxu0 0
    %340 = vmatpush1.bf16.msra.mxu0 0
    %341 = vmatprep.subr.bf16.mxu0 0
    %342 = vmatpush1.bf16.msra.mxu0 0
    %343 = vmatprep.subr.bf16.mxu0 0
    %344 = vmatpush1.bf16.msra.mxu0 0
    %345 = vmatprep.subr.bf16.mxu0 0
    %346 = vmatpush1.bf16.msra.mxu0 0
    %347 = vmatprep.subr.bf16.mxu0 0
    %348 = vmatpush1.bf16.msra.mxu0 0
    %349 = vmatprep.subr.bf16.mxu0 0
    %350 = vmatpush1.bf16.msra.mxu0 0
    %351 = vmatprep.subr.bf16.mxu0 0
    %352 = vmatpush1.bf16.msra.mxu0 0
    %353 = vmatprep.mubr.bf16.mxu0 0
    %354 = vmatmul.mubr.bf16.gmra.mrb[0].mxu0 %v171
    %v355 = vpop.f32.mrb[0].mxu0
    %v356 = vadd.f32 %v61, %v355
    %v357 = vpop.f32.mrb[0].mxu0
    %v358 = vadd.f32 %v65, %v357
    %v359 = vpop.f32.mrb[0].mxu0
    %v360 = vadd.f32 %v61, %v359
    %v361 = vpop.f32.mrb[0].mxu0
    %v362 = vadd.f32 %v65, %v361
    %363 = vmatprep.mubr.bf16.mxu0 0
    %364 = vmatmul.mubr.bf16.gmra.mrb[0].mxu0 %v174
    %v365 = vpop.f32.mrb[0].mxu0
    %v366 = vadd.f32 %v61, %v365
    %v367 = vpop.f32.mrb[0].mxu0
    %v368 = vadd.f32 %v65, %v367
    %v369 = vpop.f32.mrb[0].mxu0
    %v370 = vpop.f32.mrb[0].mxu0
    %371 = vdwg.mxu0
    %372 = vmatprep.subr.bf16.mxu0 %v202
    %373 = vmatpush1.bf16.msra.mxu0 %v199
    %374 = vmatprep.subr.bf16.mxu0 0
    %375 = vmatpush1.bf16.msra.mxu0 0
    %376 = vmatprep.subr.bf16.mxu0 0
    %377 = vmatpush1.bf16.msra.mxu0 0
    %378 = vmatprep.subr.bf16.mxu0 0
    %379 = vmatpush1.bf16.msra.mxu0 0
    %380 = vmatprep.subr.bf16.mxu0 0
    %381 = vmatpush1.bf16.msra.mxu0 0
    %382 = vmatprep.subr.bf16.mxu0 0
    %383 = vmatpush1.bf16.msra.mxu0 0
    %384 = vmatprep.subr.bf16.mxu0 0
    %385 = vmatpush1.bf16.msra.mxu0 0
    %386 = vmatprep.subr.bf16.mxu0 0
    %387 = vmatpush1.bf16.msra.mxu0 0
    %388 = vmatprep.subr.bf16.mxu0 0
    %389 = vmatpush1.bf16.msra.mxu0 0
    %390 = vmatprep.subr.bf16.mxu0 0
    %391 = vmatpush1.bf16.msra.mxu0 0
    %392 = vmatprep.subr.bf16.mxu0 0
    %393 = vmatpush1.bf16.msra.mxu0 0
    %394 = vmatprep.subr.bf16.mxu0 0
    %395 = vmatpush1.bf16.msra.mxu0 0
    %396 = vmatprep.subr.bf16.mxu0 0
    %397 = vmatpush1.bf16.msra.mxu0 0
    %398 = vmatprep.subr.bf16.mxu0 0
    %399 = vmatpush1.bf16.msra.mxu0 0
    %400 = vmatprep.subr.bf16.mxu0 0
    %401 = vmatpush1.bf16.msra.mxu0 0
    %402 = vmatprep.subr.bf16.mxu0 0
    %403 = vmatpush1.bf16.msra.mxu0 0
    %404 = vmatprep.mubr.bf16.mxu0 0
    %405 = vmatmul.mubr.bf16.gmra.mrb[0].mxu0 %v171
    %v406 = vpop.f32.mrb[0].mxu0
    %v407 = vadd.f32 %v69, %v406
    %v408 = vpop.f32.mrb[0].mxu0
    %v409 = vadd.f32 %v73, %v408
    %v410 = vpop.f32.mrb[0].mxu0
    %v411 = vadd.f32 %v69, %v410
    %v412 = vpop.f32.mrb[0].mxu0
    %v413 = vadd.f32 %v73, %v412
    %414 = vmatprep.mubr.bf16.mxu0 0
    %415 = vmatmul.mubr.bf16.gmra.mrb[0].mxu0 %v174
    %v416 = vpop.f32.mrb[0].mxu0
    %v417 = vadd.f32 %v69, %v416
    %v418 = vpop.f32.mrb[0].mxu0
    %v419 = vadd.f32 %v73, %v418
    %v420 = vpop.f32.mrb[0].mxu0
    %v421 = vpop.f32.mrb[0].mxu0
    %422 = vdwg.mxu0
    %423 = vmatprep.subr.bf16.mxu0 %v208
    %424 = vmatpush1.bf16.msra.mxu0 %v205
    %425 = vmatprep.subr.bf16.mxu0 0
    %426 = vmatpush1.bf16.msra.mxu0 0
    %427 = vmatprep.subr.bf16.mxu0 0
    %428 = vmatpush1.bf16.msra.mxu0 0
    %429 = vmatprep.subr.bf16.mxu0 0
    %430 = vmatpush1.bf16.msra.mxu0 0
    %431 = vmatprep.subr.bf16.mxu0 0
    %432 = vmatpush1.bf16.msra.mxu0 0
    %433 = vmatprep.subr.bf16.mxu0 0
    %434 = vmatpush1.bf16.msra.mxu0 0
    %435 = vmatprep.subr.bf16.mxu0 0
    %436 = vmatpush1.bf16.msra.mxu0 0
    %437 = vmatprep.subr.bf16.mxu0 0
    %438 = vmatpush1.bf16.msra.mxu0 0
    %439 = vmatprep.subr.bf16.mxu0 0
    %440 = vmatpush1.bf16.msra.mxu0 0
    %441 = vmatprep.subr.bf16.mxu0 0
    %442 = vmatpush1.bf16.msra.mxu0 0
    %443 = vmatprep.subr.bf16.mxu0 0
    %444 = vmatpush1.bf16.msra.mxu0 0
    %445 = vmatprep.subr.bf16.mxu0 0
    %446 = vmatpush1.bf16.msra.mxu0 0
    %447 = vmatprep.subr.bf16.mxu0 0
    %448 = vmatpush1.bf16.msra.mxu0 0
    %449 = vmatprep.subr.bf16.mxu0 0
    %450 = vmatpush1.bf16.msra.mxu0 0
    %451 = vmatprep.subr.bf16.mxu0 0
    %452 = vmatpush1.bf16.msra.mxu0 0
    %453 = vmatprep.subr.bf16.mxu0 0
    %454 = vmatpush1.bf16.msra.mxu0 0
    %455 = vmatprep.mubr.bf16.mxu0 0
    %456 = vmatmul.mubr.bf16.gmra.mrb[0].mxu0 %v171
    %v457 = vpop.f32.mrb[0].mxu0
    %v458 = vadd.f32 %v77, %v457
    %v459 = vpop.f32.mrb[0].mxu0
    %v460 = vadd.f32 %v81, %v459
    %v461 = vpop.f32.mrb[0].mxu0
    %v462 = vadd.f32 %v77, %v461
    %v463 = vpop.f32.mrb[0].mxu0
    %v464 = vadd.f32 %v81, %v463
    %465 = vmatprep.mubr.bf16.mxu0 0
    %466 = vmatmul.mubr.bf16.gmra.mrb[0].mxu0 %v174
    %v467 = vpop.f32.mrb[0].mxu0
    %v468 = vadd.f32 %v77, %v467
    %v469 = vpop.f32.mrb[0].mxu0
    %v470 = vadd.f32 %v81, %v469
    %v471 = vpop.f32.mrb[0].mxu0
    %v472 = vpop.f32.mrb[0].mxu0
    %473 = vdwg.mxu0
    %474 = vmatprep.subr.bf16.mxu0 %v214
    %475 = vmatpush1.bf16.msra.mxu0 %v211
    %476 = vmatprep.subr.bf16.mxu0 0
    %477 = vmatpush1.bf16.msra.mxu0 0
    %478 = vmatprep.subr.bf16.mxu0 0
    %479 = vmatpush1.bf16.msra.mxu0 0
    %480 = vmatprep.subr.bf16.mxu0 0
    %481 = vmatpush1.bf16.msra.mxu0 0
    %482 = vmatprep.subr.bf16.mxu0 0
    %483 = vmatpush1.bf16.msra.mxu0 0
    %484 = vmatprep.subr.bf16.mxu0 0
    %485 = vmatpush1.bf16.msra.mxu0 0
    %486 = vmatprep.subr.bf16.mxu0 0
    %487 = vmatpush1.bf16.msra.mxu0 0
    %488 = vmatprep.subr.bf16.mxu0 0
    %489 = vmatpush1.bf16.msra.mxu0 0
    %490 = vmatprep.subr.bf16.mxu0 0
    %491 = vmatpush1.bf16.msra.mxu0 0
    %492 = vmatprep.subr.bf16.mxu0 0
    %493 = vmatpush1.bf16.msra.mxu0 0
    %494 = vmatprep.subr.bf16.mxu0 0
    %495 = vmatpush1.bf16.msra.mxu0 0
    %496 = vmatprep.subr.bf16.mxu0 0
    %497 = vmatpush1.bf16.msra.mxu0 0
    %498 = vmatprep.subr.bf16.mxu0 0
    %499 = vmatpush1.bf16.msra.mxu0 0
    %500 = vmatprep.subr.bf16.mxu0 0
    %501 = vmatpush1.bf16.msra.mxu0 0
    %502 = vmatprep.subr.bf16.mxu0 0
    %503 = vmatpush1.bf16.msra.mxu0 0
    %504 = vmatprep.subr.bf16.mxu0 0
    %505 = vmatpush1.bf16.msra.mxu0 0
    %506 = vmatprep.mubr.bf16.mxu0 0
    %507 = vmatmul.mubr.bf16.gmra.mrb[0].mxu0 %v171
    %v508 = vpop.f32.mrb[0].mxu0
    %v509 = vadd.f32 %v85, %v508
    %v510 = vpop.f32.mrb[0].mxu0
    %v511 = vadd.f32 %v89, %v510
    %v512 = vpop.f32.mrb[0].mxu0
    %v513 = vadd.f32 %v85, %v512
    %v514 = vpop.f32.mrb[0].mxu0
    %v515 = vadd.f32 %v89, %v514
    %516 = vmatprep.mubr.bf16.mxu0 0
    %517 = vmatmul.mubr.bf16.gmra.mrb[0].mxu0 %v174
    %v518 = vpop.f32.mrb[0].mxu0
    %v519 = vadd.f32 %v85, %v518
    %v520 = vpop.f32.mrb[0].mxu0
    %v521 = vadd.f32 %v89, %v520
    %v522 = vpop.f32.mrb[0].mxu0
    %v523 = vpop.f32.mrb[0].mxu0
    %524 = vdwg.mxu0
    %525 = vmatprep.subr.bf16.mxu0 0
    %526 = vmatpush1.bf16.msra.mxu0 %v217
    %527 = vmatprep.subr.bf16.mxu0 0
    %528 = vmatpush1.bf16.msra.mxu0 0
    %529 = vmatprep.subr.bf16.mxu0 0
    %530 = vmatpush1.bf16.msra.mxu0 0
    %531 = vmatprep.subr.bf16.mxu0 0
    %532 = vmatpush1.bf16.msra.mxu0 0
    %533 = vmatprep.subr.bf16.mxu0 0
    %534 = vmatpush1.bf16.msra.mxu0 0
    %535 = vmatprep.subr.bf16.mxu0 0
    %536 = vmatpush1.bf16.msra.mxu0 0
    %537 = vmatprep.subr.bf16.mxu0 0
    %538 = vmatpush1.bf16.msra.mxu0 0
    %539 = vmatprep.subr.bf16.mxu0 0
    %540 = vmatpush1.bf16.msra.mxu0 0
    %541 = vmatprep.subr.bf16.mxu0 0
    %542 = vmatpush1.bf16.msra.mxu0 0
    %543 = vmatprep.subr.bf16.mxu0 0
    %544 = vmatpush1.bf16.msra.mxu0 0
    %545 = vmatprep.subr.bf16.mxu0 0
    %546 = vmatpush1.bf16.msra.mxu0 0
    %547 = vmatprep.subr.bf16.mxu0 0
    %548 = vmatpush1.bf16.msra.mxu0 0
    %549 = vmatprep.subr.bf16.mxu0 0
    %550 = vmatpush1.bf16.msra.mxu0 0
    %551 = vmatprep.subr.bf16.mxu0 0
    %552 = vmatpush1.bf16.msra.mxu0 0
    %553 = vmatprep.subr.bf16.mxu0 0
    %554 = vmatpush1.bf16.msra.mxu0 0
    %555 = vmatprep.subr.bf16.mxu0 0
    %556 = vmatpush1.bf16.msra.mxu0 0
    %557 = vmatprep.mubr.bf16.mxu0 0
    %558 = vmatmul.mubr.bf16.gmra.mrb[0].mxu0 %v171
    %v559 = vpop.f32.mrb[0].mxu0
    %v560 = vadd.f32 %v93, %v559
    %v561 = vpop.f32.mrb[0].mxu0
    %v562 = vpop.f32.mrb[0].mxu0
    %v563 = vadd.f32 %v93, %v562
    %v564 = vpop.f32.mrb[0].mxu0
    %565 = vmatprep.mubr.bf16.mxu0 0
    %566 = vmatmul.mubr.bf16.gmra.mrb[0].mxu0 %v174
    %v567 = vpop.f32.mrb[0].mxu0
    %v568 = vadd.f32 %v93, %v567
    %v569 = vpop.f32.mrb[0].mxu0
    %v570 = vpop.f32.mrb[0].mxu0
    %v571 = vpop.f32.mrb[0].mxu0
    %572 = vdwg.mxu0
    %573 = vst [vmem:[#allocation2] sm:$0xff] %v254
    %574 = vst [vmem:[#allocation2 + $0x8] sm:$0xff] %v256
    %575 = vst [vmem:[#allocation2 + $0x10] sm:$0xff] %v305
    %576 = vst [vmem:[#allocation2 + $0x18] sm:$0xff] %v307
    %577 = vst [vmem:[#allocation2 + $0x20] sm:$0xff] %v356
    %578 = vst [vmem:[#allocation2 + $0x28] sm:$0xff] %v358
    %579 = vst [vmem:[#allocation2 + $0x30] sm:$0xff] %v407
    %580 = vst [vmem:[#allocation2 + $0x38] sm:$0xff] %v409
    %581 = vst [vmem:[#allocation2 + $0x40] sm:$0xff] %v458
    %582 = vst [vmem:[#allocation2 + $0x48] sm:$0xff] %v460
    %583 = vst [vmem:[#allocation2 + $0x50] sm:$0xff] %v509
    %584 = vst [vmem:[#allocation2 + $0x58] sm:$0xff] %v511
    %585 = vst [vmem:[#allocation2 + $0x60] sm:$0xff] %v560
    %586 = vst [vmem:[#allocation2 + $0x68] sm:$0xff] %v258
    %587 = vst [vmem:[#allocation2 + $0x70] sm:$0xff] %v260
    %588 = vst [vmem:[#allocation2 + $0x78] sm:$0xff] %v309
    %589 = vst [vmem:[#allocation2 + $0x80] sm:$0xff] %v311
    %590 = vst [vmem:[#allocation2 + $0x88] sm:$0xff] %v360
    %591 = vst [vmem:[#allocation2 + $0x90] sm:$0xff] %v362
    %592 = vst [vmem:[#allocation2 + $0x98] sm:$0xff] %v411
    %593 = vst [vmem:[#allocation2 + $0xa0] sm:$0xff] %v413
    %594 = vst [vmem:[#allocation2 + $0xa8] sm:$0xff] %v462
    %595 = vst [vmem:[#allocation2 + $0xb0] sm:$0xff] %v464
    %596 = vst [vmem:[#allocation2 + $0xb8] sm:$0xff] %v513
    %597 = vst [vmem:[#allocation2 + $0xc0] sm:$0xff] %v515
    %598 = vst [vmem:[#allocation2 + $0xc8] sm:$0xff] %v563
    %599 = vst [vmem:[#allocation2 + $0xd0] sm:$0x3] %v264
    %600 = vst [vmem:[#allocation2 + $0xd8] sm:$0x3] %v266
    %601 = vst [vmem:[#allocation2 + $0xe0] sm:$0x3] %v315
    %602 = vst [vmem:[#allocation2 + $0xe8] sm:$0x3] %v317
    %603 = vst [vmem:[#allocation2 + $0xf0] sm:$0x3] %v366
    %604 = vst [vmem:[#allocation2 + $0xf8] sm:$0x3] %v368
    %605 = vst [vmem:[#allocation2 + $0x100] sm:$0x3] %v417
    %606 = vst [vmem:[#allocation2 + $0x108] sm:$0x3] %v419
    %607 = vst [vmem:[#allocation2 + $0x110] sm:$0x3] %v468
    %608 = vst [vmem:[#allocation2 + $0x118] sm:$0x3] %v470
    %609 = vst [vmem:[#allocation2 + $0x120] sm:$0x3] %v519
    %610 = vst [vmem:[#allocation2 + $0x128] sm:$0x3] %v521
    %611 = vst [vmem:[#allocation2 + $0x130] sm:$0x3] %v568
    %v612 = vld [vmem:[#allocation2] sm:$0x3]
    %v613 = vld [vmem:[#allocation2 + $0x8] sm:$0x3]
    %v614 = vld [vmem:[%s2] sm:$0xff]
    %v615 = vld [vmem:[%s2 + $0x8] sm:$0xff]
    %v616 = vld [vmem:[%s2 + $0x10] sm:$0xff]
    %v617 = vld [vmem:[%s2 + $0x18] sm:$0xff]
    %v618 = vld [vmem:[%s2 + $0x20] sm:$0xff]
    %v619 = vld [vmem:[%s2 + $0x28] sm:$0xff]
    %v620 = vld [vmem:[%s2 + $0x30] sm:$0xff]
    %v621 = vld [vmem:[%s2 + $0x38] sm:$0xff]
    %v630 = vunpack.c.l.b16 %v614
    %v631 = vunpack.c.h.b16 %v614
    %v632 = vunpack.c.l.b16 %v615
    %v633 = vunpack.c.h.b16 %v615
    %v634 = vunpack.c.l.b16 %v616
    %v635 = vunpack.c.h.b16 %v616
    %v636 = vunpack.c.l.b16 %v617
    %v637 = vunpack.c.h.b16 %v617
    %v638 = vunpack.c.l.b16 %v618
    %v639 = vunpack.c.h.b16 %v618
    %v640 = vunpack.c.l.b16 %v619
    %v641 = vunpack.c.h.b16 %v619
    %v642 = vunpack.c.l.b16 %v620
    %v643 = vunpack.c.h.b16 %v620
    %v644 = vunpack.c.l.b16 %v621
    %v645 = vunpack.c.h.b16 %v621
    %v646 = vpack.c.b16 %v632, %v630
    %v647 = vpack.c.b16 %v633, %v631
    %v648 = vpack.c.b16 %v636, %v634
    %v649 = vpack.c.b16 %v637, %v635
    %v650 = vpack.c.b16 %v640, %v638
    %v651 = vpack.c.b16 %v641, %v639
    %v652 = vpack.c.b16 %v644, %v642
    %v653 = vpack.c.b16 %v645, %v643
    %vm662 = vcmask 523264
    %v664 = vsel %vm662, 0, 0
    %666 = vmatprep.subr.bf16.mxu0 %v647
    %667 = vmatpush1.bf16.msra.mxu0 %v646
    %668 = vmatprep.subr.bf16.mxu0 %v649
    %669 = vmatpush1.bf16.msra.mxu0 %v648
    %670 = vmatprep.subr.bf16.mxu0 %v651
    %671 = vmatpush1.bf16.msra.mxu0 %v650
    %672 = vmatprep.subr.bf16.mxu0 %v653
    %673 = vmatpush1.bf16.msra.mxu0 %v652
    %674 = vmatprep.subr.bf16.mxu0 0
    %675 = vmatpush1.bf16.msra.mxu0 0
    %676 = vmatprep.subr.bf16.mxu0 0
    %677 = vmatpush1.bf16.msra.mxu0 0
    %678 = vmatprep.subr.bf16.mxu0 0
    %679 = vmatpush1.bf16.msra.mxu0 0
    %680 = vmatprep.subr.bf16.mxu0 0
    %681 = vmatpush1.bf16.msra.mxu0 0
    %682 = vmatprep.subr.bf16.mxu0 0
    %683 = vmatpush1.bf16.msra.mxu0 0
    %684 = vmatprep.subr.bf16.mxu0 0
    %685 = vmatpush1.bf16.msra.mxu0 0
    %686 = vmatprep.subr.bf16.mxu0 0
    %687 = vmatpush1.bf16.msra.mxu0 0
    %688 = vmatprep.subr.bf16.mxu0 0
    %689 = vmatpush1.bf16.msra.mxu0 0
    %690 = vmatprep.subr.bf16.mxu0 0
    %691 = vmatpush1.bf16.msra.mxu0 0
    %692 = vmatprep.subr.bf16.mxu0 0
    %693 = vmatpush1.bf16.msra.mxu0 0
    %694 = vmatprep.subr.bf16.mxu0 0
    %695 = vmatpush1.bf16.msra.mxu0 0
    %696 = vmatprep.subr.bf16.mxu0 0
    %697 = vmatpush1.bf16.msra.mxu0 0
    %698 = vmatprep.mubr.bf16.mxu0 0
    %699 = vmatmul.mubr.bf16.gmra.mrb[0].mxu0 %v664
    %v700 = vpop.f32.mrb[0].mxu0
    %v701 = vadd.f32 0.0, %v700
    %v702 = vpop.f32.mrb[0].mxu0
    %v703 = vadd.f32 0.0, %v702
    %v704 = vpop.f32.mrb[0].mxu0
    %v705 = vpop.f32.mrb[0].mxu0
    %706 = vdwg.mxu0
    %v707 = vadd.f32 %v612, %v701
    %v708 = vadd.f32 %v613, %v703
    %v709 = vxor.u32 %v707, 2147483648
    %v710 = vmul.f32 %v709, 1.442695
    %v711 = vpow.pop %v710
    %v712 = vadd.f32 %v711, 1.0
    %v713 = vrcp.pop %v712
    %v714 = vmul.f32 1.0, %v713
    %v715 = vtanh.pop %v708
    %v716 = vxor.u32 %v708, 2147483648
    %v717 = vmul.f32 %v716, 1.442695
    %v718 = vpow.pop %v717
    %v719 = vadd.f32 %v718, 1.0
    %v720 = vrcp.pop %v719
    %v721 = vmul.f32 1.0, %v720
    %v722 = vmul.f32 %v714, 0.0
    %v723 = vmul.f32 %v714, %v715
    %725 = vrot.lane.b32.xlu0 %v723, 64
    %v726 = vpop.permute.xlu0 %725
    %v728 = vadd.f32 %v722, %v726
    %v729 = vtanh.pop %v728
    %v730 = vmul.f32 %v721, %v729
    %v731 = vld [vmem:[#allocation2 + $0x10] sm:$0x3]
    %v732 = vld [vmem:[#allocation2 + $0x18] sm:$0x3]
    %s733 = scalar_lea.vmem %s2, 64
    %v734 = vld [vmem:[%s733] sm:$0xff]
    %v735 = vld [vmem:[%s733 + $0x8] sm:$0xff]
    %v736 = vld [vmem:[%s733 + $0x10] sm:$0xff]
    %v737 = vld [vmem:[%s733 + $0x18] sm:$0xff]
    %v738 = vld [vmem:[%s733 + $0x20] sm:$0xff]
    %v739 = vld [vmem:[%s733 + $0x28] sm:$0xff]
    %v740 = vld [vmem:[%s733 + $0x30] sm:$0xff]
    %v741 = vld [vmem:[%s733 + $0x38] sm:$0xff]
    %v750 = vunpack.c.l.b16 %v734
    %v751 = vunpack.c.h.b16 %v734
    %v752 = vunpack.c.l.b16 %v735
    %v753 = vunpack.c.h.b16 %v735
    %v754 = vunpack.c.l.b16 %v736
    %v755 = vunpack.c.h.b16 %v736
    %v756 = vunpack.c.l.b16 %v737
    %v757 = vunpack.c.h.b16 %v737
    %v758 = vunpack.c.l.b16 %v738
    %v759 = vunpack.c.h.b16 %v738
    %v760 = vunpack.c.l.b16 %v739
    %v761 = vunpack.c.h.b16 %v739
    %v762 = vunpack.c.l.b16 %v740
    %v763 = vunpack.c.h.b16 %v740
    %v764 = vunpack.c.l.b16 %v741
    %v765 = vunpack.c.h.b16 %v741
    %v766 = vpack.c.b16 %v752, %v750
    %v767 = vpack.c.b16 %v753, %v751
    %v768 = vpack.c.b16 %v756, %v754
    %v769 = vpack.c.b16 %v757, %v755
    %v770 = vpack.c.b16 %v760, %v758
    %v771 = vpack.c.b16 %v761, %v759
    %v772 = vpack.c.b16 %v764, %v762
    %v773 = vpack.c.b16 %v765, %v763
    %782 = vmatprep.subr.bf16.mxu0 %v767
    %783 = vmatpush1.bf16.msra.mxu0 %v766
    %784 = vmatprep.subr.bf16.mxu0 %v769
    %785 = vmatpush1.bf16.msra.mxu0 %v768
    %786 = vmatprep.subr.bf16.mxu0 %v771
    %787 = vmatpush1.bf16.msra.mxu0 %v770
    %788 = vmatprep.subr.bf16.mxu0 %v773
    %789 = vmatpush1.bf16.msra.mxu0 %v772
    %790 = vmatprep.subr.bf16.mxu0 0
    %791 = vmatpush1.bf16.msra.mxu0 0
    %792 = vmatprep.subr.bf16.mxu0 0
    %793 = vmatpush1.bf16.msra.mxu0 0
    %794 = vmatprep.subr.bf16.mxu0 0
    %795 = vmatpush1.bf16.msra.mxu0 0
    %796 = vmatprep.subr.bf16.mxu0 0
    %797 = vmatpush1.bf16.msra.mxu0 0
    %798 = vmatprep.subr.bf16.mxu0 0
    %799 = vmatpush1.bf16.msra.mxu0 0
    %800 = vmatprep.subr.bf16.mxu0 0
    %801 = vmatpush1.bf16.msra.mxu0 0
    %802 = vmatprep.subr.bf16.mxu0 0
    %803 = vmatpush1.bf16.msra.mxu0 0
    %804 = vmatprep.subr.bf16.mxu0 0
    %805 = vmatpush1.bf16.msra.mxu0 0
    %806 = vmatprep.subr.bf16.mxu0 0
    %807 = vmatpush1.bf16.msra.mxu0 0
    %808 = vmatprep.subr.bf16.mxu0 0
    %809 = vmatpush1.bf16.msra.mxu0 0
    %810 = vmatprep.subr.bf16.mxu0 0
    %811 = vmatpush1.bf16.msra.mxu0 0
    %812 = vmatprep.subr.bf16.mxu0 0
    %813 = vmatpush1.bf16.msra.mxu0 0
    %814 = vmatprep.mubr.bf16.mxu0 0
    %815 = vmatmul.mubr.bf16.gmra.mrb[0].mxu0 %v664
    %v816 = vpop.f32.mrb[0].mxu0
    %v817 = vadd.f32 0.0, %v816
    %v818 = vpop.f32.mrb[0].mxu0
    %v819 = vadd.f32 0.0, %v818
    %v820 = vpop.f32.mrb[0].mxu0
    %v821 = vpop.f32.mrb[0].mxu0
    %822 = vdwg.mxu0
    %v823 = vadd.f32 %v731, %v817
    %v824 = vadd.f32 %v732, %v819
    %v825 = vxor.u32 %v823, 2147483648
    %v826 = vmul.f32 %v825, 1.442695
    %v827 = vpow.pop %v826
    %v828 = vadd.f32 %v827, 1.0
    %v829 = vrcp.pop %v828
    %v830 = vmul.f32 1.0, %v829
    %v831 = vtanh.pop %v824
    %v832 = vxor.u32 %v824, 2147483648
    %v833 = vmul.f32 %v832, 1.442695
    %v834 = vpow.pop %v833
    %v835 = vadd.f32 %v834, 1.0
    %v836 = vrcp.pop %v835
    %v837 = vmul.f32 1.0, %v836
    %v838 = vmul.f32 %v830, 0.0
    %v839 = vmul.f32 %v830, %v831
    %841 = vrot.lane.b32.xlu0 %v839, 64
    %v842 = vpop.permute.xlu0 %841
    %v844 = vadd.f32 %v838, %v842
    %v845 = vtanh.pop %v844
    %v846 = vmul.f32 %v837, %v845
    %v847 = vld [vmem:[#allocation2 + $0x20] sm:$0x3]
    %v848 = vld [vmem:[#allocation2 + $0x28] sm:$0x3]
    %s849 = scalar_lea.vmem %s2, 128
    %v850 = vld [vmem:[%s849] sm:$0xff]
    %v851 = vld [vmem:[%s849 + $0x8] sm:$0xff]
    %v852 = vld [vmem:[%s849 + $0x10] sm:$0xff]
    %v853 = vld [vmem:[%s849 + $0x18] sm:$0xff]
    %v854 = vld [vmem:[%s849 + $0x20] sm:$0xff]
    %v855 = vld [vmem:[%s849 + $0x28] sm:$0xff]
    %v856 = vld [vmem:[%s849 + $0x30] sm:$0xff]
    %v857 = vld [vmem:[%s849 + $0x38] sm:$0xff]
    %v866 = vunpack.c.l.b16 %v850
    %v867 = vunpack.c.h.b16 %v850
    %v868 = vunpack.c.l.b16 %v851
    %v869 = vunpack.c.h.b16 %v851
    %v870 = vunpack.c.l.b16 %v852
    %v871 = vunpack.c.h.b16 %v852
    %v872 = vunpack.c.l.b16 %v853
    %v873 = vunpack.c.h.b16 %v853
    %v874 = vunpack.c.l.b16 %v854
    %v875 = vunpack.c.h.b16 %v854
    %v876 = vunpack.c.l.b16 %v855
    %v877 = vunpack.c.h.b16 %v855
    %v878 = vunpack.c.l.b16 %v856
    %v879 = vunpack.c.h.b16 %v856
    %v880 = vunpack.c.l.b16 %v857
    %v881 = vunpack.c.h.b16 %v857
    %v882 = vpack.c.b16 %v868, %v866
    %v883 = vpack.c.b16 %v869, %v867
    %v884 = vpack.c.b16 %v872, %v870
    %v885 = vpack.c.b16 %v873, %v871
    %v886 = vpack.c.b16 %v876, %v874
    %v887 = vpack.c.b16 %v877, %v875
    %v888 = vpack.c.b16 %v880, %v878
    %v889 = vpack.c.b16 %v881, %v879
    %898 = vmatprep.subr.bf16.mxu0 %v883
    %899 = vmatpush1.bf16.msra.mxu0 %v882
    %900 = vmatprep.subr.bf16.mxu0 %v885
    %901 = vmatpush1.bf16.msra.mxu0 %v884
    %902 = vmatprep.subr.bf16.mxu0 %v887
    %903 = vmatpush1.bf16.msra.mxu0 %v886
    %904 = vmatprep.subr.bf16.mxu0 %v889
    %905 = vmatpush1.bf16.msra.mxu0 %v888
    %906 = vmatprep.subr.bf16.mxu0 0
    %907 = vmatpush1.bf16.msra.mxu0 0
    %908 = vmatprep.subr.bf16.mxu0 0
    %909 = vmatpush1.bf16.msra.mxu0 0
    %910 = vmatprep.subr.bf16.mxu0 0
    %911 = vmatpush1.bf16.msra.mxu0 0
    %912 = vmatprep.subr.bf16.mxu0 0
    %913 = vmatpush1.bf16.msra.mxu0 0
    %914 = vmatprep.subr.bf16.mxu0 0
    %915 = vmatpush1.bf16.msra.mxu0 0
    %916 = vmatprep.subr.bf16.mxu0 0
    %917 = vmatpush1.bf16.msra.mxu0 0
    %918 = vmatprep.subr.bf16.mxu0 0
    %919 = vmatpush1.bf16.msra.mxu0 0
    %920 = vmatprep.subr.bf16.mxu0 0
    %921 = vmatpush1.bf16.msra.mxu0 0
    %922 = vmatprep.subr.bf16.mxu0 0
    %923 = vmatpush1.bf16.msra.mxu0 0
    %924 = vmatprep.subr.bf16.mxu0 0
    %925 = vmatpush1.bf16.msra.mxu0 0
    %926 = vmatprep.subr.bf16.mxu0 0
    %927 = vmatpush1.bf16.msra.mxu0 0
    %928 = vmatprep.subr.bf16.mxu0 0
    %929 = vmatpush1.bf16.msra.mxu0 0
    %930 = vmatprep.mubr.bf16.mxu0 0
    %931 = vmatmul.mubr.bf16.gmra.mrb[0].mxu0 %v664
    %v932 = vpop.f32.mrb[0].mxu0
    %v933 = vadd.f32 0.0, %v932
    %v934 = vpop.f32.mrb[0].mxu0
    %v935 = vadd.f32 0.0, %v934
    %v936 = vpop.f32.mrb[0].mxu0
    %v937 = vpop.f32.mrb[0].mxu0
    %938 = vdwg.mxu0
    %v939 = vadd.f32 %v847, %v933
    %v940 = vadd.f32 %v848, %v935
    %v941 = vxor.u32 %v939, 2147483648
    %v942 = vmul.f32 %v941, 1.442695
    %v943 = vpow.pop %v942
    %v944 = vadd.f32 %v943, 1.0
    %v945 = vrcp.pop %v944
    %v946 = vmul.f32 1.0, %v945
    %v947 = vtanh.pop %v940
    %v948 = vxor.u32 %v940, 2147483648
    %v949 = vmul.f32 %v948, 1.442695
    %v950 = vpow.pop %v949
    %v951 = vadd.f32 %v950, 1.0
    %v952 = vrcp.pop %v951
    %v953 = vmul.f32 1.0, %v952
    %v954 = vmul.f32 %v946, 0.0
    %v955 = vmul.f32 %v946, %v947
    %957 = vrot.lane.b32.xlu0 %v955, 64
    %v958 = vpop.permute.xlu0 %957
    %v960 = vadd.f32 %v954, %v958
    %v961 = vtanh.pop %v960
    %v962 = vmul.f32 %v953, %v961
    %v963 = vld [vmem:[#allocation2 + $0x30] sm:$0x3]
    %v964 = vld [vmem:[#allocation2 + $0x38] sm:$0x3]
    %s965 = scalar_lea.vmem %s2, 192
    %v966 = vld [vmem:[%s965] sm:$0xff]
    %v967 = vld [vmem:[%s965 + $0x8] sm:$0xff]
    %v968 = vld [vmem:[%s965 + $0x10] sm:$0xff]
    %v969 = vld [vmem:[%s965 + $0x18] sm:$0xff]
    %v970 = vld [vmem:[%s965 + $0x20] sm:$0xff]
    %v971 = vld [vmem:[%s965 + $0x28] sm:$0xff]
    %v972 = vld [vmem:[%s965 + $0x30] sm:$0xff]
    %v973 = vld [vmem:[%s965 + $0x38] sm:$0xff]
    %v982 = vunpack.c.l.b16 %v966
    %v983 = vunpack.c.h.b16 %v966
    %v984 = vunpack.c.l.b16 %v967
    %v985 = vunpack.c.h.b16 %v967
    %v986 = vunpack.c.l.b16 %v968
    %v987 = vunpack.c.h.b16 %v968
    %v988 = vunpack.c.l.b16 %v969
    %v989 = vunpack.c.h.b16 %v969
    %v990 = vunpack.c.l.b16 %v970
    %v991 = vunpack.c.h.b16 %v970
    %v992 = vunpack.c.l.b16 %v971
    %v993 = vunpack.c.h.b16 %v971
    %v994 = vunpack.c.l.b16 %v972
    %v995 = vunpack.c.h.b16 %v972
    %v996 = vunpack.c.l.b16 %v973
    %v997 = vunpack.c.h.b16 %v973
    %v998 = vpack.c.b16 %v984, %v982
    %v999 = vpack.c.b16 %v985, %v983
    %v1000 = vpack.c.b16 %v988, %v986
    %v1001 = vpack.c.b16 %v989, %v987
    %v1002 = vpack.c.b16 %v992, %v990
    %v1003 = vpack.c.b16 %v993, %v991
    %v1004 = vpack.c.b16 %v996, %v994
    %v1005 = vpack.c.b16 %v997, %v995
    %1014 = vmatprep.subr.bf16.mxu0 %v999
    %1015 = vmatpush1.bf16.msra.mxu0 %v998
    %1016 = vmatprep.subr.bf16.mxu0 %v1001
    %1017 = vmatpush1.bf16.msra.mxu0 %v1000
    %1018 = vmatprep.subr.bf16.mxu0 %v1003
    %1019 = vmatpush1.bf16.msra.mxu0 %v1002
    %1020 = vmatprep.subr.bf16.mxu0 %v1005
    %1021 = vmatpush1.bf16.msra.mxu0 %v1004
    %1022 = vmatprep.subr.bf16.mxu0 0
    %1023 = vmatpush1.bf16.msra.mxu0 0
    %1024 = vmatprep.subr.bf16.mxu0 0
    %1025 = vmatpush1.bf16.msra.mxu0 0
    %1026 = vmatprep.subr.bf16.mxu0 0
    %1027 = vmatpush1.bf16.msra.mxu0 0
    %1028 = vmatprep.subr.bf16.mxu0 0
    %1029 = vmatpush1.bf16.msra.mxu0 0
    %1030 = vmatprep.subr.bf16.mxu0 0
    %1031 = vmatpush1.bf16.msra.mxu0 0
    %1032 = vmatprep.subr.bf16.mxu0 0
    %1033 = vmatpush1.bf16.msra.mxu0 0
    %1034 = vmatprep.subr.bf16.mxu0 0
    %1035 = vmatpush1.bf16.msra.mxu0 0
    %1036 = vmatprep.subr.bf16.mxu0 0
    %1037 = vmatpush1.bf16.msra.mxu0 0
    %1038 = vmatprep.subr.bf16.mxu0 0
    %1039 = vmatpush1.bf16.msra.mxu0 0
    %1040 = vmatprep.subr.bf16.mxu0 0
    %1041 = vmatpush1.bf16.msra.mxu0 0
    %1042 = vmatprep.subr.bf16.mxu0 0
    %1043 = vmatpush1.bf16.msra.mxu0 0
    %1044 = vmatprep.subr.bf16.mxu0 0
    %1045 = vmatpush1.bf16.msra.mxu0 0
    %1046 = vmatprep.mubr.bf16.mxu0 0
    %1047 = vmatmul.mubr.bf16.gmra.mrb[0].mxu0 %v664
    %v1048 = vpop.f32.mrb[0].mxu0
    %v1049 = vadd.f32 0.0, %v1048
    %v1050 = vpop.f32.mrb[0].mxu0
    %v1051 = vadd.f32 0.0, %v1050
    %v1052 = vpop.f32.mrb[0].mxu0
    %v1053 = vpop.f32.mrb[0].mxu0
    %1054 = vdwg.mxu0
    %v1055 = vadd.f32 %v963, %v1049
    %v1056 = vadd.f32 %v964, %v1051
    %v1057 = vxor.u32 %v1055, 2147483648
    %v1058 = vmul.f32 %v1057, 1.442695
    %v1059 = vpow.pop %v1058
    %v1060 = vadd.f32 %v1059, 1.0
    %v1061 = vrcp.pop %v1060
    %v1062 = vmul.f32 1.0, %v1061
    %v1063 = vtanh.pop %v1056
    %v1064 = vxor.u32 %v1056, 2147483648
    %v1065 = vmul.f32 %v1064, 1.442695
    %v1066 = vpow.pop %v1065
    %v1067 = vadd.f32 %v1066, 1.0
    %v1068 = vrcp.pop %v1067
    %v1069 = vmul.f32 1.0, %v1068
    %v1070 = vmul.f32 %v1062, 0.0
    %v1071 = vmul.f32 %v1062, %v1063
    %1073 = vrot.lane.b32.xlu0 %v1071, 64
    %v1074 = vpop.permute.xlu0 %1073
    %v1076 = vadd.f32 %v1070, %v1074
    %v1077 = vtanh.pop %v1076
    %v1078 = vmul.f32 %v1069, %v1077
    %v1079 = vld [vmem:[#allocation2 + $0x40] sm:$0x3]
    %v1080 = vld [vmem:[#allocation2 + $0x48] sm:$0x3]
    %s1081 = scalar_lea.vmem %s2, 256
    %v1082 = vld [vmem:[%s1081] sm:$0xff]
    %v1083 = vld [vmem:[%s1081 + $0x8] sm:$0xff]
    %v1084 = vld [vmem:[%s1081 + $0x10] sm:$0xff]
    %v1085 = vld [vmem:[%s1081 + $0x18] sm:$0xff]
    %v1086 = vld [vmem:[%s1081 + $0x20] sm:$0xff]
    %v1087 = vld [vmem:[%s1081 + $0x28] sm:$0xff]
    %v1088 = vld [vmem:[%s1081 + $0x30] sm:$0xff]
    %v1089 = vld [vmem:[%s1081 + $0x38] sm:$0xff]
    %v1098 = vunpack.c.l.b16 %v1082
    %v1099 = vunpack.c.h.b16 %v1082
    %v1100 = vunpack.c.l.b16 %v1083
    %v1101 = vunpack.c.h.b16 %v1083
    %v1102 = vunpack.c.l.b16 %v1084
    %v1103 = vunpack.c.h.b16 %v1084
    %v1104 = vunpack.c.l.b16 %v1085
    %v1105 = vunpack.c.h.b16 %v1085
    %v1106 = vunpack.c.l.b16 %v1086
    %v1107 = vunpack.c.h.b16 %v1086
    %v1108 = vunpack.c.l.b16 %v1087
    %v1109 = vunpack.c.h.b16 %v1087
    %v1110 = vunpack.c.l.b16 %v1088
    %v1111 = vunpack.c.h.b16 %v1088
    %v1112 = vunpack.c.l.b16 %v1089
    %v1113 = vunpack.c.h.b16 %v1089
    %v1114 = vpack.c.b16 %v1100, %v1098
    %v1115 = vpack.c.b16 %v1101, %v1099
    %v1116 = vpack.c.b16 %v1104, %v1102
    %v1117 = vpack.c.b16 %v1105, %v1103
    %v1118 = vpack.c.b16 %v1108, %v1106
    %v1119 = vpack.c.b16 %v1109, %v1107
    %v1120 = vpack.c.b16 %v1112, %v1110
    %v1121 = vpack.c.b16 %v1113, %v1111
    %1130 = vmatprep.subr.bf16.mxu0 %v1115
    %1131 = vmatpush1.bf16.msra.mxu0 %v1114
    %1132 = vmatprep.subr.bf16.mxu0 %v1117
    %1133 = vmatpush1.bf16.msra.mxu0 %v1116
    %1134 = vmatprep.subr.bf16.mxu0 %v1119
    %1135 = vmatpush1.bf16.msra.mxu0 %v1118
    %1136 = vmatprep.subr.bf16.mxu0 %v1121
    %1137 = vmatpush1.bf16.msra.mxu0 %v1120
    %1138 = vmatprep.subr.bf16.mxu0 0
    %1139 = vmatpush1.bf16.msra.mxu0 0
    %1140 = vmatprep.subr.bf16.mxu0 0
    %1141 = vmatpush1.bf16.msra.mxu0 0
    %1142 = vmatprep.subr.bf16.mxu0 0
    %1143 = vmatpush1.bf16.msra.mxu0 0
    %1144 = vmatprep.subr.bf16.mxu0 0
    %1145 = vmatpush1.bf16.msra.mxu0 0
    %1146 = vmatprep.subr.bf16.mxu0 0
    %1147 = vmatpush1.bf16.msra.mxu0 0
    %1148 = vmatprep.subr.bf16.mxu0 0
    %1149 = vmatpush1.bf16.msra.mxu0 0
    %1150 = vmatprep.subr.bf16.mxu0 0
    %1151 = vmatpush1.bf16.msra.mxu0 0
    %1152 = vmatprep.subr.bf16.mxu0 0
    %1153 = vmatpush1.bf16.msra.mxu0 0
    %1154 = vmatprep.subr.bf16.mxu0 0
    %1155 = vmatpush1.bf16.msra.mxu0 0
    %1156 = vmatprep.subr.bf16.mxu0 0
    %1157 = vmatpush1.bf16.msra.mxu0 0
    %1158 = vmatprep.subr.bf16.mxu0 0
    %1159 = vmatpush1.bf16.msra.mxu0 0
    %1160 = vmatprep.subr.bf16.mxu0 0
    %1161 = vmatpush1.bf16.msra.mxu0 0
    %1162 = vmatprep.mubr.bf16.mxu0 0
    %1163 = vmatmul.mubr.bf16.gmra.mrb[0].mxu0 %v664
    %v1164 = vpop.f32.mrb[0].mxu0
    %v1165 = vadd.f32 0.0, %v1164
    %v1166 = vpop.f32.mrb[0].mxu0
    %v1167 = vadd.f32 0.0, %v1166
    %v1168 = vpop.f32.mrb[0].mxu0
    %v1169 = vpop.f32.mrb[0].mxu0
    %1170 = vdwg.mxu0
    %v1171 = vadd.f32 %v1079, %v1165
    %v1172 = vadd.f32 %v1080, %v1167
    %v1173 = vxor.u32 %v1171, 2147483648
    %v1174 = vmul.f32 %v1173, 1.442695
    %v1175 = vpow.pop %v1174
    %v1176 = vadd.f32 %v1175, 1.0
    %v1177 = vrcp.pop %v1176
    %v1178 = vmul.f32 1.0, %v1177
    %v1179 = vtanh.pop %v1172
    %v1180 = vxor.u32 %v1172, 2147483648
    %v1181 = vmul.f32 %v1180, 1.442695
    %v1182 = vpow.pop %v1181
    %v1183 = vadd.f32 %v1182, 1.0
    %v1184 = vrcp.pop %v1183
    %v1185 = vmul.f32 1.0, %v1184
    %v1186 = vmul.f32 %v1178, 0.0
    %v1187 = vmul.f32 %v1178, %v1179
    %1189 = vrot.lane.b32.xlu0 %v1187, 64
    %v1190 = vpop.permute.xlu0 %1189
    %v1192 = vadd.f32 %v1186, %v1190
    %v1193 = vtanh.pop %v1192
    %v1194 = vmul.f32 %v1185, %v1193
    %v1195 = vld [vmem:[#allocation2 + $0x50] sm:$0x3]
    %v1196 = vld [vmem:[#allocation2 + $0x58] sm:$0x3]
    %s1197 = scalar_lea.vmem %s2, 320
    %v1198 = vld [vmem:[%s1197] sm:$0xff]
    %v1199 = vld [vmem:[%s1197 + $0x8] sm:$0xff]
    %v1200 = vld [vmem:[%s1197 + $0x10] sm:$0xff]
    %v1201 = vld [vmem:[%s1197 + $0x18] sm:$0xff]
    %v1202 = vld [vmem:[%s1197 + $0x20] sm:$0xff]
    %v1203 = vld [vmem:[%s1197 + $0x28] sm:$0xff]
    %v1204 = vld [vmem:[%s1197 + $0x30] sm:$0xff]
    %v1205 = vld [vmem:[%s1197 + $0x38] sm:$0xff]
    %v1214 = vunpack.c.l.b16 %v1198
    %v1215 = vunpack.c.h.b16 %v1198
    %v1216 = vunpack.c.l.b16 %v1199
    %v1217 = vunpack.c.h.b16 %v1199
    %v1218 = vunpack.c.l.b16 %v1200
    %v1219 = vunpack.c.h.b16 %v1200
    %v1220 = vunpack.c.l.b16 %v1201
    %v1221 = vunpack.c.h.b16 %v1201
    %v1222 = vunpack.c.l.b16 %v1202
    %v1223 = vunpack.c.h.b16 %v1202
    %v1224 = vunpack.c.l.b16 %v1203
    %v1225 = vunpack.c.h.b16 %v1203
    %v1226 = vunpack.c.l.b16 %v1204
    %v1227 = vunpack.c.h.b16 %v1204
    %v1228 = vunpack.c.l.b16 %v1205
    %v1229 = vunpack.c.h.b16 %v1205
    %v1230 = vpack.c.b16 %v1216, %v1214
    %v1231 = vpack.c.b16 %v1217, %v1215
    %v1232 = vpack.c.b16 %v1220, %v1218
    %v1233 = vpack.c.b16 %v1221, %v1219
    %v1234 = vpack.c.b16 %v1224, %v1222
    %v1235 = vpack.c.b16 %v1225, %v1223
    %v1236 = vpack.c.b16 %v1228, %v1226
    %v1237 = vpack.c.b16 %v1229, %v1227
    %1246 = vmatprep.subr.bf16.mxu0 %v1231
    %1247 = vmatpush1.bf16.msra.mxu0 %v1230
    %1248 = vmatprep.subr.bf16.mxu0 %v1233
    %1249 = vmatpush1.bf16.msra.mxu0 %v1232
    %1250 = vmatprep.subr.bf16.mxu0 %v1235
    %1251 = vmatpush1.bf16.msra.mxu0 %v1234
    %1252 = vmatprep.subr.bf16.mxu0 %v1237
    %1253 = vmatpush1.bf16.msra.mxu0 %v1236
    %1254 = vmatprep.subr.bf16.mxu0 0
    %1255 = vmatpush1.bf16.msra.mxu0 0
    %1256 = vmatprep.subr.bf16.mxu0 0
    %1257 = vmatpush1.bf16.msra.mxu0 0
    %1258 = vmatprep.subr.bf16.mxu0 0
    %1259 = vmatpush1.bf16.msra.mxu0 0
    %1260 = vmatprep.subr.bf16.mxu0 0
    %1261 = vmatpush1.bf16.msra.mxu0 0
    %1262 = vmatprep.subr.bf16.mxu0 0
    %1263 = vmatpush1.bf16.msra.mxu0 0
    %1264 = vmatprep.subr.bf16.mxu0 0
    %1265 = vmatpush1.bf16.msra.mxu0 0
    %1266 = vmatprep.subr.bf16.mxu0 0
    %1267 = vmatpush1.bf16.msra.mxu0 0
    %1268 = vmatprep.subr.bf16.mxu0 0
    %1269 = vmatpush1.bf16.msra.mxu0 0
    %1270 = vmatprep.subr.bf16.mxu0 0
    %1271 = vmatpush1.bf16.msra.mxu0 0
    %1272 = vmatprep.subr.bf16.mxu0 0
    %1273 = vmatpush1.bf16.msra.mxu0 0
    %1274 = vmatprep.subr.bf16.mxu0 0
    %1275 = vmatpush1.bf16.msra.mxu0 0
    %1276 = vmatprep.subr.bf16.mxu0 0
    %1277 = vmatpush1.bf16.msra.mxu0 0
    %1278 = vmatprep.mubr.bf16.mxu0 0
    %1279 = vmatmul.mubr.bf16.gmra.mrb[0].mxu0 %v664
    %v1280 = vpop.f32.mrb[0].mxu0
    %v1281 = vadd.f32 0.0, %v1280
    %v1282 = vpop.f32.mrb[0].mxu0
    %v1283 = vadd.f32 0.0, %v1282
    %v1284 = vpop.f32.mrb[0].mxu0
    %v1285 = vpop.f32.mrb[0].mxu0
    %1286 = vdwg.mxu0
    %v1287 = vadd.f32 %v1195, %v1281
    %v1288 = vadd.f32 %v1196, %v1283
    %v1289 = vxor.u32 %v1287, 2147483648
    %v1290 = vmul.f32 %v1289, 1.442695
    %v1291 = vpow.pop %v1290
    %v1292 = vadd.f32 %v1291, 1.0
    %v1293 = vrcp.pop %v1292
    %v1294 = vmul.f32 1.0, %v1293
    %v1295 = vtanh.pop %v1288
    %v1296 = vxor.u32 %v1288, 2147483648
    %v1297 = vmul.f32 %v1296, 1.442695
    %v1298 = vpow.pop %v1297
    %v1299 = vadd.f32 %v1298, 1.0
    %v1300 = vrcp.pop %v1299
    %v1301 = vmul.f32 1.0, %v1300
    %v1302 = vmul.f32 %v1294, 0.0
    %v1303 = vmul.f32 %v1294, %v1295
    %1305 = vrot.lane.b32.xlu0 %v1303, 64
    %v1306 = vpop.permute.xlu0 %1305
    %v1308 = vadd.f32 %v1302, %v1306
    %v1309 = vtanh.pop %v1308
    %v1310 = vmul.f32 %v1301, %v1309
    %v1311 = vld [vmem:[#allocation2] sm:$0xc]
    %v1312 = vld [vmem:[#allocation2 + $0x8] sm:$0xc]
    %v1313 = vpack.c.bf16 %v730, %v730
    %1315 = vrot.lane.b32.xlu0 %v1313, 64
    %v1316 = vpop.permute.xlu0 %1315
    %v1318 = vsel %vm662, %v1316, 0
    %1320 = vmatprep.subr.bf16.mxu0 %v647
    %1321 = vmatpush1.bf16.msra.mxu0 %v646
    %1322 = vmatprep.subr.bf16.mxu0 %v649
    %1323 = vmatpush1.bf16.msra.mxu0 %v648
    %1324 = vmatprep.subr.bf16.mxu0 %v651
    %1325 = vmatpush1.bf16.msra.mxu0 %v650
    %1326 = vmatprep.subr.bf16.mxu0 %v653
    %1327 = vmatpush1.bf16.msra.mxu0 %v652
    %1328 = vmatprep.subr.bf16.mxu0 0
    %1329 = vmatpush1.bf16.msra.mxu0 0
    %1330 = vmatprep.subr.bf16.mxu0 0
    %1331 = vmatpush1.bf16.msra.mxu0 0
    %1332 = vmatprep.subr.bf16.mxu0 0
    %1333 = vmatpush1.bf16.msra.mxu0 0
    %1334 = vmatprep.subr.bf16.mxu0 0
    %1335 = vmatpush1.bf16.msra.mxu0 0
    %1336 = vmatprep.subr.bf16.mxu0 0
    %1337 = vmatpush1.bf16.msra.mxu0 0
    %1338 = vmatprep.subr.bf16.mxu0 0
    %1339 = vmatpush1.bf16.msra.mxu0 0
    %1340 = vmatprep.subr.bf16.mxu0 0
    %1341 = vmatpush1.bf16.msra.mxu0 0
    %1342 = vmatprep.subr.bf16.mxu0 0
    %1343 = vmatpush1.bf16.msra.mxu0 0
    %1344 = vmatprep.subr.bf16.mxu0 0
    %1345 = vmatpush1.bf16.msra.mxu0 0
    %1346 = vmatprep.subr.bf16.mxu0 0
    %1347 = vmatpush1.bf16.msra.mxu0 0
    %1348 = vmatprep.subr.bf16.mxu0 0
    %1349 = vmatpush1.bf16.msra.mxu0 0
    %1350 = vmatprep.subr.bf16.mxu0 0
    %1351 = vmatpush1.bf16.msra.mxu0 0
    %1352 = vmatprep.mubr.bf16.mxu0 0
    %1353 = vmatmul.mubr.bf16.gmra.mrb[0].mxu0 %v1318
    %v1354 = vpop.f32.mrb[0].mxu0
    %v1355 = vadd.f32 0.0, %v1354
    %v1356 = vpop.f32.mrb[0].mxu0
    %v1357 = vadd.f32 0.0, %v1356
    %v1358 = vpop.f32.mrb[0].mxu0
    %v1359 = vpop.f32.mrb[0].mxu0
    %1360 = vdwg.mxu0
    %v1363 = vrot.slane %v1355, 6
    %v1364 = vrot.slane %v1357, 6
    %v1367 = vadd.f32 %v1311, %v1363
    %v1368 = vadd.f32 %v1312, %v1364
    %v1369 = vxor.u32 %v1367, 2147483648
    %v1370 = vmul.f32 %v1369, 1.442695
    %v1371 = vpow.pop %v1370
    %v1372 = vadd.f32 %v1371, 1.0
    %v1373 = vrcp.pop %v1372
    %v1374 = vmul.f32 1.0, %v1373
    %v1375 = vtanh.pop %v1368
    %v1376 = vxor.u32 %v1368, 2147483648
    %v1377 = vmul.f32 %v1376, 1.442695
    %v1378 = vpow.pop %v1377
    %v1379 = vadd.f32 %v1378, 1.0
    %v1380 = vrcp.pop %v1379
    %v1381 = vmul.f32 1.0, %v1380
    %v1383 = vrot.slane %v728, 6
    %v1385 = vmul.f32 %v1374, %v1383
    %v1386 = vmul.f32 %v1374, %v1375
    %1388 = vrot.lane.b32.xlu0 %v1386, 64
    %v1389 = vpop.permute.xlu0 %1388
    %v1391 = vadd.f32 %v1385, %v1389
    %v1392 = vtanh.pop %v1391
    %v1393 = vmul.f32 %v1381, %v1392
    %v1394 = vld [vmem:[#allocation2 + $0x10] sm:$0xc]
    %v1395 = vld [vmem:[#allocation2 + $0x18] sm:$0xc]
    %v1396 = vpack.c.bf16 %v846, %v846
    %1398 = vrot.lane.b32.xlu0 %v1396, 64
    %v1399 = vpop.permute.xlu0 %1398
    %v1401 = vsel %vm662, %v1399, 0
    %1403 = vmatprep.subr.bf16.mxu0 %v767
    %1404 = vmatpush1.bf16.msra.mxu0 %v766
    %1405 = vmatprep.subr.bf16.mxu0 %v769
    %1406 = vmatpush1.bf16.msra.mxu0 %v768
    %1407 = vmatprep.subr.bf16.mxu0 %v771
    %1408 = vmatpush1.bf16.msra.mxu0 %v770
    %1409 = vmatprep.subr.bf16.mxu0 %v773
    %1410 = vmatpush1.bf16.msra.mxu0 %v772
    %1411 = vmatprep.subr.bf16.mxu0 0
    %1412 = vmatpush1.bf16.msra.mxu0 0
    %1413 = vmatprep.subr.bf16.mxu0 0
    %1414 = vmatpush1.bf16.msra.mxu0 0
    %1415 = vmatprep.subr.bf16.mxu0 0
    %1416 = vmatpush1.bf16.msra.mxu0 0
    %1417 = vmatprep.subr.bf16.mxu0 0
    %1418 = vmatpush1.bf16.msra.mxu0 0
    %1419 = vmatprep.subr.bf16.mxu0 0
    %1420 = vmatpush1.bf16.msra.mxu0 0
    %1421 = vmatprep.subr.bf16.mxu0 0
    %1422 = vmatpush1.bf16.msra.mxu0 0
    %1423 = vmatprep.subr.bf16.mxu0 0
    %1424 = vmatpush1.bf16.msra.mxu0 0
    %1425 = vmatprep.subr.bf16.mxu0 0
    %1426 = vmatpush1.bf16.msra.mxu0 0
    %1427 = vmatprep.subr.bf16.mxu0 0
    %1428 = vmatpush1.bf16.msra.mxu0 0
    %1429 = vmatprep.subr.bf16.mxu0 0
    %1430 = vmatpush1.bf16.msra.mxu0 0
    %1431 = vmatprep.subr.bf16.mxu0 0
    %1432 = vmatpush1.bf16.msra.mxu0 0
    %1433 = vmatprep.subr.bf16.mxu0 0
    %1434 = vmatpush1.bf16.msra.mxu0 0
    %1435 = vmatprep.mubr.bf16.mxu0 0
    %1436 = vmatmul.mubr.bf16.gmra.mrb[0].mxu0 %v1401
    %v1437 = vpop.f32.mrb[0].mxu0
    %v1438 = vadd.f32 0.0, %v1437
    %v1439 = vpop.f32.mrb[0].mxu0
    %v1440 = vadd.f32 0.0, %v1439
    %v1441 = vpop.f32.mrb[0].mxu0
    %v1442 = vpop.f32.mrb[0].mxu0
    %1443 = vdwg.mxu0
    %v1446 = vrot.slane %v1438, 6
    %v1447 = vrot.slane %v1440, 6
    %v1450 = vadd.f32 %v1394, %v1446
    %v1451 = vadd.f32 %v1395, %v1447
    %v1452 = vxor.u32 %v1450, 2147483648
    %v1453 = vmul.f32 %v1452, 1.442695
    %v1454 = vpow.pop %v1453
    %v1455 = vadd.f32 %v1454, 1.0
    %v1456 = vrcp.pop %v1455
    %v1457 = vmul.f32 1.0, %v1456
    %v1458 = vtanh.pop %v1451
    %v1459 = vxor.u32 %v1451, 2147483648
    %v1460 = vmul.f32 %v1459, 1.442695
    %v1461 = vpow.pop %v1460
    %v1462 = vadd.f32 %v1461, 1.0
    %v1463 = vrcp.pop %v1462
    %v1464 = vmul.f32 1.0, %v1463
    %v1466 = vrot.slane %v844, 6
    %v1468 = vmul.f32 %v1457, %v1466
    %v1469 = vmul.f32 %v1457, %v1458
    %1471 = vrot.lane.b32.xlu0 %v1469, 64
    %v1472 = vpop.permute.xlu0 %1471
    %v1474 = vadd.f32 %v1468, %v1472
    %v1475 = vtanh.pop %v1474
    %v1476 = vmul.f32 %v1464, %v1475
    %v1477 = vld [vmem:[#allocation2 + $0x20] sm:$0xc]
    %v1478 = vld [vmem:[#allocation2 + $0x28] sm:$0xc]
    %v1479 = vpack.c.bf16 %v962, %v962
    %1481 = vrot.lane.b32.xlu0 %v1479, 64
    %v1482 = vpop.permute.xlu0 %1481
    %v1484 = vsel %vm662, %v1482, 0
    %1486 = vmatprep.subr.bf16.mxu0 %v883
    %1487 = vmatpush1.bf16.msra.mxu0 %v882
    %1488 = vmatprep.subr.bf16.mxu0 %v885
    %1489 = vmatpush1.bf16.msra.mxu0 %v884
    %1490 = vmatprep.subr.bf16.mxu0 %v887
    %1491 = vmatpush1.bf16.msra.mxu0 %v886
    %1492 = vmatprep.subr.bf16.mxu0 %v889
    %1493 = vmatpush1.bf16.msra.mxu0 %v888
    %1494 = vmatprep.subr.bf16.mxu0 0
    %1495 = vmatpush1.bf16.msra.mxu0 0
    %1496 = vmatprep.subr.bf16.mxu0 0
    %1497 = vmatpush1.bf16.msra.mxu0 0
    %1498 = vmatprep.subr.bf16.mxu0 0
    %1499 = vmatpush1.bf16.msra.mxu0 0
    %1500 = vmatprep.subr.bf16.mxu0 0
    %1501 = vmatpush1.bf16.msra.mxu0 0
    %1502 = vmatprep.subr.bf16.mxu0 0
    %1503 = vmatpush1.bf16.msra.mxu0 0
    %1504 = vmatprep.subr.bf16.mxu0 0
    %1505 = vmatpush1.bf16.msra.mxu0 0
    %1506 = vmatprep.subr.bf16.mxu0 0
    %1507 = vmatpush1.bf16.msra.mxu0 0
    %1508 = vmatprep.subr.bf16.mxu0 0
    %1509 = vmatpush1.bf16.msra.mxu0 0
    %1510 = vmatprep.subr.bf16.mxu0 0
    %1511 = vmatpush1.bf16.msra.mxu0 0
    %1512 = vmatprep.subr.bf16.mxu0 0
    %1513 = vmatpush1.bf16.msra.mxu0 0
    %1514 = vmatprep.subr.bf16.mxu0 0
    %1515 = vmatpush1.bf16.msra.mxu0 0
    %1516 = vmatprep.subr.bf16.mxu0 0
    %1517 = vmatpush1.bf16.msra.mxu0 0
    %1518 = vmatprep.mubr.bf16.mxu0 0
    %1519 = vmatmul.mubr.bf16.gmra.mrb[0].mxu0 %v1484
    %v1520 = vpop.f32.mrb[0].mxu0
    %v1521 = vadd.f32 0.0, %v1520
    %v1522 = vpop.f32.mrb[0].mxu0
    %v1523 = vadd.f32 0.0, %v1522
    %v1524 = vpop.f32.mrb[0].mxu0
    %v1525 = vpop.f32.mrb[0].mxu0
    %1526 = vdwg.mxu0
    %v1529 = vrot.slane %v1521, 6
    %v1530 = vrot.slane %v1523, 6
    %v1533 = vadd.f32 %v1477, %v1529
    %v1534 = vadd.f32 %v1478, %v1530
    %v1535 = vxor.u32 %v1533, 2147483648
    %v1536 = vmul.f32 %v1535, 1.442695
    %v1537 = vpow.pop %v1536
    %v1538 = vadd.f32 %v1537, 1.0
    %v1539 = vrcp.pop %v1538
    %v1540 = vmul.f32 1.0, %v1539
    %v1541 = vtanh.pop %v1534
    %v1542 = vxor.u32 %v1534, 2147483648
    %v1543 = vmul.f32 %v1542, 1.442695
    %v1544 = vpow.pop %v1543
    %v1545 = vadd.f32 %v1544, 1.0
    %v1546 = vrcp.pop %v1545
    %v1547 = vmul.f32 1.0, %v1546
    %v1549 = vrot.slane %v960, 6
    %v1551 = vmul.f32 %v1540, %v1549
    %v1552 = vmul.f32 %v1540, %v1541
    %1554 = vrot.lane.b32.xlu0 %v1552, 64
    %v1555 = vpop.permute.xlu0 %1554
    %v1557 = vadd.f32 %v1551, %v1555
    %v1558 = vtanh.pop %v1557
    %v1559 = vmul.f32 %v1547, %v1558
    %v1560 = vld [vmem:[#allocation2 + $0x30] sm:$0xc]
    %v1561 = vld [vmem:[#allocation2 + $0x38] sm:$0xc]
    %v1562 = vpack.c.bf16 %v1078, %v1078
    %1564 = vrot.lane.b32.xlu0 %v1562, 64
    %v1565 = vpop.permute.xlu0 %1564
    %v1567 = vsel %vm662, %v1565, 0
    %1569 = vmatprep.subr.bf16.mxu0 %v999
    %1570 = vmatpush1.bf16.msra.mxu0 %v998
    %1571 = vmatprep.subr.bf16.mxu0 %v1001
    %1572 = vmatpush1.bf16.msra.mxu0 %v1000
    %1573 = vmatprep.subr.bf16.mxu0 %v1003
    %1574 = vmatpush1.bf16.msra.mxu0 %v1002
    %1575 = vmatprep.subr.bf16.mxu0 %v1005
    %1576 = vmatpush1.bf16.msra.mxu0 %v1004
    %1577 = vmatprep.subr.bf16.mxu0 0
    %1578 = vmatpush1.bf16.msra.mxu0 0
    %1579 = vmatprep.subr.bf16.mxu0 0
    %1580 = vmatpush1.bf16.msra.mxu0 0
    %1581 = vmatprep.subr.bf16.mxu0 0
    %1582 = vmatpush1.bf16.msra.mxu0 0
    %1583 = vmatprep.subr.bf16.mxu0 0
    %1584 = vmatpush1.bf16.msra.mxu0 0
    %1585 = vmatprep.subr.bf16.mxu0 0
    %1586 = vmatpush1.bf16.msra.mxu0 0
    %1587 = vmatprep.subr.bf16.mxu0 0
    %1588 = vmatpush1.bf16.msra.mxu0 0
    %1589 = vmatprep.subr.bf16.mxu0 0
    %1590 = vmatpush1.bf16.msra.mxu0 0
    %1591 = vmatprep.subr.bf16.mxu0 0
    %1592 = vmatpush1.bf16.msra.mxu0 0
    %1593 = vmatprep.subr.bf16.mxu0 0
    %1594 = vmatpush1.bf16.msra.mxu0 0
    %1595 = vmatprep.subr.bf16.mxu0 0
    %1596 = vmatpush1.bf16.msra.mxu0 0
    %1597 = vmatprep.subr.bf16.mxu0 0
    %1598 = vmatpush1.bf16.msra.mxu0 0
    %1599 = vmatprep.subr.bf16.mxu0 0
    %1600 = vmatpush1.bf16.msra.mxu0 0
    %1601 = vmatprep.mubr.bf16.mxu0 0
    %1602 = vmatmul.mubr.bf16.gmra.mrb[0].mxu0 %v1567
    %v1603 = vpop.f32.mrb[0].mxu0
    %v1604 = vadd.f32 0.0, %v1603
    %v1605 = vpop.f32.mrb[0].mxu0
    %v1606 = vadd.f32 0.0, %v1605
    %v1607 = vpop.f32.mrb[0].mxu0
    %v1608 = vpop.f32.mrb[0].mxu0
    %1609 = vdwg.mxu0
    %v1612 = vrot.slane %v1604, 6
    %v1613 = vrot.slane %v1606, 6
    %v1616 = vadd.f32 %v1560, %v1612
    %v1617 = vadd.f32 %v1561, %v1613
    %v1618 = vxor.u32 %v1616, 2147483648
    %v1619 = vmul.f32 %v1618, 1.442695
    %v1620 = vpow.pop %v1619
    %v1621 = vadd.f32 %v1620, 1.0
    %v1622 = vrcp.pop %v1621
    %v1623 = vmul.f32 1.0, %v1622
    %v1624 = vtanh.pop %v1617
    %v1625 = vxor.u32 %v1617, 2147483648
    %v1626 = vmul.f32 %v1625, 1.442695
    %v1627 = vpow.pop %v1626
    %v1628 = vadd.f32 %v1627, 1.0
    %v1629 = vrcp.pop %v1628
    %v1630 = vmul.f32 1.0, %v1629
    %v1632 = vrot.slane %v1076, 6
    %v1634 = vmul.f32 %v1623, %v1632
    %v1635 = vmul.f32 %v1623, %v1624
    %1637 = vrot.lane.b32.xlu0 %v1635, 64
    %v1638 = vpop.permute.xlu0 %1637
    %v1640 = vadd.f32 %v1634, %v1638
    %v1641 = vtanh.pop %v1640
    %v1642 = vmul.f32 %v1630, %v1641
    %v1643 = vld [vmem:[#allocation2 + $0x40] sm:$0xc]
    %v1644 = vld [vmem:[#allocation2 + $0x48] sm:$0xc]
    %v1645 = vpack.c.bf16 %v1194, %v1194
    %1647 = vrot.lane.b32.xlu0 %v1645, 64
    %v1648 = vpop.permute.xlu0 %1647
    %v1650 = vsel %vm662, %v1648, 0
    %1652 = vmatprep.subr.bf16.mxu0 %v1115
    %1653 = vmatpush1.bf16.msra.mxu0 %v1114
    %1654 = vmatprep.subr.bf16.mxu0 %v1117
    %1655 = vmatpush1.bf16.msra.mxu0 %v1116
    %1656 = vmatprep.subr.bf16.mxu0 %v1119
    %1657 = vmatpush1.bf16.msra.mxu0 %v1118
    %1658 = vmatprep.subr.bf16.mxu0 %v1121
    %1659 = vmatpush1.bf16.msra.mxu0 %v1120
    %1660 = vmatprep.subr.bf16.mxu0 0
    %1661 = vmatpush1.bf16.msra.mxu0 0
    %1662 = vmatprep.subr.bf16.mxu0 0
    %1663 = vmatpush1.bf16.msra.mxu0 0
    %1664 = vmatprep.subr.bf16.mxu0 0
    %1665 = vmatpush1.bf16.msra.mxu0 0
    %1666 = vmatprep.subr.bf16.mxu0 0
    %1667 = vmatpush1.bf16.msra.mxu0 0
    %1668 = vmatprep.subr.bf16.mxu0 0
    %1669 = vmatpush1.bf16.msra.mxu0 0
    %1670 = vmatprep.subr.bf16.mxu0 0
    %1671 = vmatpush1.bf16.msra.mxu0 0
    %1672 = vmatprep.subr.bf16.mxu0 0
    %1673 = vmatpush1.bf16.msra.mxu0 0
    %1674 = vmatprep.subr.bf16.mxu0 0
    %1675 = vmatpush1.bf16.msra.mxu0 0
    %1676 = vmatprep.subr.bf16.mxu0 0
    %1677 = vmatpush1.bf16.msra.mxu0 0
    %1678 = vmatprep.subr.bf16.mxu0 0
    %1679 = vmatpush1.bf16.msra.mxu0 0
    %1680 = vmatprep.subr.bf16.mxu0 0
    %1681 = vmatpush1.bf16.msra.mxu0 0
    %1682 = vmatprep.subr.bf16.mxu0 0
    %1683 = vmatpush1.bf16.msra.mxu0 0
    %1684 = vmatprep.mubr.bf16.mxu0 0
    %1685 = vmatmul.mubr.bf16.gmra.mrb[0].mxu0 %v1650
    %v1686 = vpop.f32.mrb[0].mxu0
    %v1687 = vadd.f32 0.0, %v1686
    %v1688 = vpop.f32.mrb[0].mxu0
    %v1689 = vadd.f32 0.0, %v1688
    %v1690 = vpop.f32.mrb[0].mxu0
    %v1691 = vpop.f32.mrb[0].mxu0
    %1692 = vdwg.mxu0
    %v1695 = vrot.slane %v1687, 6
    %v1696 = vrot.slane %v1689, 6
    %v1699 = vadd.f32 %v1643, %v1695
    %v1700 = vadd.f32 %v1644, %v1696
    %v1701 = vxor.u32 %v1699, 2147483648
    %v1702 = vmul.f32 %v1701, 1.442695
    %v1703 = vpow.pop %v1702
    %v1704 = vadd.f32 %v1703, 1.0
    %v1705 = vrcp.pop %v1704
    %v1706 = vmul.f32 1.0, %v1705
    %v1707 = vtanh.pop %v1700
    %v1708 = vxor.u32 %v1700, 2147483648
    %v1709 = vmul.f32 %v1708, 1.442695
    %v1710 = vpow.pop %v1709
    %v1711 = vadd.f32 %v1710, 1.0
    %v1712 = vrcp.pop %v1711
    %v1713 = vmul.f32 1.0, %v1712
    %v1715 = vrot.slane %v1192, 6
    %v1717 = vmul.f32 %v1706, %v1715
    %v1718 = vmul.f32 %v1706, %v1707
    %1720 = vrot.lane.b32.xlu0 %v1718, 64
    %v1721 = vpop.permute.xlu0 %1720
    %v1723 = vadd.f32 %v1717, %v1721
    %v1724 = vtanh.pop %v1723
    %v1725 = vmul.f32 %v1713, %v1724
    %v1726 = vld [vmem:[#allocation2 + $0x50] sm:$0xc]
    %v1727 = vld [vmem:[#allocation2 + $0x58] sm:$0xc]
    %v1728 = vpack.c.bf16 %v1310, %v1310
    %1730 = vrot.lane.b32.xlu0 %v1728, 64
    %v1731 = vpop.permute.xlu0 %1730
    %v1733 = vsel %vm662, %v1731, 0
    %1735 = vmatprep.subr.bf16.mxu0 %v1231
    %1736 = vmatpush1.bf16.msra.mxu0 %v1230
    %1737 = vmatprep.subr.bf16.mxu0 %v1233
    %1738 = vmatpush1.bf16.msra.mxu0 %v1232
    %1739 = vmatprep.subr.bf16.mxu0 %v1235
    %1740 = vmatpush1.bf16.msra.mxu0 %v1234
    %1741 = vmatprep.subr.bf16.mxu0 %v1237
    %1742 = vmatpush1.bf16.msra.mxu0 %v1236
    %1743 = vmatprep.subr.bf16.mxu0 0
    %1744 = vmatpush1.bf16.msra.mxu0 0
    %1745 = vmatprep.subr.bf16.mxu0 0
    %1746 = vmatpush1.bf16.msra.mxu0 0
    %1747 = vmatprep.subr.bf16.mxu0 0
    %1748 = vmatpush1.bf16.msra.mxu0 0
    %1749 = vmatprep.subr.bf16.mxu0 0
    %1750 = vmatpush1.bf16.msra.mxu0 0
    %1751 = vmatprep.subr.bf16.mxu0 0
    %1752 = vmatpush1.bf16.msra.mxu0 0
    %1753 = vmatprep.subr.bf16.mxu0 0
    %1754 = vmatpush1.bf16.msra.mxu0 0
    %1755 = vmatprep.subr.bf16.mxu0 0
    %1756 = vmatpush1.bf16.msra.mxu0 0
    %1757 = vmatprep.subr.bf16.mxu0 0
    %1758 = vmatpush1.bf16.msra.mxu0 0
    %1759 = vmatprep.subr.bf16.mxu0 0
    %1760 = vmatpush1.bf16.msra.mxu0 0
    %1761 = vmatprep.subr.bf16.mxu0 0
    %1762 = vmatpush1.bf16.msra.mxu0 0
    %1763 = vmatprep.subr.bf16.mxu0 0
    %1764 = vmatpush1.bf16.msra.mxu0 0
    %1765 = vmatprep.subr.bf16.mxu0 0
    %1766 = vmatpush1.bf16.msra.mxu0 0
    %1767 = vmatprep.mubr.bf16.mxu0 0
    %1768 = vmatmul.mubr.bf16.gmra.mrb[0].mxu0 %v1733
    %v1769 = vpop.f32.mrb[0].mxu0
    %v1770 = vadd.f32 0.0, %v1769
    %v1771 = vpop.f32.mrb[0].mxu0
    %v1772 = vadd.f32 0.0, %v1771
    %v1773 = vpop.f32.mrb[0].mxu0
    %v1774 = vpop.f32.mrb[0].mxu0
    %1775 = vdwg.mxu0
    %v1778 = vrot.slane %v1770, 6
    %v1779 = vrot.slane %v1772, 6
    %v1782 = vadd.f32 %v1726, %v1778
    %v1783 = vadd.f32 %v1727, %v1779
    %v1784 = vxor.u32 %v1782, 2147483648
    %v1785 = vmul.f32 %v1784, 1.442695
    %v1786 = vpow.pop %v1785
    %v1787 = vadd.f32 %v1786, 1.0
    %v1788 = vrcp.pop %v1787
    %v1789 = vmul.f32 1.0, %v1788
    %v1790 = vtanh.pop %v1783
    %v1791 = vxor.u32 %v1783, 2147483648
    %v1792 = vmul.f32 %v1791, 1.442695
    %v1793 = vpow.pop %v1792
    %v1794 = vadd.f32 %v1793, 1.0
    %v1795 = vrcp.pop %v1794
    %v1796 = vmul.f32 1.0, %v1795
    %v1798 = vrot.slane %v1308, 6
    %v1800 = vmul.f32 %v1789, %v1798
    %v1801 = vmul.f32 %v1789, %v1790
    %1803 = vrot.lane.b32.xlu0 %v1801, 64
    %v1804 = vpop.permute.xlu0 %1803
    %v1806 = vadd.f32 %v1800, %v1804
    %v1807 = vtanh.pop %v1806
    %v1808 = vmul.f32 %v1796, %v1807
    %v1809 = vld [vmem:[#allocation2] sm:$0x30]
    %v1810 = vld [vmem:[#allocation2 + $0x8] sm:$0x30]
    %v1811 = vpack.c.bf16 %v1393, %v1393
    %v1813 = vrot.slane %v1811, 1
    %1814 = vrot.lane.b32.xlu0 %v1813, 64
    %v1815 = vpop.permute.xlu0 %1814
    %v1817 = vsel %vm662, %v1815, 0
    %1819 = vmatprep.subr.bf16.mxu0 %v647
    %1820 = vmatpush1.bf16.msra.mxu0 %v646
    %1821 = vmatprep.subr.bf16.mxu0 %v649
    %1822 = vmatpush1.bf16.msra.mxu0 %v648
    %1823 = vmatprep.subr.bf16.mxu0 %v651
    %1824 = vmatpush1.bf16.msra.mxu0 %v650
    %1825 = vmatprep.subr.bf16.mxu0 %v653
    %1826 = vmatpush1.bf16.msra.mxu0 %v652
    %1827 = vmatprep.subr.bf16.mxu0 0
    %1828 = vmatpush1.bf16.msra.mxu0 0
    %1829 = vmatprep.subr.bf16.mxu0 0
    %1830 = vmatpush1.bf16.msra.mxu0 0
    %1831 = vmatprep.subr.bf16.mxu0 0
    %1832 = vmatpush1.bf16.msra.mxu0 0
    %1833 = vmatprep.subr.bf16.mxu0 0
    %1834 = vmatpush1.bf16.msra.mxu0 0
    %1835 = vmatprep.subr.bf16.mxu0 0
    %1836 = vmatpush1.bf16.msra.mxu0 0
    %1837 = vmatprep.subr.bf16.mxu0 0
    %1838 = vmatpush1.bf16.msra.mxu0 0
    %1839 = vmatprep.subr.bf16.mxu0 0
    %1840 = vmatpush1.bf16.msra.mxu0 0
    %1841 = vmatprep.subr.bf16.mxu0 0
    %1842 = vmatpush1.bf16.msra.mxu0 0
    %1843 = vmatprep.subr.bf16.mxu0 0
    %1844 = vmatpush1.bf16.msra.mxu0 0
    %1845 = vmatprep.subr.bf16.mxu0 0
    %1846 = vmatpush1.bf16.msra.mxu0 0
    %1847 = vmatprep.subr.bf16.mxu0 0
    %1848 = vmatpush1.bf16.msra.mxu0 0
    %1849 = vmatprep.subr.bf16.mxu0 0
    %1850 = vmatpush1.bf16.msra.mxu0 0
    %1851 = vmatprep.mubr.bf16.mxu0 0
    %1852 = vmatmul.mubr.bf16.gmra.mrb[0].mxu0 %v1817
    %v1853 = vpop.f32.mrb[0].mxu0
    %v1854 = vadd.f32 0.0, %v1853
    %v1855 = vpop.f32.mrb[0].mxu0
    %v1856 = vadd.f32 0.0, %v1855
    %v1857 = vpop.f32.mrb[0].mxu0
    %v1858 = vpop.f32.mrb[0].mxu0
    %1859 = vdwg.mxu0
    %v1862 = vrot.slane %v1854, 4
    %v1863 = vrot.slane %v1856, 4
    %v1866 = vadd.f32 %v1809, %v1862
    %v1867 = vadd.f32 %v1810, %v1863
    %v1868 = vxor.u32 %v1866, 2147483648
    %v1869 = vmul.f32 %v1868, 1.442695
    %v1870 = vpow.pop %v1869
    %v1871 = vadd.f32 %v1870, 1.0
    %v1872 = vrcp.pop %v1871
    %v1873 = vmul.f32 1.0, %v1872
    %v1874 = vtanh.pop %v1867
    %v1875 = vxor.u32 %v1867, 2147483648
    %v1876 = vmul.f32 %v1875, 1.442695
    %v1877 = vpow.pop %v1876
    %v1878 = vadd.f32 %v1877, 1.0
    %v1879 = vrcp.pop %v1878
    %v1880 = vmul.f32 1.0, %v1879
    %v1882 = vrot.slane %v1391, 6
    %v1884 = vmul.f32 %v1873, %v1882
    %v1885 = vmul.f32 %v1873, %v1874
    %1887 = vrot.lane.b32.xlu0 %v1885, 64
    %v1888 = vpop.permute.xlu0 %1887
    %v1890 = vadd.f32 %v1884, %v1888
    %v1891 = vtanh.pop %v1890
    %v1892 = vmul.f32 %v1880, %v1891
    %v1893 = vld [vmem:[#allocation2 + $0x10] sm:$0x30]
    %v1894 = vld [vmem:[#allocation2 + $0x18] sm:$0x30]
    %v1895 = vpack.c.bf16 %v1476, %v1476
    %v1897 = vrot.slane %v1895, 1
    %1898 = vrot.lane.b32.xlu0 %v1897, 64
    %v1899 = vpop.permute.xlu0 %1898
    %v1901 = vsel %vm662, %v1899, 0
    %1903 = vmatprep.subr.bf16.mxu0 %v767
    %1904 = vmatpush1.bf16.msra.mxu0 %v766
    %1905 = vmatprep.subr.bf16.mxu0 %v769
    %1906 = vmatpush1.bf16.msra.mxu0 %v768
    %1907 = vmatprep.subr.bf16.mxu0 %v771
    %1908 = vmatpush1.bf16.msra.mxu0 %v770
    %1909 = vmatprep.subr.bf16.mxu0 %v773
    %1910 = vmatpush1.bf16.msra.mxu0 %v772
    %1911 = vmatprep.subr.bf16.mxu0 0
    %1912 = vmatpush1.bf16.msra.mxu0 0
    %1913 = vmatprep.subr.bf16.mxu0 0
    %1914 = vmatpush1.bf16.msra.mxu0 0
    %1915 = vmatprep.subr.bf16.mxu0 0
    %1916 = vmatpush1.bf16.msra.mxu0 0
    %1917 = vmatprep.subr.bf16.mxu0 0
    %1918 = vmatpush1.bf16.msra.mxu0 0
    %1919 = vmatprep.subr.bf16.mxu0 0
    %1920 = vmatpush1.bf16.msra.mxu0 0
    %1921 = vmatprep.subr.bf16.mxu0 0
    %1922 = vmatpush1.bf16.msra.mxu0 0
    %1923 = vmatprep.subr.bf16.mxu0 0
    %1924 = vmatpush1.bf16.msra.mxu0 0
    %1925 = vmatprep.subr.bf16.mxu0 0
    %1926 = vmatpush1.bf16.msra.mxu0 0
    %1927 = vmatprep.subr.bf16.mxu0 0
    %1928 = vmatpush1.bf16.msra.mxu0 0
    %1929 = vmatprep.subr.bf16.mxu0 0
    %1930 = vmatpush1.bf16.msra.mxu0 0
    %1931 = vmatprep.subr.bf16.mxu0 0
    %1932 = vmatpush1.bf16.msra.mxu0 0
    %1933 = vmatprep.subr.bf16.mxu0 0
    %1934 = vmatpush1.bf16.msra.mxu0 0
    %1935 = vmatprep.mubr.bf16.mxu0 0
    %1936 = vmatmul.mubr.bf16.gmra.mrb[0].mxu0 %v1901
    %v1937 = vpop.f32.mrb[0].mxu0
    %v1938 = vadd.f32 0.0, %v1937
    %v1939 = vpop.f32.mrb[0].mxu0
    %v1940 = vadd.f32 0.0, %v1939
    %v1941 = vpop.f32.mrb[0].mxu0
    %v1942 = vpop.f32.mrb[0].mxu0
    %1943 = vdwg.mxu0
    %v1946 = vrot.slane %v1938, 4
    %v1947 = vrot.slane %v1940, 4
    %v1950 = vadd.f32 %v1893, %v1946
    %v1951 = vadd.f32 %v1894, %v1947
    %v1952 = vxor.u32 %v1950, 2147483648
    %v1953 = vmul.f32 %v1952, 1.442695
    %v1954 = vpow.pop %v1953
    %v1955 = vadd.f32 %v1954, 1.0
    %v1956 = vrcp.pop %v1955
    %v1957 = vmul.f32 1.0, %v1956
    %v1958 = vtanh.pop %v1951
    %v1959 = vxor.u32 %v1951, 2147483648
    %v1960 = vmul.f32 %v1959, 1.442695
    %v1961 = vpow.pop %v1960
    %v1962 = vadd.f32 %v1961, 1.0
    %v1963 = vrcp.pop %v1962
    %v1964 = vmul.f32 1.0, %v1963
    %v1966 = vrot.slane %v1474, 6
    %v1968 = vmul.f32 %v1957, %v1966
    %v1969 = vmul.f32 %v1957, %v1958
    %1971 = vrot.lane.b32.xlu0 %v1969, 64
    %v1972 = vpop.permute.xlu0 %1971
    %v1974 = vadd.f32 %v1968, %v1972
    %v1975 = vtanh.pop %v1974
    %v1976 = vmul.f32 %v1964, %v1975
    %v1977 = vld [vmem:[#allocation2 + $0x20] sm:$0x30]
    %v1978 = vld [vmem:[#allocation2 + $0x28] sm:$0x30]
    %v1979 = vpack.c.bf16 %v1559, %v1559
    %v1981 = vrot.slane %v1979, 1
    %1982 = vrot.lane.b32.xlu0 %v1981, 64
    %v1983 = vpop.permute.xlu0 %1982
    %v1985 = vsel %vm662, %v1983, 0
    %1987 = vmatprep.subr.bf16.mxu0 %v883
    %1988 = vmatpush1.bf16.msra.mxu0 %v882
    %1989 = vmatprep.subr.bf16.mxu0 %v885
    %1990 = vmatpush1.bf16.msra.mxu0 %v884
    %1991 = vmatprep.subr.bf16.mxu0 %v887
    %1992 = vmatpush1.bf16.msra.mxu0 %v886
    %1993 = vmatprep.subr.bf16.mxu0 %v889
    %1994 = vmatpush1.bf16.msra.mxu0 %v888
    %1995 = vmatprep.subr.bf16.mxu0 0
    %1996 = vmatpush1.bf16.msra.mxu0 0
    %1997 = vmatprep.subr.bf16.mxu0 0
    %1998 = vmatpush1.bf16.msra.mxu0 0
    %1999 = vmatprep.subr.bf16.mxu0 0
    %2000 = vmatpush1.bf16.msra.mxu0 0
    %2001 = vmatprep.subr.bf16.mxu0 0
    %2002 = vmatpush1.bf16.msra.mxu0 0
    %2003 = vmatprep.subr.bf16.mxu0 0
    %2004 = vmatpush1.bf16.msra.mxu0 0
    %2005 = vmatprep.subr.bf16.mxu0 0
    %2006 = vmatpush1.bf16.msra.mxu0 0
    %2007 = vmatprep.subr.bf16.mxu0 0
    %2008 = vmatpush1.bf16.msra.mxu0 0
    %2009 = vmatprep.subr.bf16.mxu0 0
    %2010 = vmatpush1.bf16.msra.mxu0 0
    %2011 = vmatprep.subr.bf16.mxu0 0
    %2012 = vmatpush1.bf16.msra.mxu0 0
    %2013 = vmatprep.subr.bf16.mxu0 0
    %2014 = vmatpush1.bf16.msra.mxu0 0
    %2015 = vmatprep.subr.bf16.mxu0 0
    %2016 = vmatpush1.bf16.msra.mxu0 0
    %2017 = vmatprep.subr.bf16.mxu0 0
    %2018 = vmatpush1.bf16.msra.mxu0 0
    %2019 = vmatprep.mubr.bf16.mxu0 0
    %2020 = vmatmul.mubr.bf16.gmra.mrb[0].mxu0 %v1985
    %v2021 = vpop.f32.mrb[0].mxu0
    %v2022 = vadd.f32 0.0, %v2021
    %v2023 = vpop.f32.mrb[0].mxu0
    %v2024 = vadd.f32 0.0, %v2023
    %v2025 = vpop.f32.mrb[0].mxu0
    %v2026 = vpop.f32.mrb[0].mxu0
    %2027 = vdwg.mxu0
    %v2030 = vrot.slane %v2022, 4
    %v2031 = vrot.slane %v2024, 4
    %v2034 = vadd.f32 %v1977, %v2030
    %v2035 = vadd.f32 %v1978, %v2031
    %v2036 = vxor.u32 %v2034, 2147483648
    %v2037 = vmul.f32 %v2036, 1.442695
    %v2038 = vpow.pop %v2037
    %v2039 = vadd.f32 %v2038, 1.0
    %v2040 = vrcp.pop %v2039
    %v2041 = vmul.f32 1.0, %v2040
    %v2042 = vtanh.pop %v2035
    %v2043 = vxor.u32 %v2035, 2147483648
    %v2044 = vmul.f32 %v2043, 1.442695
    %v2045 = vpow.pop %v2044
    %v2046 = vadd.f32 %v2045, 1.0
    %v2047 = vrcp.pop %v2046
    %v2048 = vmul.f32 1.0, %v2047
    %v2050 = vrot.slane %v1557, 6
    %v2052 = vmul.f32 %v2041, %v2050
    %v2053 = vmul.f32 %v2041, %v2042
    %2055 = vrot.lane.b32.xlu0 %v2053, 64
    %v2056 = vpop.permute.xlu0 %2055
    %v2058 = vadd.f32 %v2052, %v2056
    %v2059 = vtanh.pop %v2058
    %v2060 = vmul.f32 %v2048, %v2059
    %v2061 = vld [vmem:[#allocation2 + $0x30] sm:$0x30]
    %v2062 = vld [vmem:[#allocation2 + $0x38] sm:$0x30]
    %v2063 = vpack.c.bf16 %v1642, %v1642
    %v2065 = vrot.slane %v2063, 1
    %2066 = vrot.lane.b32.xlu0 %v2065, 64
    %v2067 = vpop.permute.xlu0 %2066
    %v2069 = vsel %vm662, %v2067, 0
    %2071 = vmatprep.subr.bf16.mxu0 %v999
    %2072 = vmatpush1.bf16.msra.mxu0 %v998
    %2073 = vmatprep.subr.bf16.mxu0 %v1001
    %2074 = vmatpush1.bf16.msra.mxu0 %v1000
    %2075 = vmatprep.subr.bf16.mxu0 %v1003
    %2076 = vmatpush1.bf16.msra.mxu0 %v1002
    %2077 = vmatprep.subr.bf16.mxu0 %v1005
    %2078 = vmatpush1.bf16.msra.mxu0 %v1004
    %2079 = vmatprep.subr.bf16.mxu0 0
    %2080 = vmatpush1.bf16.msra.mxu0 0
    %2081 = vmatprep.subr.bf16.mxu0 0
    %2082 = vmatpush1.bf16.msra.mxu0 0
    %2083 = vmatprep.subr.bf16.mxu0 0
    %2084 = vmatpush1.bf16.msra.mxu0 0
    %2085 = vmatprep.subr.bf16.mxu0 0
    %2086 = vmatpush1.bf16.msra.mxu0 0
    %2087 = vmatprep.subr.bf16.mxu0 0
    %2088 = vmatpush1.bf16.msra.mxu0 0
    %2089 = vmatprep.subr.bf16.mxu0 0
    %2090 = vmatpush1.bf16.msra.mxu0 0
    %2091 = vmatprep.subr.bf16.mxu0 0
    %2092 = vmatpush1.bf16.msra.mxu0 0
    %2093 = vmatprep.subr.bf16.mxu0 0
    %2094 = vmatpush1.bf16.msra.mxu0 0
    %2095 = vmatprep.subr.bf16.mxu0 0
    %2096 = vmatpush1.bf16.msra.mxu0 0
    %2097 = vmatprep.subr.bf16.mxu0 0
    %2098 = vmatpush1.bf16.msra.mxu0 0
    %2099 = vmatprep.subr.bf16.mxu0 0
    %2100 = vmatpush1.bf16.msra.mxu0 0
    %2101 = vmatprep.subr.bf16.mxu0 0
    %2102 = vmatpush1.bf16.msra.mxu0 0
    %2103 = vmatprep.mubr.bf16.mxu0 0
    %2104 = vmatmul.mubr.bf16.gmra.mrb[0].mxu0 %v2069
    %v2105 = vpop.f32.mrb[0].mxu0
    %v2106 = vadd.f32 0.0, %v2105
    %v2107 = vpop.f32.mrb[0].mxu0
    %v2108 = vadd.f32 0.0, %v2107
    %v2109 = vpop.f32.mrb[0].mxu0
    %v2110 = vpop.f32.mrb[0].mxu0
    %2111 = vdwg.mxu0
    %v2114 = vrot.slane %v2106, 4
    %v2115 = vrot.slane %v2108, 4
    %v2118 = vadd.f32 %v2061, %v2114
    %v2119 = vadd.f32 %v2062, %v2115
    %v2120 = vxor.u32 %v2118, 2147483648
    %v2121 = vmul.f32 %v2120, 1.442695
    %v2122 = vpow.pop %v2121
    %v2123 = vadd.f32 %v2122, 1.0
    %v2124 = vrcp.pop %v2123
    %v2125 = vmul.f32 1.0, %v2124
    %v2126 = vtanh.pop %v2119
    %v2127 = vxor.u32 %v2119, 2147483648
    %v2128 = vmul.f32 %v2127, 1.442695
    %v2129 = vpow.pop %v2128
    %v2130 = vadd.f32 %v2129, 1.0
    %v2131 = vrcp.pop %v2130
    %v2132 = vmul.f32 1.0, %v2131
    %v2134 = vrot.slane %v1640, 6
    %v2136 = vmul.f32 %v2125, %v2134
    %v2137 = vmul.f32 %v2125, %v2126
    %2139 = vrot.lane.b32.xlu0 %v2137, 64
    %v2140 = vpop.permute.xlu0 %2139
    %v2142 = vadd.f32 %v2136, %v2140
    %v2143 = vtanh.pop %v2142
    %v2144 = vmul.f32 %v2132, %v2143
    %v2145 = vld [vmem:[#allocation2 + $0x40] sm:$0x30]
    %v2146 = vld [vmem:[#allocation2 + $0x48] sm:$0x30]
    %v2147 = vpack.c.bf16 %v1725, %v1725
    %v2149 = vrot.slane %v2147, 1
    %2150 = vrot.lane.b32.xlu0 %v2149, 64
    %v2151 = vpop.permute.xlu0 %2150
    %v2153 = vsel %vm662, %v2151, 0
    %2155 = vmatprep.subr.bf16.mxu0 %v1115
    %2156 = vmatpush1.bf16.msra.mxu0 %v1114
    %2157 = vmatprep.subr.bf16.mxu0 %v1117
    %2158 = vmatpush1.bf16.msra.mxu0 %v1116
    %2159 = vmatprep.subr.bf16.mxu0 %v1119
    %2160 = vmatpush1.bf16.msra.mxu0 %v1118
    %2161 = vmatprep.subr.bf16.mxu0 %v1121
    %2162 = vmatpush1.bf16.msra.mxu0 %v1120
    %2163 = vmatprep.subr.bf16.mxu0 0
    %2164 = vmatpush1.bf16.msra.mxu0 0
    %2165 = vmatprep.subr.bf16.mxu0 0
    %2166 = vmatpush1.bf16.msra.mxu0 0
    %2167 = vmatprep.subr.bf16.mxu0 0
    %2168 = vmatpush1.bf16.msra.mxu0 0
    %2169 = vmatprep.subr.bf16.mxu0 0
    %2170 = vmatpush1.bf16.msra.mxu0 0
    %2171 = vmatprep.subr.bf16.mxu0 0
    %2172 = vmatpush1.bf16.msra.mxu0 0
    %2173 = vmatprep.subr.bf16.mxu0 0
    %2174 = vmatpush1.bf16.msra.mxu0 0
    %2175 = vmatprep.subr.bf16.mxu0 0
    %2176 = vmatpush1.bf16.msra.mxu0 0
    %2177 = vmatprep.subr.bf16.mxu0 0
    %2178 = vmatpush1.bf16.msra.mxu0 0
    %2179 = vmatprep.subr.bf16.mxu0 0
    %2180 = vmatpush1.bf16.msra.mxu0 0
    %2181 = vmatprep.subr.bf16.mxu0 0
    %2182 = vmatpush1.bf16.msra.mxu0 0
    %2183 = vmatprep.subr.bf16.mxu0 0
    %2184 = vmatpush1.bf16.msra.mxu0 0
    %2185 = vmatprep.subr.bf16.mxu0 0
    %2186 = vmatpush1.bf16.msra.mxu0 0
    %2187 = vmatprep.mubr.bf16.mxu0 0
    %2188 = vmatmul.mubr.bf16.gmra.mrb[0].mxu0 %v2153
    %v2189 = vpop.f32.mrb[0].mxu0
    %v2190 = vadd.f32 0.0, %v2189
    %v2191 = vpop.f32.mrb[0].mxu0
    %v2192 = vadd.f32 0.0, %v2191
    %v2193 = vpop.f32.mrb[0].mxu0
    %v2194 = vpop.f32.mrb[0].mxu0
    %2195 = vdwg.mxu0
    %v2198 = vrot.slane %v2190, 4
    %v2199 = vrot.slane %v2192, 4
    %v2202 = vadd.f32 %v2145, %v2198
    %v2203 = vadd.f32 %v2146, %v2199
    %v2204 = vxor.u32 %v2202, 2147483648
    %v2205 = vmul.f32 %v2204, 1.442695
    %v2206 = vpow.pop %v2205
    %v2207 = vadd.f32 %v2206, 1.0
    %v2208 = vrcp.pop %v2207
    %v2209 = vmul.f32 1.0, %v2208
    %v2210 = vtanh.pop %v2203
    %v2211 = vxor.u32 %v2203, 2147483648
    %v2212 = vmul.f32 %v2211, 1.442695
    %v2213 = vpow.pop %v2212
    %v2214 = vadd.f32 %v2213, 1.0
    %v2215 = vrcp.pop %v2214
    %v2216 = vmul.f32 1.0, %v2215
    %v2218 = vrot.slane %v1723, 6
    %v2220 = vmul.f32 %v2209, %v2218
    %v2221 = vmul.f32 %v2209, %v2210
    %2223 = vrot.lane.b32.xlu0 %v2221, 64
    %v2224 = vpop.permute.xlu0 %2223
    %v2226 = vadd.f32 %v2220, %v2224
    %v2227 = vtanh.pop %v2226
    %v2228 = vmul.f32 %v2216, %v2227
    %v2229 = vld [vmem:[#allocation2 + $0x50] sm:$0x30]
    %v2230 = vld [vmem:[#allocation2 + $0x58] sm:$0x30]
    %v2231 = vpack.c.bf16 %v1808, %v1808
    %v2233 = vrot.slane %v2231, 1
    %2234 = vrot.lane.b32.xlu0 %v2233, 64
    %v2235 = vpop.permute.xlu0 %2234
    %v2237 = vsel %vm662, %v2235, 0
    %2239 = vmatprep.subr.bf16.mxu0 %v1231
    %2240 = vmatpush1.bf16.msra.mxu0 %v1230
    %2241 = vmatprep.subr.bf16.mxu0 %v1233
    %2242 = vmatpush1.bf16.msra.mxu0 %v1232
    %2243 = vmatprep.subr.bf16.mxu0 %v1235
    %2244 = vmatpush1.bf16.msra.mxu0 %v1234
    %2245 = vmatprep.subr.bf16.mxu0 %v1237
    %2246 = vmatpush1.bf16.msra.mxu0 %v1236
    %2247 = vmatprep.subr.bf16.mxu0 0
    %2248 = vmatpush1.bf16.msra.mxu0 0
    %2249 = vmatprep.subr.bf16.mxu0 0
    %2250 = vmatpush1.bf16.msra.mxu0 0
    %2251 = vmatprep.subr.bf16.mxu0 0
    %2252 = vmatpush1.bf16.msra.mxu0 0
    %2253 = vmatprep.subr.bf16.mxu0 0
    %2254 = vmatpush1.bf16.msra.mxu0 0
    %2255 = vmatprep.subr.bf16.mxu0 0
    %2256 = vmatpush1.bf16.msra.mxu0 0
    %2257 = vmatprep.subr.bf16.mxu0 0
    %2258 = vmatpush1.bf16.msra.mxu0 0
    %2259 = vmatprep.subr.bf16.mxu0 0
    %2260 = vmatpush1.bf16.msra.mxu0 0
    %2261 = vmatprep.subr.bf16.mxu0 0
    %2262 = vmatpush1.bf16.msra.mxu0 0
    %2263 = vmatprep.subr.bf16.mxu0 0
    %2264 = vmatpush1.bf16.msra.mxu0 0
    %2265 = vmatprep.subr.bf16.mxu0 0
    %2266 = vmatpush1.bf16.msra.mxu0 0
    %2267 = vmatprep.subr.bf16.mxu0 0
    %2268 = vmatpush1.bf16.msra.mxu0 0
    %2269 = vmatprep.subr.bf16.mxu0 0
    %2270 = vmatpush1.bf16.msra.mxu0 0
    %2271 = vmatprep.mubr.bf16.mxu0 0
    %2272 = vmatmul.mubr.bf16.gmra.mrb[0].mxu0 %v2237
    %v2273 = vpop.f32.mrb[0].mxu0
    %v2274 = vadd.f32 0.0, %v2273
    %v2275 = vpop.f32.mrb[0].mxu0
    %v2276 = vadd.f32 0.0, %v2275
    %v2277 = vpop.f32.mrb[0].mxu0
    %v2278 = vpop.f32.mrb[0].mxu0
    %2279 = vdwg.mxu0
    %v2282 = vrot.slane %v2274, 4
    %v2283 = vrot.slane %v2276, 4
    %v2286 = vadd.f32 %v2229, %v2282
    %v2287 = vadd.f32 %v2230, %v2283
    %v2288 = vxor.u32 %v2286, 2147483648
    %v2289 = vmul.f32 %v2288, 1.442695
    %v2290 = vpow.pop %v2289
    %v2291 = vadd.f32 %v2290, 1.0
    %v2292 = vrcp.pop %v2291
    %v2293 = vmul.f32 1.0, %v2292
    %v2294 = vtanh.pop %v2287
    %v2295 = vxor.u32 %v2287, 2147483648
    %v2296 = vmul.f32 %v2295, 1.442695
    %v2297 = vpow.pop %v2296
    %v2298 = vadd.f32 %v2297, 1.0
    %v2299 = vrcp.pop %v2298
    %v2300 = vmul.f32 1.0, %v2299
    %v2302 = vrot.slane %v1806, 6
    %v2304 = vmul.f32 %v2293, %v2302
    %v2305 = vmul.f32 %v2293, %v2294
    %2307 = vrot.lane.b32.xlu0 %v2305, 64
    %v2308 = vpop.permute.xlu0 %2307
    %v2310 = vadd.f32 %v2304, %v2308
    %v2311 = vtanh.pop %v2310
    %v2312 = vmul.f32 %v2300, %v2311
    %v2313 = vld [vmem:[#allocation2] sm:$0xc0]
    %v2314 = vld [vmem:[#allocation2 + $0x8] sm:$0xc0]
    %v2315 = vpack.c.bf16 %v1892, %v1892
    %v2317 = vrot.slane %v2315, 2
    %2318 = vrot.lane.b32.xlu0 %v2317, 64
    %v2319 = vpop.permute.xlu0 %2318
    %v2321 = vsel %vm662, %v2319, 0
    %2323 = vmatprep.subr.bf16.mxu0 %v647
    %2324 = vmatpush1.bf16.msra.mxu0 %v646
    %2325 = vmatprep.subr.bf16.mxu0 %v649
    %2326 = vmatpush1.bf16.msra.mxu0 %v648
    %2327 = vmatprep.subr.bf16.mxu0 %v651
    %2328 = vmatpush1.bf16.msra.mxu0 %v650
    %2329 = vmatprep.subr.bf16.mxu0 %v653
    %2330 = vmatpush1.bf16.msra.mxu0 %v652
    %2331 = vmatprep.subr.bf16.mxu0 0
    %2332 = vmatpush1.bf16.msra.mxu0 0
    %2333 = vmatprep.subr.bf16.mxu0 0
    %2334 = vmatpush1.bf16.msra.mxu0 0
    %2335 = vmatprep.subr.bf16.mxu0 0
    %2336 = vmatpush1.bf16.msra.mxu0 0
    %2337 = vmatprep.subr.bf16.mxu0 0
    %2338 = vmatpush1.bf16.msra.mxu0 0
    %2339 = vmatprep.subr.bf16.mxu0 0
    %2340 = vmatpush1.bf16.msra.mxu0 0
    %2341 = vmatprep.subr.bf16.mxu0 0
    %2342 = vmatpush1.bf16.msra.mxu0 0
    %2343 = vmatprep.subr.bf16.mxu0 0
    %2344 = vmatpush1.bf16.msra.mxu0 0
    %2345 = vmatprep.subr.bf16.mxu0 0
    %2346 = vmatpush1.bf16.msra.mxu0 0
    %2347 = vmatprep.subr.bf16.mxu0 0
    %2348 = vmatpush1.bf16.msra.mxu0 0
    %2349 = vmatprep.subr.bf16.mxu0 0
    %2350 = vmatpush1.bf16.msra.mxu0 0
    %2351 = vmatprep.subr.bf16.mxu0 0
    %2352 = vmatpush1.bf16.msra.mxu0 0
    %2353 = vmatprep.subr.bf16.mxu0 0
    %2354 = vmatpush1.bf16.msra.mxu0 0
    %2355 = vmatprep.mubr.bf16.mxu0 0
    %2356 = vmatmul.mubr.bf16.gmra.mrb[0].mxu0 %v2321
    %v2357 = vpop.f32.mrb[0].mxu0
    %v2358 = vadd.f32 0.0, %v2357
    %v2359 = vpop.f32.mrb[0].mxu0
    %v2360 = vadd.f32 0.0, %v2359
    %v2361 = vpop.f32.mrb[0].mxu0
    %v2362 = vpop.f32.mrb[0].mxu0
    %2363 = vdwg.mxu0
    %v2366 = vrot.slane %v2358, 2
    %v2367 = vrot.slane %v2360, 2
    %v2370 = vadd.f32 %v2313, %v2366
    %v2371 = vadd.f32 %v2314, %v2367
    %v2372 = vxor.u32 %v2370, 2147483648
    %v2373 = vmul.f32 %v2372, 1.442695
    %v2374 = vpow.pop %v2373
    %v2375 = vadd.f32 %v2374, 1.0
    %v2376 = vrcp.pop %v2375
    %v2377 = vmul.f32 1.0, %v2376
    %v2378 = vtanh.pop %v2371
    %v2379 = vxor.u32 %v2371, 2147483648
    %v2380 = vmul.f32 %v2379, 1.442695
    %v2381 = vpow.pop %v2380
    %v2382 = vadd.f32 %v2381, 1.0
    %v2383 = vrcp.pop %v2382
    %v2384 = vmul.f32 1.0, %v2383
    %v2386 = vrot.slane %v1890, 6
    %v2388 = vmul.f32 %v2377, %v2386
    %v2389 = vmul.f32 %v2377, %v2378
    %2391 = vrot.lane.b32.xlu0 %v2389, 64
    %v2392 = vpop.permute.xlu0 %2391
    %v2394 = vadd.f32 %v2388, %v2392
    %v2395 = vtanh.pop %v2394
    %v2396 = vmul.f32 %v2384, %v2395
    %v2397 = vld [vmem:[#allocation2 + $0x10] sm:$0xc0]
    %v2398 = vld [vmem:[#allocation2 + $0x18] sm:$0xc0]
    %v2399 = vpack.c.bf16 %v1976, %v1976
    %v2401 = vrot.slane %v2399, 2
    %2402 = vrot.lane.b32.xlu0 %v2401, 64
    %v2403 = vpop.permute.xlu0 %2402
    %v2405 = vsel %vm662, %v2403, 0
    %2407 = vmatprep.subr.bf16.mxu0 %v767
    %2408 = vmatpush1.bf16.msra.mxu0 %v766
    %2409 = vmatprep.subr.bf16.mxu0 %v769
    %2410 = vmatpush1.bf16.msra.mxu0 %v768
    %2411 = vmatprep.subr.bf16.mxu0 %v771
    %2412 = vmatpush1.bf16.msra.mxu0 %v770
    %2413 = vmatprep.subr.bf16.mxu0 %v773
    %2414 = vmatpush1.bf16.msra.mxu0 %v772
    %2415 = vmatprep.subr.bf16.mxu0 0
    %2416 = vmatpush1.bf16.msra.mxu0 0
    %2417 = vmatprep.subr.bf16.mxu0 0
    %2418 = vmatpush1.bf16.msra.mxu0 0
    %2419 = vmatprep.subr.bf16.mxu0 0
    %2420 = vmatpush1.bf16.msra.mxu0 0
    %2421 = vmatprep.subr.bf16.mxu0 0
    %2422 = vmatpush1.bf16.msra.mxu0 0
    %2423 = vmatprep.subr.bf16.mxu0 0
    %2424 = vmatpush1.bf16.msra.mxu0 0
    %2425 = vmatprep.subr.bf16.mxu0 0
    %2426 = vmatpush1.bf16.msra.mxu0 0
    %2427 = vmatprep.subr.bf16.mxu0 0
    %2428 = vmatpush1.bf16.msra.mxu0 0
    %2429 = vmatprep.subr.bf16.mxu0 0
    %2430 = vmatpush1.bf16.msra.mxu0 0
    %2431 = vmatprep.subr.bf16.mxu0 0
    %2432 = vmatpush1.bf16.msra.mxu0 0
    %2433 = vmatprep.subr.bf16.mxu0 0
    %2434 = vmatpush1.bf16.msra.mxu0 0
    %2435 = vmatprep.subr.bf16.mxu0 0
    %2436 = vmatpush1.bf16.msra.mxu0 0
    %2437 = vmatprep.subr.bf16.mxu0 0
    %2438 = vmatpush1.bf16.msra.mxu0 0
    %2439 = vmatprep.mubr.bf16.mxu0 0
    %2440 = vmatmul.mubr.bf16.gmra.mrb[0].mxu0 %v2405
    %v2441 = vpop.f32.mrb[0].mxu0
    %v2442 = vadd.f32 0.0, %v2441
    %v2443 = vpop.f32.mrb[0].mxu0
    %v2444 = vadd.f32 0.0, %v2443
    %v2445 = vpop.f32.mrb[0].mxu0
    %v2446 = vpop.f32.mrb[0].mxu0
    %2447 = vdwg.mxu0
    %v2450 = vrot.slane %v2442, 2
    %v2451 = vrot.slane %v2444, 2
    %v2454 = vadd.f32 %v2397, %v2450
    %v2455 = vadd.f32 %v2398, %v2451
    %v2456 = vxor.u32 %v2454, 2147483648
    %v2457 = vmul.f32 %v2456, 1.442695
    %v2458 = vpow.pop %v2457
    %v2459 = vadd.f32 %v2458, 1.0
    %v2460 = vrcp.pop %v2459
    %v2461 = vmul.f32 1.0, %v2460
    %v2462 = vtanh.pop %v2455
    %v2463 = vxor.u32 %v2455, 2147483648
    %v2464 = vmul.f32 %v2463, 1.442695
    %v2465 = vpow.pop %v2464
    %v2466 = vadd.f32 %v2465, 1.0
    %v2467 = vrcp.pop %v2466
    %v2468 = vmul.f32 1.0, %v2467
    %v2470 = vrot.slane %v1974, 6
    %v2472 = vmul.f32 %v2461, %v2470
    %v2473 = vmul.f32 %v2461, %v2462
    %2475 = vrot.lane.b32.xlu0 %v2473, 64
    %v2476 = vpop.permute.xlu0 %2475
    %v2478 = vadd.f32 %v2472, %v2476
    %v2479 = vtanh.pop %v2478
    %v2480 = vmul.f32 %v2468, %v2479
    %v2481 = vld [vmem:[#allocation2 + $0x20] sm:$0xc0]
    %v2482 = vld [vmem:[#allocation2 + $0x28] sm:$0xc0]
    %v2483 = vpack.c.bf16 %v2060, %v2060
    %v2485 = vrot.slane %v2483, 2
    %2486 = vrot.lane.b32.xlu0 %v2485, 64
    %v2487 = vpop.permute.xlu0 %2486
    %v2489 = vsel %vm662, %v2487, 0
    %2491 = vmatprep.subr.bf16.mxu0 %v883
    %2492 = vmatpush1.bf16.msra.mxu0 %v882
    %2493 = vmatprep.subr.bf16.mxu0 %v885
    %2494 = vmatpush1.bf16.msra.mxu0 %v884
    %2495 = vmatprep.subr.bf16.mxu0 %v887
    %2496 = vmatpush1.bf16.msra.mxu0 %v886
    %2497 = vmatprep.subr.bf16.mxu0 %v889
    %2498 = vmatpush1.bf16.msra.mxu0 %v888
    %2499 = vmatprep.subr.bf16.mxu0 0
    %2500 = vmatpush1.bf16.msra.mxu0 0
    %2501 = vmatprep.subr.bf16.mxu0 0
    %2502 = vmatpush1.bf16.msra.mxu0 0
    %2503 = vmatprep.subr.bf16.mxu0 0
    %2504 = vmatpush1.bf16.msra.mxu0 0
    %2505 = vmatprep.subr.bf16.mxu0 0
    %2506 = vmatpush1.bf16.msra.mxu0 0
    %2507 = vmatprep.subr.bf16.mxu0 0
    %2508 = vmatpush1.bf16.msra.mxu0 0
    %2509 = vmatprep.subr.bf16.mxu0 0
    %2510 = vmatpush1.bf16.msra.mxu0 0
    %2511 = vmatprep.subr.bf16.mxu0 0
    %2512 = vmatpush1.bf16.msra.mxu0 0
    %2513 = vmatprep.subr.bf16.mxu0 0
    %2514 = vmatpush1.bf16.msra.mxu0 0
    %2515 = vmatprep.subr.bf16.mxu0 0
    %2516 = vmatpush1.bf16.msra.mxu0 0
    %2517 = vmatprep.subr.bf16.mxu0 0
    %2518 = vmatpush1.bf16.msra.mxu0 0
    %2519 = vmatprep.subr.bf16.mxu0 0
    %2520 = vmatpush1.bf16.msra.mxu0 0
    %2521 = vmatprep.subr.bf16.mxu0 0
    %2522 = vmatpush1.bf16.msra.mxu0 0
    %2523 = vmatprep.mubr.bf16.mxu0 0
    %2524 = vmatmul.mubr.bf16.gmra.mrb[0].mxu0 %v2489
    %v2525 = vpop.f32.mrb[0].mxu0
    %v2526 = vadd.f32 0.0, %v2525
    %v2527 = vpop.f32.mrb[0].mxu0
    %v2528 = vadd.f32 0.0, %v2527
    %v2529 = vpop.f32.mrb[0].mxu0
    %v2530 = vpop.f32.mrb[0].mxu0
    %2531 = vdwg.mxu0
    %v2534 = vrot.slane %v2526, 2
    %v2535 = vrot.slane %v2528, 2
    %v2538 = vadd.f32 %v2481, %v2534
    %v2539 = vadd.f32 %v2482, %v2535
    %v2540 = vxor.u32 %v2538, 2147483648
    %v2541 = vmul.f32 %v2540, 1.442695
    %v2542 = vpow.pop %v2541
    %v2543 = vadd.f32 %v2542, 1.0
    %v2544 = vrcp.pop %v2543
    %v2545 = vmul.f32 1.0, %v2544
    %v2546 = vtanh.pop %v2539
    %v2547 = vxor.u32 %v2539, 2147483648
    %v2548 = vmul.f32 %v2547, 1.442695
    %v2549 = vpow.pop %v2548
    %v2550 = vadd.f32 %v2549, 1.0
    %v2551 = vrcp.pop %v2550
    %v2552 = vmul.f32 1.0, %v2551
    %v2554 = vrot.slane %v2058, 6
    %v2556 = vmul.f32 %v2545, %v2554
    %v2557 = vmul.f32 %v2545, %v2546
    %2559 = vrot.lane.b32.xlu0 %v2557, 64
    %v2560 = vpop.permute.xlu0 %2559
    %v2562 = vadd.f32 %v2556, %v2560
    %v2563 = vtanh.pop %v2562
    %v2564 = vmul.f32 %v2552, %v2563
    %v2565 = vld [vmem:[#allocation2 + $0x30] sm:$0xc0]
    %v2566 = vld [vmem:[#allocation2 + $0x38] sm:$0xc0]
    %v2567 = vpack.c.bf16 %v2144, %v2144
    %v2569 = vrot.slane %v2567, 2
    %2570 = vrot.lane.b32.xlu0 %v2569, 64
    %v2571 = vpop.permute.xlu0 %2570
    %v2573 = vsel %vm662, %v2571, 0
    %2575 = vmatprep.subr.bf16.mxu0 %v999
    %2576 = vmatpush1.bf16.msra.mxu0 %v998
    %2577 = vmatprep.subr.bf16.mxu0 %v1001
    %2578 = vmatpush1.bf16.msra.mxu0 %v1000
    %2579 = vmatprep.subr.bf16.mxu0 %v1003
    %2580 = vmatpush1.bf16.msra.mxu0 %v1002
    %2581 = vmatprep.subr.bf16.mxu0 %v1005
    %2582 = vmatpush1.bf16.msra.mxu0 %v1004
    %2583 = vmatprep.subr.bf16.mxu0 0
    %2584 = vmatpush1.bf16.msra.mxu0 0
    %2585 = vmatprep.subr.bf16.mxu0 0
    %2586 = vmatpush1.bf16.msra.mxu0 0
    %2587 = vmatprep.subr.bf16.mxu0 0
    %2588 = vmatpush1.bf16.msra.mxu0 0
    %2589 = vmatprep.subr.bf16.mxu0 0
    %2590 = vmatpush1.bf16.msra.mxu0 0
    %2591 = vmatprep.subr.bf16.mxu0 0
    %2592 = vmatpush1.bf16.msra.mxu0 0
    %2593 = vmatprep.subr.bf16.mxu0 0
    %2594 = vmatpush1.bf16.msra.mxu0 0
    %2595 = vmatprep.subr.bf16.mxu0 0
    %2596 = vmatpush1.bf16.msra.mxu0 0
    %2597 = vmatprep.subr.bf16.mxu0 0
    %2598 = vmatpush1.bf16.msra.mxu0 0
    %2599 = vmatprep.subr.bf16.mxu0 0
    %2600 = vmatpush1.bf16.msra.mxu0 0
    %2601 = vmatprep.subr.bf16.mxu0 0
    %2602 = vmatpush1.bf16.msra.mxu0 0
    %2603 = vmatprep.subr.bf16.mxu0 0
    %2604 = vmatpush1.bf16.msra.mxu0 0
    %2605 = vmatprep.subr.bf16.mxu0 0
    %2606 = vmatpush1.bf16.msra.mxu0 0
    %2607 = vmatprep.mubr.bf16.mxu0 0
    %2608 = vmatmul.mubr.bf16.gmra.mrb[0].mxu0 %v2573
    %v2609 = vpop.f32.mrb[0].mxu0
    %v2610 = vadd.f32 0.0, %v2609
    %v2611 = vpop.f32.mrb[0].mxu0
    %v2612 = vadd.f32 0.0, %v2611
    %v2613 = vpop.f32.mrb[0].mxu0
    %v2614 = vpop.f32.mrb[0].mxu0
    %2615 = vdwg.mxu0
    %v2618 = vrot.slane %v2610, 2
    %v2619 = vrot.slane %v2612, 2
    %v2622 = vadd.f32 %v2565, %v2618
    %v2623 = vadd.f32 %v2566, %v2619
    %v2624 = vxor.u32 %v2622, 2147483648
    %v2625 = vmul.f32 %v2624, 1.442695
    %v2626 = vpow.pop %v2625
    %v2627 = vadd.f32 %v2626, 1.0
    %v2628 = vrcp.pop %v2627
    %v2629 = vmul.f32 1.0, %v2628
    %v2630 = vtanh.pop %v2623
    %v2631 = vxor.u32 %v2623, 2147483648
    %v2632 = vmul.f32 %v2631, 1.442695
    %v2633 = vpow.pop %v2632
    %v2634 = vadd.f32 %v2633, 1.0
    %v2635 = vrcp.pop %v2634
    %v2636 = vmul.f32 1.0, %v2635
    %v2638 = vrot.slane %v2142, 6
    %v2640 = vmul.f32 %v2629, %v2638
    %v2641 = vmul.f32 %v2629, %v2630
    %2643 = vrot.lane.b32.xlu0 %v2641, 64
    %v2644 = vpop.permute.xlu0 %2643
    %v2646 = vadd.f32 %v2640, %v2644
    %v2647 = vtanh.pop %v2646
    %v2648 = vmul.f32 %v2636, %v2647
    %v2649 = vld [vmem:[#allocation2 + $0x40] sm:$0xc0]
    %v2650 = vld [vmem:[#allocation2 + $0x48] sm:$0xc0]
    %v2651 = vpack.c.bf16 %v2228, %v2228
    %v2653 = vrot.slane %v2651, 2
    %2654 = vrot.lane.b32.xlu0 %v2653, 64
    %v2655 = vpop.permute.xlu0 %2654
    %v2657 = vsel %vm662, %v2655, 0
    %2659 = vmatprep.subr.bf16.mxu0 %v1115
    %2660 = vmatpush1.bf16.msra.mxu0 %v1114
    %2661 = vmatprep.subr.bf16.mxu0 %v1117
    %2662 = vmatpush1.bf16.msra.mxu0 %v1116
    %2663 = vmatprep.subr.bf16.mxu0 %v1119
    %2664 = vmatpush1.bf16.msra.mxu0 %v1118
    %2665 = vmatprep.subr.bf16.mxu0 %v1121
    %2666 = vmatpush1.bf16.msra.mxu0 %v1120
    %2667 = vmatprep.subr.bf16.mxu0 0
    %2668 = vmatpush1.bf16.msra.mxu0 0
    %2669 = vmatprep.subr.bf16.mxu0 0
    %2670 = vmatpush1.bf16.msra.mxu0 0
    %2671 = vmatprep.subr.bf16.mxu0 0
    %2672 = vmatpush1.bf16.msra.mxu0 0
    %2673 = vmatprep.subr.bf16.mxu0 0
    %2674 = vmatpush1.bf16.msra.mxu0 0
    %2675 = vmatprep.subr.bf16.mxu0 0
    %2676 = vmatpush1.bf16.msra.mxu0 0
    %2677 = vmatprep.subr.bf16.mxu0 0
    %2678 = vmatpush1.bf16.msra.mxu0 0
    %2679 = vmatprep.subr.bf16.mxu0 0
    %2680 = vmatpush1.bf16.msra.mxu0 0
    %2681 = vmatprep.subr.bf16.mxu0 0
    %2682 = vmatpush1.bf16.msra.mxu0 0
    %2683 = vmatprep.subr.bf16.mxu0 0
    %2684 = vmatpush1.bf16.msra.mxu0 0
    %2685 = vmatprep.subr.bf16.mxu0 0
    %2686 = vmatpush1.bf16.msra.mxu0 0
    %2687 = vmatprep.subr.bf16.mxu0 0
    %2688 = vmatpush1.bf16.msra.mxu0 0
    %2689 = vmatprep.subr.bf16.mxu0 0
    %2690 = vmatpush1.bf16.msra.mxu0 0
    %2691 = vmatprep.mubr.bf16.mxu0 0
    %2692 = vmatmul.mubr.bf16.gmra.mrb[0].mxu0 %v2657
    %v2693 = vpop.f32.mrb[0].mxu0
    %v2694 = vadd.f32 0.0, %v2693
    %v2695 = vpop.f32.mrb[0].mxu0
    %v2696 = vadd.f32 0.0, %v2695
    %v2697 = vpop.f32.mrb[0].mxu0
    %v2698 = vpop.f32.mrb[0].mxu0
    %2699 = vdwg.mxu0
    %v2702 = vrot.slane %v2694, 2
    %v2703 = vrot.slane %v2696, 2
    %v2706 = vadd.f32 %v2649, %v2702
    %v2707 = vadd.f32 %v2650, %v2703
    %v2708 = vxor.u32 %v2706, 2147483648
    %v2709 = vmul.f32 %v2708, 1.442695
    %v2710 = vpow.pop %v2709
    %v2711 = vadd.f32 %v2710, 1.0
    %v2712 = vrcp.pop %v2711
    %v2713 = vmul.f32 1.0, %v2712
    %v2714 = vtanh.pop %v2707
    %v2715 = vxor.u32 %v2707, 2147483648
    %v2716 = vmul.f32 %v2715, 1.442695
    %v2717 = vpow.pop %v2716
    %v2718 = vadd.f32 %v2717, 1.0
    %v2719 = vrcp.pop %v2718
    %v2720 = vmul.f32 1.0, %v2719
    %v2722 = vrot.slane %v2226, 6
    %v2724 = vmul.f32 %v2713, %v2722
    %v2725 = vmul.f32 %v2713, %v2714
    %2727 = vrot.lane.b32.xlu0 %v2725, 64
    %v2728 = vpop.permute.xlu0 %2727
    %v2730 = vadd.f32 %v2724, %v2728
    %v2731 = vtanh.pop %v2730
    %v2732 = vmul.f32 %v2720, %v2731
    %v2733 = vld [vmem:[#allocation2 + $0x50] sm:$0xc0]
    %v2734 = vld [vmem:[#allocation2 + $0x58] sm:$0xc0]
    %v2735 = vpack.c.bf16 %v2312, %v2312
    %v2737 = vrot.slane %v2735, 2
    %2738 = vrot.lane.b32.xlu0 %v2737, 64
    %v2739 = vpop.permute.xlu0 %2738
    %v2741 = vsel %vm662, %v2739, 0
    %2743 = vmatprep.subr.bf16.mxu0 %v1231
    %2744 = vmatpush1.bf16.msra.mxu0 %v1230
    %2745 = vmatprep.subr.bf16.mxu0 %v1233
    %2746 = vmatpush1.bf16.msra.mxu0 %v1232
    %2747 = vmatprep.subr.bf16.mxu0 %v1235
    %2748 = vmatpush1.bf16.msra.mxu0 %v1234
    %2749 = vmatprep.subr.bf16.mxu0 %v1237
    %2750 = vmatpush1.bf16.msra.mxu0 %v1236
    %2751 = vmatprep.subr.bf16.mxu0 0
    %2752 = vmatpush1.bf16.msra.mxu0 0
    %2753 = vmatprep.subr.bf16.mxu0 0
    %2754 = vmatpush1.bf16.msra.mxu0 0
    %2755 = vmatprep.subr.bf16.mxu0 0
    %2756 = vmatpush1.bf16.msra.mxu0 0
    %2757 = vmatprep.subr.bf16.mxu0 0
    %2758 = vmatpush1.bf16.msra.mxu0 0
    %2759 = vmatprep.subr.bf16.mxu0 0
    %2760 = vmatpush1.bf16.msra.mxu0 0
    %2761 = vmatprep.subr.bf16.mxu0 0
    %2762 = vmatpush1.bf16.msra.mxu0 0
    %2763 = vmatprep.subr.bf16.mxu0 0
    %2764 = vmatpush1.bf16.msra.mxu0 0
    %2765 = vmatprep.subr.bf16.mxu0 0
    %2766 = vmatpush1.bf16.msra.mxu0 0
    %2767 = vmatprep.subr.bf16.mxu0 0
    %2768 = vmatpush1.bf16.msra.mxu0 0
    %2769 = vmatprep.subr.bf16.mxu0 0
    %2770 = vmatpush1.bf16.msra.mxu0 0
    %2771 = vmatprep.subr.bf16.mxu0 0
    %2772 = vmatpush1.bf16.msra.mxu0 0
    %2773 = vmatprep.subr.bf16.mxu0 0
    %2774 = vmatpush1.bf16.msra.mxu0 0
    %2775 = vmatprep.mubr.bf16.mxu0 0
    %2776 = vmatmul.mubr.bf16.gmra.mrb[0].mxu0 %v2741
    %v2777 = vpop.f32.mrb[0].mxu0
    %v2778 = vadd.f32 0.0, %v2777
    %v2779 = vpop.f32.mrb[0].mxu0
    %v2780 = vadd.f32 0.0, %v2779
    %v2781 = vpop.f32.mrb[0].mxu0
    %v2782 = vpop.f32.mrb[0].mxu0
    %2783 = vdwg.mxu0
    %v2786 = vrot.slane %v2778, 2
    %v2787 = vrot.slane %v2780, 2
    %v2790 = vadd.f32 %v2733, %v2786
    %v2791 = vadd.f32 %v2734, %v2787
    %v2792 = vxor.u32 %v2790, 2147483648
    %v2793 = vmul.f32 %v2792, 1.442695
    %v2794 = vpow.pop %v2793
    %v2795 = vadd.f32 %v2794, 1.0
    %v2796 = vrcp.pop %v2795
    %v2797 = vmul.f32 1.0, %v2796
    %v2798 = vtanh.pop %v2791
    %v2799 = vxor.u32 %v2791, 2147483648
    %v2800 = vmul.f32 %v2799, 1.442695
    %v2801 = vpow.pop %v2800
    %v2802 = vadd.f32 %v2801, 1.0
    %v2803 = vrcp.pop %v2802
    %v2804 = vmul.f32 1.0, %v2803
    %v2806 = vrot.slane %v2310, 6
    %v2808 = vmul.f32 %v2797, %v2806
    %v2809 = vmul.f32 %v2797, %v2798
    %2811 = vrot.lane.b32.xlu0 %v2809, 64
    %v2812 = vpop.permute.xlu0 %2811
    %v2814 = vadd.f32 %v2808, %v2812
    %v2815 = vtanh.pop %v2814
    %v2816 = vmul.f32 %v2804, %v2815
    %v2817 = vld [vmem:[#allocation2 + $0x68] sm:$0x3]
    %v2818 = vld [vmem:[#allocation2 + $0x70] sm:$0x3]
    %v2819 = vpack.c.bf16 %v2396, %v2396
    %v2821 = vrot.slane %v2819, 3
    %2822 = vrot.lane.b32.xlu0 %v2821, 64
    %v2823 = vpop.permute.xlu0 %2822
    %v2825 = vsel %vm662, %v2823, 0
    %2827 = vmatprep.subr.bf16.mxu0 %v647
    %2828 = vmatpush1.bf16.msra.mxu0 %v646
    %2829 = vmatprep.subr.bf16.mxu0 %v649
    %2830 = vmatpush1.bf16.msra.mxu0 %v648
    %2831 = vmatprep.subr.bf16.mxu0 %v651
    %2832 = vmatpush1.bf16.msra.mxu0 %v650
    %2833 = vmatprep.subr.bf16.mxu0 %v653
    %2834 = vmatpush1.bf16.msra.mxu0 %v652
    %2835 = vmatprep.subr.bf16.mxu0 0
    %2836 = vmatpush1.bf16.msra.mxu0 0
    %2837 = vmatprep.subr.bf16.mxu0 0
    %2838 = vmatpush1.bf16.msra.mxu0 0
    %2839 = vmatprep.subr.bf16.mxu0 0
    %2840 = vmatpush1.bf16.msra.mxu0 0
    %2841 = vmatprep.subr.bf16.mxu0 0
    %2842 = vmatpush1.bf16.msra.mxu0 0
    %2843 = vmatprep.subr.bf16.mxu0 0
    %2844 = vmatpush1.bf16.msra.mxu0 0
    %2845 = vmatprep.subr.bf16.mxu0 0
    %2846 = vmatpush1.bf16.msra.mxu0 0
    %2847 = vmatprep.subr.bf16.mxu0 0
    %2848 = vmatpush1.bf16.msra.mxu0 0
    %2849 = vmatprep.subr.bf16.mxu0 0
    %2850 = vmatpush1.bf16.msra.mxu0 0
    %2851 = vmatprep.subr.bf16.mxu0 0
    %2852 = vmatpush1.bf16.msra.mxu0 0
    %2853 = vmatprep.subr.bf16.mxu0 0
    %2854 = vmatpush1.bf16.msra.mxu0 0
    %2855 = vmatprep.subr.bf16.mxu0 0
    %2856 = vmatpush1.bf16.msra.mxu0 0
    %2857 = vmatprep.subr.bf16.mxu0 0
    %2858 = vmatpush1.bf16.msra.mxu0 0
    %2859 = vmatprep.mubr.bf16.mxu0 0
    %2860 = vmatmul.mubr.bf16.gmra.mrb[0].mxu0 %v2825
    %v2861 = vpop.f32.mrb[0].mxu0
    %v2862 = vadd.f32 0.0, %v2861
    %v2863 = vpop.f32.mrb[0].mxu0
    %v2864 = vadd.f32 0.0, %v2863
    %v2865 = vpop.f32.mrb[0].mxu0
    %v2866 = vpop.f32.mrb[0].mxu0
    %2867 = vdwg.mxu0
    %v2868 = vadd.f32 %v2817, %v2862
    %v2869 = vadd.f32 %v2818, %v2864
    %v2870 = vxor.u32 %v2868, 2147483648
    %v2871 = vmul.f32 %v2870, 1.442695
    %v2872 = vpow.pop %v2871
    %v2873 = vadd.f32 %v2872, 1.0
    %v2874 = vrcp.pop %v2873
    %v2875 = vmul.f32 1.0, %v2874
    %v2876 = vtanh.pop %v2869
    %v2877 = vxor.u32 %v2869, 2147483648
    %v2878 = vmul.f32 %v2877, 1.442695
    %v2879 = vpow.pop %v2878
    %v2880 = vadd.f32 %v2879, 1.0
    %v2881 = vrcp.pop %v2880
    %v2882 = vmul.f32 1.0, %v2881
    %v2884 = vrot.slane %v2394, 6
    %v2886 = vmul.f32 %v2875, %v2884
    %v2887 = vmul.f32 %v2875, %v2876
    %2889 = vrot.lane.b32.xlu0 %v2887, 64
    %v2890 = vpop.permute.xlu0 %2889
    %v2892 = vadd.f32 %v2886, %v2890
    %v2893 = vtanh.pop %v2892
    %v2894 = vmul.f32 %v2882, %v2893
    %v2895 = vld [vmem:[#allocation2 + $0x78] sm:$0x3]
    %v2896 = vld [vmem:[#allocation2 + $0x80] sm:$0x3]
    %v2897 = vpack.c.bf16 %v2480, %v2480
    %v2899 = vrot.slane %v2897, 3
    %2900 = vrot.lane.b32.xlu0 %v2899, 64
    %v2901 = vpop.permute.xlu0 %2900
    %v2903 = vsel %vm662, %v2901, 0
    %2905 = vmatprep.subr.bf16.mxu0 %v767
    %2906 = vmatpush1.bf16.msra.mxu0 %v766
    %2907 = vmatprep.subr.bf16.mxu0 %v769
    %2908 = vmatpush1.bf16.msra.mxu0 %v768
    %2909 = vmatprep.subr.bf16.mxu0 %v771
    %2910 = vmatpush1.bf16.msra.mxu0 %v770
    %2911 = vmatprep.subr.bf16.mxu0 %v773
    %2912 = vmatpush1.bf16.msra.mxu0 %v772
    %2913 = vmatprep.subr.bf16.mxu0 0
    %2914 = vmatpush1.bf16.msra.mxu0 0
    %2915 = vmatprep.subr.bf16.mxu0 0
    %2916 = vmatpush1.bf16.msra.mxu0 0
    %2917 = vmatprep.subr.bf16.mxu0 0
    %2918 = vmatpush1.bf16.msra.mxu0 0
    %2919 = vmatprep.subr.bf16.mxu0 0
    %2920 = vmatpush1.bf16.msra.mxu0 0
    %2921 = vmatprep.subr.bf16.mxu0 0
    %2922 = vmatpush1.bf16.msra.mxu0 0
    %2923 = vmatprep.subr.bf16.mxu0 0
    %2924 = vmatpush1.bf16.msra.mxu0 0
    %2925 = vmatprep.subr.bf16.mxu0 0
    %2926 = vmatpush1.bf16.msra.mxu0 0
    %2927 = vmatprep.subr.bf16.mxu0 0
    %2928 = vmatpush1.bf16.msra.mxu0 0
    %2929 = vmatprep.subr.bf16.mxu0 0
    %2930 = vmatpush1.bf16.msra.mxu0 0
    %2931 = vmatprep.subr.bf16.mxu0 0
    %2932 = vmatpush1.bf16.msra.mxu0 0
    %2933 = vmatprep.subr.bf16.mxu0 0
    %2934 = vmatpush1.bf16.msra.mxu0 0
    %2935 = vmatprep.subr.bf16.mxu0 0
    %2936 = vmatpush1.bf16.msra.mxu0 0
    %2937 = vmatprep.mubr.bf16.mxu0 0
    %2938 = vmatmul.mubr.bf16.gmra.mrb[0].mxu0 %v2903
    %v2939 = vpop.f32.mrb[0].mxu0
    %v2940 = vadd.f32 0.0, %v2939
    %v2941 = vpop.f32.mrb[0].mxu0
    %v2942 = vadd.f32 0.0, %v2941
    %v2943 = vpop.f32.mrb[0].mxu0
    %v2944 = vpop.f32.mrb[0].mxu0
    %2945 = vdwg.mxu0
    %v2946 = vadd.f32 %v2895, %v2940
    %v2947 = vadd.f32 %v2896, %v2942
    %v2948 = vxor.u32 %v2946, 2147483648
    %v2949 = vmul.f32 %v2948, 1.442695
    %v2950 = vpow.pop %v2949
    %v2951 = vadd.f32 %v2950, 1.0
    %v2952 = vrcp.pop %v2951
    %v2953 = vmul.f32 1.0, %v2952
    %v2954 = vtanh.pop %v2947
    %v2955 = vxor.u32 %v2947, 2147483648
    %v2956 = vmul.f32 %v2955, 1.442695
    %v2957 = vpow.pop %v2956
    %v2958 = vadd.f32 %v2957, 1.0
    %v2959 = vrcp.pop %v2958
    %v2960 = vmul.f32 1.0, %v2959
    %v2962 = vrot.slane %v2478, 6
    %v2964 = vmul.f32 %v2953, %v2962
    %v2965 = vmul.f32 %v2953, %v2954
    %2967 = vrot.lane.b32.xlu0 %v2965, 64
    %v2968 = vpop.permute.xlu0 %2967
    %v2970 = vadd.f32 %v2964, %v2968
    %v2971 = vtanh.pop %v2970
    %v2972 = vmul.f32 %v2960, %v2971
    %v2973 = vld [vmem:[#allocation2 + $0x88] sm:$0x3]
    %v2974 = vld [vmem:[#allocation2 + $0x90] sm:$0x3]
    %v2975 = vpack.c.bf16 %v2564, %v2564
    %v2977 = vrot.slane %v2975, 3
    %2978 = vrot.lane.b32.xlu0 %v2977, 64
    %v2979 = vpop.permute.xlu0 %2978
    %v2981 = vsel %vm662, %v2979, 0
    %2983 = vmatprep.subr.bf16.mxu0 %v883
    %2984 = vmatpush1.bf16.msra.mxu0 %v882
    %2985 = vmatprep.subr.bf16.mxu0 %v885
    %2986 = vmatpush1.bf16.msra.mxu0 %v884
    %2987 = vmatprep.subr.bf16.mxu0 %v887
    %2988 = vmatpush1.bf16.msra.mxu0 %v886
    %2989 = vmatprep.subr.bf16.mxu0 %v889
    %2990 = vmatpush1.bf16.msra.mxu0 %v888
    %2991 = vmatprep.subr.bf16.mxu0 0
    %2992 = vmatpush1.bf16.msra.mxu0 0
    %2993 = vmatprep.subr.bf16.mxu0 0
    %2994 = vmatpush1.bf16.msra.mxu0 0
    %2995 = vmatprep.subr.bf16.mxu0 0
    %2996 = vmatpush1.bf16.msra.mxu0 0
    %2997 = vmatprep.subr.bf16.mxu0 0
    %2998 = vmatpush1.bf16.msra.mxu0 0
    %2999 = vmatprep.subr.bf16.mxu0 0
    %3000 = vmatpush1.bf16.msra.mxu0 0
    %3001 = vmatprep.subr.bf16.mxu0 0
    %3002 = vmatpush1.bf16.msra.mxu0 0
    %3003 = vmatprep.subr.bf16.mxu0 0
    %3004 = vmatpush1.bf16.msra.mxu0 0
    %3005 = vmatprep.subr.bf16.mxu0 0
    %3006 = vmatpush1.bf16.msra.mxu0 0
    %3007 = vmatprep.subr.bf16.mxu0 0
    %3008 = vmatpush1.bf16.msra.mxu0 0
    %3009 = vmatprep.subr.bf16.mxu0 0
    %3010 = vmatpush1.bf16.msra.mxu0 0
    %3011 = vmatprep.subr.bf16.mxu0 0
    %3012 = vmatpush1.bf16.msra.mxu0 0
    %3013 = vmatprep.subr.bf16.mxu0 0
    %3014 = vmatpush1.bf16.msra.mxu0 0
    %3015 = vmatprep.mubr.bf16.mxu0 0
    %3016 = vmatmul.mubr.bf16.gmra.mrb[0].mxu0 %v2981
    %v3017 = vpop.f32.mrb[0].mxu0
    %v3018 = vadd.f32 0.0, %v3017
    %v3019 = vpop.f32.mrb[0].mxu0
    %v3020 = vadd.f32 0.0, %v3019
    %v3021 = vpop.f32.mrb[0].mxu0
    %v3022 = vpop.f32.mrb[0].mxu0
    %3023 = vdwg.mxu0
    %v3024 = vadd.f32 %v2973, %v3018
    %v3025 = vadd.f32 %v2974, %v3020
    %v3026 = vxor.u32 %v3024, 2147483648
    %v3027 = vmul.f32 %v3026, 1.442695
    %v3028 = vpow.pop %v3027
    %v3029 = vadd.f32 %v3028, 1.0
    %v3030 = vrcp.pop %v3029
    %v3031 = vmul.f32 1.0, %v3030
    %v3032 = vtanh.pop %v3025
    %v3033 = vxor.u32 %v3025, 2147483648
    %v3034 = vmul.f32 %v3033, 1.442695
    %v3035 = vpow.pop %v3034
    %v3036 = vadd.f32 %v3035, 1.0
    %v3037 = vrcp.pop %v3036
    %v3038 = vmul.f32 1.0, %v3037
    %v3040 = vrot.slane %v2562, 6
    %v3042 = vmul.f32 %v3031, %v3040
    %v3043 = vmul.f32 %v3031, %v3032
    %3045 = vrot.lane.b32.xlu0 %v3043, 64
    %v3046 = vpop.permute.xlu0 %3045
    %v3048 = vadd.f32 %v3042, %v3046
    %v3049 = vtanh.pop %v3048
    %v3050 = vmul.f32 %v3038, %v3049
    %v3051 = vld [vmem:[#allocation2 + $0x98] sm:$0x3]
    %v3052 = vld [vmem:[#allocation2 + $0xa0] sm:$0x3]
    %v3053 = vpack.c.bf16 %v2648, %v2648
    %v3055 = vrot.slane %v3053, 3
    %3056 = vrot.lane.b32.xlu0 %v3055, 64
    %v3057 = vpop.permute.xlu0 %3056
    %v3059 = vsel %vm662, %v3057, 0
    %3061 = vmatprep.subr.bf16.mxu0 %v999
    %3062 = vmatpush1.bf16.msra.mxu0 %v998
    %3063 = vmatprep.subr.bf16.mxu0 %v1001
    %3064 = vmatpush1.bf16.msra.mxu0 %v1000
    %3065 = vmatprep.subr.bf16.mxu0 %v1003
    %3066 = vmatpush1.bf16.msra.mxu0 %v1002
    %3067 = vmatprep.subr.bf16.mxu0 %v1005
    %3068 = vmatpush1.bf16.msra.mxu0 %v1004
    %3069 = vmatprep.subr.bf16.mxu0 0
    %3070 = vmatpush1.bf16.msra.mxu0 0
    %3071 = vmatprep.subr.bf16.mxu0 0
    %3072 = vmatpush1.bf16.msra.mxu0 0
    %3073 = vmatprep.subr.bf16.mxu0 0
    %3074 = vmatpush1.bf16.msra.mxu0 0
    %3075 = vmatprep.subr.bf16.mxu0 0
    %3076 = vmatpush1.bf16.msra.mxu0 0
    %3077 = vmatprep.subr.bf16.mxu0 0
    %3078 = vmatpush1.bf16.msra.mxu0 0
    %3079 = vmatprep.subr.bf16.mxu0 0
    %3080 = vmatpush1.bf16.msra.mxu0 0
    %3081 = vmatprep.subr.bf16.mxu0 0
    %3082 = vmatpush1.bf16.msra.mxu0 0
    %3083 = vmatprep.subr.bf16.mxu0 0
    %3084 = vmatpush1.bf16.msra.mxu0 0
    %3085 = vmatprep.subr.bf16.mxu0 0
    %3086 = vmatpush1.bf16.msra.mxu0 0
    %3087 = vmatprep.subr.bf16.mxu0 0
    %3088 = vmatpush1.bf16.msra.mxu0 0
    %3089 = vmatprep.subr.bf16.mxu0 0
    %3090 = vmatpush1.bf16.msra.mxu0 0
    %3091 = vmatprep.subr.bf16.mxu0 0
    %3092 = vmatpush1.bf16.msra.mxu0 0
    %3093 = vmatprep.mubr.bf16.mxu0 0
    %3094 = vmatmul.mubr.bf16.gmra.mrb[0].mxu0 %v3059
    %v3095 = vpop.f32.mrb[0].mxu0
    %v3096 = vadd.f32 0.0, %v3095
    %v3097 = vpop.f32.mrb[0].mxu0
    %v3098 = vadd.f32 0.0, %v3097
    %v3099 = vpop.f32.mrb[0].mxu0
    %v3100 = vpop.f32.mrb[0].mxu0
    %3101 = vdwg.mxu0
    %v3102 = vadd.f32 %v3051, %v3096
    %v3103 = vadd.f32 %v3052, %v3098
    %v3104 = vxor.u32 %v3102, 2147483648
    %v3105 = vmul.f32 %v3104, 1.442695
    %v3106 = vpow.pop %v3105
    %v3107 = vadd.f32 %v3106, 1.0
    %v3108 = vrcp.pop %v3107
    %v3109 = vmul.f32 1.0, %v3108
    %v3110 = vtanh.pop %v3103
    %v3111 = vxor.u32 %v3103, 2147483648
    %v3112 = vmul.f32 %v3111, 1.442695
    %v3113 = vpow.pop %v3112
    %v3114 = vadd.f32 %v3113, 1.0
    %v3115 = vrcp.pop %v3114
    %v3116 = vmul.f32 1.0, %v3115
    %v3118 = vrot.slane %v2646, 6
    %v3120 = vmul.f32 %v3109, %v3118
    %v3121 = vmul.f32 %v3109, %v3110
    %3123 = vrot.lane.b32.xlu0 %v3121, 64
    %v3124 = vpop.permute.xlu0 %3123
    %v3126 = vadd.f32 %v3120, %v3124
    %v3127 = vtanh.pop %v3126
    %v3128 = vmul.f32 %v3116, %v3127
    %v3129 = vld [vmem:[#allocation2 + $0xa8] sm:$0x3]
    %v3130 = vld [vmem:[#allocation2 + $0xb0] sm:$0x3]
    %v3131 = vpack.c.bf16 %v2732, %v2732
    %v3133 = vrot.slane %v3131, 3
    %3134 = vrot.lane.b32.xlu0 %v3133, 64
    %v3135 = vpop.permute.xlu0 %3134
    %v3137 = vsel %vm662, %v3135, 0
    %3139 = vmatprep.subr.bf16.mxu0 %v1115
    %3140 = vmatpush1.bf16.msra.mxu0 %v1114
    %3141 = vmatprep.subr.bf16.mxu0 %v1117
    %3142 = vmatpush1.bf16.msra.mxu0 %v1116
    %3143 = vmatprep.subr.bf16.mxu0 %v1119
    %3144 = vmatpush1.bf16.msra.mxu0 %v1118
    %3145 = vmatprep.subr.bf16.mxu0 %v1121
    %3146 = vmatpush1.bf16.msra.mxu0 %v1120
    %3147 = vmatprep.subr.bf16.mxu0 0
    %3148 = vmatpush1.bf16.msra.mxu0 0
    %3149 = vmatprep.subr.bf16.mxu0 0
    %3150 = vmatpush1.bf16.msra.mxu0 0
    %3151 = vmatprep.subr.bf16.mxu0 0
    %3152 = vmatpush1.bf16.msra.mxu0 0
    %3153 = vmatprep.subr.bf16.mxu0 0
    %3154 = vmatpush1.bf16.msra.mxu0 0
    %3155 = vmatprep.subr.bf16.mxu0 0
    %3156 = vmatpush1.bf16.msra.mxu0 0
    %3157 = vmatprep.subr.bf16.mxu0 0
    %3158 = vmatpush1.bf16.msra.mxu0 0
    %3159 = vmatprep.subr.bf16.mxu0 0
    %3160 = vmatpush1.bf16.msra.mxu0 0
    %3161 = vmatprep.subr.bf16.mxu0 0
    %3162 = vmatpush1.bf16.msra.mxu0 0
    %3163 = vmatprep.subr.bf16.mxu0 0
    %3164 = vmatpush1.bf16.msra.mxu0 0
    %3165 = vmatprep.subr.bf16.mxu0 0
    %3166 = vmatpush1.bf16.msra.mxu0 0
    %3167 = vmatprep.subr.bf16.mxu0 0
    %3168 = vmatpush1.bf16.msra.mxu0 0
    %3169 = vmatprep.subr.bf16.mxu0 0
    %3170 = vmatpush1.bf16.msra.mxu0 0
    %3171 = vmatprep.mubr.bf16.mxu0 0
    %3172 = vmatmul.mubr.bf16.gmra.mrb[0].mxu0 %v3137
    %v3173 = vpop.f32.mrb[0].mxu0
    %v3174 = vadd.f32 0.0, %v3173
    %v3175 = vpop.f32.mrb[0].mxu0
    %v3176 = vadd.f32 0.0, %v3175
    %v3177 = vpop.f32.mrb[0].mxu0
    %v3178 = vpop.f32.mrb[0].mxu0
    %3179 = vdwg.mxu0
    %v3180 = vadd.f32 %v3129, %v3174
    %v3181 = vadd.f32 %v3130, %v3176
    %v3182 = vxor.u32 %v3180, 2147483648
    %v3183 = vmul.f32 %v3182, 1.442695
    %v3184 = vpow.pop %v3183
    %v3185 = vadd.f32 %v3184, 1.0
    %v3186 = vrcp.pop %v3185
    %v3187 = vmul.f32 1.0, %v3186
    %v3188 = vtanh.pop %v3181
    %v3189 = vxor.u32 %v3181, 2147483648
    %v3190 = vmul.f32 %v3189, 1.442695
    %v3191 = vpow.pop %v3190
    %v3192 = vadd.f32 %v3191, 1.0
    %v3193 = vrcp.pop %v3192
    %v3194 = vmul.f32 1.0, %v3193
    %v3196 = vrot.slane %v2730, 6
    %v3198 = vmul.f32 %v3187, %v3196
    %v3199 = vmul.f32 %v3187, %v3188
    %3201 = vrot.lane.b32.xlu0 %v3199, 64
    %v3202 = vpop.permute.xlu0 %3201
    %v3204 = vadd.f32 %v3198, %v3202
    %v3205 = vtanh.pop %v3204
    %v3206 = vmul.f32 %v3194, %v3205
    %v3207 = vld [vmem:[#allocation2 + $0xb8] sm:$0x3]
    %v3208 = vld [vmem:[#allocation2 + $0xc0] sm:$0x3]
    %v3209 = vpack.c.bf16 %v2816, %v2816
    %v3211 = vrot.slane %v3209, 3
    %3212 = vrot.lane.b32.xlu0 %v3211, 64
    %v3213 = vpop.permute.xlu0 %3212
    %v3215 = vsel %vm662, %v3213, 0
    %3217 = vmatprep.subr.bf16.mxu0 %v1231
    %3218 = vmatpush1.bf16.msra.mxu0 %v1230
    %3219 = vmatprep.subr.bf16.mxu0 %v1233
    %3220 = vmatpush1.bf16.msra.mxu0 %v1232
    %3221 = vmatprep.subr.bf16.mxu0 %v1235
    %3222 = vmatpush1.bf16.msra.mxu0 %v1234
    %3223 = vmatprep.subr.bf16.mxu0 %v1237
    %3224 = vmatpush1.bf16.msra.mxu0 %v1236
    %3225 = vmatprep.subr.bf16.mxu0 0
    %3226 = vmatpush1.bf16.msra.mxu0 0
    %3227 = vmatprep.subr.bf16.mxu0 0
    %3228 = vmatpush1.bf16.msra.mxu0 0
    %3229 = vmatprep.subr.bf16.mxu0 0
    %3230 = vmatpush1.bf16.msra.mxu0 0
    %3231 = vmatprep.subr.bf16.mxu0 0
    %3232 = vmatpush1.bf16.msra.mxu0 0
    %3233 = vmatprep.subr.bf16.mxu0 0
    %3234 = vmatpush1.bf16.msra.mxu0 0
    %3235 = vmatprep.subr.bf16.mxu0 0
    %3236 = vmatpush1.bf16.msra.mxu0 0
    %3237 = vmatprep.subr.bf16.mxu0 0
    %3238 = vmatpush1.bf16.msra.mxu0 0
    %3239 = vmatprep.subr.bf16.mxu0 0
    %3240 = vmatpush1.bf16.msra.mxu0 0
    %3241 = vmatprep.subr.bf16.mxu0 0
    %3242 = vmatpush1.bf16.msra.mxu0 0
    %3243 = vmatprep.subr.bf16.mxu0 0
    %3244 = vmatpush1.bf16.msra.mxu0 0
    %3245 = vmatprep.subr.bf16.mxu0 0
    %3246 = vmatpush1.bf16.msra.mxu0 0
    %3247 = vmatprep.subr.bf16.mxu0 0
    %3248 = vmatpush1.bf16.msra.mxu0 0
    %3249 = vmatprep.mubr.bf16.mxu0 0
    %3250 = vmatmul.mubr.bf16.gmra.mrb[0].mxu0 %v3215
    %v3251 = vpop.f32.mrb[0].mxu0
    %v3252 = vadd.f32 0.0, %v3251
    %v3253 = vpop.f32.mrb[0].mxu0
    %v3254 = vadd.f32 0.0, %v3253
    %v3255 = vpop.f32.mrb[0].mxu0
    %v3256 = vpop.f32.mrb[0].mxu0
    %3257 = vdwg.mxu0
    %v3258 = vadd.f32 %v3207, %v3252
    %v3259 = vadd.f32 %v3208, %v3254
    %v3260 = vxor.u32 %v3258, 2147483648
    %v3261 = vmul.f32 %v3260, 1.442695
    %v3262 = vpow.pop %v3261
    %v3263 = vadd.f32 %v3262, 1.0
    %v3264 = vrcp.pop %v3263
    %v3265 = vmul.f32 1.0, %v3264
    %v3266 = vtanh.pop %v3259
    %v3267 = vxor.u32 %v3259, 2147483648
    %v3268 = vmul.f32 %v3267, 1.442695
    %v3269 = vpow.pop %v3268
    %v3270 = vadd.f32 %v3269, 1.0
    %v3271 = vrcp.pop %v3270
    %v3272 = vmul.f32 1.0, %v3271
    %v3274 = vrot.slane %v2814, 6
    %v3276 = vmul.f32 %v3265, %v3274
    %v3277 = vmul.f32 %v3265, %v3266
    %3279 = vrot.lane.b32.xlu0 %v3277, 64
    %v3280 = vpop.permute.xlu0 %3279
    %v3282 = vadd.f32 %v3276, %v3280
    %v3283 = vtanh.pop %v3282
    %v3284 = vmul.f32 %v3272, %v3283
    %v3285 = vld [vmem:[#allocation2 + $0x68] sm:$0xc]
    %v3286 = vld [vmem:[#allocation2 + $0x70] sm:$0xc]
    %v3287 = vpack.c.bf16 %v2894, %v2894
    %3289 = vrot.lane.b32.xlu0 %v3287, 64
    %v3290 = vpop.permute.xlu0 %3289
    %v3292 = vsel %vm662, %v3290, 0
    %3294 = vmatprep.subr.bf16.mxu0 %v647
    %3295 = vmatpush1.bf16.msra.mxu0 %v646
    %3296 = vmatprep.subr.bf16.mxu0 %v649
    %3297 = vmatpush1.bf16.msra.mxu0 %v648
    %3298 = vmatprep.subr.bf16.mxu0 %v651
    %3299 = vmatpush1.bf16.msra.mxu0 %v650
    %3300 = vmatprep.subr.bf16.mxu0 %v653
    %3301 = vmatpush1.bf16.msra.mxu0 %v652
    %3302 = vmatprep.subr.bf16.mxu0 0
    %3303 = vmatpush1.bf16.msra.mxu0 0
    %3304 = vmatprep.subr.bf16.mxu0 0
    %3305 = vmatpush1.bf16.msra.mxu0 0
    %3306 = vmatprep.subr.bf16.mxu0 0
    %3307 = vmatpush1.bf16.msra.mxu0 0
    %3308 = vmatprep.subr.bf16.mxu0 0
    %3309 = vmatpush1.bf16.msra.mxu0 0
    %3310 = vmatprep.subr.bf16.mxu0 0
    %3311 = vmatpush1.bf16.msra.mxu0 0
    %3312 = vmatprep.subr.bf16.mxu0 0
    %3313 = vmatpush1.bf16.msra.mxu0 0
    %3314 = vmatprep.subr.bf16.mxu0 0
    %3315 = vmatpush1.bf16.msra.mxu0 0
    %3316 = vmatprep.subr.bf16.mxu0 0
    %3317 = vmatpush1.bf16.msra.mxu0 0
    %3318 = vmatprep.subr.bf16.mxu0 0
    %3319 = vmatpush1.bf16.msra.mxu0 0
    %3320 = vmatprep.subr.bf16.mxu0 0
    %3321 = vmatpush1.bf16.msra.mxu0 0
    %3322 = vmatprep.subr.bf16.mxu0 0
    %3323 = vmatpush1.bf16.msra.mxu0 0
    %3324 = vmatprep.subr.bf16.mxu0 0
    %3325 = vmatpush1.bf16.msra.mxu0 0
    %3326 = vmatprep.mubr.bf16.mxu0 0
    %3327 = vmatmul.mubr.bf16.gmra.mrb[0].mxu0 %v3292
    %v3328 = vpop.f32.mrb[0].mxu0
    %v3329 = vadd.f32 0.0, %v3328
    %v3330 = vpop.f32.mrb[0].mxu0
    %v3331 = vadd.f32 0.0, %v3330
    %v3332 = vpop.f32.mrb[0].mxu0
    %v3333 = vpop.f32.mrb[0].mxu0
    %3334 = vdwg.mxu0
    %v3337 = vrot.slane %v3329, 6
    %v3338 = vrot.slane %v3331, 6
    %v3341 = vadd.f32 %v3285, %v3337
    %v3342 = vadd.f32 %v3286, %v3338
    %v3343 = vxor.u32 %v3341, 2147483648
    %v3344 = vmul.f32 %v3343, 1.442695
    %v3345 = vpow.pop %v3344
    %v3346 = vadd.f32 %v3345, 1.0
    %v3347 = vrcp.pop %v3346
    %v3348 = vmul.f32 1.0, %v3347
    %v3349 = vtanh.pop %v3342
    %v3350 = vxor.u32 %v3342, 2147483648
    %v3351 = vmul.f32 %v3350, 1.442695
    %v3352 = vpow.pop %v3351
    %v3353 = vadd.f32 %v3352, 1.0
    %v3354 = vrcp.pop %v3353
    %v3355 = vmul.f32 1.0, %v3354
    %v3357 = vrot.slane %v2892, 6
    %v3359 = vmul.f32 %v3348, %v3357
    %v3360 = vmul.f32 %v3348, %v3349
    %3362 = vrot.lane.b32.xlu0 %v3360, 64
    %v3363 = vpop.permute.xlu0 %3362
    %v3365 = vadd.f32 %v3359, %v3363
    %v3366 = vtanh.pop %v3365
    %v3367 = vmul.f32 %v3355, %v3366
    %v3368 = vld [vmem:[#allocation2 + $0x78] sm:$0xc]
    %v3369 = vld [vmem:[#allocation2 + $0x80] sm:$0xc]
    %v3370 = vpack.c.bf16 %v2972, %v2972
    %3372 = vrot.lane.b32.xlu0 %v3370, 64
    %v3373 = vpop.permute.xlu0 %3372
    %v3375 = vsel %vm662, %v3373, 0
    %3377 = vmatprep.subr.bf16.mxu0 %v767
    %3378 = vmatpush1.bf16.msra.mxu0 %v766
    %3379 = vmatprep.subr.bf16.mxu0 %v769
    %3380 = vmatpush1.bf16.msra.mxu0 %v768
    %3381 = vmatprep.subr.bf16.mxu0 %v771
    %3382 = vmatpush1.bf16.msra.mxu0 %v770
    %3383 = vmatprep.subr.bf16.mxu0 %v773
    %3384 = vmatpush1.bf16.msra.mxu0 %v772
    %3385 = vmatprep.subr.bf16.mxu0 0
    %3386 = vmatpush1.bf16.msra.mxu0 0
    %3387 = vmatprep.subr.bf16.mxu0 0
    %3388 = vmatpush1.bf16.msra.mxu0 0
    %3389 = vmatprep.subr.bf16.mxu0 0
    %3390 = vmatpush1.bf16.msra.mxu0 0
    %3391 = vmatprep.subr.bf16.mxu0 0
    %3392 = vmatpush1.bf16.msra.mxu0 0
    %3393 = vmatprep.subr.bf16.mxu0 0
    %3394 = vmatpush1.bf16.msra.mxu0 0
    %3395 = vmatprep.subr.bf16.mxu0 0
    %3396 = vmatpush1.bf16.msra.mxu0 0
    %3397 = vmatprep.subr.bf16.mxu0 0
    %3398 = vmatpush1.bf16.msra.mxu0 0
    %3399 = vmatprep.subr.bf16.mxu0 0
    %3400 = vmatpush1.bf16.msra.mxu0 0
    %3401 = vmatprep.subr.bf16.mxu0 0
    %3402 = vmatpush1.bf16.msra.mxu0 0
    %3403 = vmatprep.subr.bf16.mxu0 0
    %3404 = vmatpush1.bf16.msra.mxu0 0
    %3405 = vmatprep.subr.bf16.mxu0 0
    %3406 = vmatpush1.bf16.msra.mxu0 0
    %3407 = vmatprep.subr.bf16.mxu0 0
    %3408 = vmatpush1.bf16.msra.mxu0 0
    %3409 = vmatprep.mubr.bf16.mxu0 0
    %3410 = vmatmul.mubr.bf16.gmra.mrb[0].mxu0 %v3375
    %v3411 = vpop.f32.mrb[0].mxu0
    %v3412 = vadd.f32 0.0, %v3411
    %v3413 = vpop.f32.mrb[0].mxu0
    %v3414 = vadd.f32 0.0, %v3413
    %v3415 = vpop.f32.mrb[0].mxu0
    %v3416 = vpop.f32.mrb[0].mxu0
    %3417 = vdwg.mxu0
    %v3420 = vrot.slane %v3412, 6
    %v3421 = vrot.slane %v3414, 6
    %v3424 = vadd.f32 %v3368, %v3420
    %v3425 = vadd.f32 %v3369, %v3421
    %v3426 = vxor.u32 %v3424, 2147483648
    %v3427 = vmul.f32 %v3426, 1.442695
    %v3428 = vpow.pop %v3427
    %v3429 = vadd.f32 %v3428, 1.0
    %v3430 = vrcp.pop %v3429
    %v3431 = vmul.f32 1.0, %v3430
    %v3432 = vtanh.pop %v3425
    %v3433 = vxor.u32 %v3425, 2147483648
    %v3434 = vmul.f32 %v3433, 1.442695
    %v3435 = vpow.pop %v3434
    %v3436 = vadd.f32 %v3435, 1.0
    %v3437 = vrcp.pop %v3436
    %v3438 = vmul.f32 1.0, %v3437
    %v3440 = vrot.slane %v2970, 6
    %v3442 = vmul.f32 %v3431, %v3440
    %v3443 = vmul.f32 %v3431, %v3432
    %3445 = vrot.lane.b32.xlu0 %v3443, 64
    %v3446 = vpop.permute.xlu0 %3445
    %v3448 = vadd.f32 %v3442, %v3446
    %v3449 = vtanh.pop %v3448
    %v3450 = vmul.f32 %v3438, %v3449
    %v3451 = vld [vmem:[#allocation2 + $0x88] sm:$0xc]
    %v3452 = vld [vmem:[#allocation2 + $0x90] sm:$0xc]
    %v3453 = vpack.c.bf16 %v3050, %v3050
    %3455 = vrot.lane.b32.xlu0 %v3453, 64
    %v3456 = vpop.permute.xlu0 %3455
    %v3458 = vsel %vm662, %v3456, 0
    %3460 = vmatprep.subr.bf16.mxu0 %v883
    %3461 = vmatpush1.bf16.msra.mxu0 %v882
    %3462 = vmatprep.subr.bf16.mxu0 %v885
    %3463 = vmatpush1.bf16.msra.mxu0 %v884
    %3464 = vmatprep.subr.bf16.mxu0 %v887
    %3465 = vmatpush1.bf16.msra.mxu0 %v886
    %3466 = vmatprep.subr.bf16.mxu0 %v889
    %3467 = vmatpush1.bf16.msra.mxu0 %v888
    %3468 = vmatprep.subr.bf16.mxu0 0
    %3469 = vmatpush1.bf16.msra.mxu0 0
    %3470 = vmatprep.subr.bf16.mxu0 0
    %3471 = vmatpush1.bf16.msra.mxu0 0
    %3472 = vmatprep.subr.bf16.mxu0 0
    %3473 = vmatpush1.bf16.msra.mxu0 0
    %3474 = vmatprep.subr.bf16.mxu0 0
    %3475 = vmatpush1.bf16.msra.mxu0 0
    %3476 = vmatprep.subr.bf16.mxu0 0
    %3477 = vmatpush1.bf16.msra.mxu0 0
    %3478 = vmatprep.subr.bf16.mxu0 0
    %3479 = vmatpush1.bf16.msra.mxu0 0
    %3480 = vmatprep.subr.bf16.mxu0 0
    %3481 = vmatpush1.bf16.msra.mxu0 0
    %3482 = vmatprep.subr.bf16.mxu0 0
    %3483 = vmatpush1.bf16.msra.mxu0 0
    %3484 = vmatprep.subr.bf16.mxu0 0
    %3485 = vmatpush1.bf16.msra.mxu0 0
    %3486 = vmatprep.subr.bf16.mxu0 0
    %3487 = vmatpush1.bf16.msra.mxu0 0
    %3488 = vmatprep.subr.bf16.mxu0 0
    %3489 = vmatpush1.bf16.msra.mxu0 0
    %3490 = vmatprep.subr.bf16.mxu0 0
    %3491 = vmatpush1.bf16.msra.mxu0 0
    %3492 = vmatprep.mubr.bf16.mxu0 0
    %3493 = vmatmul.mubr.bf16.gmra.mrb[0].mxu0 %v3458
    %v3494 = vpop.f32.mrb[0].mxu0
    %v3495 = vadd.f32 0.0, %v3494
    %v3496 = vpop.f32.mrb[0].mxu0
    %v3497 = vadd.f32 0.0, %v3496
    %v3498 = vpop.f32.mrb[0].mxu0
    %v3499 = vpop.f32.mrb[0].mxu0
    %3500 = vdwg.mxu0
    %v3503 = vrot.slane %v3495, 6
    %v3504 = vrot.slane %v3497, 6
    %v3507 = vadd.f32 %v3451, %v3503
    %v3508 = vadd.f32 %v3452, %v3504
    %v3509 = vxor.u32 %v3507, 2147483648
    %v3510 = vmul.f32 %v3509, 1.442695
    %v3511 = vpow.pop %v3510
    %v3512 = vadd.f32 %v3511, 1.0
    %v3513 = vrcp.pop %v3512
    %v3514 = vmul.f32 1.0, %v3513
    %v3515 = vtanh.pop %v3508
    %v3516 = vxor.u32 %v3508, 2147483648
    %v3517 = vmul.f32 %v3516, 1.442695
    %v3518 = vpow.pop %v3517
    %v3519 = vadd.f32 %v3518, 1.0
    %v3520 = vrcp.pop %v3519
    %v3521 = vmul.f32 1.0, %v3520
    %v3523 = vrot.slane %v3048, 6
    %v3525 = vmul.f32 %v3514, %v3523
    %v3526 = vmul.f32 %v3514, %v3515
    %3528 = vrot.lane.b32.xlu0 %v3526, 64
    %v3529 = vpop.permute.xlu0 %3528
    %v3531 = vadd.f32 %v3525, %v3529
    %v3532 = vtanh.pop %v3531
    %v3533 = vmul.f32 %v3521, %v3532
    %v3534 = vld [vmem:[#allocation2 + $0x98] sm:$0xc]
    %v3535 = vld [vmem:[#allocation2 + $0xa0] sm:$0xc]
    %v3536 = vpack.c.bf16 %v3128, %v3128
    %3538 = vrot.lane.b32.xlu0 %v3536, 64
    %v3539 = vpop.permute.xlu0 %3538
    %v3541 = vsel %vm662, %v3539, 0
    %3543 = vmatprep.subr.bf16.mxu0 %v999
    %3544 = vmatpush1.bf16.msra.mxu0 %v998
    %3545 = vmatprep.subr.bf16.mxu0 %v1001
    %3546 = vmatpush1.bf16.msra.mxu0 %v1000
    %3547 = vmatprep.subr.bf16.mxu0 %v1003
    %3548 = vmatpush1.bf16.msra.mxu0 %v1002
    %3549 = vmatprep.subr.bf16.mxu0 %v1005
    %3550 = vmatpush1.bf16.msra.mxu0 %v1004
    %3551 = vmatprep.subr.bf16.mxu0 0
    %3552 = vmatpush1.bf16.msra.mxu0 0
    %3553 = vmatprep.subr.bf16.mxu0 0
    %3554 = vmatpush1.bf16.msra.mxu0 0
    %3555 = vmatprep.subr.bf16.mxu0 0
    %3556 = vmatpush1.bf16.msra.mxu0 0
    %3557 = vmatprep.subr.bf16.mxu0 0
    %3558 = vmatpush1.bf16.msra.mxu0 0
    %3559 = vmatprep.subr.bf16.mxu0 0
    %3560 = vmatpush1.bf16.msra.mxu0 0
    %3561 = vmatprep.subr.bf16.mxu0 0
    %3562 = vmatpush1.bf16.msra.mxu0 0
    %3563 = vmatprep.subr.bf16.mxu0 0
    %3564 = vmatpush1.bf16.msra.mxu0 0
    %3565 = vmatprep.subr.bf16.mxu0 0
    %3566 = vmatpush1.bf16.msra.mxu0 0
    %3567 = vmatprep.subr.bf16.mxu0 0
    %3568 = vmatpush1.bf16.msra.mxu0 0
    %3569 = vmatprep.subr.bf16.mxu0 0
    %3570 = vmatpush1.bf16.msra.mxu0 0
    %3571 = vmatprep.subr.bf16.mxu0 0
    %3572 = vmatpush1.bf16.msra.mxu0 0
    %3573 = vmatprep.subr.bf16.mxu0 0
    %3574 = vmatpush1.bf16.msra.mxu0 0
    %3575 = vmatprep.mubr.bf16.mxu0 0
    %3576 = vmatmul.mubr.bf16.gmra.mrb[0].mxu0 %v3541
    %v3577 = vpop.f32.mrb[0].mxu0
    %v3578 = vadd.f32 0.0, %v3577
    %v3579 = vpop.f32.mrb[0].mxu0
    %v3580 = vadd.f32 0.0, %v3579
    %v3581 = vpop.f32.mrb[0].mxu0
    %v3582 = vpop.f32.mrb[0].mxu0
    %3583 = vdwg.mxu0
    %v3586 = vrot.slane %v3578, 6
    %v3587 = vrot.slane %v3580, 6
    %v3590 = vadd.f32 %v3534, %v3586
    %v3591 = vadd.f32 %v3535, %v3587
    %v3592 = vxor.u32 %v3590, 2147483648
    %v3593 = vmul.f32 %v3592, 1.442695
    %v3594 = vpow.pop %v3593
    %v3595 = vadd.f32 %v3594, 1.0
    %v3596 = vrcp.pop %v3595
    %v3597 = vmul.f32 1.0, %v3596
    %v3598 = vtanh.pop %v3591
    %v3599 = vxor.u32 %v3591, 2147483648
    %v3600 = vmul.f32 %v3599, 1.442695
    %v3601 = vpow.pop %v3600
    %v3602 = vadd.f32 %v3601, 1.0
    %v3603 = vrcp.pop %v3602
    %v3604 = vmul.f32 1.0, %v3603
    %v3606 = vrot.slane %v3126, 6
    %v3608 = vmul.f32 %v3597, %v3606
    %v3609 = vmul.f32 %v3597, %v3598
    %3611 = vrot.lane.b32.xlu0 %v3609, 64
    %v3612 = vpop.permute.xlu0 %3611
    %v3614 = vadd.f32 %v3608, %v3612
    %v3615 = vtanh.pop %v3614
    %v3616 = vmul.f32 %v3604, %v3615
    %v3617 = vld [vmem:[#allocation2 + $0xa8] sm:$0xc]
    %v3618 = vld [vmem:[#allocation2 + $0xb0] sm:$0xc]
    %v3619 = vpack.c.bf16 %v3206, %v3206
    %3621 = vrot.lane.b32.xlu0 %v3619, 64
    %v3622 = vpop.permute.xlu0 %3621
    %v3624 = vsel %vm662, %v3622, 0
    %3626 = vmatprep.subr.bf16.mxu0 %v1115
    %3627 = vmatpush1.bf16.msra.mxu0 %v1114
    %3628 = vmatprep.subr.bf16.mxu0 %v1117
    %3629 = vmatpush1.bf16.msra.mxu0 %v1116
    %3630 = vmatprep.subr.bf16.mxu0 %v1119
    %3631 = vmatpush1.bf16.msra.mxu0 %v1118
    %3632 = vmatprep.subr.bf16.mxu0 %v1121
    %3633 = vmatpush1.bf16.msra.mxu0 %v1120
    %3634 = vmatprep.subr.bf16.mxu0 0
    %3635 = vmatpush1.bf16.msra.mxu0 0
    %3636 = vmatprep.subr.bf16.mxu0 0
    %3637 = vmatpush1.bf16.msra.mxu0 0
    %3638 = vmatprep.subr.bf16.mxu0 0
    %3639 = vmatpush1.bf16.msra.mxu0 0
    %3640 = vmatprep.subr.bf16.mxu0 0
    %3641 = vmatpush1.bf16.msra.mxu0 0
    %3642 = vmatprep.subr.bf16.mxu0 0
    %3643 = vmatpush1.bf16.msra.mxu0 0
    %3644 = vmatprep.subr.bf16.mxu0 0
    %3645 = vmatpush1.bf16.msra.mxu0 0
    %3646 = vmatprep.subr.bf16.mxu0 0
    %3647 = vmatpush1.bf16.msra.mxu0 0
    %3648 = vmatprep.subr.bf16.mxu0 0
    %3649 = vmatpush1.bf16.msra.mxu0 0
    %3650 = vmatprep.subr.bf16.mxu0 0
    %3651 = vmatpush1.bf16.msra.mxu0 0
    %3652 = vmatprep.subr.bf16.mxu0 0
    %3653 = vmatpush1.bf16.msra.mxu0 0
    %3654 = vmatprep.subr.bf16.mxu0 0
    %3655 = vmatpush1.bf16.msra.mxu0 0
    %3656 = vmatprep.subr.bf16.mxu0 0
    %3657 = vmatpush1.bf16.msra.mxu0 0
    %3658 = vmatprep.mubr.bf16.mxu0 0
    %3659 = vmatmul.mubr.bf16.gmra.mrb[0].mxu0 %v3624
    %v3660 = vpop.f32.mrb[0].mxu0
    %v3661 = vadd.f32 0.0, %v3660
    %v3662 = vpop.f32.mrb[0].mxu0
    %v3663 = vadd.f32 0.0, %v3662
    %v3664 = vpop.f32.mrb[0].mxu0
    %v3665 = vpop.f32.mrb[0].mxu0
    %3666 = vdwg.mxu0
    %v3669 = vrot.slane %v3661, 6
    %v3670 = vrot.slane %v3663, 6
    %v3673 = vadd.f32 %v3617, %v3669
    %v3674 = vadd.f32 %v3618, %v3670
    %v3675 = vxor.u32 %v3673, 2147483648
    %v3676 = vmul.f32 %v3675, 1.442695
    %v3677 = vpow.pop %v3676
    %v3678 = vadd.f32 %v3677, 1.0
    %v3679 = vrcp.pop %v3678
    %v3680 = vmul.f32 1.0, %v3679
    %v3681 = vtanh.pop %v3674
    %v3682 = vxor.u32 %v3674, 2147483648
    %v3683 = vmul.f32 %v3682, 1.442695
    %v3684 = vpow.pop %v3683
    %v3685 = vadd.f32 %v3684, 1.0
    %v3686 = vrcp.pop %v3685
    %v3687 = vmul.f32 1.0, %v3686
    %v3689 = vrot.slane %v3204, 6
    %v3691 = vmul.f32 %v3680, %v3689
    %v3692 = vmul.f32 %v3680, %v3681
    %3694 = vrot.lane.b32.xlu0 %v3692, 64
    %v3695 = vpop.permute.xlu0 %3694
    %v3697 = vadd.f32 %v3691, %v3695
    %v3698 = vtanh.pop %v3697
    %v3699 = vmul.f32 %v3687, %v3698
    %v3700 = vld [vmem:[#allocation2 + $0xb8] sm:$0xc]
    %v3701 = vld [vmem:[#allocation2 + $0xc0] sm:$0xc]
    %v3702 = vpack.c.bf16 %v3284, %v3284
    %3704 = vrot.lane.b32.xlu0 %v3702, 64
    %v3705 = vpop.permute.xlu0 %3704
    %v3707 = vsel %vm662, %v3705, 0
    %3709 = vmatprep.subr.bf16.mxu0 %v1231
    %3710 = vmatpush1.bf16.msra.mxu0 %v1230
    %3711 = vmatprep.subr.bf16.mxu0 %v1233
    %3712 = vmatpush1.bf16.msra.mxu0 %v1232
    %3713 = vmatprep.subr.bf16.mxu0 %v1235
    %3714 = vmatpush1.bf16.msra.mxu0 %v1234
    %3715 = vmatprep.subr.bf16.mxu0 %v1237
    %3716 = vmatpush1.bf16.msra.mxu0 %v1236
    %3717 = vmatprep.subr.bf16.mxu0 0
    %3718 = vmatpush1.bf16.msra.mxu0 0
    %3719 = vmatprep.subr.bf16.mxu0 0
    %3720 = vmatpush1.bf16.msra.mxu0 0
    %3721 = vmatprep.subr.bf16.mxu0 0
    %3722 = vmatpush1.bf16.msra.mxu0 0
    %3723 = vmatprep.subr.bf16.mxu0 0
    %3724 = vmatpush1.bf16.msra.mxu0 0
    %3725 = vmatprep.subr.bf16.mxu0 0
    %3726 = vmatpush1.bf16.msra.mxu0 0
    %3727 = vmatprep.subr.bf16.mxu0 0
    %3728 = vmatpush1.bf16.msra.mxu0 0
    %3729 = vmatprep.subr.bf16.mxu0 0
    %3730 = vmatpush1.bf16.msra.mxu0 0
    %3731 = vmatprep.subr.bf16.mxu0 0
    %3732 = vmatpush1.bf16.msra.mxu0 0
    %3733 = vmatprep.subr.bf16.mxu0 0
    %3734 = vmatpush1.bf16.msra.mxu0 0
    %3735 = vmatprep.subr.bf16.mxu0 0
    %3736 = vmatpush1.bf16.msra.mxu0 0
    %3737 = vmatprep.subr.bf16.mxu0 0
    %3738 = vmatpush1.bf16.msra.mxu0 0
    %3739 = vmatprep.subr.bf16.mxu0 0
    %3740 = vmatpush1.bf16.msra.mxu0 0
    %3741 = vmatprep.mubr.bf16.mxu0 0
    %3742 = vmatmul.mubr.bf16.gmra.mrb[0].mxu0 %v3707
    %v3743 = vpop.f32.mrb[0].mxu0
    %v3744 = vadd.f32 0.0, %v3743
    %v3745 = vpop.f32.mrb[0].mxu0
    %v3746 = vadd.f32 0.0, %v3745
    %v3747 = vpop.f32.mrb[0].mxu0
    %v3748 = vpop.f32.mrb[0].mxu0
    %3749 = vdwg.mxu0
    %v3752 = vrot.slane %v3744, 6
    %v3753 = vrot.slane %v3746, 6
    %v3756 = vadd.f32 %v3700, %v3752
    %v3757 = vadd.f32 %v3701, %v3753
    %v3758 = vxor.u32 %v3756, 2147483648
    %v3759 = vmul.f32 %v3758, 1.442695
    %v3760 = vpow.pop %v3759
    %v3761 = vadd.f32 %v3760, 1.0
    %v3762 = vrcp.pop %v3761
    %v3763 = vmul.f32 1.0, %v3762
    %v3764 = vtanh.pop %v3757
    %v3765 = vxor.u32 %v3757, 2147483648
    %v3766 = vmul.f32 %v3765, 1.442695
    %v3767 = vpow.pop %v3766
    %v3768 = vadd.f32 %v3767, 1.0
    %v3769 = vrcp.pop %v3768
    %v3770 = vmul.f32 1.0, %v3769
    %v3772 = vrot.slane %v3282, 6
    %v3774 = vmul.f32 %v3763, %v3772
    %v3775 = vmul.f32 %v3763, %v3764
    %3777 = vrot.lane.b32.xlu0 %v3775, 64
    %v3778 = vpop.permute.xlu0 %3777
    %v3780 = vadd.f32 %v3774, %v3778
    %v3781 = vtanh.pop %v3780
    %v3782 = vmul.f32 %v3770, %v3781
    %v3783 = vld [vmem:[#allocation2 + $0x68] sm:$0x30]
    %v3784 = vld [vmem:[#allocation2 + $0x70] sm:$0x30]
    %v3785 = vpack.c.bf16 %v3367, %v3367
    %v3787 = vrot.slane %v3785, 1
    %3788 = vrot.lane.b32.xlu0 %v3787, 64
    %v3789 = vpop.permute.xlu0 %3788
    %v3791 = vsel %vm662, %v3789, 0
    %3793 = vmatprep.subr.bf16.mxu0 %v647
    %3794 = vmatpush1.bf16.msra.mxu0 %v646
    %3795 = vmatprep.subr.bf16.mxu0 %v649
    %3796 = vmatpush1.bf16.msra.mxu0 %v648
    %3797 = vmatprep.subr.bf16.mxu0 %v651
    %3798 = vmatpush1.bf16.msra.mxu0 %v650
    %3799 = vmatprep.subr.bf16.mxu0 %v653
    %3800 = vmatpush1.bf16.msra.mxu0 %v652
    %3801 = vmatprep.subr.bf16.mxu0 0
    %3802 = vmatpush1.bf16.msra.mxu0 0
    %3803 = vmatprep.subr.bf16.mxu0 0
    %3804 = vmatpush1.bf16.msra.mxu0 0
    %3805 = vmatprep.subr.bf16.mxu0 0
    %3806 = vmatpush1.bf16.msra.mxu0 0
    %3807 = vmatprep.subr.bf16.mxu0 0
    %3808 = vmatpush1.bf16.msra.mxu0 0
    %3809 = vmatprep.subr.bf16.mxu0 0
    %3810 = vmatpush1.bf16.msra.mxu0 0
    %3811 = vmatprep.subr.bf16.mxu0 0
    %3812 = vmatpush1.bf16.msra.mxu0 0
    %3813 = vmatprep.subr.bf16.mxu0 0
    %3814 = vmatpush1.bf16.msra.mxu0 0
    %3815 = vmatprep.subr.bf16.mxu0 0
    %3816 = vmatpush1.bf16.msra.mxu0 0
    %3817 = vmatprep.subr.bf16.mxu0 0
    %3818 = vmatpush1.bf16.msra.mxu0 0
    %3819 = vmatprep.subr.bf16.mxu0 0
    %3820 = vmatpush1.bf16.msra.mxu0 0
    %3821 = vmatprep.subr.bf16.mxu0 0
    %3822 = vmatpush1.bf16.msra.mxu0 0
    %3823 = vmatprep.subr.bf16.mxu0 0
    %3824 = vmatpush1.bf16.msra.mxu0 0
    %3825 = vmatprep.mubr.bf16.mxu0 0
    %3826 = vmatmul.mubr.bf16.gmra.mrb[0].mxu0 %v3791
    %v3827 = vpop.f32.mrb[0].mxu0
    %v3828 = vadd.f32 0.0, %v3827
    %v3829 = vpop.f32.mrb[0].mxu0
    %v3830 = vadd.f32 0.0, %v3829
    %v3831 = vpop.f32.mrb[0].mxu0
    %v3832 = vpop.f32.mrb[0].mxu0
    %3833 = vdwg.mxu0
    %v3836 = vrot.slane %v3828, 4
    %v3837 = vrot.slane %v3830, 4
    %v3840 = vadd.f32 %v3783, %v3836
    %v3841 = vadd.f32 %v3784, %v3837
    %v3842 = vxor.u32 %v3840, 2147483648
    %v3843 = vmul.f32 %v3842, 1.442695
    %v3844 = vpow.pop %v3843
    %v3845 = vadd.f32 %v3844, 1.0
    %v3846 = vrcp.pop %v3845
    %v3847 = vmul.f32 1.0, %v3846
    %v3848 = vtanh.pop %v3841
    %v3849 = vxor.u32 %v3841, 2147483648
    %v3850 = vmul.f32 %v3849, 1.442695
    %v3851 = vpow.pop %v3850
    %v3852 = vadd.f32 %v3851, 1.0
    %v3853 = vrcp.pop %v3852
    %v3854 = vmul.f32 1.0, %v3853
    %v3856 = vrot.slane %v3365, 6
    %v3858 = vmul.f32 %v3847, %v3856
    %v3859 = vmul.f32 %v3847, %v3848
    %3861 = vrot.lane.b32.xlu0 %v3859, 64
    %v3862 = vpop.permute.xlu0 %3861
    %v3864 = vadd.f32 %v3858, %v3862
    %v3865 = vtanh.pop %v3864
    %v3866 = vmul.f32 %v3854, %v3865
    %v3867 = vld [vmem:[#allocation2 + $0x78] sm:$0x30]
    %v3868 = vld [vmem:[#allocation2 + $0x80] sm:$0x30]
    %v3869 = vpack.c.bf16 %v3450, %v3450
    %v3871 = vrot.slane %v3869, 1
    %3872 = vrot.lane.b32.xlu0 %v3871, 64
    %v3873 = vpop.permute.xlu0 %3872
    %v3875 = vsel %vm662, %v3873, 0
    %3877 = vmatprep.subr.bf16.mxu0 %v767
    %3878 = vmatpush1.bf16.msra.mxu0 %v766
    %3879 = vmatprep.subr.bf16.mxu0 %v769
    %3880 = vmatpush1.bf16.msra.mxu0 %v768
    %3881 = vmatprep.subr.bf16.mxu0 %v771
    %3882 = vmatpush1.bf16.msra.mxu0 %v770
    %3883 = vmatprep.subr.bf16.mxu0 %v773
    %3884 = vmatpush1.bf16.msra.mxu0 %v772
    %3885 = vmatprep.subr.bf16.mxu0 0
    %3886 = vmatpush1.bf16.msra.mxu0 0
    %3887 = vmatprep.subr.bf16.mxu0 0
    %3888 = vmatpush1.bf16.msra.mxu0 0
    %3889 = vmatprep.subr.bf16.mxu0 0
    %3890 = vmatpush1.bf16.msra.mxu0 0
    %3891 = vmatprep.subr.bf16.mxu0 0
    %3892 = vmatpush1.bf16.msra.mxu0 0
    %3893 = vmatprep.subr.bf16.mxu0 0
    %3894 = vmatpush1.bf16.msra.mxu0 0
    %3895 = vmatprep.subr.bf16.mxu0 0
    %3896 = vmatpush1.bf16.msra.mxu0 0
    %3897 = vmatprep.subr.bf16.mxu0 0
    %3898 = vmatpush1.bf16.msra.mxu0 0
    %3899 = vmatprep.subr.bf16.mxu0 0
    %3900 = vmatpush1.bf16.msra.mxu0 0
    %3901 = vmatprep.subr.bf16.mxu0 0
    %3902 = vmatpush1.bf16.msra.mxu0 0
    %3903 = vmatprep.subr.bf16.mxu0 0
    %3904 = vmatpush1.bf16.msra.mxu0 0
    %3905 = vmatprep.subr.bf16.mxu0 0
    %3906 = vmatpush1.bf16.msra.mxu0 0
    %3907 = vmatprep.subr.bf16.mxu0 0
    %3908 = vmatpush1.bf16.msra.mxu0 0
    %3909 = vmatprep.mubr.bf16.mxu0 0
    %3910 = vmatmul.mubr.bf16.gmra.mrb[0].mxu0 %v3875
    %v3911 = vpop.f32.mrb[0].mxu0
    %v3912 = vadd.f32 0.0, %v3911
    %v3913 = vpop.f32.mrb[0].mxu0
    %v3914 = vadd.f32 0.0, %v3913
    %v3915 = vpop.f32.mrb[0].mxu0
    %v3916 = vpop.f32.mrb[0].mxu0
    %3917 = vdwg.mxu0
    %v3920 = vrot.slane %v3912, 4
    %v3921 = vrot.slane %v3914, 4
    %v3924 = vadd.f32 %v3867, %v3920
    %v3925 = vadd.f32 %v3868, %v3921
    %v3926 = vxor.u32 %v3924, 2147483648
    %v3927 = vmul.f32 %v3926, 1.442695
    %v3928 = vpow.pop %v3927
    %v3929 = vadd.f32 %v3928, 1.0
    %v3930 = vrcp.pop %v3929
    %v3931 = vmul.f32 1.0, %v3930
    %v3932 = vtanh.pop %v3925
    %v3933 = vxor.u32 %v3925, 2147483648
    %v3934 = vmul.f32 %v3933, 1.442695
    %v3935 = vpow.pop %v3934
    %v3936 = vadd.f32 %v3935, 1.0
    %v3937 = vrcp.pop %v3936
    %v3938 = vmul.f32 1.0, %v3937
    %v3940 = vrot.slane %v3448, 6
    %v3942 = vmul.f32 %v3931, %v3940
    %v3943 = vmul.f32 %v3931, %v3932
    %3945 = vrot.lane.b32.xlu0 %v3943, 64
    %v3946 = vpop.permute.xlu0 %3945
    %v3948 = vadd.f32 %v3942, %v3946
    %v3949 = vtanh.pop %v3948
    %v3950 = vmul.f32 %v3938, %v3949
    %v3951 = vld [vmem:[#allocation2 + $0x88] sm:$0x30]
    %v3952 = vld [vmem:[#allocation2 + $0x90] sm:$0x30]
    %v3953 = vpack.c.bf16 %v3533, %v3533
    %v3955 = vrot.slane %v3953, 1
    %3956 = vrot.lane.b32.xlu0 %v3955, 64
    %v3957 = vpop.permute.xlu0 %3956
    %v3959 = vsel %vm662, %v3957, 0
    %3961 = vmatprep.subr.bf16.mxu0 %v883
    %3962 = vmatpush1.bf16.msra.mxu0 %v882
    %3963 = vmatprep.subr.bf16.mxu0 %v885
    %3964 = vmatpush1.bf16.msra.mxu0 %v884
    %3965 = vmatprep.subr.bf16.mxu0 %v887
    %3966 = vmatpush1.bf16.msra.mxu0 %v886
    %3967 = vmatprep.subr.bf16.mxu0 %v889
    %3968 = vmatpush1.bf16.msra.mxu0 %v888
    %3969 = vmatprep.subr.bf16.mxu0 0
    %3970 = vmatpush1.bf16.msra.mxu0 0
    %3971 = vmatprep.subr.bf16.mxu0 0
    %3972 = vmatpush1.bf16.msra.mxu0 0
    %3973 = vmatprep.subr.bf16.mxu0 0
    %3974 = vmatpush1.bf16.msra.mxu0 0
    %3975 = vmatprep.subr.bf16.mxu0 0
    %3976 = vmatpush1.bf16.msra.mxu0 0
    %3977 = vmatprep.subr.bf16.mxu0 0
    %3978 = vmatpush1.bf16.msra.mxu0 0
    %3979 = vmatprep.subr.bf16.mxu0 0
    %3980 = vmatpush1.bf16.msra.mxu0 0
    %3981 = vmatprep.subr.bf16.mxu0 0
    %3982 = vmatpush1.bf16.msra.mxu0 0
    %3983 = vmatprep.subr.bf16.mxu0 0
    %3984 = vmatpush1.bf16.msra.mxu0 0
    %3985 = vmatprep.subr.bf16.mxu0 0
    %3986 = vmatpush1.bf16.msra.mxu0 0
    %3987 = vmatprep.subr.bf16.mxu0 0
    %3988 = vmatpush1.bf16.msra.mxu0 0
    %3989 = vmatprep.subr.bf16.mxu0 0
    %3990 = vmatpush1.bf16.msra.mxu0 0
    %3991 = vmatprep.subr.bf16.mxu0 0
    %3992 = vmatpush1.bf16.msra.mxu0 0
    %3993 = vmatprep.mubr.bf16.mxu0 0
    %3994 = vmatmul.mubr.bf16.gmra.mrb[0].mxu0 %v3959
    %v3995 = vpop.f32.mrb[0].mxu0
    %v3996 = vadd.f32 0.0, %v3995
    %v3997 = vpop.f32.mrb[0].mxu0
    %v3998 = vadd.f32 0.0, %v3997
    %v3999 = vpop.f32.mrb[0].mxu0
    %v4000 = vpop.f32.mrb[0].mxu0
    %4001 = vdwg.mxu0
    %v4004 = vrot.slane %v3996, 4
    %v4005 = vrot.slane %v3998, 4
    %v4008 = vadd.f32 %v3951, %v4004
    %v4009 = vadd.f32 %v3952, %v4005
    %v4010 = vxor.u32 %v4008, 2147483648
    %v4011 = vmul.f32 %v4010, 1.442695
    %v4012 = vpow.pop %v4011
    %v4013 = vadd.f32 %v4012, 1.0
    %v4014 = vrcp.pop %v4013
    %v4015 = vmul.f32 1.0, %v4014
    %v4016 = vtanh.pop %v4009
    %v4017 = vxor.u32 %v4009, 2147483648
    %v4018 = vmul.f32 %v4017, 1.442695
    %v4019 = vpow.pop %v4018
    %v4020 = vadd.f32 %v4019, 1.0
    %v4021 = vrcp.pop %v4020
    %v4022 = vmul.f32 1.0, %v4021
    %v4024 = vrot.slane %v3531, 6
    %v4026 = vmul.f32 %v4015, %v4024
    %v4027 = vmul.f32 %v4015, %v4016
    %4029 = vrot.lane.b32.xlu0 %v4027, 64
    %v4030 = vpop.permute.xlu0 %4029
    %v4032 = vadd.f32 %v4026, %v4030
    %v4033 = vtanh.pop %v4032
    %v4034 = vmul.f32 %v4022, %v4033
    %v4035 = vld [vmem:[#allocation2 + $0x98] sm:$0x30]
    %v4036 = vld [vmem:[#allocation2 + $0xa0] sm:$0x30]
    %v4037 = vpack.c.bf16 %v3616, %v3616
    %v4039 = vrot.slane %v4037, 1
    %4040 = vrot.lane.b32.xlu0 %v4039, 64
    %v4041 = vpop.permute.xlu0 %4040
    %v4043 = vsel %vm662, %v4041, 0
    %4045 = vmatprep.subr.bf16.mxu0 %v999
    %4046 = vmatpush1.bf16.msra.mxu0 %v998
    %4047 = vmatprep.subr.bf16.mxu0 %v1001
    %4048 = vmatpush1.bf16.msra.mxu0 %v1000
    %4049 = vmatprep.subr.bf16.mxu0 %v1003
    %4050 = vmatpush1.bf16.msra.mxu0 %v1002
    %4051 = vmatprep.subr.bf16.mxu0 %v1005
    %4052 = vmatpush1.bf16.msra.mxu0 %v1004
    %4053 = vmatprep.subr.bf16.mxu0 0
    %4054 = vmatpush1.bf16.msra.mxu0 0
    %4055 = vmatprep.subr.bf16.mxu0 0
    %4056 = vmatpush1.bf16.msra.mxu0 0
    %4057 = vmatprep.subr.bf16.mxu0 0
    %4058 = vmatpush1.bf16.msra.mxu0 0
    %4059 = vmatprep.subr.bf16.mxu0 0
    %4060 = vmatpush1.bf16.msra.mxu0 0
    %4061 = vmatprep.subr.bf16.mxu0 0
    %4062 = vmatpush1.bf16.msra.mxu0 0
    %4063 = vmatprep.subr.bf16.mxu0 0
    %4064 = vmatpush1.bf16.msra.mxu0 0
    %4065 = vmatprep.subr.bf16.mxu0 0
    %4066 = vmatpush1.bf16.msra.mxu0 0
    %4067 = vmatprep.subr.bf16.mxu0 0
    %4068 = vmatpush1.bf16.msra.mxu0 0
    %4069 = vmatprep.subr.bf16.mxu0 0
    %4070 = vmatpush1.bf16.msra.mxu0 0
    %4071 = vmatprep.subr.bf16.mxu0 0
    %4072 = vmatpush1.bf16.msra.mxu0 0
    %4073 = vmatprep.subr.bf16.mxu0 0
    %4074 = vmatpush1.bf16.msra.mxu0 0
    %4075 = vmatprep.subr.bf16.mxu0 0
    %4076 = vmatpush1.bf16.msra.mxu0 0
    %4077 = vmatprep.mubr.bf16.mxu0 0
    %4078 = vmatmul.mubr.bf16.gmra.mrb[0].mxu0 %v4043
    %v4079 = vpop.f32.mrb[0].mxu0
    %v4080 = vadd.f32 0.0, %v4079
    %v4081 = vpop.f32.mrb[0].mxu0
    %v4082 = vadd.f32 0.0, %v4081
    %v4083 = vpop.f32.mrb[0].mxu0
    %v4084 = vpop.f32.mrb[0].mxu0
    %4085 = vdwg.mxu0
    %v4088 = vrot.slane %v4080, 4
    %v4089 = vrot.slane %v4082, 4
    %v4092 = vadd.f32 %v4035, %v4088
    %v4093 = vadd.f32 %v4036, %v4089
    %v4094 = vxor.u32 %v4092, 2147483648
    %v4095 = vmul.f32 %v4094, 1.442695
    %v4096 = vpow.pop %v4095
    %v4097 = vadd.f32 %v4096, 1.0
    %v4098 = vrcp.pop %v4097
    %v4099 = vmul.f32 1.0, %v4098
    %v4100 = vtanh.pop %v4093
    %v4101 = vxor.u32 %v4093, 2147483648
    %v4102 = vmul.f32 %v4101, 1.442695
    %v4103 = vpow.pop %v4102
    %v4104 = vadd.f32 %v4103, 1.0
    %v4105 = vrcp.pop %v4104
    %v4106 = vmul.f32 1.0, %v4105
    %v4108 = vrot.slane %v3614, 6
    %v4110 = vmul.f32 %v4099, %v4108
    %v4111 = vmul.f32 %v4099, %v4100
    %4113 = vrot.lane.b32.xlu0 %v4111, 64
    %v4114 = vpop.permute.xlu0 %4113
    %v4116 = vadd.f32 %v4110, %v4114
    %v4117 = vtanh.pop %v4116
    %v4118 = vmul.f32 %v4106, %v4117
    %v4119 = vld [vmem:[#allocation2 + $0xa8] sm:$0x30]
    %v4120 = vld [vmem:[#allocation2 + $0xb0] sm:$0x30]
    %v4121 = vpack.c.bf16 %v3699, %v3699
    %v4123 = vrot.slane %v4121, 1
    %4124 = vrot.lane.b32.xlu0 %v4123, 64
    %v4125 = vpop.permute.xlu0 %4124
    %v4127 = vsel %vm662, %v4125, 0
    %4129 = vmatprep.subr.bf16.mxu0 %v1115
    %4130 = vmatpush1.bf16.msra.mxu0 %v1114
    %4131 = vmatprep.subr.bf16.mxu0 %v1117
    %4132 = vmatpush1.bf16.msra.mxu0 %v1116
    %4133 = vmatprep.subr.bf16.mxu0 %v1119
    %4134 = vmatpush1.bf16.msra.mxu0 %v1118
    %4135 = vmatprep.subr.bf16.mxu0 %v1121
    %4136 = vmatpush1.bf16.msra.mxu0 %v1120
    %4137 = vmatprep.subr.bf16.mxu0 0
    %4138 = vmatpush1.bf16.msra.mxu0 0
    %4139 = vmatprep.subr.bf16.mxu0 0
    %4140 = vmatpush1.bf16.msra.mxu0 0
    %4141 = vmatprep.subr.bf16.mxu0 0
    %4142 = vmatpush1.bf16.msra.mxu0 0
    %4143 = vmatprep.subr.bf16.mxu0 0
    %4144 = vmatpush1.bf16.msra.mxu0 0
    %4145 = vmatprep.subr.bf16.mxu0 0
    %4146 = vmatpush1.bf16.msra.mxu0 0
    %4147 = vmatprep.subr.bf16.mxu0 0
    %4148 = vmatpush1.bf16.msra.mxu0 0
    %4149 = vmatprep.subr.bf16.mxu0 0
    %4150 = vmatpush1.bf16.msra.mxu0 0
    %4151 = vmatprep.subr.bf16.mxu0 0
    %4152 = vmatpush1.bf16.msra.mxu0 0
    %4153 = vmatprep.subr.bf16.mxu0 0
    %4154 = vmatpush1.bf16.msra.mxu0 0
    %4155 = vmatprep.subr.bf16.mxu0 0
    %4156 = vmatpush1.bf16.msra.mxu0 0
    %4157 = vmatprep.subr.bf16.mxu0 0
    %4158 = vmatpush1.bf16.msra.mxu0 0
    %4159 = vmatprep.subr.bf16.mxu0 0
    %4160 = vmatpush1.bf16.msra.mxu0 0
    %4161 = vmatprep.mubr.bf16.mxu0 0
    %4162 = vmatmul.mubr.bf16.gmra.mrb[0].mxu0 %v4127
    %v4163 = vpop.f32.mrb[0].mxu0
    %v4164 = vadd.f32 0.0, %v4163
    %v4165 = vpop.f32.mrb[0].mxu0
    %v4166 = vadd.f32 0.0, %v4165
    %v4167 = vpop.f32.mrb[0].mxu0
    %v4168 = vpop.f32.mrb[0].mxu0
    %4169 = vdwg.mxu0
    %v4172 = vrot.slane %v4164, 4
    %v4173 = vrot.slane %v4166, 4
    %v4176 = vadd.f32 %v4119, %v4172
    %v4177 = vadd.f32 %v4120, %v4173
    %v4178 = vxor.u32 %v4176, 2147483648
    %v4179 = vmul.f32 %v4178, 1.442695
    %v4180 = vpow.pop %v4179
    %v4181 = vadd.f32 %v4180, 1.0
    %v4182 = vrcp.pop %v4181
    %v4183 = vmul.f32 1.0, %v4182
    %v4184 = vtanh.pop %v4177
    %v4185 = vxor.u32 %v4177, 2147483648
    %v4186 = vmul.f32 %v4185, 1.442695
    %v4187 = vpow.pop %v4186
    %v4188 = vadd.f32 %v4187, 1.0
    %v4189 = vrcp.pop %v4188
    %v4190 = vmul.f32 1.0, %v4189
    %v4192 = vrot.slane %v3697, 6
    %v4194 = vmul.f32 %v4183, %v4192
    %v4195 = vmul.f32 %v4183, %v4184
    %4197 = vrot.lane.b32.xlu0 %v4195, 64
    %v4198 = vpop.permute.xlu0 %4197
    %v4200 = vadd.f32 %v4194, %v4198
    %v4201 = vtanh.pop %v4200
    %v4202 = vmul.f32 %v4190, %v4201
    %v4203 = vld [vmem:[#allocation2 + $0xb8] sm:$0x30]
    %v4204 = vld [vmem:[#allocation2 + $0xc0] sm:$0x30]
    %v4205 = vpack.c.bf16 %v3782, %v3782
    %v4207 = vrot.slane %v4205, 1
    %4208 = vrot.lane.b32.xlu0 %v4207, 64
    %v4209 = vpop.permute.xlu0 %4208
    %v4211 = vsel %vm662, %v4209, 0
    %4213 = vmatprep.subr.bf16.mxu0 %v1231
    %4214 = vmatpush1.bf16.msra.mxu0 %v1230
    %4215 = vmatprep.subr.bf16.mxu0 %v1233
    %4216 = vmatpush1.bf16.msra.mxu0 %v1232
    %4217 = vmatprep.subr.bf16.mxu0 %v1235
    %4218 = vmatpush1.bf16.msra.mxu0 %v1234
    %4219 = vmatprep.subr.bf16.mxu0 %v1237
    %4220 = vmatpush1.bf16.msra.mxu0 %v1236
    %4221 = vmatprep.subr.bf16.mxu0 0
    %4222 = vmatpush1.bf16.msra.mxu0 0
    %4223 = vmatprep.subr.bf16.mxu0 0
    %4224 = vmatpush1.bf16.msra.mxu0 0
    %4225 = vmatprep.subr.bf16.mxu0 0
    %4226 = vmatpush1.bf16.msra.mxu0 0
    %4227 = vmatprep.subr.bf16.mxu0 0
    %4228 = vmatpush1.bf16.msra.mxu0 0
    %4229 = vmatprep.subr.bf16.mxu0 0
    %4230 = vmatpush1.bf16.msra.mxu0 0
    %4231 = vmatprep.subr.bf16.mxu0 0
    %4232 = vmatpush1.bf16.msra.mxu0 0
    %4233 = vmatprep.subr.bf16.mxu0 0
    %4234 = vmatpush1.bf16.msra.mxu0 0
    %4235 = vmatprep.subr.bf16.mxu0 0
    %4236 = vmatpush1.bf16.msra.mxu0 0
    %4237 = vmatprep.subr.bf16.mxu0 0
    %4238 = vmatpush1.bf16.msra.mxu0 0
    %4239 = vmatprep.subr.bf16.mxu0 0
    %4240 = vmatpush1.bf16.msra.mxu0 0
    %4241 = vmatprep.subr.bf16.mxu0 0
    %4242 = vmatpush1.bf16.msra.mxu0 0
    %4243 = vmatprep.subr.bf16.mxu0 0
    %4244 = vmatpush1.bf16.msra.mxu0 0
    %4245 = vmatprep.mubr.bf16.mxu0 0
    %4246 = vmatmul.mubr.bf16.gmra.mrb[0].mxu0 %v4211
    %v4247 = vpop.f32.mrb[0].mxu0
    %v4248 = vadd.f32 0.0, %v4247
    %v4249 = vpop.f32.mrb[0].mxu0
    %v4250 = vadd.f32 0.0, %v4249
    %v4251 = vpop.f32.mrb[0].mxu0
    %v4252 = vpop.f32.mrb[0].mxu0
    %4253 = vdwg.mxu0
    %v4256 = vrot.slane %v4248, 4
    %v4257 = vrot.slane %v4250, 4
    %v4260 = vadd.f32 %v4203, %v4256
    %v4261 = vadd.f32 %v4204, %v4257
    %v4262 = vxor.u32 %v4260, 2147483648
    %v4263 = vmul.f32 %v4262, 1.442695
    %v4264 = vpow.pop %v4263
    %v4265 = vadd.f32 %v4264, 1.0
    %v4266 = vrcp.pop %v4265
    %v4267 = vmul.f32 1.0, %v4266
    %v4268 = vtanh.pop %v4261
    %v4269 = vxor.u32 %v4261, 2147483648
    %v4270 = vmul.f32 %v4269, 1.442695
    %v4271 = vpow.pop %v4270
    %v4272 = vadd.f32 %v4271, 1.0
    %v4273 = vrcp.pop %v4272
    %v4274 = vmul.f32 1.0, %v4273
    %v4276 = vrot.slane %v3780, 6
    %v4278 = vmul.f32 %v4267, %v4276
    %v4279 = vmul.f32 %v4267, %v4268
    %4281 = vrot.lane.b32.xlu0 %v4279, 64
    %v4282 = vpop.permute.xlu0 %4281
    %v4284 = vadd.f32 %v4278, %v4282
    %v4285 = vtanh.pop %v4284
    %v4286 = vmul.f32 %v4274, %v4285
    %v4287 = vld [vmem:[#allocation2 + $0x68] sm:$0xc0]
    %v4288 = vld [vmem:[#allocation2 + $0x70] sm:$0xc0]
    %v4289 = vpack.c.bf16 %v3866, %v3866
    %v4291 = vrot.slane %v4289, 2
    %4292 = vrot.lane.b32.xlu0 %v4291, 64
    %v4293 = vpop.permute.xlu0 %4292
    %v4295 = vsel %vm662, %v4293, 0
    %4297 = vmatprep.subr.bf16.mxu0 %v647
    %4298 = vmatpush1.bf16.msra.mxu0 %v646
    %4299 = vmatprep.subr.bf16.mxu0 %v649
    %4300 = vmatpush1.bf16.msra.mxu0 %v648
    %4301 = vmatprep.subr.bf16.mxu0 %v651
    %4302 = vmatpush1.bf16.msra.mxu0 %v650
    %4303 = vmatprep.subr.bf16.mxu0 %v653
    %4304 = vmatpush1.bf16.msra.mxu0 %v652
    %4305 = vmatprep.subr.bf16.mxu0 0
    %4306 = vmatpush1.bf16.msra.mxu0 0
    %4307 = vmatprep.subr.bf16.mxu0 0
    %4308 = vmatpush1.bf16.msra.mxu0 0
    %4309 = vmatprep.subr.bf16.mxu0 0
    %4310 = vmatpush1.bf16.msra.mxu0 0
    %4311 = vmatprep.subr.bf16.mxu0 0
    %4312 = vmatpush1.bf16.msra.mxu0 0
    %4313 = vmatprep.subr.bf16.mxu0 0
    %4314 = vmatpush1.bf16.msra.mxu0 0
    %4315 = vmatprep.subr.bf16.mxu0 0
    %4316 = vmatpush1.bf16.msra.mxu0 0
    %4317 = vmatprep.subr.bf16.mxu0 0
    %4318 = vmatpush1.bf16.msra.mxu0 0
    %4319 = vmatprep.subr.bf16.mxu0 0
    %4320 = vmatpush1.bf16.msra.mxu0 0
    %4321 = vmatprep.subr.bf16.mxu0 0
    %4322 = vmatpush1.bf16.msra.mxu0 0
    %4323 = vmatprep.subr.bf16.mxu0 0
    %4324 = vmatpush1.bf16.msra.mxu0 0
    %4325 = vmatprep.subr.bf16.mxu0 0
    %4326 = vmatpush1.bf16.msra.mxu0 0
    %4327 = vmatprep.subr.bf16.mxu0 0
    %4328 = vmatpush1.bf16.msra.mxu0 0
    %4329 = vmatprep.mubr.bf16.mxu0 0
    %4330 = vmatmul.mubr.bf16.gmra.mrb[0].mxu0 %v4295
    %v4331 = vpop.f32.mrb[0].mxu0
    %v4332 = vadd.f32 0.0, %v4331
    %v4333 = vpop.f32.mrb[0].mxu0
    %v4334 = vadd.f32 0.0, %v4333
    %v4335 = vpop.f32.mrb[0].mxu0
    %v4336 = vpop.f32.mrb[0].mxu0
    %4337 = vdwg.mxu0
    %v4340 = vrot.slane %v4332, 2
    %v4341 = vrot.slane %v4334, 2
    %v4344 = vadd.f32 %v4287, %v4340
    %v4345 = vadd.f32 %v4288, %v4341
    %v4346 = vxor.u32 %v4344, 2147483648
    %v4347 = vmul.f32 %v4346, 1.442695
    %v4348 = vpow.pop %v4347
    %v4349 = vadd.f32 %v4348, 1.0
    %v4350 = vrcp.pop %v4349
    %v4351 = vmul.f32 1.0, %v4350
    %v4352 = vtanh.pop %v4345
    %v4353 = vxor.u32 %v4345, 2147483648
    %v4354 = vmul.f32 %v4353, 1.442695
    %v4355 = vpow.pop %v4354
    %v4356 = vadd.f32 %v4355, 1.0
    %v4357 = vrcp.pop %v4356
    %v4358 = vmul.f32 1.0, %v4357
    %v4360 = vrot.slane %v3864, 6
    %v4362 = vmul.f32 %v4351, %v4360
    %v4363 = vmul.f32 %v4351, %v4352
    %4365 = vrot.lane.b32.xlu0 %v4363, 64
    %v4366 = vpop.permute.xlu0 %4365
    %v4368 = vadd.f32 %v4362, %v4366
    %v4369 = vtanh.pop %v4368
    %v4370 = vmul.f32 %v4358, %v4369
    %v4371 = vld [vmem:[#allocation2 + $0x78] sm:$0xc0]
    %v4372 = vld [vmem:[#allocation2 + $0x80] sm:$0xc0]
    %v4373 = vpack.c.bf16 %v3950, %v3950
    %v4375 = vrot.slane %v4373, 2
    %4376 = vrot.lane.b32.xlu0 %v4375, 64
    %v4377 = vpop.permute.xlu0 %4376
    %v4379 = vsel %vm662, %v4377, 0
    %4381 = vmatprep.subr.bf16.mxu0 %v767
    %4382 = vmatpush1.bf16.msra.mxu0 %v766
    %4383 = vmatprep.subr.bf16.mxu0 %v769
    %4384 = vmatpush1.bf16.msra.mxu0 %v768
    %4385 = vmatprep.subr.bf16.mxu0 %v771
    %4386 = vmatpush1.bf16.msra.mxu0 %v770
    %4387 = vmatprep.subr.bf16.mxu0 %v773
    %4388 = vmatpush1.bf16.msra.mxu0 %v772
    %4389 = vmatprep.subr.bf16.mxu0 0
    %4390 = vmatpush1.bf16.msra.mxu0 0
    %4391 = vmatprep.subr.bf16.mxu0 0
    %4392 = vmatpush1.bf16.msra.mxu0 0
    %4393 = vmatprep.subr.bf16.mxu0 0
    %4394 = vmatpush1.bf16.msra.mxu0 0
    %4395 = vmatprep.subr.bf16.mxu0 0
    %4396 = vmatpush1.bf16.msra.mxu0 0
    %4397 = vmatprep.subr.bf16.mxu0 0
    %4398 = vmatpush1.bf16.msra.mxu0 0
    %4399 = vmatprep.subr.bf16.mxu0 0
    %4400 = vmatpush1.bf16.msra.mxu0 0
    %4401 = vmatprep.subr.bf16.mxu0 0
    %4402 = vmatpush1.bf16.msra.mxu0 0
    %4403 = vmatprep.subr.bf16.mxu0 0
    %4404 = vmatpush1.bf16.msra.mxu0 0
    %4405 = vmatprep.subr.bf16.mxu0 0
    %4406 = vmatpush1.bf16.msra.mxu0 0
    %4407 = vmatprep.subr.bf16.mxu0 0
    %4408 = vmatpush1.bf16.msra.mxu0 0
    %4409 = vmatprep.subr.bf16.mxu0 0
    %4410 = vmatpush1.bf16.msra.mxu0 0
    %4411 = vmatprep.subr.bf16.mxu0 0
    %4412 = vmatpush1.bf16.msra.mxu0 0
    %4413 = vmatprep.mubr.bf16.mxu0 0
    %4414 = vmatmul.mubr.bf16.gmra.mrb[0].mxu0 %v4379
    %v4415 = vpop.f32.mrb[0].mxu0
    %v4416 = vadd.f32 0.0, %v4415
    %v4417 = vpop.f32.mrb[0].mxu0
    %v4418 = vadd.f32 0.0, %v4417
    %v4419 = vpop.f32.mrb[0].mxu0
    %v4420 = vpop.f32.mrb[0].mxu0
    %4421 = vdwg.mxu0
    %v4424 = vrot.slane %v4416, 2
    %v4425 = vrot.slane %v4418, 2
    %v4428 = vadd.f32 %v4371, %v4424
    %v4429 = vadd.f32 %v4372, %v4425
    %v4430 = vxor.u32 %v4428, 2147483648
    %v4431 = vmul.f32 %v4430, 1.442695
    %v4432 = vpow.pop %v4431
    %v4433 = vadd.f32 %v4432, 1.0
    %v4434 = vrcp.pop %v4433
    %v4435 = vmul.f32 1.0, %v4434
    %v4436 = vtanh.pop %v4429
    %v4437 = vxor.u32 %v4429, 2147483648
    %v4438 = vmul.f32 %v4437, 1.442695
    %v4439 = vpow.pop %v4438
    %v4440 = vadd.f32 %v4439, 1.0
    %v4441 = vrcp.pop %v4440
    %v4442 = vmul.f32 1.0, %v4441
    %v4444 = vrot.slane %v3948, 6
    %v4446 = vmul.f32 %v4435, %v4444
    %v4447 = vmul.f32 %v4435, %v4436
    %4449 = vrot.lane.b32.xlu0 %v4447, 64
    %v4450 = vpop.permute.xlu0 %4449
    %v4452 = vadd.f32 %v4446, %v4450
    %v4453 = vtanh.pop %v4452
    %v4454 = vmul.f32 %v4442, %v4453
    %v4455 = vld [vmem:[#allocation2 + $0x88] sm:$0xc0]
    %v4456 = vld [vmem:[#allocation2 + $0x90] sm:$0xc0]
    %v4457 = vpack.c.bf16 %v4034, %v4034
    %v4459 = vrot.slane %v4457, 2
    %4460 = vrot.lane.b32.xlu0 %v4459, 64
    %v4461 = vpop.permute.xlu0 %4460
    %v4463 = vsel %vm662, %v4461, 0
    %4465 = vmatprep.subr.bf16.mxu0 %v883
    %4466 = vmatpush1.bf16.msra.mxu0 %v882
    %4467 = vmatprep.subr.bf16.mxu0 %v885
    %4468 = vmatpush1.bf16.msra.mxu0 %v884
    %4469 = vmatprep.subr.bf16.mxu0 %v887
    %4470 = vmatpush1.bf16.msra.mxu0 %v886
    %4471 = vmatprep.subr.bf16.mxu0 %v889
    %4472 = vmatpush1.bf16.msra.mxu0 %v888
    %4473 = vmatprep.subr.bf16.mxu0 0
    %4474 = vmatpush1.bf16.msra.mxu0 0
    %4475 = vmatprep.subr.bf16.mxu0 0
    %4476 = vmatpush1.bf16.msra.mxu0 0
    %4477 = vmatprep.subr.bf16.mxu0 0
    %4478 = vmatpush1.bf16.msra.mxu0 0
    %4479 = vmatprep.subr.bf16.mxu0 0
    %4480 = vmatpush1.bf16.msra.mxu0 0
    %4481 = vmatprep.subr.bf16.mxu0 0
    %4482 = vmatpush1.bf16.msra.mxu0 0
    %4483 = vmatprep.subr.bf16.mxu0 0
    %4484 = vmatpush1.bf16.msra.mxu0 0
    %4485 = vmatprep.subr.bf16.mxu0 0
    %4486 = vmatpush1.bf16.msra.mxu0 0
    %4487 = vmatprep.subr.bf16.mxu0 0
    %4488 = vmatpush1.bf16.msra.mxu0 0
    %4489 = vmatprep.subr.bf16.mxu0 0
    %4490 = vmatpush1.bf16.msra.mxu0 0
    %4491 = vmatprep.subr.bf16.mxu0 0
    %4492 = vmatpush1.bf16.msra.mxu0 0
    %4493 = vmatprep.subr.bf16.mxu0 0
    %4494 = vmatpush1.bf16.msra.mxu0 0
    %4495 = vmatprep.subr.bf16.mxu0 0
    %4496 = vmatpush1.bf16.msra.mxu0 0
    %4497 = vmatprep.mubr.bf16.mxu0 0
    %4498 = vmatmul.mubr.bf16.gmra.mrb[0].mxu0 %v4463
    %v4499 = vpop.f32.mrb[0].mxu0
    %v4500 = vadd.f32 0.0, %v4499
    %v4501 = vpop.f32.mrb[0].mxu0
    %v4502 = vadd.f32 0.0, %v4501
    %v4503 = vpop.f32.mrb[0].mxu0
    %v4504 = vpop.f32.mrb[0].mxu0
    %4505 = vdwg.mxu0
    %v4508 = vrot.slane %v4500, 2
    %v4509 = vrot.slane %v4502, 2
    %v4512 = vadd.f32 %v4455, %v4508
    %v4513 = vadd.f32 %v4456, %v4509
    %v4514 = vxor.u32 %v4512, 2147483648
    %v4515 = vmul.f32 %v4514, 1.442695
    %v4516 = vpow.pop %v4515
    %v4517 = vadd.f32 %v4516, 1.0
    %v4518 = vrcp.pop %v4517
    %v4519 = vmul.f32 1.0, %v4518
    %v4520 = vtanh.pop %v4513
    %v4521 = vxor.u32 %v4513, 2147483648
    %v4522 = vmul.f32 %v4521, 1.442695
    %v4523 = vpow.pop %v4522
    %v4524 = vadd.f32 %v4523, 1.0
    %v4525 = vrcp.pop %v4524
    %v4526 = vmul.f32 1.0, %v4525
    %v4528 = vrot.slane %v4032, 6
    %v4530 = vmul.f32 %v4519, %v4528
    %v4531 = vmul.f32 %v4519, %v4520
    %4533 = vrot.lane.b32.xlu0 %v4531, 64
    %v4534 = vpop.permute.xlu0 %4533
    %v4536 = vadd.f32 %v4530, %v4534
    %v4537 = vtanh.pop %v4536
    %v4538 = vmul.f32 %v4526, %v4537
    %v4539 = vld [vmem:[#allocation2 + $0x98] sm:$0xc0]
    %v4540 = vld [vmem:[#allocation2 + $0xa0] sm:$0xc0]
    %v4541 = vpack.c.bf16 %v4118, %v4118
    %v4543 = vrot.slane %v4541, 2
    %4544 = vrot.lane.b32.xlu0 %v4543, 64
    %v4545 = vpop.permute.xlu0 %4544
    %v4547 = vsel %vm662, %v4545, 0
    %4549 = vmatprep.subr.bf16.mxu0 %v999
    %4550 = vmatpush1.bf16.msra.mxu0 %v998
    %4551 = vmatprep.subr.bf16.mxu0 %v1001
    %4552 = vmatpush1.bf16.msra.mxu0 %v1000
    %4553 = vmatprep.subr.bf16.mxu0 %v1003
    %4554 = vmatpush1.bf16.msra.mxu0 %v1002
    %4555 = vmatprep.subr.bf16.mxu0 %v1005
    %4556 = vmatpush1.bf16.msra.mxu0 %v1004
    %4557 = vmatprep.subr.bf16.mxu0 0
    %4558 = vmatpush1.bf16.msra.mxu0 0
    %4559 = vmatprep.subr.bf16.mxu0 0
    %4560 = vmatpush1.bf16.msra.mxu0 0
    %4561 = vmatprep.subr.bf16.mxu0 0
    %4562 = vmatpush1.bf16.msra.mxu0 0
    %4563 = vmatprep.subr.bf16.mxu0 0
    %4564 = vmatpush1.bf16.msra.mxu0 0
    %4565 = vmatprep.subr.bf16.mxu0 0
    %4566 = vmatpush1.bf16.msra.mxu0 0
    %4567 = vmatprep.subr.bf16.mxu0 0
    %4568 = vmatpush1.bf16.msra.mxu0 0
    %4569 = vmatprep.subr.bf16.mxu0 0
    %4570 = vmatpush1.bf16.msra.mxu0 0
    %4571 = vmatprep.subr.bf16.mxu0 0
    %4572 = vmatpush1.bf16.msra.mxu0 0
    %4573 = vmatprep.subr.bf16.mxu0 0
    %4574 = vmatpush1.bf16.msra.mxu0 0
    %4575 = vmatprep.subr.bf16.mxu0 0
    %4576 = vmatpush1.bf16.msra.mxu0 0
    %4577 = vmatprep.subr.bf16.mxu0 0
    %4578 = vmatpush1.bf16.msra.mxu0 0
    %4579 = vmatprep.subr.bf16.mxu0 0
    %4580 = vmatpush1.bf16.msra.mxu0 0
    %4581 = vmatprep.mubr.bf16.mxu0 0
    %4582 = vmatmul.mubr.bf16.gmra.mrb[0].mxu0 %v4547
    %v4583 = vpop.f32.mrb[0].mxu0
    %v4584 = vadd.f32 0.0, %v4583
    %v4585 = vpop.f32.mrb[0].mxu0
    %v4586 = vadd.f32 0.0, %v4585
    %v4587 = vpop.f32.mrb[0].mxu0
    %v4588 = vpop.f32.mrb[0].mxu0
    %4589 = vdwg.mxu0
    %v4592 = vrot.slane %v4584, 2
    %v4593 = vrot.slane %v4586, 2
    %v4596 = vadd.f32 %v4539, %v4592
    %v4597 = vadd.f32 %v4540, %v4593
    %v4598 = vxor.u32 %v4596, 2147483648
    %v4599 = vmul.f32 %v4598, 1.442695
    %v4600 = vpow.pop %v4599
    %v4601 = vadd.f32 %v4600, 1.0
    %v4602 = vrcp.pop %v4601
    %v4603 = vmul.f32 1.0, %v4602
    %v4604 = vtanh.pop %v4597
    %v4605 = vxor.u32 %v4597, 2147483648
    %v4606 = vmul.f32 %v4605, 1.442695
    %v4607 = vpow.pop %v4606
    %v4608 = vadd.f32 %v4607, 1.0
    %v4609 = vrcp.pop %v4608
    %v4610 = vmul.f32 1.0, %v4609
    %v4612 = vrot.slane %v4116, 6
    %v4614 = vmul.f32 %v4603, %v4612
    %v4615 = vmul.f32 %v4603, %v4604
    %4617 = vrot.lane.b32.xlu0 %v4615, 64
    %v4618 = vpop.permute.xlu0 %4617
    %v4620 = vadd.f32 %v4614, %v4618
    %v4621 = vtanh.pop %v4620
    %v4622 = vmul.f32 %v4610, %v4621
    %v4623 = vld [vmem:[#allocation2 + $0xa8] sm:$0xc0]
    %v4624 = vld [vmem:[#allocation2 + $0xb0] sm:$0xc0]
    %v4625 = vpack.c.bf16 %v4202, %v4202
    %v4627 = vrot.slane %v4625, 2
    %4628 = vrot.lane.b32.xlu0 %v4627, 64
    %v4629 = vpop.permute.xlu0 %4628
    %v4631 = vsel %vm662, %v4629, 0
    %4633 = vmatprep.subr.bf16.mxu0 %v1115
    %4634 = vmatpush1.bf16.msra.mxu0 %v1114
    %4635 = vmatprep.subr.bf16.mxu0 %v1117
    %4636 = vmatpush1.bf16.msra.mxu0 %v1116
    %4637 = vmatprep.subr.bf16.mxu0 %v1119
    %4638 = vmatpush1.bf16.msra.mxu0 %v1118
    %4639 = vmatprep.subr.bf16.mxu0 %v1121
    %4640 = vmatpush1.bf16.msra.mxu0 %v1120
    %4641 = vmatprep.subr.bf16.mxu0 0
    %4642 = vmatpush1.bf16.msra.mxu0 0
    %4643 = vmatprep.subr.bf16.mxu0 0
    %4644 = vmatpush1.bf16.msra.mxu0 0
    %4645 = vmatprep.subr.bf16.mxu0 0
    %4646 = vmatpush1.bf16.msra.mxu0 0
    %4647 = vmatprep.subr.bf16.mxu0 0
    %4648 = vmatpush1.bf16.msra.mxu0 0
    %4649 = vmatprep.subr.bf16.mxu0 0
    %4650 = vmatpush1.bf16.msra.mxu0 0
    %4651 = vmatprep.subr.bf16.mxu0 0
    %4652 = vmatpush1.bf16.msra.mxu0 0
    %4653 = vmatprep.subr.bf16.mxu0 0
    %4654 = vmatpush1.bf16.msra.mxu0 0
    %4655 = vmatprep.subr.bf16.mxu0 0
    %4656 = vmatpush1.bf16.msra.mxu0 0
    %4657 = vmatprep.subr.bf16.mxu0 0
    %4658 = vmatpush1.bf16.msra.mxu0 0
    %4659 = vmatprep.subr.bf16.mxu0 0
    %4660 = vmatpush1.bf16.msra.mxu0 0
    %4661 = vmatprep.subr.bf16.mxu0 0
    %4662 = vmatpush1.bf16.msra.mxu0 0
    %4663 = vmatprep.subr.bf16.mxu0 0
    %4664 = vmatpush1.bf16.msra.mxu0 0
    %4665 = vmatprep.mubr.bf16.mxu0 0
    %4666 = vmatmul.mubr.bf16.gmra.mrb[0].mxu0 %v4631
    %v4667 = vpop.f32.mrb[0].mxu0
    %v4668 = vadd.f32 0.0, %v4667
    %v4669 = vpop.f32.mrb[0].mxu0
    %v4670 = vadd.f32 0.0, %v4669
    %v4671 = vpop.f32.mrb[0].mxu0
    %v4672 = vpop.f32.mrb[0].mxu0
    %4673 = vdwg.mxu0
    %v4676 = vrot.slane %v4668, 2
    %v4677 = vrot.slane %v4670, 2
    %v4680 = vadd.f32 %v4623, %v4676
    %v4681 = vadd.f32 %v4624, %v4677
    %v4682 = vxor.u32 %v4680, 2147483648
    %v4683 = vmul.f32 %v4682, 1.442695
    %v4684 = vpow.pop %v4683
    %v4685 = vadd.f32 %v4684, 1.0
    %v4686 = vrcp.pop %v4685
    %v4687 = vmul.f32 1.0, %v4686
    %v4688 = vtanh.pop %v4681
    %v4689 = vxor.u32 %v4681, 2147483648
    %v4690 = vmul.f32 %v4689, 1.442695
    %v4691 = vpow.pop %v4690
    %v4692 = vadd.f32 %v4691, 1.0
    %v4693 = vrcp.pop %v4692
    %v4694 = vmul.f32 1.0, %v4693
    %v4696 = vrot.slane %v4200, 6
    %v4698 = vmul.f32 %v4687, %v4696
    %v4699 = vmul.f32 %v4687, %v4688
    %4701 = vrot.lane.b32.xlu0 %v4699, 64
    %v4702 = vpop.permute.xlu0 %4701
    %v4704 = vadd.f32 %v4698, %v4702
    %v4705 = vtanh.pop %v4704
    %v4706 = vmul.f32 %v4694, %v4705
    %v4707 = vld [vmem:[#allocation2 + $0xb8] sm:$0xc0]
    %v4708 = vld [vmem:[#allocation2 + $0xc0] sm:$0xc0]
    %v4709 = vpack.c.bf16 %v4286, %v4286
    %v4711 = vrot.slane %v4709, 2
    %4712 = vrot.lane.b32.xlu0 %v4711, 64
    %v4713 = vpop.permute.xlu0 %4712
    %v4715 = vsel %vm662, %v4713, 0
    %4717 = vmatprep.subr.bf16.mxu0 %v1231
    %4718 = vmatpush1.bf16.msra.mxu0 %v1230
    %4719 = vmatprep.subr.bf16.mxu0 %v1233
    %4720 = vmatpush1.bf16.msra.mxu0 %v1232
    %4721 = vmatprep.subr.bf16.mxu0 %v1235
    %4722 = vmatpush1.bf16.msra.mxu0 %v1234
    %4723 = vmatprep.subr.bf16.mxu0 %v1237
    %4724 = vmatpush1.bf16.msra.mxu0 %v1236
    %4725 = vmatprep.subr.bf16.mxu0 0
    %4726 = vmatpush1.bf16.msra.mxu0 0
    %4727 = vmatprep.subr.bf16.mxu0 0
    %4728 = vmatpush1.bf16.msra.mxu0 0
    %4729 = vmatprep.subr.bf16.mxu0 0
    %4730 = vmatpush1.bf16.msra.mxu0 0
    %4731 = vmatprep.subr.bf16.mxu0 0
    %4732 = vmatpush1.bf16.msra.mxu0 0
    %4733 = vmatprep.subr.bf16.mxu0 0
    %4734 = vmatpush1.bf16.msra.mxu0 0
    %4735 = vmatprep.subr.bf16.mxu0 0
    %4736 = vmatpush1.bf16.msra.mxu0 0
    %4737 = vmatprep.subr.bf16.mxu0 0
    %4738 = vmatpush1.bf16.msra.mxu0 0
    %4739 = vmatprep.subr.bf16.mxu0 0
    %4740 = vmatpush1.bf16.msra.mxu0 0
    %4741 = vmatprep.subr.bf16.mxu0 0
    %4742 = vmatpush1.bf16.msra.mxu0 0
    %4743 = vmatprep.subr.bf16.mxu0 0
    %4744 = vmatpush1.bf16.msra.mxu0 0
    %4745 = vmatprep.subr.bf16.mxu0 0
    %4746 = vmatpush1.bf16.msra.mxu0 0
    %4747 = vmatprep.subr.bf16.mxu0 0
    %4748 = vmatpush1.bf16.msra.mxu0 0
    %4749 = vmatprep.mubr.bf16.mxu0 0
    %4750 = vmatmul.mubr.bf16.gmra.mrb[0].mxu0 %v4715
    %v4751 = vpop.f32.mrb[0].mxu0
    %v4752 = vadd.f32 0.0, %v4751
    %v4753 = vpop.f32.mrb[0].mxu0
    %v4754 = vadd.f32 0.0, %v4753
    %v4755 = vpop.f32.mrb[0].mxu0
    %v4756 = vpop.f32.mrb[0].mxu0
    %4757 = vdwg.mxu0
    %v4760 = vrot.slane %v4752, 2
    %v4761 = vrot.slane %v4754, 2
    %v4764 = vadd.f32 %v4707, %v4760
    %v4765 = vadd.f32 %v4708, %v4761
    %v4766 = vxor.u32 %v4764, 2147483648
    %v4767 = vmul.f32 %v4766, 1.442695
    %v4768 = vpow.pop %v4767
    %v4769 = vadd.f32 %v4768, 1.0
    %v4770 = vrcp.pop %v4769
    %v4771 = vmul.f32 1.0, %v4770
    %v4772 = vtanh.pop %v4765
    %v4773 = vxor.u32 %v4765, 2147483648
    %v4774 = vmul.f32 %v4773, 1.442695
    %v4775 = vpow.pop %v4774
    %v4776 = vadd.f32 %v4775, 1.0
    %v4777 = vrcp.pop %v4776
    %v4778 = vmul.f32 1.0, %v4777
    %v4780 = vrot.slane %v4284, 6
    %v4782 = vmul.f32 %v4771, %v4780
    %v4783 = vmul.f32 %v4771, %v4772
    %4785 = vrot.lane.b32.xlu0 %v4783, 64
    %v4786 = vpop.permute.xlu0 %4785
    %v4788 = vadd.f32 %v4782, %v4786
    %v4789 = vtanh.pop %v4788
    %v4790 = vmul.f32 %v4778, %v4789
    %v4791 = vld [vmem:[#allocation2 + $0x130] sm:$0x3]
    %v4792 = vmax.f32 %v4791, 0.0
    %v4793 = vld [vmem:[%s5 + $0xd] sm:$0x1]
    %v4794 = vld [vmem:[%s5 + $0xe] sm:$0x1]
    %v4795 = vpack.c.bf16 %v4370, %v4370
    %v4796 = vld [vmem:[%s3] sm:$0xf]
    %v4797 = vld [vmem:[%s3 + $0x4] sm:$0xf]
    %v4798 = vld [vmem:[%s3 + $0x8] sm:$0xf]
    %v4799 = vld [vmem:[%s3 + $0xc] sm:$0xf]
    %v4800 = vld [vmem:[%s3 + $0x10] sm:$0xf]
    %v4801 = vld [vmem:[%s3 + $0x14] sm:$0xf]
    %v4802 = vld [vmem:[%s3 + $0x18] sm:$0xf]
    %v4803 = vld [vmem:[%s3 + $0x1c] sm:$0xf]
    %v4805 = vrot.slane %v4795, 3
    %4806 = vrot.lane.b32.xlu0 %v4805, 64
    %v4807 = vpop.permute.xlu0 %4806
    %v4816 = vunpack.c.l.b16 %v4796
    %v4817 = vunpack.c.l.b16 %v4797
    %v4818 = vunpack.c.l.b16 %v4798
    %v4819 = vunpack.c.l.b16 %v4799
    %v4820 = vunpack.c.l.b16 %v4800
    %v4821 = vunpack.c.l.b16 %v4801
    %v4822 = vunpack.c.l.b16 %v4802
    %v4823 = vunpack.c.l.b16 %v4803
    %v4824 = vpack.c.b16 %v4817, %v4816
    %v4825 = vpack.c.b16 %v4819, %v4818
    %v4826 = vpack.c.b16 %v4821, %v4820
    %v4827 = vpack.c.b16 %v4823, %v4822
    %v4833 = vsel %vm662, %v4807, 0
    %4835 = vmatprep.subr.bf16.mxu0 0
    %4836 = vmatpush1.bf16.msra.mxu0 %v4824
    %4837 = vmatprep.subr.bf16.mxu0 0
    %4838 = vmatpush1.bf16.msra.mxu0 %v4825
    %4839 = vmatprep.subr.bf16.mxu0 0
    %4840 = vmatpush1.bf16.msra.mxu0 %v4826
    %4841 = vmatprep.subr.bf16.mxu0 0
    %4842 = vmatpush1.bf16.msra.mxu0 %v4827
    %4843 = vmatprep.subr.bf16.mxu0 0
    %4844 = vmatpush1.bf16.msra.mxu0 0
    %4845 = vmatprep.subr.bf16.mxu0 0
    %4846 = vmatpush1.bf16.msra.mxu0 0
    %4847 = vmatprep.subr.bf16.mxu0 0
    %4848 = vmatpush1.bf16.msra.mxu0 0
    %4849 = vmatprep.subr.bf16.mxu0 0
    %4850 = vmatpush1.bf16.msra.mxu0 0
    %4851 = vmatprep.subr.bf16.mxu0 0
    %4852 = vmatpush1.bf16.msra.mxu0 0
    %4853 = vmatprep.subr.bf16.mxu0 0
    %4854 = vmatpush1.bf16.msra.mxu0 0
    %4855 = vmatprep.subr.bf16.mxu0 0
    %4856 = vmatpush1.bf16.msra.mxu0 0
    %4857 = vmatprep.subr.bf16.mxu0 0
    %4858 = vmatpush1.bf16.msra.mxu0 0
    %4859 = vmatprep.subr.bf16.mxu0 0
    %4860 = vmatpush1.bf16.msra.mxu0 0
    %4861 = vmatprep.subr.bf16.mxu0 0
    %4862 = vmatpush1.bf16.msra.mxu0 0
    %4863 = vmatprep.subr.bf16.mxu0 0
    %4864 = vmatpush1.bf16.msra.mxu0 0
    %4865 = vmatprep.subr.bf16.mxu0 0
    %4866 = vmatpush1.bf16.msra.mxu0 0
    %4867 = vmatprep.mubr.bf16.mxu0 0
    %4868 = vmatmul.mubr.bf16.gmra.mrb[0].mxu0 %v4833
    %v4869 = vpop.f32.mrb[0].mxu0
    %v4870 = vadd.f32 0.0, %v4869
    %v4871 = vpop.f32.mrb[0].mxu0
    %v4872 = vpop.f32.mrb[0].mxu0
    %v4873 = vpop.f32.mrb[0].mxu0
    %4874 = vdwg.mxu0
    %v4876 = vlaneseq
    %v4877 = vshrl.u32 %v4876, 7
    %v4878 = vsub.s32 0, %v4877
    %v4879 = vrot.slane %v4793, %v4878
    %v4881 = vadd.f32 %v4879, %v4870
    %v4882 = vpack.c.bf16 %v4454, %v4454
    %v4883 = vld [vmem:[%s3 + $0x20] sm:$0xf]
    %v4884 = vld [vmem:[%s3 + $0x24] sm:$0xf]
    %v4885 = vld [vmem:[%s3 + $0x28] sm:$0xf]
    %v4886 = vld [vmem:[%s3 + $0x2c] sm:$0xf]
    %v4887 = vld [vmem:[%s3 + $0x30] sm:$0xf]
    %v4888 = vld [vmem:[%s3 + $0x34] sm:$0xf]
    %v4889 = vld [vmem:[%s3 + $0x38] sm:$0xf]
    %v4890 = vld [vmem:[%s3 + $0x3c] sm:$0xf]
    %v4892 = vrot.slane %v4882, 3
    %4893 = vrot.lane.b32.xlu0 %v4892, 64
    %v4894 = vpop.permute.xlu0 %4893
    %v4903 = vunpack.c.l.b16 %v4883
    %v4904 = vunpack.c.l.b16 %v4884
    %v4905 = vunpack.c.l.b16 %v4885
    %v4906 = vunpack.c.l.b16 %v4886
    %v4907 = vunpack.c.l.b16 %v4887
    %v4908 = vunpack.c.l.b16 %v4888
    %v4909 = vunpack.c.l.b16 %v4889
    %v4910 = vunpack.c.l.b16 %v4890
    %v4911 = vpack.c.b16 %v4904, %v4903
    %v4912 = vpack.c.b16 %v4906, %v4905
    %v4913 = vpack.c.b16 %v4908, %v4907
    %v4914 = vpack.c.b16 %v4910, %v4909
    %v4920 = vsel %vm662, %v4894, 0
    %4922 = vmatprep.subr.bf16.mxu0 0
    %4923 = vmatpush1.bf16.msra.mxu0 %v4911
    %4924 = vmatprep.subr.bf16.mxu0 0
    %4925 = vmatpush1.bf16.msra.mxu0 %v4912
    %4926 = vmatprep.subr.bf16.mxu0 0
    %4927 = vmatpush1.bf16.msra.mxu0 %v4913
    %4928 = vmatprep.subr.bf16.mxu0 0
    %4929 = vmatpush1.bf16.msra.mxu0 %v4914
    %4930 = vmatprep.subr.bf16.mxu0 0
    %4931 = vmatpush1.bf16.msra.mxu0 0
    %4932 = vmatprep.subr.bf16.mxu0 0
    %4933 = vmatpush1.bf16.msra.mxu0 0
    %4934 = vmatprep.subr.bf16.mxu0 0
    %4935 = vmatpush1.bf16.msra.mxu0 0
    %4936 = vmatprep.subr.bf16.mxu0 0
    %4937 = vmatpush1.bf16.msra.mxu0 0
    %4938 = vmatprep.subr.bf16.mxu0 0
    %4939 = vmatpush1.bf16.msra.mxu0 0
    %4940 = vmatprep.subr.bf16.mxu0 0
    %4941 = vmatpush1.bf16.msra.mxu0 0
    %4942 = vmatprep.subr.bf16.mxu0 0
    %4943 = vmatpush1.bf16.msra.mxu0 0
    %4944 = vmatprep.subr.bf16.mxu0 0
    %4945 = vmatpush1.bf16.msra.mxu0 0
    %4946 = vmatprep.subr.bf16.mxu0 0
    %4947 = vmatpush1.bf16.msra.mxu0 0
    %4948 = vmatprep.subr.bf16.mxu0 0
    %4949 = vmatpush1.bf16.msra.mxu0 0
    %4950 = vmatprep.subr.bf16.mxu0 0
    %4951 = vmatpush1.bf16.msra.mxu0 0
    %4952 = vmatprep.subr.bf16.mxu0 0
    %4953 = vmatpush1.bf16.msra.mxu0 0
    %4954 = vmatprep.mubr.bf16.mxu0 0
    %4955 = vmatmul.mubr.bf16.gmra.mrb[0].mxu0 %v4920
    %v4956 = vpop.f32.mrb[0].mxu0
    %v4957 = vadd.f32 0.0, %v4956
    %v4958 = vpop.f32.mrb[0].mxu0
    %v4959 = vpop.f32.mrb[0].mxu0
    %v4960 = vpop.f32.mrb[0].mxu0
    %4961 = vdwg.mxu0
    %v4962 = vadd.f32 %v4881, %v4957
    %v4963 = vpack.c.bf16 %v4538, %v4538
    %v4964 = vld [vmem:[%s3 + $0x40] sm:$0xf]
    %v4965 = vld [vmem:[%s3 + $0x44] sm:$0xf]
    %v4966 = vld [vmem:[%s3 + $0x48] sm:$0xf]
    %v4967 = vld [vmem:[%s3 + $0x4c] sm:$0xf]
    %v4968 = vld [vmem:[%s3 + $0x50] sm:$0xf]
    %v4969 = vld [vmem:[%s3 + $0x54] sm:$0xf]
    %v4970 = vld [vmem:[%s3 + $0x58] sm:$0xf]
    %v4971 = vld [vmem:[%s3 + $0x5c] sm:$0xf]
    %v4973 = vrot.slane %v4963, 3
    %4974 = vrot.lane.b32.xlu0 %v4973, 64
    %v4975 = vpop.permute.xlu0 %4974
    %v4984 = vunpack.c.l.b16 %v4964
    %v4985 = vunpack.c.l.b16 %v4965
    %v4986 = vunpack.c.l.b16 %v4966
    %v4987 = vunpack.c.l.b16 %v4967
    %v4988 = vunpack.c.l.b16 %v4968
    %v4989 = vunpack.c.l.b16 %v4969
    %v4990 = vunpack.c.l.b16 %v4970
    %v4991 = vunpack.c.l.b16 %v4971
    %v4992 = vpack.c.b16 %v4985, %v4984
    %v4993 = vpack.c.b16 %v4987, %v4986
    %v4994 = vpack.c.b16 %v4989, %v4988
    %v4995 = vpack.c.b16 %v4991, %v4990
    %v5001 = vsel %vm662, %v4975, 0
    %5003 = vmatprep.subr.bf16.mxu0 0
    %5004 = vmatpush1.bf16.msra.mxu0 %v4992
    %5005 = vmatprep.subr.bf16.mxu0 0
    %5006 = vmatpush1.bf16.msra.mxu0 %v4993
    %5007 = vmatprep.subr.bf16.mxu0 0
    %5008 = vmatpush1.bf16.msra.mxu0 %v4994
    %5009 = vmatprep.subr.bf16.mxu0 0
    %5010 = vmatpush1.bf16.msra.mxu0 %v4995
    %5011 = vmatprep.subr.bf16.mxu0 0
    %5012 = vmatpush1.bf16.msra.mxu0 0
    %5013 = vmatprep.subr.bf16.mxu0 0
    %5014 = vmatpush1.bf16.msra.mxu0 0
    %5015 = vmatprep.subr.bf16.mxu0 0
    %5016 = vmatpush1.bf16.msra.mxu0 0
    %5017 = vmatprep.subr.bf16.mxu0 0
    %5018 = vmatpush1.bf16.msra.mxu0 0
    %5019 = vmatprep.subr.bf16.mxu0 0
    %5020 = vmatpush1.bf16.msra.mxu0 0
    %5021 = vmatprep.subr.bf16.mxu0 0
    %5022 = vmatpush1.bf16.msra.mxu0 0
    %5023 = vmatprep.subr.bf16.mxu0 0
    %5024 = vmatpush1.bf16.msra.mxu0 0
    %5025 = vmatprep.subr.bf16.mxu0 0
    %5026 = vmatpush1.bf16.msra.mxu0 0
    %5027 = vmatprep.subr.bf16.mxu0 0
    %5028 = vmatpush1.bf16.msra.mxu0 0
    %5029 = vmatprep.subr.bf16.mxu0 0
    %5030 = vmatpush1.bf16.msra.mxu0 0
    %5031 = vmatprep.subr.bf16.mxu0 0
    %5032 = vmatpush1.bf16.msra.mxu0 0
    %5033 = vmatprep.subr.bf16.mxu0 0
    %5034 = vmatpush1.bf16.msra.mxu0 0
    %5035 = vmatprep.mubr.bf16.mxu0 0
    %5036 = vmatmul.mubr.bf16.gmra.mrb[0].mxu0 %v5001
    %v5037 = vpop.f32.mrb[0].mxu0
    %v5038 = vadd.f32 0.0, %v5037
    %v5039 = vpop.f32.mrb[0].mxu0
    %v5040 = vpop.f32.mrb[0].mxu0
    %v5041 = vpop.f32.mrb[0].mxu0
    %5042 = vdwg.mxu0
    %v5043 = vadd.f32 %v4962, %v5038
    %v5044 = vpack.c.bf16 %v4792, %v4792
    %v5045 = vld [vmem:[%s3 + $0x60] sm:$0xf]
    %v5046 = vld [vmem:[%s3 + $0x64] sm:$0xf]
    %v5047 = vld [vmem:[%s3 + $0x68] sm:$0xf]
    %v5048 = vld [vmem:[%s3 + $0x6c] sm:$0xf]
    %v5049 = vld [vmem:[%s3 + $0x70] sm:$0xf]
    %v5050 = vld [vmem:[%s3 + $0x74] sm:$0xf]
    %v5051 = vld [vmem:[%s3 + $0x78] sm:$0xf]
    %v5052 = vld [vmem:[%s3 + $0x7c] sm:$0xf]
    %v5061 = vunpack.c.l.b16 %v5045
    %v5062 = vunpack.c.l.b16 %v5046
    %v5063 = vunpack.c.l.b16 %v5047
    %v5064 = vunpack.c.l.b16 %v5048
    %v5065 = vunpack.c.l.b16 %v5049
    %v5066 = vunpack.c.l.b16 %v5050
    %v5067 = vunpack.c.l.b16 %v5051
    %v5068 = vunpack.c.l.b16 %v5052
    %v5069 = vpack.c.b16 %v5062, %v5061
    %v5070 = vpack.c.b16 %v5064, %v5063
    %v5071 = vpack.c.b16 %v5066, %v5065
    %v5072 = vpack.c.b16 %v5068, %v5067
    %v5078 = vsel %vm662, %v5044, 0
    %5080 = vmatprep.subr.bf16.mxu0 0
    %5081 = vmatpush1.bf16.msra.mxu0 %v5069
    %5082 = vmatprep.subr.bf16.mxu0 0
    %5083 = vmatpush1.bf16.msra.mxu0 %v5070
    %5084 = vmatprep.subr.bf16.mxu0 0
    %5085 = vmatpush1.bf16.msra.mxu0 %v5071
    %5086 = vmatprep.subr.bf16.mxu0 0
    %5087 = vmatpush1.bf16.msra.mxu0 %v5072
    %5088 = vmatprep.subr.bf16.mxu0 0
    %5089 = vmatpush1.bf16.msra.mxu0 0
    %5090 = vmatprep.subr.bf16.mxu0 0
    %5091 = vmatpush1.bf16.msra.mxu0 0
    %5092 = vmatprep.subr.bf16.mxu0 0
    %5093 = vmatpush1.bf16.msra.mxu0 0
    %5094 = vmatprep.subr.bf16.mxu0 0
    %5095 = vmatpush1.bf16.msra.mxu0 0
    %5096 = vmatprep.subr.bf16.mxu0 0
    %5097 = vmatpush1.bf16.msra.mxu0 0
    %5098 = vmatprep.subr.bf16.mxu0 0
    %5099 = vmatpush1.bf16.msra.mxu0 0
    %5100 = vmatprep.subr.bf16.mxu0 0
    %5101 = vmatpush1.bf16.msra.mxu0 0
    %5102 = vmatprep.subr.bf16.mxu0 0
    %5103 = vmatpush1.bf16.msra.mxu0 0
    %5104 = vmatprep.subr.bf16.mxu0 0
    %5105 = vmatpush1.bf16.msra.mxu0 0
    %5106 = vmatprep.subr.bf16.mxu0 0
    %5107 = vmatpush1.bf16.msra.mxu0 0
    %5108 = vmatprep.subr.bf16.mxu0 0
    %5109 = vmatpush1.bf16.msra.mxu0 0
    %5110 = vmatprep.subr.bf16.mxu0 0
    %5111 = vmatpush1.bf16.msra.mxu0 0
    %5112 = vmatprep.mubr.bf16.mxu0 0
    %5113 = vmatmul.mubr.bf16.gmra.mrb[0].mxu0 %v5078
    %v5114 = vpop.f32.mrb[0].mxu0
    %v5115 = vadd.f32 0.0, %v5114
    %v5116 = vpop.f32.mrb[0].mxu0
    %v5117 = vpop.f32.mrb[0].mxu0
    %v5118 = vpop.f32.mrb[0].mxu0
    %5119 = vdwg.mxu0
    %v5120 = vadd.f32 %v5043, %v5115
    %v5121 = vmax.f32 %v5120, 0.0
    %v5122 = vpack.c.bf16 %v5121, %v5121
    %v5123 = vld [vmem:[%s4] sm:$0xf]
    %v5124 = vld [vmem:[%s4 + $0x4] sm:$0xf]
    %v5125 = vld [vmem:[%s4 + $0x8] sm:$0xf]
    %v5126 = vld [vmem:[%s4 + $0xc] sm:$0xf]
    %v5127 = vld [vmem:[%s4 + $0x10] sm:$0xf]
    %v5128 = vld [vmem:[%s4 + $0x14] sm:$0xf]
    %v5129 = vld [vmem:[%s4 + $0x18] sm:$0xf]
    %v5130 = vld [vmem:[%s4 + $0x1c] sm:$0xf]
    %v5132 = vlaneseq
    %v5133 = vshrl.u32 %v5132, 7
    %v5134 = vsub.s32 0, %v5133
    %v5135 = vrot.slane %v4794, %v5134
    %v5145 = vunpack.c.l.b16 %v5123
    %v5146 = vunpack.c.l.b16 %v5124
    %v5147 = vunpack.c.l.b16 %v5125
    %v5148 = vunpack.c.l.b16 %v5126
    %v5149 = vunpack.c.l.b16 %v5127
    %v5150 = vunpack.c.l.b16 %v5128
    %v5151 = vunpack.c.l.b16 %v5129
    %v5152 = vunpack.c.l.b16 %v5130
    %v5153 = vpack.c.b16 %v5146, %v5145
    %v5154 = vpack.c.b16 %v5148, %v5147
    %v5155 = vpack.c.b16 %v5150, %v5149
    %v5156 = vpack.c.b16 %v5152, %v5151
    %v5162 = vsel %vm662, %v5122, 0
    %5164 = vmatprep.subr.bf16.mxu0 0
    %5165 = vmatpush1.bf16.msra.mxu0 %v5153
    %5166 = vmatprep.subr.bf16.mxu0 0
    %5167 = vmatpush1.bf16.msra.mxu0 %v5154
    %5168 = vmatprep.subr.bf16.mxu0 0
    %5169 = vmatpush1.bf16.msra.mxu0 %v5155
    %5170 = vmatprep.subr.bf16.mxu0 0
    %5171 = vmatpush1.bf16.msra.mxu0 %v5156
    %5172 = vmatprep.subr.bf16.mxu0 0
    %5173 = vmatpush1.bf16.msra.mxu0 0
    %5174 = vmatprep.subr.bf16.mxu0 0
    %5175 = vmatpush1.bf16.msra.mxu0 0
    %5176 = vmatprep.subr.bf16.mxu0 0
    %5177 = vmatpush1.bf16.msra.mxu0 0
    %5178 = vmatprep.subr.bf16.mxu0 0
    %5179 = vmatpush1.bf16.msra.mxu0 0
    %5180 = vmatprep.subr.bf16.mxu0 0
    %5181 = vmatpush1.bf16.msra.mxu0 0
    %5182 = vmatprep.subr.bf16.mxu0 0
    %5183 = vmatpush1.bf16.msra.mxu0 0
    %5184 = vmatprep.subr.bf16.mxu0 0
    %5185 = vmatpush1.bf16.msra.mxu0 0
    %5186 = vmatprep.subr.bf16.mxu0 0
    %5187 = vmatpush1.bf16.msra.mxu0 0
    %5188 = vmatprep.subr.bf16.mxu0 0
    %5189 = vmatpush1.bf16.msra.mxu0 0
    %5190 = vmatprep.subr.bf16.mxu0 0
    %5191 = vmatpush1.bf16.msra.mxu0 0
    %5192 = vmatprep.subr.bf16.mxu0 0
    %5193 = vmatpush1.bf16.msra.mxu0 0
    %5194 = vmatprep.subr.bf16.mxu0 0
    %5195 = vmatpush1.bf16.msra.mxu0 0
    %5196 = vmatprep.mubr.bf16.mxu0 0
    %5197 = vmatmul.mubr.bf16.gmra.mrb[0].mxu0 %v5162
    %v5198 = vpop.f32.mrb[0].mxu0
    %v5199 = vadd.f32 %v5135, %v5198
    %v5200 = vpop.f32.mrb[0].mxu0
    %v5201 = vpop.f32.mrb[0].mxu0
    %v5202 = vpop.f32.mrb[0].mxu0
    %5203 = vdwg.mxu0
    %vm5204 = vcmask 41984
    %5205 = vst.msk [vmem:[#allocation3] sm:$0x3] %vm5204, %v5199
    %v5206 = vpack.c.bf16 %v4622, %v4622
    %s5207 = scalar_lea.vmem %s3, 128
    %v5208 = vld [vmem:[%s5207] sm:$0xf]
    %v5209 = vld [vmem:[%s5207 + $0x4] sm:$0xf]
    %v5210 = vld [vmem:[%s5207 + $0x8] sm:$0xf]
    %v5211 = vld [vmem:[%s5207 + $0xc] sm:$0xf]
    %v5212 = vld [vmem:[%s5207 + $0x10] sm:$0xf]
    %v5213 = vld [vmem:[%s5207 + $0x14] sm:$0xf]
    %v5214 = vld [vmem:[%s5207 + $0x18] sm:$0xf]
    %v5215 = vld [vmem:[%s5207 + $0x1c] sm:$0xf]
    %v5217 = vrot.slane %v5206, 3
    %5218 = vrot.lane.b32.xlu0 %v5217, 64
    %v5219 = vpop.permute.xlu0 %5218
    %v5228 = vunpack.c.l.b16 %v5208
    %v5229 = vunpack.c.l.b16 %v5209
    %v5230 = vunpack.c.l.b16 %v5210
    %v5231 = vunpack.c.l.b16 %v5211
    %v5232 = vunpack.c.l.b16 %v5212
    %v5233 = vunpack.c.l.b16 %v5213
    %v5234 = vunpack.c.l.b16 %v5214
    %v5235 = vunpack.c.l.b16 %v5215
    %v5236 = vpack.c.b16 %v5229, %v5228
    %v5237 = vpack.c.b16 %v5231, %v5230
    %v5238 = vpack.c.b16 %v5233, %v5232
    %v5239 = vpack.c.b16 %v5235, %v5234
    %v5245 = vsel %vm662, %v5219, 0
    %5247 = vmatprep.subr.bf16.mxu0 0
    %5248 = vmatpush1.bf16.msra.mxu0 %v5236
    %5249 = vmatprep.subr.bf16.mxu0 0
    %5250 = vmatpush1.bf16.msra.mxu0 %v5237
    %5251 = vmatprep.subr.bf16.mxu0 0
    %5252 = vmatpush1.bf16.msra.mxu0 %v5238
    %5253 = vmatprep.subr.bf16.mxu0 0
    %5254 = vmatpush1.bf16.msra.mxu0 %v5239
    %5255 = vmatprep.subr.bf16.mxu0 0
    %5256 = vmatpush1.bf16.msra.mxu0 0
    %5257 = vmatprep.subr.bf16.mxu0 0
    %5258 = vmatpush1.bf16.msra.mxu0 0
    %5259 = vmatprep.subr.bf16.mxu0 0
    %5260 = vmatpush1.bf16.msra.mxu0 0
    %5261 = vmatprep.subr.bf16.mxu0 0
    %5262 = vmatpush1.bf16.msra.mxu0 0
    %5263 = vmatprep.subr.bf16.mxu0 0
    %5264 = vmatpush1.bf16.msra.mxu0 0
    %5265 = vmatprep.subr.bf16.mxu0 0
    %5266 = vmatpush1.bf16.msra.mxu0 0
    %5267 = vmatprep.subr.bf16.mxu0 0
    %5268 = vmatpush1.bf16.msra.mxu0 0
    %5269 = vmatprep.subr.bf16.mxu0 0
    %5270 = vmatpush1.bf16.msra.mxu0 0
    %5271 = vmatprep.subr.bf16.mxu0 0
    %5272 = vmatpush1.bf16.msra.mxu0 0
    %5273 = vmatprep.subr.bf16.mxu0 0
    %5274 = vmatpush1.bf16.msra.mxu0 0
    %5275 = vmatprep.subr.bf16.mxu0 0
    %5276 = vmatpush1.bf16.msra.mxu0 0
    %5277 = vmatprep.subr.bf16.mxu0 0
    %5278 = vmatpush1.bf16.msra.mxu0 0
    %5279 = vmatprep.mubr.bf16.mxu0 0
    %5280 = vmatmul.mubr.bf16.gmra.mrb[0].mxu0 %v5245
    %v5281 = vpop.f32.mrb[0].mxu0
    %v5282 = vadd.f32 0.0, %v5281
    %v5283 = vpop.f32.mrb[0].mxu0
    %v5284 = vpop.f32.mrb[0].mxu0
    %v5285 = vpop.f32.mrb[0].mxu0
    %5286 = vdwg.mxu0
    %5288 = vrot.lane.b32.xlu0 %v5282, 64
    %v5289 = vpop.permute.xlu0 %5288
    %v5291 = vadd.f32 %v4879, %v5289
    %v5292 = vpack.c.bf16 %v4706, %v4706
    %v5293 = vld [vmem:[%s5207 + $0x20] sm:$0xf]
    %v5294 = vld [vmem:[%s5207 + $0x24] sm:$0xf]
    %v5295 = vld [vmem:[%s5207 + $0x28] sm:$0xf]
    %v5296 = vld [vmem:[%s5207 + $0x2c] sm:$0xf]
    %v5297 = vld [vmem:[%s5207 + $0x30] sm:$0xf]
    %v5298 = vld [vmem:[%s5207 + $0x34] sm:$0xf]
    %v5299 = vld [vmem:[%s5207 + $0x38] sm:$0xf]
    %v5300 = vld [vmem:[%s5207 + $0x3c] sm:$0xf]
    %v5302 = vrot.slane %v5292, 3
    %5303 = vrot.lane.b32.xlu0 %v5302, 64
    %v5304 = vpop.permute.xlu0 %5303
    %v5313 = vunpack.c.l.b16 %v5293
    %v5314 = vunpack.c.l.b16 %v5294
    %v5315 = vunpack.c.l.b16 %v5295
    %v5316 = vunpack.c.l.b16 %v5296
    %v5317 = vunpack.c.l.b16 %v5297
    %v5318 = vunpack.c.l.b16 %v5298
    %v5319 = vunpack.c.l.b16 %v5299
    %v5320 = vunpack.c.l.b16 %v5300
    %v5321 = vpack.c.b16 %v5314, %v5313
    %v5322 = vpack.c.b16 %v5316, %v5315
    %v5323 = vpack.c.b16 %v5318, %v5317
    %v5324 = vpack.c.b16 %v5320, %v5319
    %v5330 = vsel %vm662, %v5304, 0
    %5332 = vmatprep.subr.bf16.mxu0 0
    %5333 = vmatpush1.bf16.msra.mxu0 %v5321
    %5334 = vmatprep.subr.bf16.mxu0 0
    %5335 = vmatpush1.bf16.msra.mxu0 %v5322
    %5336 = vmatprep.subr.bf16.mxu0 0
    %5337 = vmatpush1.bf16.msra.mxu0 %v5323
    %5338 = vmatprep.subr.bf16.mxu0 0
    %5339 = vmatpush1.bf16.msra.mxu0 %v5324
    %5340 = vmatprep.subr.bf16.mxu0 0
    %5341 = vmatpush1.bf16.msra.mxu0 0
    %5342 = vmatprep.subr.bf16.mxu0 0
    %5343 = vmatpush1.bf16.msra.mxu0 0
    %5344 = vmatprep.subr.bf16.mxu0 0
    %5345 = vmatpush1.bf16.msra.mxu0 0
    %5346 = vmatprep.subr.bf16.mxu0 0
    %5347 = vmatpush1.bf16.msra.mxu0 0
    %5348 = vmatprep.subr.bf16.mxu0 0
    %5349 = vmatpush1.bf16.msra.mxu0 0
    %5350 = vmatprep.subr.bf16.mxu0 0
    %5351 = vmatpush1.bf16.msra.mxu0 0
    %5352 = vmatprep.subr.bf16.mxu0 0
    %5353 = vmatpush1.bf16.msra.mxu0 0
    %5354 = vmatprep.subr.bf16.mxu0 0
    %5355 = vmatpush1.bf16.msra.mxu0 0
    %5356 = vmatprep.subr.bf16.mxu0 0
    %5357 = vmatpush1.bf16.msra.mxu0 0
    %5358 = vmatprep.subr.bf16.mxu0 0
    %5359 = vmatpush1.bf16.msra.mxu0 0
    %5360 = vmatprep.subr.bf16.mxu0 0
    %5361 = vmatpush1.bf16.msra.mxu0 0
    %5362 = vmatprep.subr.bf16.mxu0 0
    %5363 = vmatpush1.bf16.msra.mxu0 0
    %5364 = vmatprep.mubr.bf16.mxu0 0
    %5365 = vmatmul.mubr.bf16.gmra.mrb[0].mxu0 %v5330
    %v5366 = vpop.f32.mrb[0].mxu0
    %v5367 = vadd.f32 0.0, %v5366
    %v5368 = vpop.f32.mrb[0].mxu0
    %v5369 = vpop.f32.mrb[0].mxu0
    %v5370 = vpop.f32.mrb[0].mxu0
    %5371 = vdwg.mxu0
    %5373 = vrot.lane.b32.xlu0 %v5367, 64
    %v5374 = vpop.permute.xlu0 %5373
    %v5376 = vadd.f32 %v5291, %v5374
    %v5377 = vpack.c.bf16 %v4790, %v4790
    %v5378 = vld [vmem:[%s5207 + $0x40] sm:$0xf]
    %v5379 = vld [vmem:[%s5207 + $0x44] sm:$0xf]
    %v5380 = vld [vmem:[%s5207 + $0x48] sm:$0xf]
    %v5381 = vld [vmem:[%s5207 + $0x4c] sm:$0xf]
    %v5382 = vld [vmem:[%s5207 + $0x50] sm:$0xf]
    %v5383 = vld [vmem:[%s5207 + $0x54] sm:$0xf]
    %v5384 = vld [vmem:[%s5207 + $0x58] sm:$0xf]
    %v5385 = vld [vmem:[%s5207 + $0x5c] sm:$0xf]
    %v5387 = vrot.slane %v5377, 3
    %5388 = vrot.lane.b32.xlu0 %v5387, 64
    %v5389 = vpop.permute.xlu0 %5388
    %v5398 = vunpack.c.l.b16 %v5378
    %v5399 = vunpack.c.l.b16 %v5379
    %v5400 = vunpack.c.l.b16 %v5380
    %v5401 = vunpack.c.l.b16 %v5381
    %v5402 = vunpack.c.l.b16 %v5382
    %v5403 = vunpack.c.l.b16 %v5383
    %v5404 = vunpack.c.l.b16 %v5384
    %v5405 = vunpack.c.l.b16 %v5385
    %v5406 = vpack.c.b16 %v5399, %v5398
    %v5407 = vpack.c.b16 %v5401, %v5400
    %v5408 = vpack.c.b16 %v5403, %v5402
    %v5409 = vpack.c.b16 %v5405, %v5404
    %v5415 = vsel %vm662, %v5389, 0
    %5417 = vmatprep.subr.bf16.mxu0 0
    %5418 = vmatpush1.bf16.msra.mxu0 %v5406
    %5419 = vmatprep.subr.bf16.mxu0 0
    %5420 = vmatpush1.bf16.msra.mxu0 %v5407
    %5421 = vmatprep.subr.bf16.mxu0 0
    %5422 = vmatpush1.bf16.msra.mxu0 %v5408
    %5423 = vmatprep.subr.bf16.mxu0 0
    %5424 = vmatpush1.bf16.msra.mxu0 %v5409
    %5425 = vmatprep.subr.bf16.mxu0 0
    %5426 = vmatpush1.bf16.msra.mxu0 0
    %5427 = vmatprep.subr.bf16.mxu0 0
    %5428 = vmatpush1.bf16.msra.mxu0 0
    %5429 = vmatprep.subr.bf16.mxu0 0
    %5430 = vmatpush1.bf16.msra.mxu0 0
    %5431 = vmatprep.subr.bf16.mxu0 0
    %5432 = vmatpush1.bf16.msra.mxu0 0
    %5433 = vmatprep.subr.bf16.mxu0 0
    %5434 = vmatpush1.bf16.msra.mxu0 0
    %5435 = vmatprep.subr.bf16.mxu0 0
    %5436 = vmatpush1.bf16.msra.mxu0 0
    %5437 = vmatprep.subr.bf16.mxu0 0
    %5438 = vmatpush1.bf16.msra.mxu0 0
    %5439 = vmatprep.subr.bf16.mxu0 0
    %5440 = vmatpush1.bf16.msra.mxu0 0
    %5441 = vmatprep.subr.bf16.mxu0 0
    %5442 = vmatpush1.bf16.msra.mxu0 0
    %5443 = vmatprep.subr.bf16.mxu0 0
    %5444 = vmatpush1.bf16.msra.mxu0 0
    %5445 = vmatprep.subr.bf16.mxu0 0
    %5446 = vmatpush1.bf16.msra.mxu0 0
    %5447 = vmatprep.subr.bf16.mxu0 0
    %5448 = vmatpush1.bf16.msra.mxu0 0
    %5449 = vmatprep.mubr.bf16.mxu0 0
    %5450 = vmatmul.mubr.bf16.gmra.mrb[0].mxu0 %v5415
    %v5451 = vpop.f32.mrb[0].mxu0
    %v5452 = vadd.f32 0.0, %v5451
    %v5453 = vpop.f32.mrb[0].mxu0
    %v5454 = vpop.f32.mrb[0].mxu0
    %v5455 = vpop.f32.mrb[0].mxu0
    %5456 = vdwg.mxu0
    %5458 = vrot.lane.b32.xlu0 %v5452, 64
    %v5459 = vpop.permute.xlu0 %5458
    %v5461 = vadd.f32 %v5376, %v5459
    %v5462 = vld [vmem:[%s5207 + $0x60] sm:$0xf]
    %v5463 = vld [vmem:[%s5207 + $0x64] sm:$0xf]
    %v5464 = vld [vmem:[%s5207 + $0x68] sm:$0xf]
    %v5465 = vld [vmem:[%s5207 + $0x6c] sm:$0xf]
    %v5466 = vld [vmem:[%s5207 + $0x70] sm:$0xf]
    %v5467 = vld [vmem:[%s5207 + $0x74] sm:$0xf]
    %v5468 = vld [vmem:[%s5207 + $0x78] sm:$0xf]
    %v5469 = vld [vmem:[%s5207 + $0x7c] sm:$0xf]
    %5471 = vrot.lane.b32.xlu0 %v5044, 64
    %v5472 = vpop.permute.xlu0 %5471
    %v5481 = vunpack.c.l.b16 %v5462
    %v5482 = vunpack.c.l.b16 %v5463
    %v5483 = vunpack.c.l.b16 %v5464
    %v5484 = vunpack.c.l.b16 %v5465
    %v5485 = vunpack.c.l.b16 %v5466
    %v5486 = vunpack.c.l.b16 %v5467
    %v5487 = vunpack.c.l.b16 %v5468
    %v5488 = vunpack.c.l.b16 %v5469
    %v5489 = vpack.c.b16 %v5482, %v5481
    %v5490 = vpack.c.b16 %v5484, %v5483
    %v5491 = vpack.c.b16 %v5486, %v5485
    %v5492 = vpack.c.b16 %v5488, %v5487
    %v5498 = vsel %vm662, %v5472, 0
    %5500 = vmatprep.subr.bf16.mxu0 0
    %5501 = vmatpush1.bf16.msra.mxu0 %v5489
    %5502 = vmatprep.subr.bf16.mxu0 0
    %5503 = vmatpush1.bf16.msra.mxu0 %v5490
    %5504 = vmatprep.subr.bf16.mxu0 0
    %5505 = vmatpush1.bf16.msra.mxu0 %v5491
    %5506 = vmatprep.subr.bf16.mxu0 0
    %5507 = vmatpush1.bf16.msra.mxu0 %v5492
    %5508 = vmatprep.subr.bf16.mxu0 0
    %5509 = vmatpush1.bf16.msra.mxu0 0
    %5510 = vmatprep.subr.bf16.mxu0 0
    %5511 = vmatpush1.bf16.msra.mxu0 0
    %5512 = vmatprep.subr.bf16.mxu0 0
    %5513 = vmatpush1.bf16.msra.mxu0 0
    %5514 = vmatprep.subr.bf16.mxu0 0
    %5515 = vmatpush1.bf16.msra.mxu0 0
    %5516 = vmatprep.subr.bf16.mxu0 0
    %5517 = vmatpush1.bf16.msra.mxu0 0
    %5518 = vmatprep.subr.bf16.mxu0 0
    %5519 = vmatpush1.bf16.msra.mxu0 0
    %5520 = vmatprep.subr.bf16.mxu0 0
    %5521 = vmatpush1.bf16.msra.mxu0 0
    %5522 = vmatprep.subr.bf16.mxu0 0
    %5523 = vmatpush1.bf16.msra.mxu0 0
    %5524 = vmatprep.subr.bf16.mxu0 0
    %5525 = vmatpush1.bf16.msra.mxu0 0
    %5526 = vmatprep.subr.bf16.mxu0 0
    %5527 = vmatpush1.bf16.msra.mxu0 0
    %5528 = vmatprep.subr.bf16.mxu0 0
    %5529 = vmatpush1.bf16.msra.mxu0 0
    %5530 = vmatprep.subr.bf16.mxu0 0
    %5531 = vmatpush1.bf16.msra.mxu0 0
    %5532 = vmatprep.mubr.bf16.mxu0 0
    %5533 = vmatmul.mubr.bf16.gmra.mrb[0].mxu0 %v5498
    %v5534 = vpop.f32.mrb[0].mxu0
    %v5535 = vadd.f32 0.0, %v5534
    %v5536 = vpop.f32.mrb[0].mxu0
    %v5537 = vpop.f32.mrb[0].mxu0
    %v5538 = vpop.f32.mrb[0].mxu0
    %5539 = vdwg.mxu0
    %5541 = vrot.lane.b32.xlu0 %v5535, 64
    %v5542 = vpop.permute.xlu0 %5541
    %v5544 = vadd.f32 %v5461, %v5542
    %v5545 = vmax.f32 %v5544, 0.0
    %v5546 = vpack.c.bf16 %v5545, %v5545
    %s5547 = scalar_lea.vmem %s4, 32
    %v5548 = vld [vmem:[%s5547] sm:$0xf]
    %v5549 = vld [vmem:[%s5547 + $0x4] sm:$0xf]
    %v5550 = vld [vmem:[%s5547 + $0x8] sm:$0xf]
    %v5551 = vld [vmem:[%s5547 + $0xc] sm:$0xf]
    %v5552 = vld [vmem:[%s5547 + $0x10] sm:$0xf]
    %v5553 = vld [vmem:[%s5547 + $0x14] sm:$0xf]
    %v5554 = vld [vmem:[%s5547 + $0x18] sm:$0xf]
    %v5555 = vld [vmem:[%s5547 + $0x1c] sm:$0xf]
    %5557 = vrot.lane.b32.xlu0 %v5546, 64
    %v5558 = vpop.permute.xlu0 %5557
    %v5567 = vunpack.c.l.b16 %v5548
    %v5568 = vunpack.c.l.b16 %v5549
    %v5569 = vunpack.c.l.b16 %v5550
    %v5570 = vunpack.c.l.b16 %v5551
    %v5571 = vunpack.c.l.b16 %v5552
    %v5572 = vunpack.c.l.b16 %v5553
    %v5573 = vunpack.c.l.b16 %v5554
    %v5574 = vunpack.c.l.b16 %v5555
    %v5575 = vpack.c.b16 %v5568, %v5567
    %v5576 = vpack.c.b16 %v5570, %v5569
    %v5577 = vpack.c.b16 %v5572, %v5571
    %v5578 = vpack.c.b16 %v5574, %v5573
    %5583 = vrot.lane.b32.xlu0 %v5135, 122
    %v5584 = vpop.permute.xlu0 %5583
    %v5587 = vsel %vm662, %v5558, 0
    %5589 = vmatprep.subr.bf16.mxu0 0
    %5590 = vmatpush1.bf16.msra.mxu0 %v5575
    %5591 = vmatprep.subr.bf16.mxu0 0
    %5592 = vmatpush1.bf16.msra.mxu0 %v5576
    %5593 = vmatprep.subr.bf16.mxu0 0
    %5594 = vmatpush1.bf16.msra.mxu0 %v5577
    %5595 = vmatprep.subr.bf16.mxu0 0
    %5596 = vmatpush1.bf16.msra.mxu0 %v5578
    %5597 = vmatprep.subr.bf16.mxu0 0
    %5598 = vmatpush1.bf16.msra.mxu0 0
    %5599 = vmatprep.subr.bf16.mxu0 0
    %5600 = vmatpush1.bf16.msra.mxu0 0
    %5601 = vmatprep.subr.bf16.mxu0 0
    %5602 = vmatpush1.bf16.msra.mxu0 0
    %5603 = vmatprep.subr.bf16.mxu0 0
    %5604 = vmatpush1.bf16.msra.mxu0 0
    %5605 = vmatprep.subr.bf16.mxu0 0
    %5606 = vmatpush1.bf16.msra.mxu0 0
    %5607 = vmatprep.subr.bf16.mxu0 0
    %5608 = vmatpush1.bf16.msra.mxu0 0
    %5609 = vmatprep.subr.bf16.mxu0 0
    %5610 = vmatpush1.bf16.msra.mxu0 0
    %5611 = vmatprep.subr.bf16.mxu0 0
    %5612 = vmatpush1.bf16.msra.mxu0 0
    %5613 = vmatprep.subr.bf16.mxu0 0
    %5614 = vmatpush1.bf16.msra.mxu0 0
    %5615 = vmatprep.subr.bf16.mxu0 0
    %5616 = vmatpush1.bf16.msra.mxu0 0
    %5617 = vmatprep.subr.bf16.mxu0 0
    %5618 = vmatpush1.bf16.msra.mxu0 0
    %5619 = vmatprep.subr.bf16.mxu0 0
    %5620 = vmatpush1.bf16.msra.mxu0 0
    %5621 = vmatprep.mubr.bf16.mxu0 0
    %5622 = vmatmul.mubr.bf16.gmra.mrb[0].mxu0 %v5587
    %v5623 = vpop.f32.mrb[0].mxu0
    %v5624 = vadd.f32 %v5584, %v5623
    %v5625 = vpop.f32.mrb[0].mxu0
    %v5626 = vpop.f32.mrb[0].mxu0
    %v5627 = vpop.f32.mrb[0].mxu0
    %5628 = vdwg.mxu0
    %v5629 = vmax.f32 %v5624, 0.0
    %5630 = vst.msk [vmem:[#allocation7] sm:$0x3] %vm5204, %v5629
    %v5631 = vsel %vm5204, %v5629, -inf
    %5632 = vmax.xlane.f32.xlu0 %v5631
    %v5633 = vpop.xlane.xlu0 %5632
    %v5634 = vsub.f32 %v5629, %v5633
    %v5635 = vmul.f32 %v5634, 1.442695
    %v5636 = vpow.pop %v5635
    %v5637 = vsel %vm5204, %v5636, 0.0
    %5638 = vadd.xlane.f32.xlu0 %v5637
    %v5639 = vpop.xlane.xlu0 %5638
    %v5640 = vlog2.pop %v5639
    %v5641 = vmul.f32 %v5640, 0.6931472
    %v5642 = vadd.f32 %v5633, %v5641
    %v5643 = vsub.f32 %v5629, %v5642
    %5644 = vst.msk [vmem:[#allocation5] sm:$0x3] %vm5204, %v5643
    // Predicated region
    $region26: #{lstm_abr_forward.1} parent=1 // pred_check
      _
    $region27: #{lstm_abr_forward.1} parent=1 // pred_check_branch
      %5646 = sbr.rel (0) target = $region29
    $region28: #{lstm_abr_forward.1} parent=1 // pred_region
      %s5648 = ssub.s32 32, 32
      %5649 = vsyncadd [#allocation4], %s5648
      %s5651 = sshll.u32 [#allocation3], 4
      %s5652 = int_to_ptr.vmem [resolvable:$true] %s5651
      %5654 = dma.vmem_to_hbm [thread:$0]  %s5652, 32, %s6, [#allocation4]
    $region29: #{lstm_abr_forward.1} parent=1 // pred_fallthru
      _
    // Predicated region
    $region30: #{lstm_abr_forward.1} parent=1 // pred_check
      _
    $region31: #{lstm_abr_forward.1} parent=1 // pred_check_branch
      %5656 = sbr.rel (0) target = $region33
    $region32: #{lstm_abr_forward.1} parent=1 // pred_region
      %s5658 = ssub.s32 32, 32
      %5659 = vsyncadd [#allocation6], %s5658
      %s5661 = sshll.u32 [#allocation5], 4
      %s5662 = int_to_ptr.vmem [resolvable:$true] %s5661
      %5664 = dma.vmem_to_hbm [thread:$0]  %s5662, 32, %s7, [#allocation6]
    $region33: #{lstm_abr_forward.1} parent=1 // pred_fallthru
      _
    // Predicated region
    $region34: #{lstm_abr_forward.1} parent=1 // pred_check
      _
    $region35: #{lstm_abr_forward.1} parent=1 // pred_check_branch
      %5666 = sbr.rel (0) target = $region37
    $region36: #{lstm_abr_forward.1} parent=1 // pred_region
      %s5668 = ssub.s32 32, 32
      %5669 = vsyncadd [#allocation6], %s5668
      %s5671 = sshll.u32 [#allocation7], 4
      %s5672 = int_to_ptr.vmem [resolvable:$true] %s5671
      %5674 = dma.vmem_to_hbm [thread:$0]  %s5672, 32, %s8, [#allocation6]
    $region37: #{lstm_abr_forward.1} parent=1 // pred_fallthru
      _
    // Predicated region
    $region38: #{lstm_abr_forward.1} parent=1 // pred_check
      _
    $region39: #{lstm_abr_forward.1} parent=1 // pred_check_branch
      %5676 = sbr.rel (0) target = $region41
    $region40: #{lstm_abr_forward.1} parent=1 // pred_region
      %5677 = dma.done [#allocation4], 32
    $region41: #{lstm_abr_forward.1} parent=1 // pred_fallthru
      _
    // Predicated region
    $region42: #{lstm_abr_forward.1} parent=1 // pred_check
      _
    $region43: #{lstm_abr_forward.1} parent=1 // pred_check_branch
      %5679 = sbr.rel (0) target = $region45
    $region44: #{lstm_abr_forward.1} parent=1 // pred_region
      %5680 = dma.done [#allocation6], 32
    $region45: #{lstm_abr_forward.1} parent=1 // pred_fallthru
      _
    // Predicated region
    $region46: #{lstm_abr_forward.1} parent=1 // pred_check
      _
    $region47: #{lstm_abr_forward.1} parent=1 // pred_check_branch
      %5682 = sbr.rel (0) target = $region49
    $region48: #{lstm_abr_forward.1} parent=1 // pred_region
      %5683 = dma.done [#allocation6], 32
    $region49: #{lstm_abr_forward.1} parent=1 // pred_fallthru
      _
    %5684 = vsyncpa [#allocation4], 1
    %5685 = vsyncpa [#allocation6], 1

</llo_original>
